<compile_context>
chip_gen: v7x
topology: tpu7x:2x2x1
jax: 0.10.0
libtpu: 0.0.40
codegen_flags: <defaults>
</compile_context>

<pallas_src>
import functools

import jax
import jax.numpy as jnp
from jax import lax
from jax.experimental import pallas as pl
from jax.experimental.pallas import tpu as pltpu


# ----------------------------------------------------------------------------
# Single fused Pallas kernel: conv1 -> relu -> conv2 -> (identity pool) -> relu
#                             -> flatten -> fc1 -> relu -> fc2 -> relu -> fc3
# ----------------------------------------------------------------------------
def _fused_classifier_kernel(x_ref, w1_ref, b1_ref, w2_ref, b2_ref,
                             w3_ref, b3_ref, w4_ref, b4_ref, w5_ref, b5_ref,
                             o_ref, *, batch, h_in, w_in):
    c1 = b1_ref.shape[1]                  # 16
    c2 = b2_ref.shape[1]                  # 32
    ho2, wo2 = h_in - 4, w_in - 4         # 12, 12 (after two valid 3x3 convs)
    frame = h_in * w_in                   # rows per image in the "frame" layout
    offs = [i * w_in + j for i in range(3) for j in range(3)]
    max_off = offs[-1]
    # number of frame rows needed for conv2 / conv1 outputs
    l2 = (batch - 1) * frame + (ho2 - 1) * w_in + wo2
    l1 = l2 + max_off                     # note: l1 + max_off == batch*frame

    # ---- conv1: one matmul against the 9 concatenated taps + 9 shifted adds
    t1 = jnp.dot(x_ref[...], w1_ref[...],
                 preferred_element_type=jnp.float32)        # [batch*H*W, 9*c1]
    acc1 = t1[offs[0]:offs[0] + l1, 0:c1]
    for k in range(1, 9):
        acc1 = acc1 + t1[offs[k]:offs[k] + l1, k * c1:(k + 1) * c1]
    y1 = jnp.maximum(acc1 + b1_ref[...], 0.0).astype(jnp.bfloat16)   # [l1, c1]

    # ---- conv2 (+ identity AdaptiveMaxPool2d((12,12)) + fused ReLU)
    t2 = jnp.dot(y1, w2_ref[...], preferred_element_type=jnp.float32)  # [l1, 9*c2]
    acc2 = t2[offs[0]:offs[0] + l2, 0:c2]
    for k in range(1, 9):
        acc2 = acc2 + t2[offs[k]:offs[k] + l2, k * c2:(k + 1) * c2]
    y2 = jnp.maximum(acc2 + b2_ref[...], 0.0)               # [l2, c2] f32

    # ---- flatten to torch NCHW order (feature = c*HW + h*W + w), per sample
    feats = []
    for b in range(batch):
        rows = [y2[b * frame + hh * w_in: b * frame + hh * w_in + wo2, :]
                for hh in range(ho2)]
        comp = jnp.concatenate(rows, axis=0)                # [ho2*wo2, c2]
        comp_t = jnp.transpose(comp)                        # [c2, ho2*wo2]
        feats.append(jnp.concatenate(
            [comp_t[c:c + 1, :] for c in range(c2)], axis=1))  # [1, c2*ho2*wo2]
    f = jnp.concatenate(feats, axis=0).astype(jnp.bfloat16)    # [batch, 4608]

    # ---- fc1 -> ReLU -> fc2 -> ReLU -> fc3 (bf16 operands, f32 accumulate)
    h3 = jnp.maximum(jnp.dot(f, w3_ref[...], preferred_element_type=jnp.float32)
                     + b3_ref[...], 0.0).astype(jnp.bfloat16)
    h4 = jnp.maximum(jnp.dot(h3, w4_ref[...], preferred_element_type=jnp.float32)
                     + b4_ref[...], 0.0).astype(jnp.bfloat16)
    o_ref[...] = (jnp.dot(h4, w5_ref[...], preferred_element_type=jnp.float32)
                  + b5_ref[...]).astype(o_ref.dtype)


# ----------------------------------------------------------------------------
# Wrapper: one pallas_call, full-array blocks (everything fits in VMEM)
# ----------------------------------------------------------------------------
@jax.jit
def classifier_forward(x, prepped):
    batch, c_in, h_in, w_in = x.shape
    assert (h_in - 4, w_in - 4) == (12, 12), (
        "AdaptiveMaxPool2d((12,12)) is only the identity for 16x16 inputs")
    # TODO(synk): general AdaptiveMaxPool2d path (real pooling windows) for
    # inputs whose conv2 output is larger than 12x12.
    num_classes = prepped["b5"].shape[1]

    # NCHW -> channel-last "frame" layout [batch*H*W, Cin]; tiny (8 KB) layout
    # plumbing done once in the wrapper, everything else stays in VMEM.
    x2d = x.transpose(0, 2, 3, 1).reshape(batch * h_in * w_in, c_in)
    x2d = x2d.astype(jnp.bfloat16)

    operands = (x2d, prepped["w1cat"], prepped["b1"], prepped["w2cat"],
                prepped["b2"], prepped["w3"], prepped["b3"], prepped["w4"],
                prepped["b4"], prepped["w5"], prepped["b5"])

    kernel = functools.partial(_fused_classifier_kernel,
                               batch=batch, h_in=h_in, w_in=w_in)
    return pl.pallas_call(
        kernel,
        out_shape=jax.ShapeDtypeStruct((batch, num_classes), jnp.float32),
        grid=(1,),
        in_specs=[pl.BlockSpec(op.shape, lambda i: (0, 0)) for op in operands],
        out_specs=pl.BlockSpec((batch, num_classes), lambda i: (0, 0)),
        compiler_params=pltpu.CompilerParams(
            dimension_semantics=("arbitrary",),
            vmem_limit_bytes=32 * 1024 * 1024),
    )(*operands)


# ----------------------------------------------------------------------------
# One-time weight preparation (free, static): concat conv taps, cast to bf16
# ----------------------------------------------------------------------------
def prepare_params(p):
    c_in = p["w1"].shape[1]
    c1 = p["w1"].shape[0]
    c2 = p["w2"].shape[0]
    return {
        # w1cat[ci, (i*3+j)*c1 + co] = w1[co, ci, i, j]
        "w1cat": p["w1"].transpose(1, 2, 3, 0).reshape(c_in, 9 * c1).astype(jnp.bfloat16),
        "b1": p["b1"].reshape(1, -1).astype(jnp.float32),
        "w2cat": p["w2"].transpose(1, 2, 3, 0).reshape(c1, 9 * c2).astype(jnp.bfloat16),
        "b2": p["b2"].reshape(1, -1).astype(jnp.float32),
        # linear weights stored [in, out]; w3 rows are already in torch's NCHW
        # flatten order (c*144 + h*12 + w), which is exactly what the kernel builds.
        "w3": p["w3"].astype(jnp.bfloat16),
        "b3": p["b3"].reshape(1, -1).astype(jnp.float32),
        "w4": p["w4"].astype(jnp.bfloat16),
        "b4": p["b4"].reshape(1, -1).astype(jnp.float32),
        "w5": p["w5"].astype(jnp.bfloat16),
        "b5": p["b5"].reshape(1, -1).astype(jnp.float32),
    }


# ----------------------------------------------------------------------------
# Deterministic parameter init (synthetic weights; shapes match the module)
# ----------------------------------------------------------------------------
def init_params(key, in_channels, num_classes):
    ks = jax.random.split(key, 10)

    def u(k, shape, fan_in):
        bound = 1.0 / jnp.sqrt(fan_in)
        return jax.random.uniform(k, shape, jnp.float32, -bound, bound)

    return {
        "w1": u(ks[0], (16, in_channels, 3, 3), in_channels * 9),
        "b1": u(ks[1], (16,), in_channels * 9),
        "w2": u(ks[2], (32, 16, 3, 3), 16 * 9),
        "b2": u(ks[3], (32,), 16 * 9),
        "w3": u(ks[4], (12 * 12 * 32, 256), 12 * 12 * 32),
        "b3": u(ks[5], (256,), 12 * 12 * 32),
        "w4": u(ks[6], (256, 128), 256),
        "b4": u(ks[7], (128,), 256),
        "w5": u(ks[8], (128, num_classes), 128),
        "b5": u(ks[9], (num_classes,), 128),
    }


# ----------------------------------------------------------------------------
# Pure-JAX reference (f32) for a sanity check
# ----------------------------------------------------------------------------
def _reference_forward(x, p):
    dn = ("NCHW", "OIHW", "NCHW")
    y = lax.conv_general_dilated(x, p["w1"], (1, 1), "VALID",
                                 dimension_numbers=dn,
                                 precision=lax.Precision.HIGHEST)
    y = jnp.maximum(y + p["b1"][None, :, None, None], 0.0)
    y = lax.conv_general_dilated(y, p["w2"], (1, 1), "VALID",
                                 dimension_numbers=dn,
                                 precision=lax.Precision.HIGHEST)
    # AdaptiveMaxPool2d((12,12)) == identity: conv2 output is already 12x12.
    y = jnp.maximum(y + p["b2"][None, :, None, None], 0.0)
    f = y.reshape(y.shape[0], -1)
    f = jnp.maximum(jnp.dot(f, p["w3"], precision=lax.Precision.HIGHEST) + p["b3"], 0.0)
    f = jnp.maximum(jnp.dot(f, p["w4"], precision=lax.Precision.HIGHEST) + p["b4"], 0.0)
    return jnp.dot(f, p["w5"], precision=lax.Precision.HIGHEST) + p["b5"]


if __name__ == "__main__":
    key = jax.random.PRNGKey(0)
    kx, kp = jax.random.split(key)

    batch, in_channels, spatial, num_classes = 2, 4, 16, 10
    x = jax.random.normal(kx, (batch, in_channels, spatial, spatial), jnp.float32)
    params = init_params(kp, in_channels, num_classes)
    prepped = prepare_params(params)

    out = classifier_forward(x, prepped)
    out = jax.block_until_ready(out)
    assert out.shape == (batch, num_classes)
    assert out.dtype == jnp.float32

    ref = _reference_forward(x, params)
    max_err = float(jnp.max(jnp.abs(out - ref)))
    assert max_err < 5e-2, f"kernel/reference mismatch: {max_err}"

    print("KERNEL_OK")
</pallas_src>

<mosaic_0001>
module attributes {stable_mosaic.version = 11 : i64} {
  func.func @_fused_classifier_kernel(%arg0: i32, %arg1: memref<512x4xbf16, #tpu.memory_space<vmem>>, %arg2: memref<4x144xbf16, #tpu.memory_space<vmem>>, %arg3: memref<1x16xf32, #tpu.memory_space<vmem>>, %arg4: memref<16x288xbf16, #tpu.memory_space<vmem>>, %arg5: memref<1x32xf32, #tpu.memory_space<vmem>>, %arg6: memref<4608x256xbf16, #tpu.memory_space<vmem>>, %arg7: memref<1x256xf32, #tpu.memory_space<vmem>>, %arg8: memref<256x128xbf16, #tpu.memory_space<vmem>>, %arg9: memref<1x128xf32, #tpu.memory_space<vmem>>, %arg10: memref<128x10xbf16, #tpu.memory_space<vmem>>, %arg11: memref<1x10xf32, #tpu.memory_space<vmem>>, %arg12: memref<2x10xf32, #tpu.memory_space<vmem>>) attributes {dimension_semantics = [#tpu.dimension_semantics<arbitrary>], iteration_bounds = array<i64: 1>, scalar_prefetch = 0 : i64, scratch_operands = 0 : i64, tpu.core_type = #tpu.core_type<tc>, window_params = [{pipeline_mode = #tpu.pipeline_mode<synchronous>, transform_indices = @transform_0, window_bounds = array<i64: 512, 4>}, {pipeline_mode = #tpu.pipeline_mode<synchronous>, transform_indices = @transform_1, window_bounds = array<i64: 4, 144>}, {pipeline_mode = #tpu.pipeline_mode<synchronous>, transform_indices = @transform_2, window_bounds = array<i64: 1, 16>}, {pipeline_mode = #tpu.pipeline_mode<synchronous>, transform_indices = @transform_3, window_bounds = array<i64: 16, 288>}, {pipeline_mode = #tpu.pipeline_mode<synchronous>, transform_indices = @transform_4, window_bounds = array<i64: 1, 32>}, {pipeline_mode = #tpu.pipeline_mode<synchronous>, transform_indices = @transform_5, window_bounds = array<i64: 4608, 256>}, {pipeline_mode = #tpu.pipeline_mode<synchronous>, transform_indices = @transform_6, window_bounds = array<i64: 1, 256>}, {pipeline_mode = #tpu.pipeline_mode<synchronous>, transform_indices = @transform_7, window_bounds = array<i64: 256, 128>}, {pipeline_mode = #tpu.pipeline_mode<synchronous>, transform_indices = @transform_8, window_bounds = array<i64: 1, 128>}, {pipeline_mode = #tpu.pipeline_mode<synchronous>, transform_indices = @transform_9, window_bounds = array<i64: 128, 10>}, {pipeline_mode = #tpu.pipeline_mode<synchronous>, transform_indices = @transform_10, window_bounds = array<i64: 1, 10>}, {pipeline_mode = #tpu.pipeline_mode<synchronous>, transform_indices = @transform_11, window_bounds = array<i64: 2, 10>}]} {
    %c0 = arith.constant 0 : index
    %c0_0 = arith.constant 0 : index
    %0 = vector.load %arg1[%c0, %c0_0] : memref<512x4xbf16, #tpu.memory_space<vmem>>, vector<512x4xbf16>
    %c0_1 = arith.constant 0 : index
    %c0_2 = arith.constant 0 : index
    %1 = vector.load %arg2[%c0_1, %c0_2] : memref<4x144xbf16, #tpu.memory_space<vmem>>, vector<4x144xbf16>
    %cst = arith.constant dense<0.000000e+00> : vector<512x144xf32>
    %2 = tpu.matmul %0, %1, %cst {dimension_numbers = #tpu.dot_dimension_numbers<[1], [0], [0], [1], [0, 0, 1, 1], [], []>} : vector<512x4xbf16>, vector<4x144xbf16>, vector<512x144xf32> -> vector<512x144xf32>
    %3 = vector.extract_strided_slice %2 {offsets = [0, 0], sizes = [478, 16], strides = [1, 1]} : vector<512x144xf32> to vector<478x16xf32>
    %4 = vector.extract_strided_slice %2 {offsets = [1, 16], sizes = [478, 16], strides = [1, 1]} : vector<512x144xf32> to vector<478x16xf32>
    %5 = arith.addf %3, %4 : vector<478x16xf32>
    %6 = vector.extract_strided_slice %2 {offsets = [2, 32], sizes = [478, 16], strides = [1, 1]} : vector<512x144xf32> to vector<478x16xf32>
    %7 = arith.addf %5, %6 : vector<478x16xf32>
    %8 = vector.extract_strided_slice %2 {offsets = [16, 48], sizes = [478, 16], strides = [1, 1]} : vector<512x144xf32> to vector<478x16xf32>
    %9 = arith.addf %7, %8 : vector<478x16xf32>
    %10 = vector.extract_strided_slice %2 {offsets = [17, 64], sizes = [478, 16], strides = [1, 1]} : vector<512x144xf32> to vector<478x16xf32>
    %11 = arith.addf %9, %10 : vector<478x16xf32>
    %12 = vector.extract_strided_slice %2 {offsets = [18, 80], sizes = [478, 16], strides = [1, 1]} : vector<512x144xf32> to vector<478x16xf32>
    %13 = arith.addf %11, %12 : vector<478x16xf32>
    %14 = vector.extract_strided_slice %2 {offsets = [32, 96], sizes = [478, 16], strides = [1, 1]} : vector<512x144xf32> to vector<478x16xf32>
    %15 = arith.addf %13, %14 : vector<478x16xf32>
    %16 = vector.extract_strided_slice %2 {offsets = [33, 112], sizes = [478, 16], strides = [1, 1]} : vector<512x144xf32> to vector<478x16xf32>
    %17 = arith.addf %15, %16 : vector<478x16xf32>
    %18 = vector.extract_strided_slice %2 {offsets = [34, 128], sizes = [478, 16], strides = [1, 1]} : vector<512x144xf32> to vector<478x16xf32>
    %19 = arith.addf %17, %18 : vector<478x16xf32>
    %c0_3 = arith.constant 0 : index
    %c0_4 = arith.constant 0 : index
    %20 = vector.load %arg3[%c0_3, %c0_4] : memref<1x16xf32, #tpu.memory_space<vmem>>, vector<1x16xf32>
    %21 = vector.broadcast %20 : vector<1x16xf32> to vector<478x16xf32>
    %22 = arith.addf %19, %21 : vector<478x16xf32>
    %cst_5 = arith.constant 0.000000e+00 : f32
    %23 = vector.broadcast %cst_5 : f32 to vector<478x16xf32>
    %24 = arith.maximumf %22, %23 : vector<478x16xf32>
    %25 = arith.truncf %24 : vector<478x16xf32> to vector<478x16xbf16>
    %c0_6 = arith.constant 0 : index
    %c0_7 = arith.constant 0 : index
    %26 = vector.load %arg4[%c0_6, %c0_7] : memref<16x288xbf16, #tpu.memory_space<vmem>>, vector<16x288xbf16>
    %cst_8 = arith.constant dense<0.000000e+00> : vector<478x288xf32>
    %27 = tpu.matmul %25, %26, %cst_8 {dimension_numbers = #tpu.dot_dimension_numbers<[1], [0], [0], [1], [0, 0, 1, 1], [], []>} : vector<478x16xbf16>, vector<16x288xbf16>, vector<478x288xf32> -> vector<478x288xf32>
    %28 = vector.extract_strided_slice %27 {offsets = [0, 0], sizes = [444, 32], strides = [1, 1]} : vector<478x288xf32> to vector<444x32xf32>
    %29 = vector.extract_strided_slice %27 {offsets = [1, 32], sizes = [444, 32], strides = [1, 1]} : vector<478x288xf32> to vector<444x32xf32>
    %30 = arith.addf %28, %29 : vector<444x32xf32>
    %31 = vector.extract_strided_slice %27 {offsets = [2, 64], sizes = [444, 32], strides = [1, 1]} : vector<478x288xf32> to vector<444x32xf32>
    %32 = arith.addf %30, %31 : vector<444x32xf32>
    %33 = vector.extract_strided_slice %27 {offsets = [16, 96], sizes = [444, 32], strides = [1, 1]} : vector<478x288xf32> to vector<444x32xf32>
    %34 = arith.addf %32, %33 : vector<444x32xf32>
    %35 = vector.extract_strided_slice %27 {offsets = [17, 128], sizes = [444, 32], strides = [1, 1]} : vector<478x288xf32> to vector<444x32xf32>
    %36 = arith.addf %34, %35 : vector<444x32xf32>
    %37 = vector.extract_strided_slice %27 {offsets = [18, 160], sizes = [444, 32], strides = [1, 1]} : vector<478x288xf32> to vector<444x32xf32>
    %38 = arith.addf %36, %37 : vector<444x32xf32>
    %39 = vector.extract_strided_slice %27 {offsets = [32, 192], sizes = [444, 32], strides = [1, 1]} : vector<478x288xf32> to vector<444x32xf32>
    %40 = arith.addf %38, %39 : vector<444x32xf32>
    %41 = vector.extract_strided_slice %27 {offsets = [33, 224], sizes = [444, 32], strides = [1, 1]} : vector<478x288xf32> to vector<444x32xf32>
    %42 = arith.addf %40, %41 : vector<444x32xf32>
    %43 = vector.extract_strided_slice %27 {offsets = [34, 256], sizes = [444, 32], strides = [1, 1]} : vector<478x288xf32> to vector<444x32xf32>
    %44 = arith.addf %42, %43 : vector<444x32xf32>
    %c0_9 = arith.constant 0 : index
    %c0_10 = arith.constant 0 : index
    %45 = vector.load %arg5[%c0_9, %c0_10] : memref<1x32xf32, #tpu.memory_space<vmem>>, vector<1x32xf32>
    %46 = vector.broadcast %45 : vector<1x32xf32> to vector<444x32xf32>
    %47 = arith.addf %44, %46 : vector<444x32xf32>
    %cst_11 = arith.constant 0.000000e+00 : f32
    %48 = vector.broadcast %cst_11 : f32 to vector<444x32xf32>
    %49 = arith.maximumf %47, %48 : vector<444x32xf32>
    %50 = vector.extract_strided_slice %49 {offsets = [0, 0], sizes = [12, 32], strides = [1, 1]} : vector<444x32xf32> to vector<12x32xf32>
    %51 = vector.extract_strided_slice %49 {offsets = [16, 0], sizes = [12, 32], strides = [1, 1]} : vector<444x32xf32> to vector<12x32xf32>
    %52 = vector.extract_strided_slice %49 {offsets = [32, 0], sizes = [12, 32], strides = [1, 1]} : vector<444x32xf32> to vector<12x32xf32>
    %53 = vector.extract_strided_slice %49 {offsets = [48, 0], sizes = [12, 32], strides = [1, 1]} : vector<444x32xf32> to vector<12x32xf32>
    %54 = vector.extract_strided_slice %49 {offsets = [64, 0], sizes = [12, 32], strides = [1, 1]} : vector<444x32xf32> to vector<12x32xf32>
    %55 = vector.extract_strided_slice %49 {offsets = [80, 0], sizes = [12, 32], strides = [1, 1]} : vector<444x32xf32> to vector<12x32xf32>
    %56 = vector.extract_strided_slice %49 {offsets = [96, 0], sizes = [12, 32], strides = [1, 1]} : vector<444x32xf32> to vector<12x32xf32>
    %57 = vector.extract_strided_slice %49 {offsets = [112, 0], sizes = [12, 32], strides = [1, 1]} : vector<444x32xf32> to vector<12x32xf32>
    %58 = vector.extract_strided_slice %49 {offsets = [128, 0], sizes = [12, 32], strides = [1, 1]} : vector<444x32xf32> to vector<12x32xf32>
    %59 = vector.extract_strided_slice %49 {offsets = [144, 0], sizes = [12, 32], strides = [1, 1]} : vector<444x32xf32> to vector<12x32xf32>
    %60 = vector.extract_strided_slice %49 {offsets = [160, 0], sizes = [12, 32], strides = [1, 1]} : vector<444x32xf32> to vector<12x32xf32>
    %61 = vector.extract_strided_slice %49 {offsets = [176, 0], sizes = [12, 32], strides = [1, 1]} : vector<444x32xf32> to vector<12x32xf32>
    %62 = tpu.concatenate %50, %51, %52, %53, %54, %55, %56, %57, %58, %59, %60, %61 in 0 : vector<12x32xf32>, vector<12x32xf32>, vector<12x32xf32>, vector<12x32xf32>, vector<12x32xf32>, vector<12x32xf32>, vector<12x32xf32>, vector<12x32xf32>, vector<12x32xf32>, vector<12x32xf32>, vector<12x32xf32>, vector<12x32xf32> -> vector<144x32xf32>
    %63 = tpu.transpose %62, [1, 0] : vector<144x32xf32> -> vector<32x144xf32>
    %64 = vector.extract_strided_slice %63 {offsets = [0, 0], sizes = [1, 144], strides = [1, 1]} : vector<32x144xf32> to vector<1x144xf32>
    %65 = vector.extract_strided_slice %63 {offsets = [1, 0], sizes = [1, 144], strides = [1, 1]} : vector<32x144xf32> to vector<1x144xf32>
    %66 = vector.extract_strided_slice %63 {offsets = [2, 0], sizes = [1, 144], strides = [1, 1]} : vector<32x144xf32> to vector<1x144xf32>
    %67 = vector.extract_strided_slice %63 {offsets = [3, 0], sizes = [1, 144], strides = [1, 1]} : vector<32x144xf32> to vector<1x144xf32>
    %68 = vector.extract_strided_slice %63 {offsets = [4, 0], sizes = [1, 144], strides = [1, 1]} : vector<32x144xf32> to vector<1x144xf32>
    %69 = vector.extract_strided_slice %63 {offsets = [5, 0], sizes = [1, 144], strides = [1, 1]} : vector<32x144xf32> to vector<1x144xf32>
    %70 = vector.extract_strided_slice %63 {offsets = [6, 0], sizes = [1, 144], strides = [1, 1]} : vector<32x144xf32> to vector<1x144xf32>
    %71 = vector.extract_strided_slice %63 {offsets = [7, 0], sizes = [1, 144], strides = [1, 1]} : vector<32x144xf32> to vector<1x144xf32>
    %72 = vector.extract_strided_slice %63 {offsets = [8, 0], sizes = [1, 144], strides = [1, 1]} : vector<32x144xf32> to vector<1x144xf32>
    %73 = vector.extract_strided_slice %63 {offsets = [9, 0], sizes = [1, 144], strides = [1, 1]} : vector<32x144xf32> to vector<1x144xf32>
    %74 = vector.extract_strided_slice %63 {offsets = [10, 0], sizes = [1, 144], strides = [1, 1]} : vector<32x144xf32> to vector<1x144xf32>
    %75 = vector.extract_strided_slice %63 {offsets = [11, 0], sizes = [1, 144], strides = [1, 1]} : vector<32x144xf32> to vector<1x144xf32>
    %76 = vector.extract_strided_slice %63 {offsets = [12, 0], sizes = [1, 144], strides = [1, 1]} : vector<32x144xf32> to vector<1x144xf32>
    %77 = vector.extract_strided_slice %63 {offsets = [13, 0], sizes = [1, 144], strides = [1, 1]} : vector<32x144xf32> to vector<1x144xf32>
    %78 = vector.extract_strided_slice %63 {offsets = [14, 0], sizes = [1, 144], strides = [1, 1]} : vector<32x144xf32> to vector<1x144xf32>
    %79 = vector.extract_strided_slice %63 {offsets = [15, 0], sizes = [1, 144], strides = [1, 1]} : vector<32x144xf32> to vector<1x144xf32>
    %80 = vector.extract_strided_slice %63 {offsets = [16, 0], sizes = [1, 144], strides = [1, 1]} : vector<32x144xf32> to vector<1x144xf32>
    %81 = vector.extract_strided_slice %63 {offsets = [17, 0], sizes = [1, 144], strides = [1, 1]} : vector<32x144xf32> to vector<1x144xf32>
    %82 = vector.extract_strided_slice %63 {offsets = [18, 0], sizes = [1, 144], strides = [1, 1]} : vector<32x144xf32> to vector<1x144xf32>
    %83 = vector.extract_strided_slice %63 {offsets = [19, 0], sizes = [1, 144], strides = [1, 1]} : vector<32x144xf32> to vector<1x144xf32>
    %84 = vector.extract_strided_slice %63 {offsets = [20, 0], sizes = [1, 144], strides = [1, 1]} : vector<32x144xf32> to vector<1x144xf32>
    %85 = vector.extract_strided_slice %63 {offsets = [21, 0], sizes = [1, 144], strides = [1, 1]} : vector<32x144xf32> to vector<1x144xf32>
    %86 = vector.extract_strided_slice %63 {offsets = [22, 0], sizes = [1, 144], strides = [1, 1]} : vector<32x144xf32> to vector<1x144xf32>
    %87 = vector.extract_strided_slice %63 {offsets = [23, 0], sizes = [1, 144], strides = [1, 1]} : vector<32x144xf32> to vector<1x144xf32>
    %88 = vector.extract_strided_slice %63 {offsets = [24, 0], sizes = [1, 144], strides = [1, 1]} : vector<32x144xf32> to vector<1x144xf32>
    %89 = vector.extract_strided_slice %63 {offsets = [25, 0], sizes = [1, 144], strides = [1, 1]} : vector<32x144xf32> to vector<1x144xf32>
    %90 = vector.extract_strided_slice %63 {offsets = [26, 0], sizes = [1, 144], strides = [1, 1]} : vector<32x144xf32> to vector<1x144xf32>
    %91 = vector.extract_strided_slice %63 {offsets = [27, 0], sizes = [1, 144], strides = [1, 1]} : vector<32x144xf32> to vector<1x144xf32>
    %92 = vector.extract_strided_slice %63 {offsets = [28, 0], sizes = [1, 144], strides = [1, 1]} : vector<32x144xf32> to vector<1x144xf32>
    %93 = vector.extract_strided_slice %63 {offsets = [29, 0], sizes = [1, 144], strides = [1, 1]} : vector<32x144xf32> to vector<1x144xf32>
    %94 = vector.extract_strided_slice %63 {offsets = [30, 0], sizes = [1, 144], strides = [1, 1]} : vector<32x144xf32> to vector<1x144xf32>
    %95 = vector.extract_strided_slice %63 {offsets = [31, 0], sizes = [1, 144], strides = [1, 1]} : vector<32x144xf32> to vector<1x144xf32>
    %96 = tpu.concatenate %64, %65, %66, %67, %68, %69, %70, %71, %72, %73, %74, %75, %76, %77, %78, %79 in 1 : vector<1x144xf32>, vector<1x144xf32>, vector<1x144xf32>, vector<1x144xf32>, vector<1x144xf32>, vector<1x144xf32>, vector<1x144xf32>, vector<1x144xf32>, vector<1x144xf32>, vector<1x144xf32>, vector<1x144xf32>, vector<1x144xf32>, vector<1x144xf32>, vector<1x144xf32>, vector<1x144xf32>, vector<1x144xf32> -> vector<1x2304xf32>
    %97 = tpu.concatenate %80, %81, %82, %83, %84, %85, %86, %87, %88, %89, %90, %91, %92, %93, %94, %95 in 1 : vector<1x144xf32>, vector<1x144xf32>, vector<1x144xf32>, vector<1x144xf32>, vector<1x144xf32>, vector<1x144xf32>, vector<1x144xf32>, vector<1x144xf32>, vector<1x144xf32>, vector<1x144xf32>, vector<1x144xf32>, vector<1x144xf32>, vector<1x144xf32>, vector<1x144xf32>, vector<1x144xf32>, vector<1x144xf32> -> vector<1x2304xf32>
    %98 = tpu.concatenate %96, %97 in 1 : vector<1x2304xf32>, vector<1x2304xf32> -> vector<1x4608xf32>
    %99 = vector.extract_strided_slice %49 {offsets = [256, 0], sizes = [12, 32], strides = [1, 1]} : vector<444x32xf32> to vector<12x32xf32>
    %100 = vector.extract_strided_slice %49 {offsets = [272, 0], sizes = [12, 32], strides = [1, 1]} : vector<444x32xf32> to vector<12x32xf32>
    %101 = vector.extract_strided_slice %49 {offsets = [288, 0], sizes = [12, 32], strides = [1, 1]} : vector<444x32xf32> to vector<12x32xf32>
    %102 = vector.extract_strided_slice %49 {offsets = [304, 0], sizes = [12, 32], strides = [1, 1]} : vector<444x32xf32> to vector<12x32xf32>
    %103 = vector.extract_strided_slice %49 {offsets = [320, 0], sizes = [12, 32], strides = [1, 1]} : vector<444x32xf32> to vector<12x32xf32>
    %104 = vector.extract_strided_slice %49 {offsets = [336, 0], sizes = [12, 32], strides = [1, 1]} : vector<444x32xf32> to vector<12x32xf32>
    %105 = vector.extract_strided_slice %49 {offsets = [352, 0], sizes = [12, 32], strides = [1, 1]} : vector<444x32xf32> to vector<12x32xf32>
    %106 = vector.extract_strided_slice %49 {offsets = [368, 0], sizes = [12, 32], strides = [1, 1]} : vector<444x32xf32> to vector<12x32xf32>
    %107 = vector.extract_strided_slice %49 {offsets = [384, 0], sizes = [12, 32], strides = [1, 1]} : vector<444x32xf32> to vector<12x32xf32>
    %108 = vector.extract_strided_slice %49 {offsets = [400, 0], sizes = [12, 32], strides = [1, 1]} : vector<444x32xf32> to vector<12x32xf32>
    %109 = vector.extract_strided_slice %49 {offsets = [416, 0], sizes = [12, 32], strides = [1, 1]} : vector<444x32xf32> to vector<12x32xf32>
    %110 = vector.extract_strided_slice %49 {offsets = [432, 0], sizes = [12, 32], strides = [1, 1]} : vector<444x32xf32> to vector<12x32xf32>
    %111 = tpu.concatenate %99, %100, %101, %102, %103, %104, %105, %106, %107, %108, %109, %110 in 0 : vector<12x32xf32>, vector<12x32xf32>, vector<12x32xf32>, vector<12x32xf32>, vector<12x32xf32>, vector<12x32xf32>, vector<12x32xf32>, vector<12x32xf32>, vector<12x32xf32>, vector<12x32xf32>, vector<12x32xf32>, vector<12x32xf32> -> vector<144x32xf32>
    %112 = tpu.transpose %111, [1, 0] : vector<144x32xf32> -> vector<32x144xf32>
    %113 = vector.extract_strided_slice %112 {offsets = [0, 0], sizes = [1, 144], strides = [1, 1]} : vector<32x144xf32> to vector<1x144xf32>
    %114 = vector.extract_strided_slice %112 {offsets = [1, 0], sizes = [1, 144], strides = [1, 1]} : vector<32x144xf32> to vector<1x144xf32>
    %115 = vector.extract_strided_slice %112 {offsets = [2, 0], sizes = [1, 144], strides = [1, 1]} : vector<32x144xf32> to vector<1x144xf32>
    %116 = vector.extract_strided_slice %112 {offsets = [3, 0], sizes = [1, 144], strides = [1, 1]} : vector<32x144xf32> to vector<1x144xf32>
    %117 = vector.extract_strided_slice %112 {offsets = [4, 0], sizes = [1, 144], strides = [1, 1]} : vector<32x144xf32> to vector<1x144xf32>
    %118 = vector.extract_strided_slice %112 {offsets = [5, 0], sizes = [1, 144], strides = [1, 1]} : vector<32x144xf32> to vector<1x144xf32>
    %119 = vector.extract_strided_slice %112 {offsets = [6, 0], sizes = [1, 144], strides = [1, 1]} : vector<32x144xf32> to vector<1x144xf32>
    %120 = vector.extract_strided_slice %112 {offsets = [7, 0], sizes = [1, 144], strides = [1, 1]} : vector<32x144xf32> to vector<1x144xf32>
    %121 = vector.extract_strided_slice %112 {offsets = [8, 0], sizes = [1, 144], strides = [1, 1]} : vector<32x144xf32> to vector<1x144xf32>
    %122 = vector.extract_strided_slice %112 {offsets = [9, 0], sizes = [1, 144], strides = [1, 1]} : vector<32x144xf32> to vector<1x144xf32>
    %123 = vector.extract_strided_slice %112 {offsets = [10, 0], sizes = [1, 144], strides = [1, 1]} : vector<32x144xf32> to vector<1x144xf32>
    %124 = vector.extract_strided_slice %112 {offsets = [11, 0], sizes = [1, 144], strides = [1, 1]} : vector<32x144xf32> to vector<1x144xf32>
    %125 = vector.extract_strided_slice %112 {offsets = [12, 0], sizes = [1, 144], strides = [1, 1]} : vector<32x144xf32> to vector<1x144xf32>
    %126 = vector.extract_strided_slice %112 {offsets = [13, 0], sizes = [1, 144], strides = [1, 1]} : vector<32x144xf32> to vector<1x144xf32>
    %127 = vector.extract_strided_slice %112 {offsets = [14, 0], sizes = [1, 144], strides = [1, 1]} : vector<32x144xf32> to vector<1x144xf32>
    %128 = vector.extract_strided_slice %112 {offsets = [15, 0], sizes = [1, 144], strides = [1, 1]} : vector<32x144xf32> to vector<1x144xf32>
    %129 = vector.extract_strided_slice %112 {offsets = [16, 0], sizes = [1, 144], strides = [1, 1]} : vector<32x144xf32> to vector<1x144xf32>
    %130 = vector.extract_strided_slice %112 {offsets = [17, 0], sizes = [1, 144], strides = [1, 1]} : vector<32x144xf32> to vector<1x144xf32>
    %131 = vector.extract_strided_slice %112 {offsets = [18, 0], sizes = [1, 144], strides = [1, 1]} : vector<32x144xf32> to vector<1x144xf32>
    %132 = vector.extract_strided_slice %112 {offsets = [19, 0], sizes = [1, 144], strides = [1, 1]} : vector<32x144xf32> to vector<1x144xf32>
    %133 = vector.extract_strided_slice %112 {offsets = [20, 0], sizes = [1, 144], strides = [1, 1]} : vector<32x144xf32> to vector<1x144xf32>
    %134 = vector.extract_strided_slice %112 {offsets = [21, 0], sizes = [1, 144], strides = [1, 1]} : vector<32x144xf32> to vector<1x144xf32>
    %135 = vector.extract_strided_slice %112 {offsets = [22, 0], sizes = [1, 144], strides = [1, 1]} : vector<32x144xf32> to vector<1x144xf32>
    %136 = vector.extract_strided_slice %112 {offsets = [23, 0], sizes = [1, 144], strides = [1, 1]} : vector<32x144xf32> to vector<1x144xf32>
    %137 = vector.extract_strided_slice %112 {offsets = [24, 0], sizes = [1, 144], strides = [1, 1]} : vector<32x144xf32> to vector<1x144xf32>
    %138 = vector.extract_strided_slice %112 {offsets = [25, 0], sizes = [1, 144], strides = [1, 1]} : vector<32x144xf32> to vector<1x144xf32>
    %139 = vector.extract_strided_slice %112 {offsets = [26, 0], sizes = [1, 144], strides = [1, 1]} : vector<32x144xf32> to vector<1x144xf32>
    %140 = vector.extract_strided_slice %112 {offsets = [27, 0], sizes = [1, 144], strides = [1, 1]} : vector<32x144xf32> to vector<1x144xf32>
    %141 = vector.extract_strided_slice %112 {offsets = [28, 0], sizes = [1, 144], strides = [1, 1]} : vector<32x144xf32> to vector<1x144xf32>
    %142 = vector.extract_strided_slice %112 {offsets = [29, 0], sizes = [1, 144], strides = [1, 1]} : vector<32x144xf32> to vector<1x144xf32>
    %143 = vector.extract_strided_slice %112 {offsets = [30, 0], sizes = [1, 144], strides = [1, 1]} : vector<32x144xf32> to vector<1x144xf32>
    %144 = vector.extract_strided_slice %112 {offsets = [31, 0], sizes = [1, 144], strides = [1, 1]} : vector<32x144xf32> to vector<1x144xf32>
    %145 = tpu.concatenate %113, %114, %115, %116, %117, %118, %119, %120, %121, %122, %123, %124, %125, %126, %127, %128 in 1 : vector<1x144xf32>, vector<1x144xf32>, vector<1x144xf32>, vector<1x144xf32>, vector<1x144xf32>, vector<1x144xf32>, vector<1x144xf32>, vector<1x144xf32>, vector<1x144xf32>, vector<1x144xf32>, vector<1x144xf32>, vector<1x144xf32>, vector<1x144xf32>, vector<1x144xf32>, vector<1x144xf32>, vector<1x144xf32> -> vector<1x2304xf32>
    %146 = tpu.concatenate %129, %130, %131, %132, %133, %134, %135, %136, %137, %138, %139, %140, %141, %142, %143, %144 in 1 : vector<1x144xf32>, vector<1x144xf32>, vector<1x144xf32>, vector<1x144xf32>, vector<1x144xf32>, vector<1x144xf32>, vector<1x144xf32>, vector<1x144xf32>, vector<1x144xf32>, vector<1x144xf32>, vector<1x144xf32>, vector<1x144xf32>, vector<1x144xf32>, vector<1x144xf32>, vector<1x144xf32>, vector<1x144xf32> -> vector<1x2304xf32>
    %147 = tpu.concatenate %145, %146 in 1 : vector<1x2304xf32>, vector<1x2304xf32> -> vector<1x4608xf32>
    %148 = tpu.concatenate %98, %147 in 0 : vector<1x4608xf32>, vector<1x4608xf32> -> vector<2x4608xf32>
    %149 = arith.truncf %148 : vector<2x4608xf32> to vector<2x4608xbf16>
    %c0_12 = arith.constant 0 : index
    %c0_13 = arith.constant 0 : index
    %150 = vector.load %arg6[%c0_12, %c0_13] : memref<4608x256xbf16, #tpu.memory_space<vmem>>, vector<4608x256xbf16>
    %cst_14 = arith.constant dense<0.000000e+00> : vector<2x256xf32>
    %151 = tpu.matmul %149, %150, %cst_14 {dimension_numbers = #tpu.dot_dimension_numbers<[1], [0], [0], [1], [0, 0, 1, 1], [], []>} : vector<2x4608xbf16>, vector<4608x256xbf16>, vector<2x256xf32> -> vector<2x256xf32>
    %c0_15 = arith.constant 0 : index
    %c0_16 = arith.constant 0 : index
    %152 = vector.load %arg7[%c0_15, %c0_16] : memref<1x256xf32, #tpu.memory_space<vmem>>, vector<1x256xf32>
    %153 = vector.broadcast %152 : vector<1x256xf32> to vector<2x256xf32>
    %154 = arith.addf %151, %153 : vector<2x256xf32>
    %cst_17 = arith.constant 0.000000e+00 : f32
    %155 = vector.broadcast %cst_17 : f32 to vector<2x256xf32>
    %156 = arith.maximumf %154, %155 : vector<2x256xf32>
    %157 = arith.truncf %156 : vector<2x256xf32> to vector<2x256xbf16>
    %c0_18 = arith.constant 0 : index
    %c0_19 = arith.constant 0 : index
    %158 = vector.load %arg8[%c0_18, %c0_19] : memref<256x128xbf16, #tpu.memory_space<vmem>>, vector<256x128xbf16>
    %cst_20 = arith.constant dense<0.000000e+00> : vector<2x128xf32>
    %159 = tpu.matmul %157, %158, %cst_20 {dimension_numbers = #tpu.dot_dimension_numbers<[1], [0], [0], [1], [0, 0, 1, 1], [], []>} : vector<2x256xbf16>, vector<256x128xbf16>, vector<2x128xf32> -> vector<2x128xf32>
    %c0_21 = arith.constant 0 : index
    %c0_22 = arith.constant 0 : index
    %160 = vector.load %arg9[%c0_21, %c0_22] : memref<1x128xf32, #tpu.memory_space<vmem>>, vector<1x128xf32>
    %161 = vector.broadcast %160 : vector<1x128xf32> to vector<2x128xf32>
    %162 = arith.addf %159, %161 : vector<2x128xf32>
    %cst_23 = arith.constant 0.000000e+00 : f32
    %163 = vector.broadcast %cst_23 : f32 to vector<2x128xf32>
    %164 = arith.maximumf %162, %163 : vector<2x128xf32>
    %165 = arith.truncf %164 : vector<2x128xf32> to vector<2x128xbf16>
    %c0_24 = arith.constant 0 : index
    %c0_25 = arith.constant 0 : index
    %166 = vector.load %arg10[%c0_24, %c0_25] : memref<128x10xbf16, #tpu.memory_space<vmem>>, vector<128x10xbf16>
    %cst_26 = arith.constant dense<0.000000e+00> : vector<2x10xf32>
    %167 = tpu.matmul %165, %166, %cst_26 {dimension_numbers = #tpu.dot_dimension_numbers<[1], [0], [0], [1], [0, 0, 1, 1], [], []>} : vector<2x128xbf16>, vector<128x10xbf16>, vector<2x10xf32> -> vector<2x10xf32>
    %c0_27 = arith.constant 0 : index
    %c0_28 = arith.constant 0 : index
    %168 = vector.load %arg11[%c0_27, %c0_28] : memref<1x10xf32, #tpu.memory_space<vmem>>, vector<1x10xf32>
    %169 = vector.broadcast %168 : vector<1x10xf32> to vector<2x10xf32>
    %170 = arith.addf %167, %169 : vector<2x10xf32>
    %c0_29 = arith.constant 0 : index
    %c0_30 = arith.constant 0 : index
    %171 = vector.load %arg12[%c0_29, %c0_30] : memref<2x10xf32, #tpu.memory_space<vmem>>, vector<2x10xf32>
    tpu.vector_store %arg12[%c0_29, %c0_30], %170 {strides = array<i32>} : memref<2x10xf32, #tpu.memory_space<vmem>>, vector<2x10xf32>,
    return
  }
  func.func @transform_0(%arg0: i32) -> (i32, i32) {
    %c0_i32 = arith.constant 0 : i32
    %c0_i32_0 = arith.constant 0 : i32
    %c0_i32_1 = arith.constant 0 : i32
    return %c0_i32, %c0_i32_0 : i32, i32
  }
  func.func @transform_1(%arg0: i32) -> (i32, i32) {
    %c0_i32 = arith.constant 0 : i32
    %c0_i32_0 = arith.constant 0 : i32
    %c0_i32_1 = arith.constant 0 : i32
    return %c0_i32, %c0_i32_0 : i32, i32
  }
  func.func @transform_2(%arg0: i32) -> (i32, i32) {
    %c0_i32 = arith.constant 0 : i32
    %c0_i32_0 = arith.constant 0 : i32
    %c0_i32_1 = arith.constant 0 : i32
    return %c0_i32, %c0_i32_0 : i32, i32
  }
  func.func @transform_3(%arg0: i32) -> (i32, i32) {
    %c0_i32 = arith.constant 0 : i32
    %c0_i32_0 = arith.constant 0 : i32
    %c0_i32_1 = arith.constant 0 : i32
    return %c0_i32, %c0_i32_0 : i32, i32
  }
  func.func @transform_4(%arg0: i32) -> (i32, i32) {
    %c0_i32 = arith.constant 0 : i32
    %c0_i32_0 = arith.constant 0 : i32
    %c0_i32_1 = arith.constant 0 : i32
    return %c0_i32, %c0_i32_0 : i32, i32
  }
  func.func @transform_5(%arg0: i32) -> (i32, i32) {
    %c0_i32 = arith.constant 0 : i32
    %c0_i32_0 = arith.constant 0 : i32
    %c0_i32_1 = arith.constant 0 : i32
    return %c0_i32, %c0_i32_0 : i32, i32
  }
  func.func @transform_6(%arg0: i32) -> (i32, i32) {
    %c0_i32 = arith.constant 0 : i32
    %c0_i32_0 = arith.constant 0 : i32
    %c0_i32_1 = arith.constant 0 : i32
    return %c0_i32, %c0_i32_0 : i32, i32
  }
  func.func @transform_7(%arg0: i32) -> (i32, i32) {
    %c0_i32 = arith.constant 0 : i32
    %c0_i32_0 = arith.constant 0 : i32
    %c0_i32_1 = arith.constant 0 : i32
    return %c0_i32, %c0_i32_0 : i32, i32
  }
  func.func @transform_8(%arg0: i32) -> (i32, i32) {
    %c0_i32 = arith.constant 0 : i32
    %c0_i32_0 = arith.constant 0 : i32
    %c0_i32_1 = arith.constant 0 : i32
    return %c0_i32, %c0_i32_0 : i32, i32
  }
  func.func @transform_9(%arg0: i32) -> (i32, i32) {
    %c0_i32 = arith.constant 0 : i32
    %c0_i32_0 = arith.constant 0 : i32
    %c0_i32_1 = arith.constant 0 : i32
    return %c0_i32, %c0_i32_0 : i32, i32
  }
  func.func @transform_10(%arg0: i32) -> (i32, i32) {
    %c0_i32 = arith.constant 0 : i32
    %c0_i32_0 = arith.constant 0 : i32
    %c0_i32_1 = arith.constant 0 : i32
    return %c0_i32, %c0_i32_0 : i32, i32
  }
  func.func @transform_11(%arg0: i32) -> (i32, i32) {
    %c0_i32 = arith.constant 0 : i32
    %c0_i32_0 = arith.constant 0 : i32
    %c0_i32_1 = arith.constant 0 : i32
    return %c0_i32, %c0_i32_0 : i32, i32
  }
}

</mosaic_0001>

<llo_original>
// kernel: classifier_forward.1
$region0: #{classifier_forward.1}
  #allocation0 [shape = 'u32[]', space=smem, size = 0x4, offset = 0x4, fixed_abs, tag = 'smem constant byte address 0x4 - core index']
  #allocation1 [shape = 'u32[144,128]{1,0:T(1,128)}', space=vmem, size = 0x12000, scoped, tag = 'internal scratch']
  %s0 = inlined_call_operand.vmem [shape: bf16[512,4], index: 0, kind: input, shape index: {}]
  %s1 = inlined_call_operand.hbm [shape: bf16[4,144], index: 1, kind: input, shape index: {}]
  %s2 = inlined_call_operand.hbm [shape: f32[1,16], index: 2, kind: input, shape index: {}]
  %s3 = inlined_call_operand.hbm [shape: bf16[16,288], index: 3, kind: input, shape index: {}]
  %s4 = inlined_call_operand.hbm [shape: f32[1,32], index: 4, kind: input, shape index: {}]
  %s5 = inlined_call_operand.hbm [shape: bf16[4608,256], index: 5, kind: input, shape index: {}]
  %s6 = inlined_call_operand.hbm [shape: f32[1,256], index: 6, kind: input, shape index: {}]
  %s7 = inlined_call_operand.hbm [shape: bf16[256,128], index: 7, kind: input, shape index: {}]
  %s8 = inlined_call_operand.hbm [shape: f32[1,128], index: 8, kind: input, shape index: {}]
  %s9 = inlined_call_operand.vmem [shape: bf16[128,10], index: 9, kind: input, shape index: {}]
  %s10 = inlined_call_operand.hbm [shape: f32[1,10], index: 10, kind: input, shape index: {}]
  %s11 = inlined_call_operand.hbm [shape: f32[2,10], index: 11, kind: output, shape index: {}]
  %s12 = sld [smem:[#allocation0]]
  $region90: #{classifier_forward.1} parent=0
    _
  %s14 = ssub.s32 1, %s12
  %s15 = scalar_select 0, %s14, %s12
  $region1: #{classifier_forward.1} parent=0
    #allocation2 [shape = 'u8[2048]{0}', space=vmem, size = 0x800, scoped, tag = 'input window, operand 1, single buffered']
    #allocation3 [shape = 's32[1]{0}', space=sflag, size = 0x4, scoped, tag = 'scoped memory for classifier_forward.1']
    #allocation4 [shape = 's32[1]{0}', space=sflag, size = 0x4, scoped, tag = 'scoped memory for classifier_forward.1']
    #allocation5 [shape = 'u8[512]{0}', space=vmem, size = 0x400, scoped, tag = 'input window, operand 2, single buffered']
    #allocation6 [shape = 's32[1]{0}', space=sflag, size = 0x4, scoped, tag = 'scoped memory for classifier_forward.1']
    #allocation7 [shape = 'u8[12288]{0}', space=vmem, size = 0x3000, scoped, tag = 'input window, operand 3, single buffered']
    #allocation8 [shape = 'u8[512]{0}', space=vmem, size = 0x400, scoped, tag = 'input window, operand 4, single buffered']
    #allocation9 [shape = 's32[1]{0}', space=sflag, size = 0x4, scoped, tag = 'scoped memory for classifier_forward.1']
    #allocation10 [shape = 'u8[2359296]{0}', space=vmem, size = 0x240000, scoped, tag = 'input window, operand 5, single buffered']
    #allocation11 [shape = 'u8[1024]{0}', space=vmem, size = 0x400, scoped, tag = 'input window, operand 6, single buffered']
    #allocation12 [shape = 's32[1]{0}', space=sflag, size = 0x4, scoped, tag = 'scoped memory for classifier_forward.1']
    #allocation13 [shape = 'u8[65536]{0}', space=vmem, size = 0x10000, scoped, tag = 'input window, operand 7, single buffered']
    #allocation14 [shape = 'u8[512]{0}', space=vmem, size = 0x400, scoped, tag = 'input window, operand 8, single buffered']
    #allocation15 [shape = 's32[1]{0}', space=sflag, size = 0x4, scoped, tag = 'scoped memory for classifier_forward.1']
    #allocation16 [shape = 'u8[512]{0}', space=vmem, size = 0x400, scoped, tag = 'input window, operand 10, single buffered']
    #allocation17 [shape = 'u8[1024]{0}', space=vmem, size = 0x400, scoped, tag = 'output window, operand 0, single buffered']
    %16 = vsyncpa [#allocation3], 0
    %17 = vsyncpa [#allocation6], 0
    %18 = vsyncpa [#allocation9], 0
    %19 = vsyncpa [#allocation12], 0
    %20 = vsyncpa [#allocation15], 0
    %21 = vsyncpa [#allocation4], 0
    // Predicated region
    $region2: #{classifier_forward.1} parent=1 // pred_check
      _
    $region3: #{classifier_forward.1} parent=1 // pred_check_branch
      %23 = sbr.rel (0) target = $region5
    $region4: #{classifier_forward.1} parent=1 // pred_region
      _
    $region5: #{classifier_forward.1} parent=1 // pred_fallthru
      _
    // Predicated region
    $region6: #{classifier_forward.1} parent=1 // pred_check
      _
    $region7: #{classifier_forward.1} parent=1 // pred_check_branch
      %25 = sbr.rel (0) target = $region9
    $region8: #{classifier_forward.1} parent=1 // pred_region
      %s27 = ssub.s32 64, 64
      %28 = vsyncadd [#allocation3], %s27
      %s30 = sshll.u32 [#allocation2], 4
      %s31 = int_to_ptr.vmem [resolvable:$true] %s30
      %33 = dma.hbm_to_vmem [thread:$0]  %s1, 64, %s31, [#allocation3]
    $region9: #{classifier_forward.1} parent=1 // pred_fallthru
      _
    // Predicated region
    $region10: #{classifier_forward.1} parent=1 // pred_check
      _
    $region11: #{classifier_forward.1} parent=1 // pred_check_branch
      %35 = sbr.rel (0) target = $region13
    $region12: #{classifier_forward.1} parent=1 // pred_region
      %s37 = ssub.s32 16, 16
      %38 = vsyncadd [#allocation6], %s37
      %s40 = sshll.u32 [#allocation5], 4
      %s41 = int_to_ptr.vmem [resolvable:$true] %s40
      %43 = dma.hbm_to_vmem [thread:$0]  %s2, 16, %s41, [#allocation6]
    $region13: #{classifier_forward.1} parent=1 // pred_fallthru
      _
    // Predicated region
    $region14: #{classifier_forward.1} parent=1 // pred_check
      _
    $region15: #{classifier_forward.1} parent=1 // pred_check_branch
      %45 = sbr.rel (0) target = $region17
    $region16: #{classifier_forward.1} parent=1 // pred_region
      %s47 = ssub.s32 384, 384
      %48 = vsyncadd [#allocation6], %s47
      %s49 = sshll.u32 [#allocation7], 4
      %s50 = int_to_ptr.vmem [resolvable:$true] %s49
      %55 = dma.hbm_to_vmem [thread:$0]  %s3, 384, %s50, [#allocation6], 192, 192, 12
    $region17: #{classifier_forward.1} parent=1 // pred_fallthru
      _
    // Predicated region
    $region18: #{classifier_forward.1} parent=1 // pred_check
      _
    $region19: #{classifier_forward.1} parent=1 // pred_check_branch
      %57 = sbr.rel (0) target = $region21
    $region20: #{classifier_forward.1} parent=1 // pred_region
      %s59 = ssub.s32 16, 16
      %60 = vsyncadd [#allocation9], %s59
      %s62 = sshll.u32 [#allocation8], 4
      %s63 = int_to_ptr.vmem [resolvable:$true] %s62
      %65 = dma.hbm_to_vmem [thread:$0]  %s4, 16, %s63, [#allocation9]
    $region21: #{classifier_forward.1} parent=1 // pred_fallthru
      _
    // Predicated region
    $region22: #{classifier_forward.1} parent=1 // pred_check
      _
    $region23: #{classifier_forward.1} parent=1 // pred_check_branch
      %67 = sbr.rel (0) target = $region25
    $region24: #{classifier_forward.1} parent=1 // pred_region
      %s69 = ssub.s32 73728, 73728
      %70 = vsyncadd [#allocation9], %s69
      %s71 = sshll.u32 [#allocation10], 4
      %s72 = int_to_ptr.vmem [resolvable:$true] %s71
      %77 = dma.hbm_to_vmem [thread:$0]  %s5, 73728, %s72, [#allocation9], 128, 128, 8
    $region25: #{classifier_forward.1} parent=1 // pred_fallthru
      _
    // Predicated region
    $region26: #{classifier_forward.1} parent=1 // pred_check
      _
    $region27: #{classifier_forward.1} parent=1 // pred_check_branch
      %79 = sbr.rel (0) target = $region29
    $region28: #{classifier_forward.1} parent=1 // pred_region
      %s81 = ssub.s32 32, 32
      %82 = vsyncadd [#allocation12], %s81
      %s84 = sshll.u32 [#allocation11], 4
      %s85 = int_to_ptr.vmem [resolvable:$true] %s84
      %87 = dma.hbm_to_vmem [thread:$0]  %s6, 32, %s85, [#allocation12]
    $region29: #{classifier_forward.1} parent=1 // pred_fallthru
      _
    // Predicated region
    $region30: #{classifier_forward.1} parent=1 // pred_check
      _
    $region31: #{classifier_forward.1} parent=1 // pred_check_branch
      %89 = sbr.rel (0) target = $region33
    $region32: #{classifier_forward.1} parent=1 // pred_region
      %s91 = ssub.s32 2048, 2048
      %92 = vsyncadd [#allocation12], %s91
      %s93 = sshll.u32 [#allocation13], 4
      %s94 = int_to_ptr.vmem [resolvable:$true] %s93
      %99 = dma.hbm_to_vmem [thread:$0]  %s7, 2048, %s94, [#allocation12], 64, 64, 4
    $region33: #{classifier_forward.1} parent=1 // pred_fallthru
      _
    // Predicated region
    $region34: #{classifier_forward.1} parent=1 // pred_check
      _
    $region35: #{classifier_forward.1} parent=1 // pred_check_branch
      %101 = sbr.rel (0) target = $region37
    $region36: #{classifier_forward.1} parent=1 // pred_region
      %s103 = ssub.s32 16, 16
      %104 = vsyncadd [#allocation15], %s103
      %s106 = sshll.u32 [#allocation14], 4
      %s107 = int_to_ptr.vmem [resolvable:$true] %s106
      %109 = dma.hbm_to_vmem [thread:$0]  %s8, 16, %s107, [#allocation15]
    $region37: #{classifier_forward.1} parent=1 // pred_fallthru
      _
    // Predicated region
    $region38: #{classifier_forward.1} parent=1 // pred_check
      _
    $region39: #{classifier_forward.1} parent=1 // pred_check_branch
      %111 = sbr.rel (0) target = $region41
    $region40: #{classifier_forward.1} parent=1 // pred_region
      _
    $region41: #{classifier_forward.1} parent=1 // pred_fallthru
      _
    // Predicated region
    $region42: #{classifier_forward.1} parent=1 // pred_check
      _
    $region43: #{classifier_forward.1} parent=1 // pred_check_branch
      %113 = sbr.rel (0) target = $region45
    $region44: #{classifier_forward.1} parent=1 // pred_region
      %s115 = ssub.s32 16, 16
      %116 = vsyncadd [#allocation15], %s115
      %s118 = sshll.u32 [#allocation16], 4
      %s119 = int_to_ptr.vmem [resolvable:$true] %s118
      %121 = dma.hbm_to_vmem [thread:$0]  %s10, 16, %s119, [#allocation15]
    $region45: #{classifier_forward.1} parent=1 // pred_fallthru
      _
    // Predicated region
    $region46: #{classifier_forward.1} parent=1 // pred_check
      _
    $region47: #{classifier_forward.1} parent=1 // pred_check_branch
      %123 = sbr.rel (0) target = $region49
    $region48: #{classifier_forward.1} parent=1 // pred_region
      %124 = dma.done [#allocation3], 64
    $region49: #{classifier_forward.1} parent=1 // pred_fallthru
      _
    // Predicated region
    $region50: #{classifier_forward.1} parent=1 // pred_check
      _
    $region51: #{classifier_forward.1} parent=1 // pred_check_branch
      %126 = sbr.rel (0) target = $region53
    $region52: #{classifier_forward.1} parent=1 // pred_region
      %127 = dma.done [#allocation6], 16
    $region53: #{classifier_forward.1} parent=1 // pred_fallthru
      _
    // Predicated region
    $region54: #{classifier_forward.1} parent=1 // pred_check
      _
    $region55: #{classifier_forward.1} parent=1 // pred_check_branch
      %129 = sbr.rel (0) target = $region57
    $region56: #{classifier_forward.1} parent=1 // pred_region
      %130 = dma.done [#allocation6], 384
    $region57: #{classifier_forward.1} parent=1 // pred_fallthru
      _
    // Predicated region
    $region58: #{classifier_forward.1} parent=1 // pred_check
      _
    $region59: #{classifier_forward.1} parent=1 // pred_check_branch
      %132 = sbr.rel (0) target = $region61
    $region60: #{classifier_forward.1} parent=1 // pred_region
      %133 = dma.done [#allocation9], 16
    $region61: #{classifier_forward.1} parent=1 // pred_fallthru
      _
    // Predicated region
    $region62: #{classifier_forward.1} parent=1 // pred_check
      _
    $region63: #{classifier_forward.1} parent=1 // pred_check_branch
      %135 = sbr.rel (0) target = $region65
    $region64: #{classifier_forward.1} parent=1 // pred_region
      %136 = dma.done [#allocation9], 73728
    $region65: #{classifier_forward.1} parent=1 // pred_fallthru
      _
    // Predicated region
    $region66: #{classifier_forward.1} parent=1 // pred_check
      _
    $region67: #{classifier_forward.1} parent=1 // pred_check_branch
      %138 = sbr.rel (0) target = $region69
    $region68: #{classifier_forward.1} parent=1 // pred_region
      %139 = dma.done [#allocation12], 32
    $region69: #{classifier_forward.1} parent=1 // pred_fallthru
      _
    // Predicated region
    $region70: #{classifier_forward.1} parent=1 // pred_check
      _
    $region71: #{classifier_forward.1} parent=1 // pred_check_branch
      %141 = sbr.rel (0) target = $region73
    $region72: #{classifier_forward.1} parent=1 // pred_region
      %142 = dma.done [#allocation12], 2048
    $region73: #{classifier_forward.1} parent=1 // pred_fallthru
      _
    // Predicated region
    $region74: #{classifier_forward.1} parent=1 // pred_check
      _
    $region75: #{classifier_forward.1} parent=1 // pred_check_branch
      %144 = sbr.rel (0) target = $region77
    $region76: #{classifier_forward.1} parent=1 // pred_region
      %145 = dma.done [#allocation15], 16
    $region77: #{classifier_forward.1} parent=1 // pred_fallthru
      _
    // Predicated region
    $region78: #{classifier_forward.1} parent=1 // pred_check
      _
    $region79: #{classifier_forward.1} parent=1 // pred_check_branch
      %147 = sbr.rel (0) target = $region81
    $region80: #{classifier_forward.1} parent=1 // pred_region
      %148 = dma.done [#allocation15], 16
    $region81: #{classifier_forward.1} parent=1 // pred_fallthru
      _
    %v150 = vld [vmem:[%s0] sm:$0xf]
    %v151 = vld [vmem:[%s0 + $0x4] sm:$0xf]
    %v152 = vld [vmem:[%s0 + $0x8] sm:$0xf]
    %v153 = vld [vmem:[%s0 + $0xc] sm:$0xf]
    %v154 = vld [vmem:[%s0 + $0x10] sm:$0xf]
    %v155 = vld [vmem:[%s0 + $0x14] sm:$0xf]
    %v156 = vld [vmem:[%s0 + $0x18] sm:$0xf]
    %v157 = vld [vmem:[%s0 + $0x1c] sm:$0xf]
    %v158 = vld [vmem:[%s0 + $0x20] sm:$0xf]
    %v159 = vld [vmem:[%s0 + $0x24] sm:$0xf]
    %v160 = vld [vmem:[%s0 + $0x28] sm:$0xf]
    %v161 = vld [vmem:[%s0 + $0x2c] sm:$0xf]
    %v162 = vld [vmem:[%s0 + $0x30] sm:$0xf]
    %v163 = vld [vmem:[%s0 + $0x34] sm:$0xf]
    %v164 = vld [vmem:[%s0 + $0x38] sm:$0xf]
    %v165 = vld [vmem:[%s0 + $0x3c] sm:$0xf]
    %v166 = vld [vmem:[%s0 + $0x40] sm:$0xf]
    %v167 = vld [vmem:[%s0 + $0x44] sm:$0xf]
    %v168 = vld [vmem:[%s0 + $0x48] sm:$0xf]
    %v169 = vld [vmem:[%s0 + $0x4c] sm:$0xf]
    %v170 = vld [vmem:[%s0 + $0x50] sm:$0xf]
    %v171 = vld [vmem:[%s0 + $0x54] sm:$0xf]
    %v172 = vld [vmem:[%s0 + $0x58] sm:$0xf]
    %v173 = vld [vmem:[%s0 + $0x5c] sm:$0xf]
    %v174 = vld [vmem:[%s0 + $0x60] sm:$0xf]
    %v175 = vld [vmem:[%s0 + $0x64] sm:$0xf]
    %v176 = vld [vmem:[%s0 + $0x68] sm:$0xf]
    %v177 = vld [vmem:[%s0 + $0x6c] sm:$0xf]
    %v178 = vld [vmem:[%s0 + $0x70] sm:$0xf]
    %v179 = vld [vmem:[%s0 + $0x74] sm:$0xf]
    %v180 = vld [vmem:[%s0 + $0x78] sm:$0xf]
    %v181 = vld [vmem:[%s0 + $0x7c] sm:$0xf]
    %v182 = vld [vmem:[%s0 + $0x80] sm:$0xf]
    %v183 = vld [vmem:[%s0 + $0x84] sm:$0xf]
    %v184 = vld [vmem:[%s0 + $0x88] sm:$0xf]
    %v185 = vld [vmem:[%s0 + $0x8c] sm:$0xf]
    %v186 = vld [vmem:[%s0 + $0x90] sm:$0xf]
    %v187 = vld [vmem:[%s0 + $0x94] sm:$0xf]
    %v188 = vld [vmem:[%s0 + $0x98] sm:$0xf]
    %v189 = vld [vmem:[%s0 + $0x9c] sm:$0xf]
    %v190 = vld [vmem:[%s0 + $0xa0] sm:$0xf]
    %v191 = vld [vmem:[%s0 + $0xa4] sm:$0xf]
    %v192 = vld [vmem:[%s0 + $0xa8] sm:$0xf]
    %v193 = vld [vmem:[%s0 + $0xac] sm:$0xf]
    %v194 = vld [vmem:[%s0 + $0xb0] sm:$0xf]
    %v195 = vld [vmem:[%s0 + $0xb4] sm:$0xf]
    %v196 = vld [vmem:[%s0 + $0xb8] sm:$0xf]
    %v197 = vld [vmem:[%s0 + $0xbc] sm:$0xf]
    %v198 = vld [vmem:[%s0 + $0xc0] sm:$0xf]
    %v199 = vld [vmem:[%s0 + $0xc4] sm:$0xf]
    %v200 = vld [vmem:[%s0 + $0xc8] sm:$0xf]
    %v201 = vld [vmem:[%s0 + $0xcc] sm:$0xf]
    %v202 = vld [vmem:[%s0 + $0xd0] sm:$0xf]
    %v203 = vld [vmem:[%s0 + $0xd4] sm:$0xf]
    %v204 = vld [vmem:[%s0 + $0xd8] sm:$0xf]
    %v205 = vld [vmem:[%s0 + $0xdc] sm:$0xf]
    %v206 = vld [vmem:[%s0 + $0xe0] sm:$0xf]
    %v207 = vld [vmem:[%s0 + $0xe4] sm:$0xf]
    %v208 = vld [vmem:[%s0 + $0xe8] sm:$0xf]
    %v209 = vld [vmem:[%s0 + $0xec] sm:$0xf]
    %v210 = vld [vmem:[%s0 + $0xf0] sm:$0xf]
    %v211 = vld [vmem:[%s0 + $0xf4] sm:$0xf]
    %v212 = vld [vmem:[%s0 + $0xf8] sm:$0xf]
    %v213 = vld [vmem:[%s0 + $0xfc] sm:$0xf]
    %v214 = vld [vmem:[#allocation2] sm:$0xf]
    %v279 = vunpack.c.l.b16 %v150
    %v280 = vunpack.c.l.b16 %v151
    %v281 = vunpack.c.l.b16 %v152
    %v282 = vunpack.c.l.b16 %v153
    %v283 = vunpack.c.l.b16 %v154
    %v284 = vunpack.c.l.b16 %v155
    %v285 = vunpack.c.l.b16 %v156
    %v286 = vunpack.c.l.b16 %v157
    %v287 = vunpack.c.l.b16 %v158
    %v288 = vunpack.c.l.b16 %v159
    %v289 = vunpack.c.l.b16 %v160
    %v290 = vunpack.c.l.b16 %v161
    %v291 = vunpack.c.l.b16 %v162
    %v292 = vunpack.c.l.b16 %v163
    %v293 = vunpack.c.l.b16 %v164
    %v294 = vunpack.c.l.b16 %v165
    %v295 = vunpack.c.l.b16 %v166
    %v296 = vunpack.c.l.b16 %v167
    %v297 = vunpack.c.l.b16 %v168
    %v298 = vunpack.c.l.b16 %v169
    %v299 = vunpack.c.l.b16 %v170
    %v300 = vunpack.c.l.b16 %v171
    %v301 = vunpack.c.l.b16 %v172
    %v302 = vunpack.c.l.b16 %v173
    %v303 = vunpack.c.l.b16 %v174
    %v304 = vunpack.c.l.b16 %v175
    %v305 = vunpack.c.l.b16 %v176
    %v306 = vunpack.c.l.b16 %v177
    %v307 = vunpack.c.l.b16 %v178
    %v308 = vunpack.c.l.b16 %v179
    %v309 = vunpack.c.l.b16 %v180
    %v310 = vunpack.c.l.b16 %v181
    %v311 = vunpack.c.l.b16 %v182
    %v312 = vunpack.c.l.b16 %v183
    %v313 = vunpack.c.l.b16 %v184
    %v314 = vunpack.c.l.b16 %v185
    %v315 = vunpack.c.l.b16 %v186
    %v316 = vunpack.c.l.b16 %v187
    %v317 = vunpack.c.l.b16 %v188
    %v318 = vunpack.c.l.b16 %v189
    %v319 = vunpack.c.l.b16 %v190
    %v320 = vunpack.c.l.b16 %v191
    %v321 = vunpack.c.l.b16 %v192
    %v322 = vunpack.c.l.b16 %v193
    %v323 = vunpack.c.l.b16 %v194
    %v324 = vunpack.c.l.b16 %v195
    %v325 = vunpack.c.l.b16 %v196
    %v326 = vunpack.c.l.b16 %v197
    %v327 = vunpack.c.l.b16 %v198
    %v328 = vunpack.c.l.b16 %v199
    %v329 = vunpack.c.l.b16 %v200
    %v330 = vunpack.c.l.b16 %v201
    %v331 = vunpack.c.l.b16 %v202
    %v332 = vunpack.c.l.b16 %v203
    %v333 = vunpack.c.l.b16 %v204
    %v334 = vunpack.c.l.b16 %v205
    %v335 = vunpack.c.l.b16 %v206
    %v336 = vunpack.c.l.b16 %v207
    %v337 = vunpack.c.l.b16 %v208
    %v338 = vunpack.c.l.b16 %v209
    %v339 = vunpack.c.l.b16 %v210
    %v340 = vunpack.c.l.b16 %v211
    %v341 = vunpack.c.l.b16 %v212
    %v342 = vunpack.c.l.b16 %v213
    %v343 = vpack.c.b16 %v280, %v279
    %v344 = vpack.c.b16 %v282, %v281
    %v345 = vpack.c.b16 %v284, %v283
    %v346 = vpack.c.b16 %v286, %v285
    %v347 = vpack.c.b16 %v288, %v287
    %v348 = vpack.c.b16 %v290, %v289
    %v349 = vpack.c.b16 %v292, %v291
    %v350 = vpack.c.b16 %v294, %v293
    %v351 = vpack.c.b16 %v296, %v295
    %v352 = vpack.c.b16 %v298, %v297
    %v353 = vpack.c.b16 %v300, %v299
    %v354 = vpack.c.b16 %v302, %v301
    %v355 = vpack.c.b16 %v304, %v303
    %v356 = vpack.c.b16 %v306, %v305
    %v357 = vpack.c.b16 %v308, %v307
    %v358 = vpack.c.b16 %v310, %v309
    %v359 = vpack.c.b16 %v312, %v311
    %v360 = vpack.c.b16 %v314, %v313
    %v361 = vpack.c.b16 %v316, %v315
    %v362 = vpack.c.b16 %v318, %v317
    %v363 = vpack.c.b16 %v320, %v319
    %v364 = vpack.c.b16 %v322, %v321
    %v365 = vpack.c.b16 %v324, %v323
    %v366 = vpack.c.b16 %v326, %v325
    %v367 = vpack.c.b16 %v328, %v327
    %v368 = vpack.c.b16 %v330, %v329
    %v369 = vpack.c.b16 %v332, %v331
    %v370 = vpack.c.b16 %v334, %v333
    %v371 = vpack.c.b16 %v336, %v335
    %v372 = vpack.c.b16 %v338, %v337
    %v373 = vpack.c.b16 %v340, %v339
    %v374 = vpack.c.b16 %v342, %v341
    %v377 = vunpack.c.l.s4 1983009808
    %v378 = vunpack.c.0.s8 %v377
    %v379 = vlaneseq
    %v380 = vshrl.u32 %v379, 7
    %v381 = vsub.s32 %v378, %v380
    %v382 = vrot.slane %v214, %v381
    %v383 = vcombine.high %v382, %v382
    %vm384 = vcmask 31744
    %v386 = vsel %vm384, %v343, 0
    %v389 = vsel %vm384, %v344, 0
    %v392 = vsel %vm384, %v345, 0
    %v395 = vsel %vm384, %v346, 0
    %v398 = vsel %vm384, %v347, 0
    %v401 = vsel %vm384, %v348, 0
    %v404 = vsel %vm384, %v349, 0
    %v407 = vsel %vm384, %v350, 0
    %v410 = vsel %vm384, %v351, 0
    %v413 = vsel %vm384, %v352, 0
    %v416 = vsel %vm384, %v353, 0
    %v419 = vsel %vm384, %v354, 0
    %v422 = vsel %vm384, %v355, 0
    %v425 = vsel %vm384, %v356, 0
    %v428 = vsel %vm384, %v357, 0
    %v431 = vsel %vm384, %v358, 0
    %v434 = vsel %vm384, %v359, 0
    %v437 = vsel %vm384, %v360, 0
    %v440 = vsel %vm384, %v361, 0
    %v443 = vsel %vm384, %v362, 0
    %v446 = vsel %vm384, %v363, 0
    %v449 = vsel %vm384, %v364, 0
    %v452 = vsel %vm384, %v365, 0
    %v455 = vsel %vm384, %v366, 0
    %v458 = vsel %vm384, %v367, 0
    %v461 = vsel %vm384, %v368, 0
    %v464 = vsel %vm384, %v369, 0
    %v467 = vsel %vm384, %v370, 0
    %v470 = vsel %vm384, %v371, 0
    %v473 = vsel %vm384, %v372, 0
    %v476 = vsel %vm384, %v373, 0
    %v479 = vsel %vm384, %v374, 0
    %vm481 = vcmask 1041408
    %v483 = vsel %vm481, %v382, 0
    %v486 = vsel %vm481, %v383, 0
    %488 = vmatprep.subr.bf16.mxu0 %v486
    %489 = vmatpush1.bf16.msra.mxu0 %v483
    %490 = vmatprep.subr.bf16.mxu0 0
    %491 = vmatpush1.bf16.msra.mxu0 0
    %492 = vmatprep.subr.bf16.mxu0 0
    %493 = vmatpush1.bf16.msra.mxu0 0
    %494 = vmatprep.subr.bf16.mxu0 0
    %495 = vmatpush1.bf16.msra.mxu0 0
    %496 = vmatprep.subr.bf16.mxu0 0
    %497 = vmatpush1.bf16.msra.mxu0 0
    %498 = vmatprep.subr.bf16.mxu0 0
    %499 = vmatpush1.bf16.msra.mxu0 0
    %500 = vmatprep.subr.bf16.mxu0 0
    %501 = vmatpush1.bf16.msra.mxu0 0
    %502 = vmatprep.subr.bf16.mxu0 0
    %503 = vmatpush1.bf16.msra.mxu0 0
    %504 = vmatprep.subr.bf16.mxu0 0
    %505 = vmatpush1.bf16.msra.mxu0 0
    %506 = vmatprep.subr.bf16.mxu0 0
    %507 = vmatpush1.bf16.msra.mxu0 0
    %508 = vmatprep.subr.bf16.mxu0 0
    %509 = vmatpush1.bf16.msra.mxu0 0
    %510 = vmatprep.subr.bf16.mxu0 0
    %511 = vmatpush1.bf16.msra.mxu0 0
    %512 = vmatprep.subr.bf16.mxu0 0
    %513 = vmatpush1.bf16.msra.mxu0 0
    %514 = vmatprep.subr.bf16.mxu0 0
    %515 = vmatpush1.bf16.msra.mxu0 0
    %516 = vmatprep.subr.bf16.mxu0 0
    %517 = vmatpush1.bf16.msra.mxu0 0
    %518 = vmatprep.subr.bf16.mxu0 0
    %519 = vmatpush1.bf16.msra.mxu0 0
    %520 = vmatprep.mubr.bf16.mxu0 0
    %521 = vmatmul.mubr.bf16.gmra.mrb[0].mxu0 %v386
    %v522 = vpop.f32.mrb[0].mxu0
    %v523 = vadd.f32 0.0, %v522
    %v524 = vpop.f32.mrb[0].mxu0
    %v525 = vpop.f32.mrb[0].mxu0
    %v526 = vadd.f32 0.0, %v525
    %v527 = vpop.f32.mrb[0].mxu0
    %528 = vmatprep.mubr.bf16.mxu0 0
    %529 = vmatmul.mubr.bf16.gmra.mrb[0].mxu0 %v389
    %v530 = vpop.f32.mrb[0].mxu0
    %v531 = vadd.f32 0.0, %v530
    %v532 = vpop.f32.mrb[0].mxu0
    %v533 = vpop.f32.mrb[0].mxu0
    %v534 = vadd.f32 0.0, %v533
    %v535 = vpop.f32.mrb[0].mxu0
    %536 = vmatprep.mubr.bf16.mxu0 0
    %537 = vmatmul.mubr.bf16.gmra.mrb[0].mxu0 %v392
    %v538 = vpop.f32.mrb[0].mxu0
    %v539 = vadd.f32 0.0, %v538
    %v540 = vpop.f32.mrb[0].mxu0
    %v541 = vadd.f32 0.0, %v540
    %v542 = vpop.f32.mrb[0].mxu0
    %v543 = vadd.f32 0.0, %v542
    %v544 = vpop.f32.mrb[0].mxu0
    %v545 = vadd.f32 0.0, %v544
    %546 = vmatprep.mubr.bf16.mxu0 0
    %547 = vmatmul.mubr.bf16.gmra.mrb[0].mxu0 %v395
    %v548 = vpop.f32.mrb[0].mxu0
    %v549 = vadd.f32 0.0, %v548
    %v550 = vpop.f32.mrb[0].mxu0
    %v551 = vadd.f32 0.0, %v550
    %v552 = vpop.f32.mrb[0].mxu0
    %v553 = vadd.f32 0.0, %v552
    %v554 = vpop.f32.mrb[0].mxu0
    %v555 = vadd.f32 0.0, %v554
    %556 = vmatprep.mubr.bf16.mxu0 0
    %557 = vmatmul.mubr.bf16.gmra.mrb[0].mxu0 %v398
    %v558 = vpop.f32.mrb[0].mxu0
    %v559 = vadd.f32 0.0, %v558
    %v560 = vpop.f32.mrb[0].mxu0
    %v561 = vadd.f32 0.0, %v560
    %v562 = vpop.f32.mrb[0].mxu0
    %v563 = vadd.f32 0.0, %v562
    %v564 = vpop.f32.mrb[0].mxu0
    %v565 = vadd.f32 0.0, %v564
    %566 = vmatprep.mubr.bf16.mxu0 0
    %567 = vmatmul.mubr.bf16.gmra.mrb[0].mxu0 %v401
    %v568 = vpop.f32.mrb[0].mxu0
    %v569 = vadd.f32 0.0, %v568
    %v570 = vpop.f32.mrb[0].mxu0
    %v571 = vadd.f32 0.0, %v570
    %v572 = vpop.f32.mrb[0].mxu0
    %v573 = vadd.f32 0.0, %v572
    %v574 = vpop.f32.mrb[0].mxu0
    %v575 = vadd.f32 0.0, %v574
    %576 = vmatprep.mubr.bf16.mxu0 0
    %577 = vmatmul.mubr.bf16.gmra.mrb[0].mxu0 %v404
    %v578 = vpop.f32.mrb[0].mxu0
    %v579 = vadd.f32 0.0, %v578
    %v580 = vpop.f32.mrb[0].mxu0
    %v581 = vadd.f32 0.0, %v580
    %v582 = vpop.f32.mrb[0].mxu0
    %v583 = vadd.f32 0.0, %v582
    %v584 = vpop.f32.mrb[0].mxu0
    %v585 = vadd.f32 0.0, %v584
    %586 = vmatprep.mubr.bf16.mxu0 0
    %587 = vmatmul.mubr.bf16.gmra.mrb[0].mxu0 %v407
    %v588 = vpop.f32.mrb[0].mxu0
    %v589 = vadd.f32 0.0, %v588
    %v590 = vpop.f32.mrb[0].mxu0
    %v591 = vadd.f32 0.0, %v590
    %v592 = vpop.f32.mrb[0].mxu0
    %v593 = vadd.f32 0.0, %v592
    %v594 = vpop.f32.mrb[0].mxu0
    %v595 = vadd.f32 0.0, %v594
    %596 = vmatprep.mubr.bf16.mxu0 0
    %597 = vmatmul.mubr.bf16.gmra.mrb[0].mxu0 %v410
    %v598 = vpop.f32.mrb[0].mxu0
    %v599 = vadd.f32 0.0, %v598
    %v600 = vpop.f32.mrb[0].mxu0
    %v601 = vadd.f32 0.0, %v600
    %v602 = vpop.f32.mrb[0].mxu0
    %v603 = vadd.f32 0.0, %v602
    %v604 = vpop.f32.mrb[0].mxu0
    %v605 = vadd.f32 0.0, %v604
    %606 = vmatprep.mubr.bf16.mxu0 0
    %607 = vmatmul.mubr.bf16.gmra.mrb[0].mxu0 %v413
    %v608 = vpop.f32.mrb[0].mxu0
    %v609 = vadd.f32 0.0, %v608
    %v610 = vpop.f32.mrb[0].mxu0
    %v611 = vadd.f32 0.0, %v610
    %v612 = vpop.f32.mrb[0].mxu0
    %v613 = vadd.f32 0.0, %v612
    %v614 = vpop.f32.mrb[0].mxu0
    %v615 = vadd.f32 0.0, %v614
    %616 = vmatprep.mubr.bf16.mxu0 0
    %617 = vmatmul.mubr.bf16.gmra.mrb[0].mxu0 %v416
    %v618 = vpop.f32.mrb[0].mxu0
    %v619 = vadd.f32 0.0, %v618
    %v620 = vpop.f32.mrb[0].mxu0
    %v621 = vadd.f32 0.0, %v620
    %v622 = vpop.f32.mrb[0].mxu0
    %v623 = vadd.f32 0.0, %v622
    %v624 = vpop.f32.mrb[0].mxu0
    %v625 = vadd.f32 0.0, %v624
    %626 = vmatprep.mubr.bf16.mxu0 0
    %627 = vmatmul.mubr.bf16.gmra.mrb[0].mxu0 %v419
    %v628 = vpop.f32.mrb[0].mxu0
    %v629 = vadd.f32 0.0, %v628
    %v630 = vpop.f32.mrb[0].mxu0
    %v631 = vadd.f32 0.0, %v630
    %v632 = vpop.f32.mrb[0].mxu0
    %v633 = vadd.f32 0.0, %v632
    %v634 = vpop.f32.mrb[0].mxu0
    %v635 = vadd.f32 0.0, %v634
    %636 = vmatprep.mubr.bf16.mxu0 0
    %637 = vmatmul.mubr.bf16.gmra.mrb[0].mxu0 %v422
    %v638 = vpop.f32.mrb[0].mxu0
    %v639 = vadd.f32 0.0, %v638
    %v640 = vpop.f32.mrb[0].mxu0
    %v641 = vadd.f32 0.0, %v640
    %v642 = vpop.f32.mrb[0].mxu0
    %v643 = vadd.f32 0.0, %v642
    %v644 = vpop.f32.mrb[0].mxu0
    %v645 = vadd.f32 0.0, %v644
    %646 = vmatprep.mubr.bf16.mxu0 0
    %647 = vmatmul.mubr.bf16.gmra.mrb[0].mxu0 %v425
    %v648 = vpop.f32.mrb[0].mxu0
    %v649 = vadd.f32 0.0, %v648
    %v650 = vpop.f32.mrb[0].mxu0
    %v651 = vadd.f32 0.0, %v650
    %v652 = vpop.f32.mrb[0].mxu0
    %v653 = vadd.f32 0.0, %v652
    %v654 = vpop.f32.mrb[0].mxu0
    %v655 = vadd.f32 0.0, %v654
    %656 = vmatprep.mubr.bf16.mxu0 0
    %657 = vmatmul.mubr.bf16.gmra.mrb[0].mxu0 %v428
    %v658 = vpop.f32.mrb[0].mxu0
    %v659 = vadd.f32 0.0, %v658
    %v660 = vpop.f32.mrb[0].mxu0
    %v661 = vadd.f32 0.0, %v660
    %v662 = vpop.f32.mrb[0].mxu0
    %v663 = vadd.f32 0.0, %v662
    %v664 = vpop.f32.mrb[0].mxu0
    %v665 = vadd.f32 0.0, %v664
    %666 = vmatprep.mubr.bf16.mxu0 0
    %667 = vmatmul.mubr.bf16.gmra.mrb[0].mxu0 %v431
    %v668 = vpop.f32.mrb[0].mxu0
    %v669 = vadd.f32 0.0, %v668
    %v670 = vpop.f32.mrb[0].mxu0
    %v671 = vadd.f32 0.0, %v670
    %v672 = vpop.f32.mrb[0].mxu0
    %v673 = vadd.f32 0.0, %v672
    %v674 = vpop.f32.mrb[0].mxu0
    %v675 = vadd.f32 0.0, %v674
    %676 = vmatprep.mubr.bf16.mxu0 0
    %677 = vmatmul.mubr.bf16.gmra.mrb[0].mxu0 %v434
    %v678 = vpop.f32.mrb[0].mxu0
    %v679 = vadd.f32 0.0, %v678
    %v680 = vpop.f32.mrb[0].mxu0
    %v681 = vadd.f32 0.0, %v680
    %v682 = vpop.f32.mrb[0].mxu0
    %v683 = vadd.f32 0.0, %v682
    %v684 = vpop.f32.mrb[0].mxu0
    %v685 = vadd.f32 0.0, %v684
    %686 = vmatprep.mubr.bf16.mxu0 0
    %687 = vmatmul.mubr.bf16.gmra.mrb[0].mxu0 %v437
    %v688 = vpop.f32.mrb[0].mxu0
    %v689 = vadd.f32 0.0, %v688
    %v690 = vpop.f32.mrb[0].mxu0
    %v691 = vadd.f32 0.0, %v690
    %v692 = vpop.f32.mrb[0].mxu0
    %v693 = vadd.f32 0.0, %v692
    %v694 = vpop.f32.mrb[0].mxu0
    %v695 = vadd.f32 0.0, %v694
    %696 = vmatprep.mubr.bf16.mxu0 0
    %697 = vmatmul.mubr.bf16.gmra.mrb[0].mxu0 %v440
    %v698 = vpop.f32.mrb[0].mxu0
    %v699 = vadd.f32 0.0, %v698
    %v700 = vpop.f32.mrb[0].mxu0
    %v701 = vadd.f32 0.0, %v700
    %v702 = vpop.f32.mrb[0].mxu0
    %v703 = vadd.f32 0.0, %v702
    %v704 = vpop.f32.mrb[0].mxu0
    %v705 = vadd.f32 0.0, %v704
    %706 = vmatprep.mubr.bf16.mxu0 0
    %707 = vmatmul.mubr.bf16.gmra.mrb[0].mxu0 %v443
    %v708 = vpop.f32.mrb[0].mxu0
    %v709 = vadd.f32 0.0, %v708
    %v710 = vpop.f32.mrb[0].mxu0
    %v711 = vadd.f32 0.0, %v710
    %v712 = vpop.f32.mrb[0].mxu0
    %v713 = vadd.f32 0.0, %v712
    %v714 = vpop.f32.mrb[0].mxu0
    %v715 = vadd.f32 0.0, %v714
    %716 = vmatprep.mubr.bf16.mxu0 0
    %717 = vmatmul.mubr.bf16.gmra.mrb[0].mxu0 %v446
    %v718 = vpop.f32.mrb[0].mxu0
    %v719 = vadd.f32 0.0, %v718
    %v720 = vpop.f32.mrb[0].mxu0
    %v721 = vadd.f32 0.0, %v720
    %v722 = vpop.f32.mrb[0].mxu0
    %v723 = vadd.f32 0.0, %v722
    %v724 = vpop.f32.mrb[0].mxu0
    %v725 = vadd.f32 0.0, %v724
    %726 = vmatprep.mubr.bf16.mxu0 0
    %727 = vmatmul.mubr.bf16.gmra.mrb[0].mxu0 %v449
    %v728 = vpop.f32.mrb[0].mxu0
    %v729 = vadd.f32 0.0, %v728
    %v730 = vpop.f32.mrb[0].mxu0
    %v731 = vadd.f32 0.0, %v730
    %v732 = vpop.f32.mrb[0].mxu0
    %v733 = vadd.f32 0.0, %v732
    %v734 = vpop.f32.mrb[0].mxu0
    %v735 = vadd.f32 0.0, %v734
    %736 = vmatprep.mubr.bf16.mxu0 0
    %737 = vmatmul.mubr.bf16.gmra.mrb[0].mxu0 %v452
    %v738 = vpop.f32.mrb[0].mxu0
    %v739 = vadd.f32 0.0, %v738
    %v740 = vpop.f32.mrb[0].mxu0
    %v741 = vadd.f32 0.0, %v740
    %v742 = vpop.f32.mrb[0].mxu0
    %v743 = vadd.f32 0.0, %v742
    %v744 = vpop.f32.mrb[0].mxu0
    %v745 = vadd.f32 0.0, %v744
    %746 = vmatprep.mubr.bf16.mxu0 0
    %747 = vmatmul.mubr.bf16.gmra.mrb[0].mxu0 %v455
    %v748 = vpop.f32.mrb[0].mxu0
    %v749 = vadd.f32 0.0, %v748
    %v750 = vpop.f32.mrb[0].mxu0
    %v751 = vadd.f32 0.0, %v750
    %v752 = vpop.f32.mrb[0].mxu0
    %v753 = vadd.f32 0.0, %v752
    %v754 = vpop.f32.mrb[0].mxu0
    %v755 = vadd.f32 0.0, %v754
    %756 = vmatprep.mubr.bf16.mxu0 0
    %757 = vmatmul.mubr.bf16.gmra.mrb[0].mxu0 %v458
    %v758 = vpop.f32.mrb[0].mxu0
    %v759 = vadd.f32 0.0, %v758
    %v760 = vpop.f32.mrb[0].mxu0
    %v761 = vadd.f32 0.0, %v760
    %v762 = vpop.f32.mrb[0].mxu0
    %v763 = vadd.f32 0.0, %v762
    %v764 = vpop.f32.mrb[0].mxu0
    %v765 = vadd.f32 0.0, %v764
    %766 = vmatprep.mubr.bf16.mxu0 0
    %767 = vmatmul.mubr.bf16.gmra.mrb[0].mxu0 %v461
    %v768 = vpop.f32.mrb[0].mxu0
    %v769 = vadd.f32 0.0, %v768
    %v770 = vpop.f32.mrb[0].mxu0
    %v771 = vadd.f32 0.0, %v770
    %v772 = vpop.f32.mrb[0].mxu0
    %v773 = vadd.f32 0.0, %v772
    %v774 = vpop.f32.mrb[0].mxu0
    %v775 = vadd.f32 0.0, %v774
    %776 = vmatprep.mubr.bf16.mxu0 0
    %777 = vmatmul.mubr.bf16.gmra.mrb[0].mxu0 %v464
    %v778 = vpop.f32.mrb[0].mxu0
    %v779 = vadd.f32 0.0, %v778
    %v780 = vpop.f32.mrb[0].mxu0
    %v781 = vadd.f32 0.0, %v780
    %v782 = vpop.f32.mrb[0].mxu0
    %v783 = vadd.f32 0.0, %v782
    %v784 = vpop.f32.mrb[0].mxu0
    %v785 = vadd.f32 0.0, %v784
    %786 = vmatprep.mubr.bf16.mxu0 0
    %787 = vmatmul.mubr.bf16.gmra.mrb[0].mxu0 %v467
    %v788 = vpop.f32.mrb[0].mxu0
    %v789 = vadd.f32 0.0, %v788
    %v790 = vpop.f32.mrb[0].mxu0
    %v791 = vadd.f32 0.0, %v790
    %v792 = vpop.f32.mrb[0].mxu0
    %v793 = vadd.f32 0.0, %v792
    %v794 = vpop.f32.mrb[0].mxu0
    %v795 = vadd.f32 0.0, %v794
    %796 = vmatprep.mubr.bf16.mxu0 0
    %797 = vmatmul.mubr.bf16.gmra.mrb[0].mxu0 %v470
    %v798 = vpop.f32.mrb[0].mxu0
    %v799 = vadd.f32 0.0, %v798
    %v800 = vpop.f32.mrb[0].mxu0
    %v801 = vadd.f32 0.0, %v800
    %v802 = vpop.f32.mrb[0].mxu0
    %v803 = vadd.f32 0.0, %v802
    %v804 = vpop.f32.mrb[0].mxu0
    %v805 = vadd.f32 0.0, %v804
    %806 = vmatprep.mubr.bf16.mxu0 0
    %807 = vmatmul.mubr.bf16.gmra.mrb[0].mxu0 %v473
    %v808 = vpop.f32.mrb[0].mxu0
    %v809 = vadd.f32 0.0, %v808
    %v810 = vpop.f32.mrb[0].mxu0
    %v811 = vadd.f32 0.0, %v810
    %v812 = vpop.f32.mrb[0].mxu0
    %v813 = vadd.f32 0.0, %v812
    %v814 = vpop.f32.mrb[0].mxu0
    %v815 = vadd.f32 0.0, %v814
    %816 = vmatprep.mubr.bf16.mxu0 0
    %817 = vmatmul.mubr.bf16.gmra.mrb[0].mxu0 %v476
    %v818 = vpop.f32.mrb[0].mxu0
    %v819 = vadd.f32 0.0, %v818
    %v820 = vpop.f32.mrb[0].mxu0
    %v821 = vadd.f32 0.0, %v820
    %v822 = vpop.f32.mrb[0].mxu0
    %v823 = vadd.f32 0.0, %v822
    %v824 = vpop.f32.mrb[0].mxu0
    %v825 = vadd.f32 0.0, %v824
    %826 = vmatprep.mubr.bf16.mxu0 0
    %827 = vmatmul.mubr.bf16.gmra.mrb[0].mxu0 %v479
    %v828 = vpop.f32.mrb[0].mxu0
    %v829 = vadd.f32 0.0, %v828
    %v830 = vpop.f32.mrb[0].mxu0
    %v831 = vadd.f32 0.0, %v830
    %v832 = vpop.f32.mrb[0].mxu0
    %v833 = vadd.f32 0.0, %v832
    %v834 = vpop.f32.mrb[0].mxu0
    %v835 = vadd.f32 0.0, %v834
    %836 = vdwg.mxu0
    %vm897 = vcmask 1046528
    %v898 = vrot.slane %v523, 1
    %v899 = vrot.slane %v526, 1
    %v900 = vsel %vm897, %v898, %v899
    %v901 = vrot.slane %v531, 1
    %v902 = vsel %vm897, %v899, %v901
    %v903 = vrot.slane %v534, 1
    %v904 = vsel %vm897, %v901, %v903
    %v905 = vrot.slane %v539, 1
    %v906 = vsel %vm897, %v903, %v905
    %v907 = vrot.slane %v543, 1
    %v908 = vsel %vm897, %v905, %v907
    %v909 = vrot.slane %v549, 1
    %v910 = vsel %vm897, %v907, %v909
    %v911 = vrot.slane %v553, 1
    %v912 = vsel %vm897, %v909, %v911
    %v913 = vrot.slane %v559, 1
    %v914 = vsel %vm897, %v911, %v913
    %v915 = vrot.slane %v563, 1
    %v916 = vsel %vm897, %v913, %v915
    %v917 = vrot.slane %v569, 1
    %v918 = vsel %vm897, %v915, %v917
    %v919 = vrot.slane %v573, 1
    %v920 = vsel %vm897, %v917, %v919
    %v921 = vrot.slane %v579, 1
    %v922 = vsel %vm897, %v919, %v921
    %v923 = vrot.slane %v583, 1
    %v924 = vsel %vm897, %v921, %v923
    %v925 = vrot.slane %v589, 1
    %v926 = vsel %vm897, %v923, %v925
    %v927 = vrot.slane %v593, 1
    %v928 = vsel %vm897, %v925, %v927
    %v929 = vrot.slane %v599, 1
    %v930 = vsel %vm897, %v927, %v929
    %v931 = vrot.slane %v603, 1
    %v932 = vsel %vm897, %v929, %v931
    %v933 = vrot.slane %v609, 1
    %v934 = vsel %vm897, %v931, %v933
    %v935 = vrot.slane %v613, 1
    %v936 = vsel %vm897, %v933, %v935
    %v937 = vrot.slane %v619, 1
    %v938 = vsel %vm897, %v935, %v937
    %v939 = vrot.slane %v623, 1
    %v940 = vsel %vm897, %v937, %v939
    %v941 = vrot.slane %v629, 1
    %v942 = vsel %vm897, %v939, %v941
    %v943 = vrot.slane %v633, 1
    %v944 = vsel %vm897, %v941, %v943
    %v945 = vrot.slane %v639, 1
    %v946 = vsel %vm897, %v943, %v945
    %v947 = vrot.slane %v643, 1
    %v948 = vsel %vm897, %v945, %v947
    %v949 = vrot.slane %v649, 1
    %v950 = vsel %vm897, %v947, %v949
    %v951 = vrot.slane %v653, 1
    %v952 = vsel %vm897, %v949, %v951
    %v953 = vrot.slane %v659, 1
    %v954 = vsel %vm897, %v951, %v953
    %v955 = vrot.slane %v663, 1
    %v956 = vsel %vm897, %v953, %v955
    %v957 = vrot.slane %v669, 1
    %v958 = vsel %vm897, %v955, %v957
    %v959 = vrot.slane %v673, 1
    %v960 = vsel %vm897, %v957, %v959
    %v961 = vrot.slane %v679, 1
    %v962 = vsel %vm897, %v959, %v961
    %v963 = vrot.slane %v683, 1
    %v964 = vsel %vm897, %v961, %v963
    %v965 = vrot.slane %v689, 1
    %v966 = vsel %vm897, %v963, %v965
    %v967 = vrot.slane %v693, 1
    %v968 = vsel %vm897, %v965, %v967
    %v969 = vrot.slane %v699, 1
    %v970 = vsel %vm897, %v967, %v969
    %v971 = vrot.slane %v703, 1
    %v972 = vsel %vm897, %v969, %v971
    %v973 = vrot.slane %v709, 1
    %v974 = vsel %vm897, %v971, %v973
    %v975 = vrot.slane %v713, 1
    %v976 = vsel %vm897, %v973, %v975
    %v977 = vrot.slane %v719, 1
    %v978 = vsel %vm897, %v975, %v977
    %v979 = vrot.slane %v723, 1
    %v980 = vsel %vm897, %v977, %v979
    %v981 = vrot.slane %v729, 1
    %v982 = vsel %vm897, %v979, %v981
    %v983 = vrot.slane %v733, 1
    %v984 = vsel %vm897, %v981, %v983
    %v985 = vrot.slane %v739, 1
    %v986 = vsel %vm897, %v983, %v985
    %v987 = vrot.slane %v743, 1
    %v988 = vsel %vm897, %v985, %v987
    %v989 = vrot.slane %v749, 1
    %v990 = vsel %vm897, %v987, %v989
    %v991 = vrot.slane %v753, 1
    %v992 = vsel %vm897, %v989, %v991
    %v993 = vrot.slane %v759, 1
    %v994 = vsel %vm897, %v991, %v993
    %v995 = vrot.slane %v763, 1
    %v996 = vsel %vm897, %v993, %v995
    %v997 = vrot.slane %v769, 1
    %v998 = vsel %vm897, %v995, %v997
    %v999 = vrot.slane %v773, 1
    %v1000 = vsel %vm897, %v997, %v999
    %v1001 = vrot.slane %v779, 1
    %v1002 = vsel %vm897, %v999, %v1001
    %v1003 = vrot.slane %v783, 1
    %v1004 = vsel %vm897, %v1001, %v1003
    %v1005 = vrot.slane %v789, 1
    %v1006 = vsel %vm897, %v1003, %v1005
    %v1007 = vrot.slane %v793, 1
    %v1008 = vsel %vm897, %v1005, %v1007
    %v1009 = vrot.slane %v799, 1
    %v1010 = vsel %vm897, %v1007, %v1009
    %v1011 = vrot.slane %v803, 1
    %v1012 = vsel %vm897, %v1009, %v1011
    %v1013 = vrot.slane %v809, 1
    %v1014 = vsel %vm897, %v1011, %v1013
    %v1015 = vrot.slane %v813, 1
    %v1016 = vsel %vm897, %v1013, %v1015
    %1017 = vrot.lane.b32.xlu0 %v900, 112
    %v1018 = vpop.permute.xlu0 %1017
    %1019 = vrot.lane.b32.xlu0 %v902, 112
    %v1020 = vpop.permute.xlu0 %1019
    %1021 = vrot.lane.b32.xlu0 %v904, 112
    %v1022 = vpop.permute.xlu0 %1021
    %1023 = vrot.lane.b32.xlu0 %v906, 112
    %v1024 = vpop.permute.xlu0 %1023
    %1025 = vrot.lane.b32.xlu0 %v908, 112
    %v1026 = vpop.permute.xlu0 %1025
    %1027 = vrot.lane.b32.xlu0 %v910, 112
    %v1028 = vpop.permute.xlu0 %1027
    %1029 = vrot.lane.b32.xlu0 %v912, 112
    %v1030 = vpop.permute.xlu0 %1029
    %1031 = vrot.lane.b32.xlu0 %v914, 112
    %v1032 = vpop.permute.xlu0 %1031
    %1033 = vrot.lane.b32.xlu0 %v916, 112
    %v1034 = vpop.permute.xlu0 %1033
    %1035 = vrot.lane.b32.xlu0 %v918, 112
    %v1036 = vpop.permute.xlu0 %1035
    %1037 = vrot.lane.b32.xlu0 %v920, 112
    %v1038 = vpop.permute.xlu0 %1037
    %1039 = vrot.lane.b32.xlu0 %v922, 112
    %v1040 = vpop.permute.xlu0 %1039
    %1041 = vrot.lane.b32.xlu0 %v924, 112
    %v1042 = vpop.permute.xlu0 %1041
    %1043 = vrot.lane.b32.xlu0 %v926, 112
    %v1044 = vpop.permute.xlu0 %1043
    %1045 = vrot.lane.b32.xlu0 %v928, 112
    %v1046 = vpop.permute.xlu0 %1045
    %1047 = vrot.lane.b32.xlu0 %v930, 112
    %v1048 = vpop.permute.xlu0 %1047
    %1049 = vrot.lane.b32.xlu0 %v932, 112
    %v1050 = vpop.permute.xlu0 %1049
    %1051 = vrot.lane.b32.xlu0 %v934, 112
    %v1052 = vpop.permute.xlu0 %1051
    %1053 = vrot.lane.b32.xlu0 %v936, 112
    %v1054 = vpop.permute.xlu0 %1053
    %1055 = vrot.lane.b32.xlu0 %v938, 112
    %v1056 = vpop.permute.xlu0 %1055
    %1057 = vrot.lane.b32.xlu0 %v940, 112
    %v1058 = vpop.permute.xlu0 %1057
    %1059 = vrot.lane.b32.xlu0 %v942, 112
    %v1060 = vpop.permute.xlu0 %1059
    %1061 = vrot.lane.b32.xlu0 %v944, 112
    %v1062 = vpop.permute.xlu0 %1061
    %1063 = vrot.lane.b32.xlu0 %v946, 112
    %v1064 = vpop.permute.xlu0 %1063
    %1065 = vrot.lane.b32.xlu0 %v948, 112
    %v1066 = vpop.permute.xlu0 %1065
    %1067 = vrot.lane.b32.xlu0 %v950, 112
    %v1068 = vpop.permute.xlu0 %1067
    %1069 = vrot.lane.b32.xlu0 %v952, 112
    %v1070 = vpop.permute.xlu0 %1069
    %1071 = vrot.lane.b32.xlu0 %v954, 112
    %v1072 = vpop.permute.xlu0 %1071
    %1073 = vrot.lane.b32.xlu0 %v956, 112
    %v1074 = vpop.permute.xlu0 %1073
    %1075 = vrot.lane.b32.xlu0 %v958, 112
    %v1076 = vpop.permute.xlu0 %1075
    %1077 = vrot.lane.b32.xlu0 %v960, 112
    %v1078 = vpop.permute.xlu0 %1077
    %1079 = vrot.lane.b32.xlu0 %v962, 112
    %v1080 = vpop.permute.xlu0 %1079
    %1081 = vrot.lane.b32.xlu0 %v964, 112
    %v1082 = vpop.permute.xlu0 %1081
    %1083 = vrot.lane.b32.xlu0 %v966, 112
    %v1084 = vpop.permute.xlu0 %1083
    %1085 = vrot.lane.b32.xlu0 %v968, 112
    %v1086 = vpop.permute.xlu0 %1085
    %1087 = vrot.lane.b32.xlu0 %v970, 112
    %v1088 = vpop.permute.xlu0 %1087
    %1089 = vrot.lane.b32.xlu0 %v972, 112
    %v1090 = vpop.permute.xlu0 %1089
    %1091 = vrot.lane.b32.xlu0 %v974, 112
    %v1092 = vpop.permute.xlu0 %1091
    %1093 = vrot.lane.b32.xlu0 %v976, 112
    %v1094 = vpop.permute.xlu0 %1093
    %1095 = vrot.lane.b32.xlu0 %v978, 112
    %v1096 = vpop.permute.xlu0 %1095
    %1097 = vrot.lane.b32.xlu0 %v980, 112
    %v1098 = vpop.permute.xlu0 %1097
    %1099 = vrot.lane.b32.xlu0 %v982, 112
    %v1100 = vpop.permute.xlu0 %1099
    %1101 = vrot.lane.b32.xlu0 %v984, 112
    %v1102 = vpop.permute.xlu0 %1101
    %1103 = vrot.lane.b32.xlu0 %v986, 112
    %v1104 = vpop.permute.xlu0 %1103
    %1105 = vrot.lane.b32.xlu0 %v988, 112
    %v1106 = vpop.permute.xlu0 %1105
    %1107 = vrot.lane.b32.xlu0 %v990, 112
    %v1108 = vpop.permute.xlu0 %1107
    %1109 = vrot.lane.b32.xlu0 %v992, 112
    %v1110 = vpop.permute.xlu0 %1109
    %1111 = vrot.lane.b32.xlu0 %v994, 112
    %v1112 = vpop.permute.xlu0 %1111
    %1113 = vrot.lane.b32.xlu0 %v996, 112
    %v1114 = vpop.permute.xlu0 %1113
    %1115 = vrot.lane.b32.xlu0 %v998, 112
    %v1116 = vpop.permute.xlu0 %1115
    %1117 = vrot.lane.b32.xlu0 %v1000, 112
    %v1118 = vpop.permute.xlu0 %1117
    %1119 = vrot.lane.b32.xlu0 %v1002, 112
    %v1120 = vpop.permute.xlu0 %1119
    %1121 = vrot.lane.b32.xlu0 %v1004, 112
    %v1122 = vpop.permute.xlu0 %1121
    %1123 = vrot.lane.b32.xlu0 %v1006, 112
    %v1124 = vpop.permute.xlu0 %1123
    %1125 = vrot.lane.b32.xlu0 %v1008, 112
    %v1126 = vpop.permute.xlu0 %1125
    %1127 = vrot.lane.b32.xlu0 %v1010, 112
    %v1128 = vpop.permute.xlu0 %1127
    %1129 = vrot.lane.b32.xlu0 %v1012, 112
    %v1130 = vpop.permute.xlu0 %1129
    %1131 = vrot.lane.b32.xlu0 %v1014, 112
    %v1132 = vpop.permute.xlu0 %1131
    %1133 = vrot.lane.b32.xlu0 %v1016, 112
    %v1134 = vpop.permute.xlu0 %1133
    %1135 = vrot.lane.b32.xlu0 %v1015, 112
    %v1136 = vpop.permute.xlu0 %1135
    %v1197 = vadd.f32 %v523, %v1018
    %v1198 = vadd.f32 %v526, %v1020
    %v1199 = vadd.f32 %v531, %v1022
    %v1200 = vadd.f32 %v534, %v1024
    %v1201 = vadd.f32 %v539, %v1026
    %v1202 = vadd.f32 %v543, %v1028
    %v1203 = vadd.f32 %v549, %v1030
    %v1204 = vadd.f32 %v553, %v1032
    %v1205 = vadd.f32 %v559, %v1034
    %v1206 = vadd.f32 %v563, %v1036
    %v1207 = vadd.f32 %v569, %v1038
    %v1208 = vadd.f32 %v573, %v1040
    %v1209 = vadd.f32 %v579, %v1042
    %v1210 = vadd.f32 %v583, %v1044
    %v1211 = vadd.f32 %v589, %v1046
    %v1212 = vadd.f32 %v593, %v1048
    %v1213 = vadd.f32 %v599, %v1050
    %v1214 = vadd.f32 %v603, %v1052
    %v1215 = vadd.f32 %v609, %v1054
    %v1216 = vadd.f32 %v613, %v1056
    %v1217 = vadd.f32 %v619, %v1058
    %v1218 = vadd.f32 %v623, %v1060
    %v1219 = vadd.f32 %v629, %v1062
    %v1220 = vadd.f32 %v633, %v1064
    %v1221 = vadd.f32 %v639, %v1066
    %v1222 = vadd.f32 %v643, %v1068
    %v1223 = vadd.f32 %v649, %v1070
    %v1224 = vadd.f32 %v653, %v1072
    %v1225 = vadd.f32 %v659, %v1074
    %v1226 = vadd.f32 %v663, %v1076
    %v1227 = vadd.f32 %v669, %v1078
    %v1228 = vadd.f32 %v673, %v1080
    %v1229 = vadd.f32 %v679, %v1082
    %v1230 = vadd.f32 %v683, %v1084
    %v1231 = vadd.f32 %v689, %v1086
    %v1232 = vadd.f32 %v693, %v1088
    %v1233 = vadd.f32 %v699, %v1090
    %v1234 = vadd.f32 %v703, %v1092
    %v1235 = vadd.f32 %v709, %v1094
    %v1236 = vadd.f32 %v713, %v1096
    %v1237 = vadd.f32 %v719, %v1098
    %v1238 = vadd.f32 %v723, %v1100
    %v1239 = vadd.f32 %v729, %v1102
    %v1240 = vadd.f32 %v733, %v1104
    %v1241 = vadd.f32 %v739, %v1106
    %v1242 = vadd.f32 %v743, %v1108
    %v1243 = vadd.f32 %v749, %v1110
    %v1244 = vadd.f32 %v753, %v1112
    %v1245 = vadd.f32 %v759, %v1114
    %v1246 = vadd.f32 %v763, %v1116
    %v1247 = vadd.f32 %v769, %v1118
    %v1248 = vadd.f32 %v773, %v1120
    %v1249 = vadd.f32 %v779, %v1122
    %v1250 = vadd.f32 %v783, %v1124
    %v1251 = vadd.f32 %v789, %v1126
    %v1252 = vadd.f32 %v793, %v1128
    %v1253 = vadd.f32 %v799, %v1130
    %v1254 = vadd.f32 %v803, %v1132
    %v1255 = vadd.f32 %v809, %v1134
    %v1256 = vadd.f32 %v813, %v1136
    %vm1257 = vcmask 1045504
    %v1258 = vrot.slane %v523, 2
    %v1259 = vrot.slane %v526, 2
    %v1260 = vsel %vm1257, %v1258, %v1259
    %v1261 = vrot.slane %v531, 2
    %v1262 = vsel %vm1257, %v1259, %v1261
    %v1263 = vrot.slane %v534, 2
    %v1264 = vsel %vm1257, %v1261, %v1263
    %v1265 = vrot.slane %v539, 2
    %v1266 = vsel %vm1257, %v1263, %v1265
    %v1267 = vrot.slane %v543, 2
    %v1268 = vsel %vm1257, %v1265, %v1267
    %v1269 = vrot.slane %v549, 2
    %v1270 = vsel %vm1257, %v1267, %v1269
    %v1271 = vrot.slane %v553, 2
    %v1272 = vsel %vm1257, %v1269, %v1271
    %v1273 = vrot.slane %v559, 2
    %v1274 = vsel %vm1257, %v1271, %v1273
    %v1275 = vrot.slane %v563, 2
    %v1276 = vsel %vm1257, %v1273, %v1275
    %v1277 = vrot.slane %v569, 2
    %v1278 = vsel %vm1257, %v1275, %v1277
    %v1279 = vrot.slane %v573, 2
    %v1280 = vsel %vm1257, %v1277, %v1279
    %v1281 = vrot.slane %v579, 2
    %v1282 = vsel %vm1257, %v1279, %v1281
    %v1283 = vrot.slane %v583, 2
    %v1284 = vsel %vm1257, %v1281, %v1283
    %v1285 = vrot.slane %v589, 2
    %v1286 = vsel %vm1257, %v1283, %v1285
    %v1287 = vrot.slane %v593, 2
    %v1288 = vsel %vm1257, %v1285, %v1287
    %v1289 = vrot.slane %v599, 2
    %v1290 = vsel %vm1257, %v1287, %v1289
    %v1291 = vrot.slane %v603, 2
    %v1292 = vsel %vm1257, %v1289, %v1291
    %v1293 = vrot.slane %v609, 2
    %v1294 = vsel %vm1257, %v1291, %v1293
    %v1295 = vrot.slane %v613, 2
    %v1296 = vsel %vm1257, %v1293, %v1295
    %v1297 = vrot.slane %v619, 2
    %v1298 = vsel %vm1257, %v1295, %v1297
    %v1299 = vrot.slane %v623, 2
    %v1300 = vsel %vm1257, %v1297, %v1299
    %v1301 = vrot.slane %v629, 2
    %v1302 = vsel %vm1257, %v1299, %v1301
    %v1303 = vrot.slane %v633, 2
    %v1304 = vsel %vm1257, %v1301, %v1303
    %v1305 = vrot.slane %v639, 2
    %v1306 = vsel %vm1257, %v1303, %v1305
    %v1307 = vrot.slane %v643, 2
    %v1308 = vsel %vm1257, %v1305, %v1307
    %v1309 = vrot.slane %v649, 2
    %v1310 = vsel %vm1257, %v1307, %v1309
    %v1311 = vrot.slane %v653, 2
    %v1312 = vsel %vm1257, %v1309, %v1311
    %v1313 = vrot.slane %v659, 2
    %v1314 = vsel %vm1257, %v1311, %v1313
    %v1315 = vrot.slane %v663, 2
    %v1316 = vsel %vm1257, %v1313, %v1315
    %v1317 = vrot.slane %v669, 2
    %v1318 = vsel %vm1257, %v1315, %v1317
    %v1319 = vrot.slane %v673, 2
    %v1320 = vsel %vm1257, %v1317, %v1319
    %v1321 = vrot.slane %v679, 2
    %v1322 = vsel %vm1257, %v1319, %v1321
    %v1323 = vrot.slane %v683, 2
    %v1324 = vsel %vm1257, %v1321, %v1323
    %v1325 = vrot.slane %v689, 2
    %v1326 = vsel %vm1257, %v1323, %v1325
    %v1327 = vrot.slane %v693, 2
    %v1328 = vsel %vm1257, %v1325, %v1327
    %v1329 = vrot.slane %v699, 2
    %v1330 = vsel %vm1257, %v1327, %v1329
    %v1331 = vrot.slane %v703, 2
    %v1332 = vsel %vm1257, %v1329, %v1331
    %v1333 = vrot.slane %v709, 2
    %v1334 = vsel %vm1257, %v1331, %v1333
    %v1335 = vrot.slane %v713, 2
    %v1336 = vsel %vm1257, %v1333, %v1335
    %v1337 = vrot.slane %v719, 2
    %v1338 = vsel %vm1257, %v1335, %v1337
    %v1339 = vrot.slane %v723, 2
    %v1340 = vsel %vm1257, %v1337, %v1339
    %v1341 = vrot.slane %v729, 2
    %v1342 = vsel %vm1257, %v1339, %v1341
    %v1343 = vrot.slane %v733, 2
    %v1344 = vsel %vm1257, %v1341, %v1343
    %v1345 = vrot.slane %v739, 2
    %v1346 = vsel %vm1257, %v1343, %v1345
    %v1347 = vrot.slane %v743, 2
    %v1348 = vsel %vm1257, %v1345, %v1347
    %v1349 = vrot.slane %v749, 2
    %v1350 = vsel %vm1257, %v1347, %v1349
    %v1351 = vrot.slane %v753, 2
    %v1352 = vsel %vm1257, %v1349, %v1351
    %v1353 = vrot.slane %v759, 2
    %v1354 = vsel %vm1257, %v1351, %v1353
    %v1355 = vrot.slane %v763, 2
    %v1356 = vsel %vm1257, %v1353, %v1355
    %v1357 = vrot.slane %v769, 2
    %v1358 = vsel %vm1257, %v1355, %v1357
    %v1359 = vrot.slane %v773, 2
    %v1360 = vsel %vm1257, %v1357, %v1359
    %v1361 = vrot.slane %v779, 2
    %v1362 = vsel %vm1257, %v1359, %v1361
    %v1363 = vrot.slane %v783, 2
    %v1364 = vsel %vm1257, %v1361, %v1363
    %v1365 = vrot.slane %v789, 2
    %v1366 = vsel %vm1257, %v1363, %v1365
    %v1367 = vrot.slane %v793, 2
    %v1368 = vsel %vm1257, %v1365, %v1367
    %v1369 = vrot.slane %v799, 2
    %v1370 = vsel %vm1257, %v1367, %v1369
    %v1371 = vrot.slane %v803, 2
    %v1372 = vsel %vm1257, %v1369, %v1371
    %v1373 = vrot.slane %v809, 2
    %v1374 = vsel %vm1257, %v1371, %v1373
    %v1375 = vrot.slane %v813, 2
    %v1376 = vsel %vm1257, %v1373, %v1375
    %1377 = vrot.lane.b32.xlu0 %v1260, 96
    %v1378 = vpop.permute.xlu0 %1377
    %1379 = vrot.lane.b32.xlu0 %v1262, 96
    %v1380 = vpop.permute.xlu0 %1379
    %1381 = vrot.lane.b32.xlu0 %v1264, 96
    %v1382 = vpop.permute.xlu0 %1381
    %1383 = vrot.lane.b32.xlu0 %v1266, 96
    %v1384 = vpop.permute.xlu0 %1383
    %1385 = vrot.lane.b32.xlu0 %v1268, 96
    %v1386 = vpop.permute.xlu0 %1385
    %1387 = vrot.lane.b32.xlu0 %v1270, 96
    %v1388 = vpop.permute.xlu0 %1387
    %1389 = vrot.lane.b32.xlu0 %v1272, 96
    %v1390 = vpop.permute.xlu0 %1389
    %1391 = vrot.lane.b32.xlu0 %v1274, 96
    %v1392 = vpop.permute.xlu0 %1391
    %1393 = vrot.lane.b32.xlu0 %v1276, 96
    %v1394 = vpop.permute.xlu0 %1393
    %1395 = vrot.lane.b32.xlu0 %v1278, 96
    %v1396 = vpop.permute.xlu0 %1395
    %1397 = vrot.lane.b32.xlu0 %v1280, 96
    %v1398 = vpop.permute.xlu0 %1397
    %1399 = vrot.lane.b32.xlu0 %v1282, 96
    %v1400 = vpop.permute.xlu0 %1399
    %1401 = vrot.lane.b32.xlu0 %v1284, 96
    %v1402 = vpop.permute.xlu0 %1401
    %1403 = vrot.lane.b32.xlu0 %v1286, 96
    %v1404 = vpop.permute.xlu0 %1403
    %1405 = vrot.lane.b32.xlu0 %v1288, 96
    %v1406 = vpop.permute.xlu0 %1405
    %1407 = vrot.lane.b32.xlu0 %v1290, 96
    %v1408 = vpop.permute.xlu0 %1407
    %1409 = vrot.lane.b32.xlu0 %v1292, 96
    %v1410 = vpop.permute.xlu0 %1409
    %1411 = vrot.lane.b32.xlu0 %v1294, 96
    %v1412 = vpop.permute.xlu0 %1411
    %1413 = vrot.lane.b32.xlu0 %v1296, 96
    %v1414 = vpop.permute.xlu0 %1413
    %1415 = vrot.lane.b32.xlu0 %v1298, 96
    %v1416 = vpop.permute.xlu0 %1415
    %1417 = vrot.lane.b32.xlu0 %v1300, 96
    %v1418 = vpop.permute.xlu0 %1417
    %1419 = vrot.lane.b32.xlu0 %v1302, 96
    %v1420 = vpop.permute.xlu0 %1419
    %1421 = vrot.lane.b32.xlu0 %v1304, 96
    %v1422 = vpop.permute.xlu0 %1421
    %1423 = vrot.lane.b32.xlu0 %v1306, 96
    %v1424 = vpop.permute.xlu0 %1423
    %1425 = vrot.lane.b32.xlu0 %v1308, 96
    %v1426 = vpop.permute.xlu0 %1425
    %1427 = vrot.lane.b32.xlu0 %v1310, 96
    %v1428 = vpop.permute.xlu0 %1427
    %1429 = vrot.lane.b32.xlu0 %v1312, 96
    %v1430 = vpop.permute.xlu0 %1429
    %1431 = vrot.lane.b32.xlu0 %v1314, 96
    %v1432 = vpop.permute.xlu0 %1431
    %1433 = vrot.lane.b32.xlu0 %v1316, 96
    %v1434 = vpop.permute.xlu0 %1433
    %1435 = vrot.lane.b32.xlu0 %v1318, 96
    %v1436 = vpop.permute.xlu0 %1435
    %1437 = vrot.lane.b32.xlu0 %v1320, 96
    %v1438 = vpop.permute.xlu0 %1437
    %1439 = vrot.lane.b32.xlu0 %v1322, 96
    %v1440 = vpop.permute.xlu0 %1439
    %1441 = vrot.lane.b32.xlu0 %v1324, 96
    %v1442 = vpop.permute.xlu0 %1441
    %1443 = vrot.lane.b32.xlu0 %v1326, 96
    %v1444 = vpop.permute.xlu0 %1443
    %1445 = vrot.lane.b32.xlu0 %v1328, 96
    %v1446 = vpop.permute.xlu0 %1445
    %1447 = vrot.lane.b32.xlu0 %v1330, 96
    %v1448 = vpop.permute.xlu0 %1447
    %1449 = vrot.lane.b32.xlu0 %v1332, 96
    %v1450 = vpop.permute.xlu0 %1449
    %1451 = vrot.lane.b32.xlu0 %v1334, 96
    %v1452 = vpop.permute.xlu0 %1451
    %1453 = vrot.lane.b32.xlu0 %v1336, 96
    %v1454 = vpop.permute.xlu0 %1453
    %1455 = vrot.lane.b32.xlu0 %v1338, 96
    %v1456 = vpop.permute.xlu0 %1455
    %1457 = vrot.lane.b32.xlu0 %v1340, 96
    %v1458 = vpop.permute.xlu0 %1457
    %1459 = vrot.lane.b32.xlu0 %v1342, 96
    %v1460 = vpop.permute.xlu0 %1459
    %1461 = vrot.lane.b32.xlu0 %v1344, 96
    %v1462 = vpop.permute.xlu0 %1461
    %1463 = vrot.lane.b32.xlu0 %v1346, 96
    %v1464 = vpop.permute.xlu0 %1463
    %1465 = vrot.lane.b32.xlu0 %v1348, 96
    %v1466 = vpop.permute.xlu0 %1465
    %1467 = vrot.lane.b32.xlu0 %v1350, 96
    %v1468 = vpop.permute.xlu0 %1467
    %1469 = vrot.lane.b32.xlu0 %v1352, 96
    %v1470 = vpop.permute.xlu0 %1469
    %1471 = vrot.lane.b32.xlu0 %v1354, 96
    %v1472 = vpop.permute.xlu0 %1471
    %1473 = vrot.lane.b32.xlu0 %v1356, 96
    %v1474 = vpop.permute.xlu0 %1473
    %1475 = vrot.lane.b32.xlu0 %v1358, 96
    %v1476 = vpop.permute.xlu0 %1475
    %1477 = vrot.lane.b32.xlu0 %v1360, 96
    %v1478 = vpop.permute.xlu0 %1477
    %1479 = vrot.lane.b32.xlu0 %v1362, 96
    %v1480 = vpop.permute.xlu0 %1479
    %1481 = vrot.lane.b32.xlu0 %v1364, 96
    %v1482 = vpop.permute.xlu0 %1481
    %1483 = vrot.lane.b32.xlu0 %v1366, 96
    %v1484 = vpop.permute.xlu0 %1483
    %1485 = vrot.lane.b32.xlu0 %v1368, 96
    %v1486 = vpop.permute.xlu0 %1485
    %1487 = vrot.lane.b32.xlu0 %v1370, 96
    %v1488 = vpop.permute.xlu0 %1487
    %1489 = vrot.lane.b32.xlu0 %v1372, 96
    %v1490 = vpop.permute.xlu0 %1489
    %1491 = vrot.lane.b32.xlu0 %v1374, 96
    %v1492 = vpop.permute.xlu0 %1491
    %1493 = vrot.lane.b32.xlu0 %v1376, 96
    %v1494 = vpop.permute.xlu0 %1493
    %1495 = vrot.lane.b32.xlu0 %v1375, 96
    %v1496 = vpop.permute.xlu0 %1495
    %v1557 = vadd.f32 %v1197, %v1378
    %v1558 = vadd.f32 %v1198, %v1380
    %v1559 = vadd.f32 %v1199, %v1382
    %v1560 = vadd.f32 %v1200, %v1384
    %v1561 = vadd.f32 %v1201, %v1386
    %v1562 = vadd.f32 %v1202, %v1388
    %v1563 = vadd.f32 %v1203, %v1390
    %v1564 = vadd.f32 %v1204, %v1392
    %v1565 = vadd.f32 %v1205, %v1394
    %v1566 = vadd.f32 %v1206, %v1396
    %v1567 = vadd.f32 %v1207, %v1398
    %v1568 = vadd.f32 %v1208, %v1400
    %v1569 = vadd.f32 %v1209, %v1402
    %v1570 = vadd.f32 %v1210, %v1404
    %v1571 = vadd.f32 %v1211, %v1406
    %v1572 = vadd.f32 %v1212, %v1408
    %v1573 = vadd.f32 %v1213, %v1410
    %v1574 = vadd.f32 %v1214, %v1412
    %v1575 = vadd.f32 %v1215, %v1414
    %v1576 = vadd.f32 %v1216, %v1416
    %v1577 = vadd.f32 %v1217, %v1418
    %v1578 = vadd.f32 %v1218, %v1420
    %v1579 = vadd.f32 %v1219, %v1422
    %v1580 = vadd.f32 %v1220, %v1424
    %v1581 = vadd.f32 %v1221, %v1426
    %v1582 = vadd.f32 %v1222, %v1428
    %v1583 = vadd.f32 %v1223, %v1430
    %v1584 = vadd.f32 %v1224, %v1432
    %v1585 = vadd.f32 %v1225, %v1434
    %v1586 = vadd.f32 %v1226, %v1436
    %v1587 = vadd.f32 %v1227, %v1438
    %v1588 = vadd.f32 %v1228, %v1440
    %v1589 = vadd.f32 %v1229, %v1442
    %v1590 = vadd.f32 %v1230, %v1444
    %v1591 = vadd.f32 %v1231, %v1446
    %v1592 = vadd.f32 %v1232, %v1448
    %v1593 = vadd.f32 %v1233, %v1450
    %v1594 = vadd.f32 %v1234, %v1452
    %v1595 = vadd.f32 %v1235, %v1454
    %v1596 = vadd.f32 %v1236, %v1456
    %v1597 = vadd.f32 %v1237, %v1458
    %v1598 = vadd.f32 %v1238, %v1460
    %v1599 = vadd.f32 %v1239, %v1462
    %v1600 = vadd.f32 %v1240, %v1464
    %v1601 = vadd.f32 %v1241, %v1466
    %v1602 = vadd.f32 %v1242, %v1468
    %v1603 = vadd.f32 %v1243, %v1470
    %v1604 = vadd.f32 %v1244, %v1472
    %v1605 = vadd.f32 %v1245, %v1474
    %v1606 = vadd.f32 %v1246, %v1476
    %v1607 = vadd.f32 %v1247, %v1478
    %v1608 = vadd.f32 %v1248, %v1480
    %v1609 = vadd.f32 %v1249, %v1482
    %v1610 = vadd.f32 %v1250, %v1484
    %v1611 = vadd.f32 %v1251, %v1486
    %v1612 = vadd.f32 %v1252, %v1488
    %v1613 = vadd.f32 %v1253, %v1490
    %v1614 = vadd.f32 %v1254, %v1492
    %v1615 = vadd.f32 %v1255, %v1494
    %v1616 = vadd.f32 %v1256, %v1496
    %1619 = vrot.lane.b32.xlu0 %v531, 80
    %v1620 = vpop.permute.xlu0 %1619
    %1621 = vrot.lane.b32.xlu0 %v534, 80
    %v1622 = vpop.permute.xlu0 %1621
    %1623 = vrot.lane.b32.xlu0 %v539, 80
    %v1624 = vpop.permute.xlu0 %1623
    %1625 = vrot.lane.b32.xlu0 %v543, 80
    %v1626 = vpop.permute.xlu0 %1625
    %1627 = vrot.lane.b32.xlu0 %v549, 80
    %v1628 = vpop.permute.xlu0 %1627
    %1629 = vrot.lane.b32.xlu0 %v553, 80
    %v1630 = vpop.permute.xlu0 %1629
    %1631 = vrot.lane.b32.xlu0 %v559, 80
    %v1632 = vpop.permute.xlu0 %1631
    %1633 = vrot.lane.b32.xlu0 %v563, 80
    %v1634 = vpop.permute.xlu0 %1633
    %1635 = vrot.lane.b32.xlu0 %v569, 80
    %v1636 = vpop.permute.xlu0 %1635
    %1637 = vrot.lane.b32.xlu0 %v573, 80
    %v1638 = vpop.permute.xlu0 %1637
    %1639 = vrot.lane.b32.xlu0 %v579, 80
    %v1640 = vpop.permute.xlu0 %1639
    %1641 = vrot.lane.b32.xlu0 %v583, 80
    %v1642 = vpop.permute.xlu0 %1641
    %1643 = vrot.lane.b32.xlu0 %v589, 80
    %v1644 = vpop.permute.xlu0 %1643
    %1645 = vrot.lane.b32.xlu0 %v593, 80
    %v1646 = vpop.permute.xlu0 %1645
    %1647 = vrot.lane.b32.xlu0 %v599, 80
    %v1648 = vpop.permute.xlu0 %1647
    %1649 = vrot.lane.b32.xlu0 %v603, 80
    %v1650 = vpop.permute.xlu0 %1649
    %1651 = vrot.lane.b32.xlu0 %v609, 80
    %v1652 = vpop.permute.xlu0 %1651
    %1653 = vrot.lane.b32.xlu0 %v613, 80
    %v1654 = vpop.permute.xlu0 %1653
    %1655 = vrot.lane.b32.xlu0 %v619, 80
    %v1656 = vpop.permute.xlu0 %1655
    %1657 = vrot.lane.b32.xlu0 %v623, 80
    %v1658 = vpop.permute.xlu0 %1657
    %1659 = vrot.lane.b32.xlu0 %v629, 80
    %v1660 = vpop.permute.xlu0 %1659
    %1661 = vrot.lane.b32.xlu0 %v633, 80
    %v1662 = vpop.permute.xlu0 %1661
    %1663 = vrot.lane.b32.xlu0 %v639, 80
    %v1664 = vpop.permute.xlu0 %1663
    %1665 = vrot.lane.b32.xlu0 %v643, 80
    %v1666 = vpop.permute.xlu0 %1665
    %1667 = vrot.lane.b32.xlu0 %v649, 80
    %v1668 = vpop.permute.xlu0 %1667
    %1669 = vrot.lane.b32.xlu0 %v653, 80
    %v1670 = vpop.permute.xlu0 %1669
    %1671 = vrot.lane.b32.xlu0 %v659, 80
    %v1672 = vpop.permute.xlu0 %1671
    %1673 = vrot.lane.b32.xlu0 %v663, 80
    %v1674 = vpop.permute.xlu0 %1673
    %1675 = vrot.lane.b32.xlu0 %v669, 80
    %v1676 = vpop.permute.xlu0 %1675
    %1677 = vrot.lane.b32.xlu0 %v673, 80
    %v1678 = vpop.permute.xlu0 %1677
    %1679 = vrot.lane.b32.xlu0 %v679, 80
    %v1680 = vpop.permute.xlu0 %1679
    %1681 = vrot.lane.b32.xlu0 %v683, 80
    %v1682 = vpop.permute.xlu0 %1681
    %1683 = vrot.lane.b32.xlu0 %v689, 80
    %v1684 = vpop.permute.xlu0 %1683
    %1685 = vrot.lane.b32.xlu0 %v693, 80
    %v1686 = vpop.permute.xlu0 %1685
    %1687 = vrot.lane.b32.xlu0 %v699, 80
    %v1688 = vpop.permute.xlu0 %1687
    %1689 = vrot.lane.b32.xlu0 %v703, 80
    %v1690 = vpop.permute.xlu0 %1689
    %1691 = vrot.lane.b32.xlu0 %v709, 80
    %v1692 = vpop.permute.xlu0 %1691
    %1693 = vrot.lane.b32.xlu0 %v713, 80
    %v1694 = vpop.permute.xlu0 %1693
    %1695 = vrot.lane.b32.xlu0 %v719, 80
    %v1696 = vpop.permute.xlu0 %1695
    %1697 = vrot.lane.b32.xlu0 %v723, 80
    %v1698 = vpop.permute.xlu0 %1697
    %1699 = vrot.lane.b32.xlu0 %v729, 80
    %v1700 = vpop.permute.xlu0 %1699
    %1701 = vrot.lane.b32.xlu0 %v733, 80
    %v1702 = vpop.permute.xlu0 %1701
    %1703 = vrot.lane.b32.xlu0 %v739, 80
    %v1704 = vpop.permute.xlu0 %1703
    %1705 = vrot.lane.b32.xlu0 %v743, 80
    %v1706 = vpop.permute.xlu0 %1705
    %1707 = vrot.lane.b32.xlu0 %v749, 80
    %v1708 = vpop.permute.xlu0 %1707
    %1709 = vrot.lane.b32.xlu0 %v753, 80
    %v1710 = vpop.permute.xlu0 %1709
    %1711 = vrot.lane.b32.xlu0 %v759, 80
    %v1712 = vpop.permute.xlu0 %1711
    %1713 = vrot.lane.b32.xlu0 %v763, 80
    %v1714 = vpop.permute.xlu0 %1713
    %1715 = vrot.lane.b32.xlu0 %v769, 80
    %v1716 = vpop.permute.xlu0 %1715
    %1717 = vrot.lane.b32.xlu0 %v773, 80
    %v1718 = vpop.permute.xlu0 %1717
    %1719 = vrot.lane.b32.xlu0 %v779, 80
    %v1720 = vpop.permute.xlu0 %1719
    %1721 = vrot.lane.b32.xlu0 %v783, 80
    %v1722 = vpop.permute.xlu0 %1721
    %1723 = vrot.lane.b32.xlu0 %v789, 80
    %v1724 = vpop.permute.xlu0 %1723
    %1725 = vrot.lane.b32.xlu0 %v793, 80
    %v1726 = vpop.permute.xlu0 %1725
    %1727 = vrot.lane.b32.xlu0 %v799, 80
    %v1728 = vpop.permute.xlu0 %1727
    %1729 = vrot.lane.b32.xlu0 %v803, 80
    %v1730 = vpop.permute.xlu0 %1729
    %1731 = vrot.lane.b32.xlu0 %v809, 80
    %v1732 = vpop.permute.xlu0 %1731
    %1733 = vrot.lane.b32.xlu0 %v813, 80
    %v1734 = vpop.permute.xlu0 %1733
    %1735 = vrot.lane.b32.xlu0 %v819, 80
    %v1736 = vpop.permute.xlu0 %1735
    %1737 = vrot.lane.b32.xlu0 %v823, 80
    %v1738 = vpop.permute.xlu0 %1737
    %v1799 = vadd.f32 %v1557, %v1620
    %v1800 = vadd.f32 %v1558, %v1622
    %v1801 = vadd.f32 %v1559, %v1624
    %v1802 = vadd.f32 %v1560, %v1626
    %v1803 = vadd.f32 %v1561, %v1628
    %v1804 = vadd.f32 %v1562, %v1630
    %v1805 = vadd.f32 %v1563, %v1632
    %v1806 = vadd.f32 %v1564, %v1634
    %v1807 = vadd.f32 %v1565, %v1636
    %v1808 = vadd.f32 %v1566, %v1638
    %v1809 = vadd.f32 %v1567, %v1640
    %v1810 = vadd.f32 %v1568, %v1642
    %v1811 = vadd.f32 %v1569, %v1644
    %v1812 = vadd.f32 %v1570, %v1646
    %v1813 = vadd.f32 %v1571, %v1648
    %v1814 = vadd.f32 %v1572, %v1650
    %v1815 = vadd.f32 %v1573, %v1652
    %v1816 = vadd.f32 %v1574, %v1654
    %v1817 = vadd.f32 %v1575, %v1656
    %v1818 = vadd.f32 %v1576, %v1658
    %v1819 = vadd.f32 %v1577, %v1660
    %v1820 = vadd.f32 %v1578, %v1662
    %v1821 = vadd.f32 %v1579, %v1664
    %v1822 = vadd.f32 %v1580, %v1666
    %v1823 = vadd.f32 %v1581, %v1668
    %v1824 = vadd.f32 %v1582, %v1670
    %v1825 = vadd.f32 %v1583, %v1672
    %v1826 = vadd.f32 %v1584, %v1674
    %v1827 = vadd.f32 %v1585, %v1676
    %v1828 = vadd.f32 %v1586, %v1678
    %v1829 = vadd.f32 %v1587, %v1680
    %v1830 = vadd.f32 %v1588, %v1682
    %v1831 = vadd.f32 %v1589, %v1684
    %v1832 = vadd.f32 %v1590, %v1686
    %v1833 = vadd.f32 %v1591, %v1688
    %v1834 = vadd.f32 %v1592, %v1690
    %v1835 = vadd.f32 %v1593, %v1692
    %v1836 = vadd.f32 %v1594, %v1694
    %v1837 = vadd.f32 %v1595, %v1696
    %v1838 = vadd.f32 %v1596, %v1698
    %v1839 = vadd.f32 %v1597, %v1700
    %v1840 = vadd.f32 %v1598, %v1702
    %v1841 = vadd.f32 %v1599, %v1704
    %v1842 = vadd.f32 %v1600, %v1706
    %v1843 = vadd.f32 %v1601, %v1708
    %v1844 = vadd.f32 %v1602, %v1710
    %v1845 = vadd.f32 %v1603, %v1712
    %v1846 = vadd.f32 %v1604, %v1714
    %v1847 = vadd.f32 %v1605, %v1716
    %v1848 = vadd.f32 %v1606, %v1718
    %v1849 = vadd.f32 %v1607, %v1720
    %v1850 = vadd.f32 %v1608, %v1722
    %v1851 = vadd.f32 %v1609, %v1724
    %v1852 = vadd.f32 %v1610, %v1726
    %v1853 = vadd.f32 %v1611, %v1728
    %v1854 = vadd.f32 %v1612, %v1730
    %v1855 = vadd.f32 %v1613, %v1732
    %v1856 = vadd.f32 %v1614, %v1734
    %v1857 = vadd.f32 %v1615, %v1736
    %v1858 = vadd.f32 %v1616, %v1738
    %v1859 = vrot.slane %v819, 1
    %v1860 = vsel %vm897, %v1015, %v1859
    %v1861 = vrot.slane %v823, 1
    %v1862 = vsel %vm897, %v1859, %v1861
    %1863 = vrot.lane.b32.xlu0 %v904, 64
    %v1864 = vpop.permute.xlu0 %1863
    %1865 = vrot.lane.b32.xlu0 %v906, 64
    %v1866 = vpop.permute.xlu0 %1865
    %1867 = vrot.lane.b32.xlu0 %v908, 64
    %v1868 = vpop.permute.xlu0 %1867
    %1869 = vrot.lane.b32.xlu0 %v910, 64
    %v1870 = vpop.permute.xlu0 %1869
    %1871 = vrot.lane.b32.xlu0 %v912, 64
    %v1872 = vpop.permute.xlu0 %1871
    %1873 = vrot.lane.b32.xlu0 %v914, 64
    %v1874 = vpop.permute.xlu0 %1873
    %1875 = vrot.lane.b32.xlu0 %v916, 64
    %v1876 = vpop.permute.xlu0 %1875
    %1877 = vrot.lane.b32.xlu0 %v918, 64
    %v1878 = vpop.permute.xlu0 %1877
    %1879 = vrot.lane.b32.xlu0 %v920, 64
    %v1880 = vpop.permute.xlu0 %1879
    %1881 = vrot.lane.b32.xlu0 %v922, 64
    %v1882 = vpop.permute.xlu0 %1881
    %1883 = vrot.lane.b32.xlu0 %v924, 64
    %v1884 = vpop.permute.xlu0 %1883
    %1885 = vrot.lane.b32.xlu0 %v926, 64
    %v1886 = vpop.permute.xlu0 %1885
    %1887 = vrot.lane.b32.xlu0 %v928, 64
    %v1888 = vpop.permute.xlu0 %1887
    %1889 = vrot.lane.b32.xlu0 %v930, 64
    %v1890 = vpop.permute.xlu0 %1889
    %1891 = vrot.lane.b32.xlu0 %v932, 64
    %v1892 = vpop.permute.xlu0 %1891
    %1893 = vrot.lane.b32.xlu0 %v934, 64
    %v1894 = vpop.permute.xlu0 %1893
    %1895 = vrot.lane.b32.xlu0 %v936, 64
    %v1896 = vpop.permute.xlu0 %1895
    %1897 = vrot.lane.b32.xlu0 %v938, 64
    %v1898 = vpop.permute.xlu0 %1897
    %1899 = vrot.lane.b32.xlu0 %v940, 64
    %v1900 = vpop.permute.xlu0 %1899
    %1901 = vrot.lane.b32.xlu0 %v942, 64
    %v1902 = vpop.permute.xlu0 %1901
    %1903 = vrot.lane.b32.xlu0 %v944, 64
    %v1904 = vpop.permute.xlu0 %1903
    %1905 = vrot.lane.b32.xlu0 %v946, 64
    %v1906 = vpop.permute.xlu0 %1905
    %1907 = vrot.lane.b32.xlu0 %v948, 64
    %v1908 = vpop.permute.xlu0 %1907
    %1909 = vrot.lane.b32.xlu0 %v950, 64
    %v1910 = vpop.permute.xlu0 %1909
    %1911 = vrot.lane.b32.xlu0 %v952, 64
    %v1912 = vpop.permute.xlu0 %1911
    %1913 = vrot.lane.b32.xlu0 %v954, 64
    %v1914 = vpop.permute.xlu0 %1913
    %1915 = vrot.lane.b32.xlu0 %v956, 64
    %v1916 = vpop.permute.xlu0 %1915
    %1917 = vrot.lane.b32.xlu0 %v958, 64
    %v1918 = vpop.permute.xlu0 %1917
    %1919 = vrot.lane.b32.xlu0 %v960, 64
    %v1920 = vpop.permute.xlu0 %1919
    %1921 = vrot.lane.b32.xlu0 %v962, 64
    %v1922 = vpop.permute.xlu0 %1921
    %1923 = vrot.lane.b32.xlu0 %v964, 64
    %v1924 = vpop.permute.xlu0 %1923
    %1925 = vrot.lane.b32.xlu0 %v966, 64
    %v1926 = vpop.permute.xlu0 %1925
    %1927 = vrot.lane.b32.xlu0 %v968, 64
    %v1928 = vpop.permute.xlu0 %1927
    %1929 = vrot.lane.b32.xlu0 %v970, 64
    %v1930 = vpop.permute.xlu0 %1929
    %1931 = vrot.lane.b32.xlu0 %v972, 64
    %v1932 = vpop.permute.xlu0 %1931
    %1933 = vrot.lane.b32.xlu0 %v974, 64
    %v1934 = vpop.permute.xlu0 %1933
    %1935 = vrot.lane.b32.xlu0 %v976, 64
    %v1936 = vpop.permute.xlu0 %1935
    %1937 = vrot.lane.b32.xlu0 %v978, 64
    %v1938 = vpop.permute.xlu0 %1937
    %1939 = vrot.lane.b32.xlu0 %v980, 64
    %v1940 = vpop.permute.xlu0 %1939
    %1941 = vrot.lane.b32.xlu0 %v982, 64
    %v1942 = vpop.permute.xlu0 %1941
    %1943 = vrot.lane.b32.xlu0 %v984, 64
    %v1944 = vpop.permute.xlu0 %1943
    %1945 = vrot.lane.b32.xlu0 %v986, 64
    %v1946 = vpop.permute.xlu0 %1945
    %1947 = vrot.lane.b32.xlu0 %v988, 64
    %v1948 = vpop.permute.xlu0 %1947
    %1949 = vrot.lane.b32.xlu0 %v990, 64
    %v1950 = vpop.permute.xlu0 %1949
    %1951 = vrot.lane.b32.xlu0 %v992, 64
    %v1952 = vpop.permute.xlu0 %1951
    %1953 = vrot.lane.b32.xlu0 %v994, 64
    %v1954 = vpop.permute.xlu0 %1953
    %1955 = vrot.lane.b32.xlu0 %v996, 64
    %v1956 = vpop.permute.xlu0 %1955
    %1957 = vrot.lane.b32.xlu0 %v998, 64
    %v1958 = vpop.permute.xlu0 %1957
    %1959 = vrot.lane.b32.xlu0 %v1000, 64
    %v1960 = vpop.permute.xlu0 %1959
    %1961 = vrot.lane.b32.xlu0 %v1002, 64
    %v1962 = vpop.permute.xlu0 %1961
    %1963 = vrot.lane.b32.xlu0 %v1004, 64
    %v1964 = vpop.permute.xlu0 %1963
    %1965 = vrot.lane.b32.xlu0 %v1006, 64
    %v1966 = vpop.permute.xlu0 %1965
    %1967 = vrot.lane.b32.xlu0 %v1008, 64
    %v1968 = vpop.permute.xlu0 %1967
    %1969 = vrot.lane.b32.xlu0 %v1010, 64
    %v1970 = vpop.permute.xlu0 %1969
    %1971 = vrot.lane.b32.xlu0 %v1012, 64
    %v1972 = vpop.permute.xlu0 %1971
    %1973 = vrot.lane.b32.xlu0 %v1014, 64
    %v1974 = vpop.permute.xlu0 %1973
    %1975 = vrot.lane.b32.xlu0 %v1016, 64
    %v1976 = vpop.permute.xlu0 %1975
    %1977 = vrot.lane.b32.xlu0 %v1860, 64
    %v1978 = vpop.permute.xlu0 %1977
    %1979 = vrot.lane.b32.xlu0 %v1862, 64
    %v1980 = vpop.permute.xlu0 %1979
    %1981 = vrot.lane.b32.xlu0 %v1861, 64
    %v1982 = vpop.permute.xlu0 %1981
    %v2043 = vadd.f32 %v1799, %v1864
    %v2044 = vadd.f32 %v1800, %v1866
    %v2045 = vadd.f32 %v1801, %v1868
    %v2046 = vadd.f32 %v1802, %v1870
    %v2047 = vadd.f32 %v1803, %v1872
    %v2048 = vadd.f32 %v1804, %v1874
    %v2049 = vadd.f32 %v1805, %v1876
    %v2050 = vadd.f32 %v1806, %v1878
    %v2051 = vadd.f32 %v1807, %v1880
    %v2052 = vadd.f32 %v1808, %v1882
    %v2053 = vadd.f32 %v1809, %v1884
    %v2054 = vadd.f32 %v1810, %v1886
    %v2055 = vadd.f32 %v1811, %v1888
    %v2056 = vadd.f32 %v1812, %v1890
    %v2057 = vadd.f32 %v1813, %v1892
    %v2058 = vadd.f32 %v1814, %v1894
    %v2059 = vadd.f32 %v1815, %v1896
    %v2060 = vadd.f32 %v1816, %v1898
    %v2061 = vadd.f32 %v1817, %v1900
    %v2062 = vadd.f32 %v1818, %v1902
    %v2063 = vadd.f32 %v1819, %v1904
    %v2064 = vadd.f32 %v1820, %v1906
    %v2065 = vadd.f32 %v1821, %v1908
    %v2066 = vadd.f32 %v1822, %v1910
    %v2067 = vadd.f32 %v1823, %v1912
    %v2068 = vadd.f32 %v1824, %v1914
    %v2069 = vadd.f32 %v1825, %v1916
    %v2070 = vadd.f32 %v1826, %v1918
    %v2071 = vadd.f32 %v1827, %v1920
    %v2072 = vadd.f32 %v1828, %v1922
    %v2073 = vadd.f32 %v1829, %v1924
    %v2074 = vadd.f32 %v1830, %v1926
    %v2075 = vadd.f32 %v1831, %v1928
    %v2076 = vadd.f32 %v1832, %v1930
    %v2077 = vadd.f32 %v1833, %v1932
    %v2078 = vadd.f32 %v1834, %v1934
    %v2079 = vadd.f32 %v1835, %v1936
    %v2080 = vadd.f32 %v1836, %v1938
    %v2081 = vadd.f32 %v1837, %v1940
    %v2082 = vadd.f32 %v1838, %v1942
    %v2083 = vadd.f32 %v1839, %v1944
    %v2084 = vadd.f32 %v1840, %v1946
    %v2085 = vadd.f32 %v1841, %v1948
    %v2086 = vadd.f32 %v1842, %v1950
    %v2087 = vadd.f32 %v1843, %v1952
    %v2088 = vadd.f32 %v1844, %v1954
    %v2089 = vadd.f32 %v1845, %v1956
    %v2090 = vadd.f32 %v1846, %v1958
    %v2091 = vadd.f32 %v1847, %v1960
    %v2092 = vadd.f32 %v1848, %v1962
    %v2093 = vadd.f32 %v1849, %v1964
    %v2094 = vadd.f32 %v1850, %v1966
    %v2095 = vadd.f32 %v1851, %v1968
    %v2096 = vadd.f32 %v1852, %v1970
    %v2097 = vadd.f32 %v1853, %v1972
    %v2098 = vadd.f32 %v1854, %v1974
    %v2099 = vadd.f32 %v1855, %v1976
    %v2100 = vadd.f32 %v1856, %v1978
    %v2101 = vadd.f32 %v1857, %v1980
    %v2102 = vadd.f32 %v1858, %v1982
    %v2103 = vrot.slane %v819, 2
    %v2104 = vsel %vm1257, %v1375, %v2103
    %v2105 = vrot.slane %v823, 2
    %v2106 = vsel %vm1257, %v2103, %v2105
    %2107 = vrot.lane.b32.xlu0 %v1264, 48
    %v2108 = vpop.permute.xlu0 %2107
    %2109 = vrot.lane.b32.xlu0 %v1266, 48
    %v2110 = vpop.permute.xlu0 %2109
    %2111 = vrot.lane.b32.xlu0 %v1268, 48
    %v2112 = vpop.permute.xlu0 %2111
    %2113 = vrot.lane.b32.xlu0 %v1270, 48
    %v2114 = vpop.permute.xlu0 %2113
    %2115 = vrot.lane.b32.xlu0 %v1272, 48
    %v2116 = vpop.permute.xlu0 %2115
    %2117 = vrot.lane.b32.xlu0 %v1274, 48
    %v2118 = vpop.permute.xlu0 %2117
    %2119 = vrot.lane.b32.xlu0 %v1276, 48
    %v2120 = vpop.permute.xlu0 %2119
    %2121 = vrot.lane.b32.xlu0 %v1278, 48
    %v2122 = vpop.permute.xlu0 %2121
    %2123 = vrot.lane.b32.xlu0 %v1280, 48
    %v2124 = vpop.permute.xlu0 %2123
    %2125 = vrot.lane.b32.xlu0 %v1282, 48
    %v2126 = vpop.permute.xlu0 %2125
    %2127 = vrot.lane.b32.xlu0 %v1284, 48
    %v2128 = vpop.permute.xlu0 %2127
    %2129 = vrot.lane.b32.xlu0 %v1286, 48
    %v2130 = vpop.permute.xlu0 %2129
    %2131 = vrot.lane.b32.xlu0 %v1288, 48
    %v2132 = vpop.permute.xlu0 %2131
    %2133 = vrot.lane.b32.xlu0 %v1290, 48
    %v2134 = vpop.permute.xlu0 %2133
    %2135 = vrot.lane.b32.xlu0 %v1292, 48
    %v2136 = vpop.permute.xlu0 %2135
    %2137 = vrot.lane.b32.xlu0 %v1294, 48
    %v2138 = vpop.permute.xlu0 %2137
    %2139 = vrot.lane.b32.xlu0 %v1296, 48
    %v2140 = vpop.permute.xlu0 %2139
    %2141 = vrot.lane.b32.xlu0 %v1298, 48
    %v2142 = vpop.permute.xlu0 %2141
    %2143 = vrot.lane.b32.xlu0 %v1300, 48
    %v2144 = vpop.permute.xlu0 %2143
    %2145 = vrot.lane.b32.xlu0 %v1302, 48
    %v2146 = vpop.permute.xlu0 %2145
    %2147 = vrot.lane.b32.xlu0 %v1304, 48
    %v2148 = vpop.permute.xlu0 %2147
    %2149 = vrot.lane.b32.xlu0 %v1306, 48
    %v2150 = vpop.permute.xlu0 %2149
    %2151 = vrot.lane.b32.xlu0 %v1308, 48
    %v2152 = vpop.permute.xlu0 %2151
    %2153 = vrot.lane.b32.xlu0 %v1310, 48
    %v2154 = vpop.permute.xlu0 %2153
    %2155 = vrot.lane.b32.xlu0 %v1312, 48
    %v2156 = vpop.permute.xlu0 %2155
    %2157 = vrot.lane.b32.xlu0 %v1314, 48
    %v2158 = vpop.permute.xlu0 %2157
    %2159 = vrot.lane.b32.xlu0 %v1316, 48
    %v2160 = vpop.permute.xlu0 %2159
    %2161 = vrot.lane.b32.xlu0 %v1318, 48
    %v2162 = vpop.permute.xlu0 %2161
    %2163 = vrot.lane.b32.xlu0 %v1320, 48
    %v2164 = vpop.permute.xlu0 %2163
    %2165 = vrot.lane.b32.xlu0 %v1322, 48
    %v2166 = vpop.permute.xlu0 %2165
    %2167 = vrot.lane.b32.xlu0 %v1324, 48
    %v2168 = vpop.permute.xlu0 %2167
    %2169 = vrot.lane.b32.xlu0 %v1326, 48
    %v2170 = vpop.permute.xlu0 %2169
    %2171 = vrot.lane.b32.xlu0 %v1328, 48
    %v2172 = vpop.permute.xlu0 %2171
    %2173 = vrot.lane.b32.xlu0 %v1330, 48
    %v2174 = vpop.permute.xlu0 %2173
    %2175 = vrot.lane.b32.xlu0 %v1332, 48
    %v2176 = vpop.permute.xlu0 %2175
    %2177 = vrot.lane.b32.xlu0 %v1334, 48
    %v2178 = vpop.permute.xlu0 %2177
    %2179 = vrot.lane.b32.xlu0 %v1336, 48
    %v2180 = vpop.permute.xlu0 %2179
    %2181 = vrot.lane.b32.xlu0 %v1338, 48
    %v2182 = vpop.permute.xlu0 %2181
    %2183 = vrot.lane.b32.xlu0 %v1340, 48
    %v2184 = vpop.permute.xlu0 %2183
    %2185 = vrot.lane.b32.xlu0 %v1342, 48
    %v2186 = vpop.permute.xlu0 %2185
    %2187 = vrot.lane.b32.xlu0 %v1344, 48
    %v2188 = vpop.permute.xlu0 %2187
    %2189 = vrot.lane.b32.xlu0 %v1346, 48
    %v2190 = vpop.permute.xlu0 %2189
    %2191 = vrot.lane.b32.xlu0 %v1348, 48
    %v2192 = vpop.permute.xlu0 %2191
    %2193 = vrot.lane.b32.xlu0 %v1350, 48
    %v2194 = vpop.permute.xlu0 %2193
    %2195 = vrot.lane.b32.xlu0 %v1352, 48
    %v2196 = vpop.permute.xlu0 %2195
    %2197 = vrot.lane.b32.xlu0 %v1354, 48
    %v2198 = vpop.permute.xlu0 %2197
    %2199 = vrot.lane.b32.xlu0 %v1356, 48
    %v2200 = vpop.permute.xlu0 %2199
    %2201 = vrot.lane.b32.xlu0 %v1358, 48
    %v2202 = vpop.permute.xlu0 %2201
    %2203 = vrot.lane.b32.xlu0 %v1360, 48
    %v2204 = vpop.permute.xlu0 %2203
    %2205 = vrot.lane.b32.xlu0 %v1362, 48
    %v2206 = vpop.permute.xlu0 %2205
    %2207 = vrot.lane.b32.xlu0 %v1364, 48
    %v2208 = vpop.permute.xlu0 %2207
    %2209 = vrot.lane.b32.xlu0 %v1366, 48
    %v2210 = vpop.permute.xlu0 %2209
    %2211 = vrot.lane.b32.xlu0 %v1368, 48
    %v2212 = vpop.permute.xlu0 %2211
    %2213 = vrot.lane.b32.xlu0 %v1370, 48
    %v2214 = vpop.permute.xlu0 %2213
    %2215 = vrot.lane.b32.xlu0 %v1372, 48
    %v2216 = vpop.permute.xlu0 %2215
    %2217 = vrot.lane.b32.xlu0 %v1374, 48
    %v2218 = vpop.permute.xlu0 %2217
    %2219 = vrot.lane.b32.xlu0 %v1376, 48
    %v2220 = vpop.permute.xlu0 %2219
    %2221 = vrot.lane.b32.xlu0 %v2104, 48
    %v2222 = vpop.permute.xlu0 %2221
    %2223 = vrot.lane.b32.xlu0 %v2106, 48
    %v2224 = vpop.permute.xlu0 %2223
    %2225 = vrot.lane.b32.xlu0 %v2105, 48
    %v2226 = vpop.permute.xlu0 %2225
    %v2287 = vadd.f32 %v2043, %v2108
    %v2288 = vadd.f32 %v2044, %v2110
    %v2289 = vadd.f32 %v2045, %v2112
    %v2290 = vadd.f32 %v2046, %v2114
    %v2291 = vadd.f32 %v2047, %v2116
    %v2292 = vadd.f32 %v2048, %v2118
    %v2293 = vadd.f32 %v2049, %v2120
    %v2294 = vadd.f32 %v2050, %v2122
    %v2295 = vadd.f32 %v2051, %v2124
    %v2296 = vadd.f32 %v2052, %v2126
    %v2297 = vadd.f32 %v2053, %v2128
    %v2298 = vadd.f32 %v2054, %v2130
    %v2299 = vadd.f32 %v2055, %v2132
    %v2300 = vadd.f32 %v2056, %v2134
    %v2301 = vadd.f32 %v2057, %v2136
    %v2302 = vadd.f32 %v2058, %v2138
    %v2303 = vadd.f32 %v2059, %v2140
    %v2304 = vadd.f32 %v2060, %v2142
    %v2305 = vadd.f32 %v2061, %v2144
    %v2306 = vadd.f32 %v2062, %v2146
    %v2307 = vadd.f32 %v2063, %v2148
    %v2308 = vadd.f32 %v2064, %v2150
    %v2309 = vadd.f32 %v2065, %v2152
    %v2310 = vadd.f32 %v2066, %v2154
    %v2311 = vadd.f32 %v2067, %v2156
    %v2312 = vadd.f32 %v2068, %v2158
    %v2313 = vadd.f32 %v2069, %v2160
    %v2314 = vadd.f32 %v2070, %v2162
    %v2315 = vadd.f32 %v2071, %v2164
    %v2316 = vadd.f32 %v2072, %v2166
    %v2317 = vadd.f32 %v2073, %v2168
    %v2318 = vadd.f32 %v2074, %v2170
    %v2319 = vadd.f32 %v2075, %v2172
    %v2320 = vadd.f32 %v2076, %v2174
    %v2321 = vadd.f32 %v2077, %v2176
    %v2322 = vadd.f32 %v2078, %v2178
    %v2323 = vadd.f32 %v2079, %v2180
    %v2324 = vadd.f32 %v2080, %v2182
    %v2325 = vadd.f32 %v2081, %v2184
    %v2326 = vadd.f32 %v2082, %v2186
    %v2327 = vadd.f32 %v2083, %v2188
    %v2328 = vadd.f32 %v2084, %v2190
    %v2329 = vadd.f32 %v2085, %v2192
    %v2330 = vadd.f32 %v2086, %v2194
    %v2331 = vadd.f32 %v2087, %v2196
    %v2332 = vadd.f32 %v2088, %v2198
    %v2333 = vadd.f32 %v2089, %v2200
    %v2334 = vadd.f32 %v2090, %v2202
    %v2335 = vadd.f32 %v2091, %v2204
    %v2336 = vadd.f32 %v2092, %v2206
    %v2337 = vadd.f32 %v2093, %v2208
    %v2338 = vadd.f32 %v2094, %v2210
    %v2339 = vadd.f32 %v2095, %v2212
    %v2340 = vadd.f32 %v2096, %v2214
    %v2341 = vadd.f32 %v2097, %v2216
    %v2342 = vadd.f32 %v2098, %v2218
    %v2343 = vadd.f32 %v2099, %v2220
    %v2344 = vadd.f32 %v2100, %v2222
    %v2345 = vadd.f32 %v2101, %v2224
    %v2346 = vadd.f32 %v2102, %v2226
    %2349 = vrot.lane.b32.xlu0 %v539, 32
    %v2350 = vpop.permute.xlu0 %2349
    %2351 = vrot.lane.b32.xlu0 %v543, 32
    %v2352 = vpop.permute.xlu0 %2351
    %2353 = vrot.lane.b32.xlu0 %v549, 32
    %v2354 = vpop.permute.xlu0 %2353
    %2355 = vrot.lane.b32.xlu0 %v553, 32
    %v2356 = vpop.permute.xlu0 %2355
    %2357 = vrot.lane.b32.xlu0 %v559, 32
    %v2358 = vpop.permute.xlu0 %2357
    %2359 = vrot.lane.b32.xlu0 %v563, 32
    %v2360 = vpop.permute.xlu0 %2359
    %2361 = vrot.lane.b32.xlu0 %v569, 32
    %v2362 = vpop.permute.xlu0 %2361
    %2363 = vrot.lane.b32.xlu0 %v573, 32
    %v2364 = vpop.permute.xlu0 %2363
    %2365 = vrot.lane.b32.xlu0 %v579, 32
    %v2366 = vpop.permute.xlu0 %2365
    %2367 = vrot.lane.b32.xlu0 %v583, 32
    %v2368 = vpop.permute.xlu0 %2367
    %2369 = vrot.lane.b32.xlu0 %v589, 32
    %v2370 = vpop.permute.xlu0 %2369
    %2371 = vrot.lane.b32.xlu0 %v593, 32
    %v2372 = vpop.permute.xlu0 %2371
    %2373 = vrot.lane.b32.xlu0 %v599, 32
    %v2374 = vpop.permute.xlu0 %2373
    %2375 = vrot.lane.b32.xlu0 %v603, 32
    %v2376 = vpop.permute.xlu0 %2375
    %2377 = vrot.lane.b32.xlu0 %v609, 32
    %v2378 = vpop.permute.xlu0 %2377
    %2379 = vrot.lane.b32.xlu0 %v613, 32
    %v2380 = vpop.permute.xlu0 %2379
    %2381 = vrot.lane.b32.xlu0 %v619, 32
    %v2382 = vpop.permute.xlu0 %2381
    %2383 = vrot.lane.b32.xlu0 %v623, 32
    %v2384 = vpop.permute.xlu0 %2383
    %2385 = vrot.lane.b32.xlu0 %v629, 32
    %v2386 = vpop.permute.xlu0 %2385
    %2387 = vrot.lane.b32.xlu0 %v633, 32
    %v2388 = vpop.permute.xlu0 %2387
    %2389 = vrot.lane.b32.xlu0 %v639, 32
    %v2390 = vpop.permute.xlu0 %2389
    %2391 = vrot.lane.b32.xlu0 %v643, 32
    %v2392 = vpop.permute.xlu0 %2391
    %2393 = vrot.lane.b32.xlu0 %v649, 32
    %v2394 = vpop.permute.xlu0 %2393
    %2395 = vrot.lane.b32.xlu0 %v653, 32
    %v2396 = vpop.permute.xlu0 %2395
    %2397 = vrot.lane.b32.xlu0 %v659, 32
    %v2398 = vpop.permute.xlu0 %2397
    %2399 = vrot.lane.b32.xlu0 %v663, 32
    %v2400 = vpop.permute.xlu0 %2399
    %2401 = vrot.lane.b32.xlu0 %v669, 32
    %v2402 = vpop.permute.xlu0 %2401
    %2403 = vrot.lane.b32.xlu0 %v673, 32
    %v2404 = vpop.permute.xlu0 %2403
    %2405 = vrot.lane.b32.xlu0 %v679, 32
    %v2406 = vpop.permute.xlu0 %2405
    %2407 = vrot.lane.b32.xlu0 %v683, 32
    %v2408 = vpop.permute.xlu0 %2407
    %2409 = vrot.lane.b32.xlu0 %v689, 32
    %v2410 = vpop.permute.xlu0 %2409
    %2411 = vrot.lane.b32.xlu0 %v693, 32
    %v2412 = vpop.permute.xlu0 %2411
    %2413 = vrot.lane.b32.xlu0 %v699, 32
    %v2414 = vpop.permute.xlu0 %2413
    %2415 = vrot.lane.b32.xlu0 %v703, 32
    %v2416 = vpop.permute.xlu0 %2415
    %2417 = vrot.lane.b32.xlu0 %v709, 32
    %v2418 = vpop.permute.xlu0 %2417
    %2419 = vrot.lane.b32.xlu0 %v713, 32
    %v2420 = vpop.permute.xlu0 %2419
    %2421 = vrot.lane.b32.xlu0 %v719, 32
    %v2422 = vpop.permute.xlu0 %2421
    %2423 = vrot.lane.b32.xlu0 %v723, 32
    %v2424 = vpop.permute.xlu0 %2423
    %2425 = vrot.lane.b32.xlu0 %v729, 32
    %v2426 = vpop.permute.xlu0 %2425
    %2427 = vrot.lane.b32.xlu0 %v733, 32
    %v2428 = vpop.permute.xlu0 %2427
    %2429 = vrot.lane.b32.xlu0 %v739, 32
    %v2430 = vpop.permute.xlu0 %2429
    %2431 = vrot.lane.b32.xlu0 %v743, 32
    %v2432 = vpop.permute.xlu0 %2431
    %2433 = vrot.lane.b32.xlu0 %v749, 32
    %v2434 = vpop.permute.xlu0 %2433
    %2435 = vrot.lane.b32.xlu0 %v753, 32
    %v2436 = vpop.permute.xlu0 %2435
    %2437 = vrot.lane.b32.xlu0 %v759, 32
    %v2438 = vpop.permute.xlu0 %2437
    %2439 = vrot.lane.b32.xlu0 %v763, 32
    %v2440 = vpop.permute.xlu0 %2439
    %2441 = vrot.lane.b32.xlu0 %v769, 32
    %v2442 = vpop.permute.xlu0 %2441
    %2443 = vrot.lane.b32.xlu0 %v773, 32
    %v2444 = vpop.permute.xlu0 %2443
    %2445 = vrot.lane.b32.xlu0 %v779, 32
    %v2446 = vpop.permute.xlu0 %2445
    %2447 = vrot.lane.b32.xlu0 %v783, 32
    %v2448 = vpop.permute.xlu0 %2447
    %2449 = vrot.lane.b32.xlu0 %v789, 32
    %v2450 = vpop.permute.xlu0 %2449
    %2451 = vrot.lane.b32.xlu0 %v793, 32
    %v2452 = vpop.permute.xlu0 %2451
    %2453 = vrot.lane.b32.xlu0 %v799, 32
    %v2454 = vpop.permute.xlu0 %2453
    %2455 = vrot.lane.b32.xlu0 %v803, 32
    %v2456 = vpop.permute.xlu0 %2455
    %2457 = vrot.lane.b32.xlu0 %v809, 32
    %v2458 = vpop.permute.xlu0 %2457
    %2459 = vrot.lane.b32.xlu0 %v813, 32
    %v2460 = vpop.permute.xlu0 %2459
    %2461 = vrot.lane.b32.xlu0 %v819, 32
    %v2462 = vpop.permute.xlu0 %2461
    %2463 = vrot.lane.b32.xlu0 %v823, 32
    %v2464 = vpop.permute.xlu0 %2463
    %2465 = vrot.lane.b32.xlu0 %v829, 32
    %v2466 = vpop.permute.xlu0 %2465
    %2467 = vrot.lane.b32.xlu0 %v833, 32
    %v2468 = vpop.permute.xlu0 %2467
    %v2529 = vadd.f32 %v2287, %v2350
    %v2530 = vadd.f32 %v2288, %v2352
    %v2531 = vadd.f32 %v2289, %v2354
    %v2532 = vadd.f32 %v2290, %v2356
    %v2533 = vadd.f32 %v2291, %v2358
    %v2534 = vadd.f32 %v2292, %v2360
    %v2535 = vadd.f32 %v2293, %v2362
    %v2536 = vadd.f32 %v2294, %v2364
    %v2537 = vadd.f32 %v2295, %v2366
    %v2538 = vadd.f32 %v2296, %v2368
    %v2539 = vadd.f32 %v2297, %v2370
    %v2540 = vadd.f32 %v2298, %v2372
    %v2541 = vadd.f32 %v2299, %v2374
    %v2542 = vadd.f32 %v2300, %v2376
    %v2543 = vadd.f32 %v2301, %v2378
    %v2544 = vadd.f32 %v2302, %v2380
    %v2545 = vadd.f32 %v2303, %v2382
    %v2546 = vadd.f32 %v2304, %v2384
    %v2547 = vadd.f32 %v2305, %v2386
    %v2548 = vadd.f32 %v2306, %v2388
    %v2549 = vadd.f32 %v2307, %v2390
    %v2550 = vadd.f32 %v2308, %v2392
    %v2551 = vadd.f32 %v2309, %v2394
    %v2552 = vadd.f32 %v2310, %v2396
    %v2553 = vadd.f32 %v2311, %v2398
    %v2554 = vadd.f32 %v2312, %v2400
    %v2555 = vadd.f32 %v2313, %v2402
    %v2556 = vadd.f32 %v2314, %v2404
    %v2557 = vadd.f32 %v2315, %v2406
    %v2558 = vadd.f32 %v2316, %v2408
    %v2559 = vadd.f32 %v2317, %v2410
    %v2560 = vadd.f32 %v2318, %v2412
    %v2561 = vadd.f32 %v2319, %v2414
    %v2562 = vadd.f32 %v2320, %v2416
    %v2563 = vadd.f32 %v2321, %v2418
    %v2564 = vadd.f32 %v2322, %v2420
    %v2565 = vadd.f32 %v2323, %v2422
    %v2566 = vadd.f32 %v2324, %v2424
    %v2567 = vadd.f32 %v2325, %v2426
    %v2568 = vadd.f32 %v2326, %v2428
    %v2569 = vadd.f32 %v2327, %v2430
    %v2570 = vadd.f32 %v2328, %v2432
    %v2571 = vadd.f32 %v2329, %v2434
    %v2572 = vadd.f32 %v2330, %v2436
    %v2573 = vadd.f32 %v2331, %v2438
    %v2574 = vadd.f32 %v2332, %v2440
    %v2575 = vadd.f32 %v2333, %v2442
    %v2576 = vadd.f32 %v2334, %v2444
    %v2577 = vadd.f32 %v2335, %v2446
    %v2578 = vadd.f32 %v2336, %v2448
    %v2579 = vadd.f32 %v2337, %v2450
    %v2580 = vadd.f32 %v2338, %v2452
    %v2581 = vadd.f32 %v2339, %v2454
    %v2582 = vadd.f32 %v2340, %v2456
    %v2583 = vadd.f32 %v2341, %v2458
    %v2584 = vadd.f32 %v2342, %v2460
    %v2585 = vadd.f32 %v2343, %v2462
    %v2586 = vadd.f32 %v2344, %v2464
    %v2587 = vadd.f32 %v2345, %v2466
    %v2588 = vadd.f32 %v2346, %v2468
    %v2589 = vrot.slane %v829, 1
    %v2590 = vsel %vm897, %v1861, %v2589
    %v2591 = vrot.slane %v833, 1
    %v2592 = vsel %vm897, %v2589, %v2591
    %2593 = vrot.lane.b32.xlu0 %v908, 16
    %v2594 = vpop.permute.xlu0 %2593
    %2595 = vrot.lane.b32.xlu0 %v910, 16
    %v2596 = vpop.permute.xlu0 %2595
    %2597 = vrot.lane.b32.xlu0 %v912, 16
    %v2598 = vpop.permute.xlu0 %2597
    %2599 = vrot.lane.b32.xlu0 %v914, 16
    %v2600 = vpop.permute.xlu0 %2599
    %2601 = vrot.lane.b32.xlu0 %v916, 16
    %v2602 = vpop.permute.xlu0 %2601
    %2603 = vrot.lane.b32.xlu0 %v918, 16
    %v2604 = vpop.permute.xlu0 %2603
    %2605 = vrot.lane.b32.xlu0 %v920, 16
    %v2606 = vpop.permute.xlu0 %2605
    %2607 = vrot.lane.b32.xlu0 %v922, 16
    %v2608 = vpop.permute.xlu0 %2607
    %2609 = vrot.lane.b32.xlu0 %v924, 16
    %v2610 = vpop.permute.xlu0 %2609
    %2611 = vrot.lane.b32.xlu0 %v926, 16
    %v2612 = vpop.permute.xlu0 %2611
    %2613 = vrot.lane.b32.xlu0 %v928, 16
    %v2614 = vpop.permute.xlu0 %2613
    %2615 = vrot.lane.b32.xlu0 %v930, 16
    %v2616 = vpop.permute.xlu0 %2615
    %2617 = vrot.lane.b32.xlu0 %v932, 16
    %v2618 = vpop.permute.xlu0 %2617
    %2619 = vrot.lane.b32.xlu0 %v934, 16
    %v2620 = vpop.permute.xlu0 %2619
    %2621 = vrot.lane.b32.xlu0 %v936, 16
    %v2622 = vpop.permute.xlu0 %2621
    %2623 = vrot.lane.b32.xlu0 %v938, 16
    %v2624 = vpop.permute.xlu0 %2623
    %2625 = vrot.lane.b32.xlu0 %v940, 16
    %v2626 = vpop.permute.xlu0 %2625
    %2627 = vrot.lane.b32.xlu0 %v942, 16
    %v2628 = vpop.permute.xlu0 %2627
    %2629 = vrot.lane.b32.xlu0 %v944, 16
    %v2630 = vpop.permute.xlu0 %2629
    %2631 = vrot.lane.b32.xlu0 %v946, 16
    %v2632 = vpop.permute.xlu0 %2631
    %2633 = vrot.lane.b32.xlu0 %v948, 16
    %v2634 = vpop.permute.xlu0 %2633
    %2635 = vrot.lane.b32.xlu0 %v950, 16
    %v2636 = vpop.permute.xlu0 %2635
    %2637 = vrot.lane.b32.xlu0 %v952, 16
    %v2638 = vpop.permute.xlu0 %2637
    %2639 = vrot.lane.b32.xlu0 %v954, 16
    %v2640 = vpop.permute.xlu0 %2639
    %2641 = vrot.lane.b32.xlu0 %v956, 16
    %v2642 = vpop.permute.xlu0 %2641
    %2643 = vrot.lane.b32.xlu0 %v958, 16
    %v2644 = vpop.permute.xlu0 %2643
    %2645 = vrot.lane.b32.xlu0 %v960, 16
    %v2646 = vpop.permute.xlu0 %2645
    %2647 = vrot.lane.b32.xlu0 %v962, 16
    %v2648 = vpop.permute.xlu0 %2647
    %2649 = vrot.lane.b32.xlu0 %v964, 16
    %v2650 = vpop.permute.xlu0 %2649
    %2651 = vrot.lane.b32.xlu0 %v966, 16
    %v2652 = vpop.permute.xlu0 %2651
    %2653 = vrot.lane.b32.xlu0 %v968, 16
    %v2654 = vpop.permute.xlu0 %2653
    %2655 = vrot.lane.b32.xlu0 %v970, 16
    %v2656 = vpop.permute.xlu0 %2655
    %2657 = vrot.lane.b32.xlu0 %v972, 16
    %v2658 = vpop.permute.xlu0 %2657
    %2659 = vrot.lane.b32.xlu0 %v974, 16
    %v2660 = vpop.permute.xlu0 %2659
    %2661 = vrot.lane.b32.xlu0 %v976, 16
    %v2662 = vpop.permute.xlu0 %2661
    %2663 = vrot.lane.b32.xlu0 %v978, 16
    %v2664 = vpop.permute.xlu0 %2663
    %2665 = vrot.lane.b32.xlu0 %v980, 16
    %v2666 = vpop.permute.xlu0 %2665
    %2667 = vrot.lane.b32.xlu0 %v982, 16
    %v2668 = vpop.permute.xlu0 %2667
    %2669 = vrot.lane.b32.xlu0 %v984, 16
    %v2670 = vpop.permute.xlu0 %2669
    %2671 = vrot.lane.b32.xlu0 %v986, 16
    %v2672 = vpop.permute.xlu0 %2671
    %2673 = vrot.lane.b32.xlu0 %v988, 16
    %v2674 = vpop.permute.xlu0 %2673
    %2675 = vrot.lane.b32.xlu0 %v990, 16
    %v2676 = vpop.permute.xlu0 %2675
    %2677 = vrot.lane.b32.xlu0 %v992, 16
    %v2678 = vpop.permute.xlu0 %2677
    %2679 = vrot.lane.b32.xlu0 %v994, 16
    %v2680 = vpop.permute.xlu0 %2679
    %2681 = vrot.lane.b32.xlu0 %v996, 16
    %v2682 = vpop.permute.xlu0 %2681
    %2683 = vrot.lane.b32.xlu0 %v998, 16
    %v2684 = vpop.permute.xlu0 %2683
    %2685 = vrot.lane.b32.xlu0 %v1000, 16
    %v2686 = vpop.permute.xlu0 %2685
    %2687 = vrot.lane.b32.xlu0 %v1002, 16
    %v2688 = vpop.permute.xlu0 %2687
    %2689 = vrot.lane.b32.xlu0 %v1004, 16
    %v2690 = vpop.permute.xlu0 %2689
    %2691 = vrot.lane.b32.xlu0 %v1006, 16
    %v2692 = vpop.permute.xlu0 %2691
    %2693 = vrot.lane.b32.xlu0 %v1008, 16
    %v2694 = vpop.permute.xlu0 %2693
    %2695 = vrot.lane.b32.xlu0 %v1010, 16
    %v2696 = vpop.permute.xlu0 %2695
    %2697 = vrot.lane.b32.xlu0 %v1012, 16
    %v2698 = vpop.permute.xlu0 %2697
    %2699 = vrot.lane.b32.xlu0 %v1014, 16
    %v2700 = vpop.permute.xlu0 %2699
    %2701 = vrot.lane.b32.xlu0 %v1016, 16
    %v2702 = vpop.permute.xlu0 %2701
    %2703 = vrot.lane.b32.xlu0 %v1860, 16
    %v2704 = vpop.permute.xlu0 %2703
    %2705 = vrot.lane.b32.xlu0 %v1862, 16
    %v2706 = vpop.permute.xlu0 %2705
    %2707 = vrot.lane.b32.xlu0 %v2590, 16
    %v2708 = vpop.permute.xlu0 %2707
    %2709 = vrot.lane.b32.xlu0 %v2592, 16
    %v2710 = vpop.permute.xlu0 %2709
    %2711 = vrot.lane.b32.xlu0 %v2591, 16
    %v2712 = vpop.permute.xlu0 %2711
    %v2773 = vadd.f32 %v2529, %v2594
    %v2774 = vadd.f32 %v2530, %v2596
    %v2775 = vadd.f32 %v2531, %v2598
    %v2776 = vadd.f32 %v2532, %v2600
    %v2777 = vadd.f32 %v2533, %v2602
    %v2778 = vadd.f32 %v2534, %v2604
    %v2779 = vadd.f32 %v2535, %v2606
    %v2780 = vadd.f32 %v2536, %v2608
    %v2781 = vadd.f32 %v2537, %v2610
    %v2782 = vadd.f32 %v2538, %v2612
    %v2783 = vadd.f32 %v2539, %v2614
    %v2784 = vadd.f32 %v2540, %v2616
    %v2785 = vadd.f32 %v2541, %v2618
    %v2786 = vadd.f32 %v2542, %v2620
    %v2787 = vadd.f32 %v2543, %v2622
    %v2788 = vadd.f32 %v2544, %v2624
    %v2789 = vadd.f32 %v2545, %v2626
    %v2790 = vadd.f32 %v2546, %v2628
    %v2791 = vadd.f32 %v2547, %v2630
    %v2792 = vadd.f32 %v2548, %v2632
    %v2793 = vadd.f32 %v2549, %v2634
    %v2794 = vadd.f32 %v2550, %v2636
    %v2795 = vadd.f32 %v2551, %v2638
    %v2796 = vadd.f32 %v2552, %v2640
    %v2797 = vadd.f32 %v2553, %v2642
    %v2798 = vadd.f32 %v2554, %v2644
    %v2799 = vadd.f32 %v2555, %v2646
    %v2800 = vadd.f32 %v2556, %v2648
    %v2801 = vadd.f32 %v2557, %v2650
    %v2802 = vadd.f32 %v2558, %v2652
    %v2803 = vadd.f32 %v2559, %v2654
    %v2804 = vadd.f32 %v2560, %v2656
    %v2805 = vadd.f32 %v2561, %v2658
    %v2806 = vadd.f32 %v2562, %v2660
    %v2807 = vadd.f32 %v2563, %v2662
    %v2808 = vadd.f32 %v2564, %v2664
    %v2809 = vadd.f32 %v2565, %v2666
    %v2810 = vadd.f32 %v2566, %v2668
    %v2811 = vadd.f32 %v2567, %v2670
    %v2812 = vadd.f32 %v2568, %v2672
    %v2813 = vadd.f32 %v2569, %v2674
    %v2814 = vadd.f32 %v2570, %v2676
    %v2815 = vadd.f32 %v2571, %v2678
    %v2816 = vadd.f32 %v2572, %v2680
    %v2817 = vadd.f32 %v2573, %v2682
    %v2818 = vadd.f32 %v2574, %v2684
    %v2819 = vadd.f32 %v2575, %v2686
    %v2820 = vadd.f32 %v2576, %v2688
    %v2821 = vadd.f32 %v2577, %v2690
    %v2822 = vadd.f32 %v2578, %v2692
    %v2823 = vadd.f32 %v2579, %v2694
    %v2824 = vadd.f32 %v2580, %v2696
    %v2825 = vadd.f32 %v2581, %v2698
    %v2826 = vadd.f32 %v2582, %v2700
    %v2827 = vadd.f32 %v2583, %v2702
    %v2828 = vadd.f32 %v2584, %v2704
    %v2829 = vadd.f32 %v2585, %v2706
    %v2830 = vadd.f32 %v2586, %v2708
    %v2831 = vadd.f32 %v2587, %v2710
    %v2832 = vadd.f32 %v2588, %v2712
    %v2893 = vrot.slane %v541, 2
    %v2894 = vrot.slane %v545, 2
    %v2895 = vsel %vm1257, %v2893, %v2894
    %v2896 = vrot.slane %v551, 2
    %v2897 = vsel %vm1257, %v2894, %v2896
    %v2898 = vrot.slane %v555, 2
    %v2899 = vsel %vm1257, %v2896, %v2898
    %v2900 = vrot.slane %v561, 2
    %v2901 = vsel %vm1257, %v2898, %v2900
    %v2902 = vrot.slane %v565, 2
    %v2903 = vsel %vm1257, %v2900, %v2902
    %v2904 = vrot.slane %v571, 2
    %v2905 = vsel %vm1257, %v2902, %v2904
    %v2906 = vrot.slane %v575, 2
    %v2907 = vsel %vm1257, %v2904, %v2906
    %v2908 = vrot.slane %v581, 2
    %v2909 = vsel %vm1257, %v2906, %v2908
    %v2910 = vrot.slane %v585, 2
    %v2911 = vsel %vm1257, %v2908, %v2910
    %v2912 = vrot.slane %v591, 2
    %v2913 = vsel %vm1257, %v2910, %v2912
    %v2914 = vrot.slane %v595, 2
    %v2915 = vsel %vm1257, %v2912, %v2914
    %v2916 = vrot.slane %v601, 2
    %v2917 = vsel %vm1257, %v2914, %v2916
    %v2918 = vrot.slane %v605, 2
    %v2919 = vsel %vm1257, %v2916, %v2918
    %v2920 = vrot.slane %v611, 2
    %v2921 = vsel %vm1257, %v2918, %v2920
    %v2922 = vrot.slane %v615, 2
    %v2923 = vsel %vm1257, %v2920, %v2922
    %v2924 = vrot.slane %v621, 2
    %v2925 = vsel %vm1257, %v2922, %v2924
    %v2926 = vrot.slane %v625, 2
    %v2927 = vsel %vm1257, %v2924, %v2926
    %v2928 = vrot.slane %v631, 2
    %v2929 = vsel %vm1257, %v2926, %v2928
    %v2930 = vrot.slane %v635, 2
    %v2931 = vsel %vm1257, %v2928, %v2930
    %v2932 = vrot.slane %v641, 2
    %v2933 = vsel %vm1257, %v2930, %v2932
    %v2934 = vrot.slane %v645, 2
    %v2935 = vsel %vm1257, %v2932, %v2934
    %v2936 = vrot.slane %v651, 2
    %v2937 = vsel %vm1257, %v2934, %v2936
    %v2938 = vrot.slane %v655, 2
    %v2939 = vsel %vm1257, %v2936, %v2938
    %v2940 = vrot.slane %v661, 2
    %v2941 = vsel %vm1257, %v2938, %v2940
    %v2942 = vrot.slane %v665, 2
    %v2943 = vsel %vm1257, %v2940, %v2942
    %v2944 = vrot.slane %v671, 2
    %v2945 = vsel %vm1257, %v2942, %v2944
    %v2946 = vrot.slane %v675, 2
    %v2947 = vsel %vm1257, %v2944, %v2946
    %v2948 = vrot.slane %v681, 2
    %v2949 = vsel %vm1257, %v2946, %v2948
    %v2950 = vrot.slane %v685, 2
    %v2951 = vsel %vm1257, %v2948, %v2950
    %v2952 = vrot.slane %v691, 2
    %v2953 = vsel %vm1257, %v2950, %v2952
    %v2954 = vrot.slane %v695, 2
    %v2955 = vsel %vm1257, %v2952, %v2954
    %v2956 = vrot.slane %v701, 2
    %v2957 = vsel %vm1257, %v2954, %v2956
    %v2958 = vrot.slane %v705, 2
    %v2959 = vsel %vm1257, %v2956, %v2958
    %v2960 = vrot.slane %v711, 2
    %v2961 = vsel %vm1257, %v2958, %v2960
    %v2962 = vrot.slane %v715, 2
    %v2963 = vsel %vm1257, %v2960, %v2962
    %v2964 = vrot.slane %v721, 2
    %v2965 = vsel %vm1257, %v2962, %v2964
    %v2966 = vrot.slane %v725, 2
    %v2967 = vsel %vm1257, %v2964, %v2966
    %v2968 = vrot.slane %v731, 2
    %v2969 = vsel %vm1257, %v2966, %v2968
    %v2970 = vrot.slane %v735, 2
    %v2971 = vsel %vm1257, %v2968, %v2970
    %v2972 = vrot.slane %v741, 2
    %v2973 = vsel %vm1257, %v2970, %v2972
    %v2974 = vrot.slane %v745, 2
    %v2975 = vsel %vm1257, %v2972, %v2974
    %v2976 = vrot.slane %v751, 2
    %v2977 = vsel %vm1257, %v2974, %v2976
    %v2978 = vrot.slane %v755, 2
    %v2979 = vsel %vm1257, %v2976, %v2978
    %v2980 = vrot.slane %v761, 2
    %v2981 = vsel %vm1257, %v2978, %v2980
    %v2982 = vrot.slane %v765, 2
    %v2983 = vsel %vm1257, %v2980, %v2982
    %v2984 = vrot.slane %v771, 2
    %v2985 = vsel %vm1257, %v2982, %v2984
    %v2986 = vrot.slane %v775, 2
    %v2987 = vsel %vm1257, %v2984, %v2986
    %v2988 = vrot.slane %v781, 2
    %v2989 = vsel %vm1257, %v2986, %v2988
    %v2990 = vrot.slane %v785, 2
    %v2991 = vsel %vm1257, %v2988, %v2990
    %v2992 = vrot.slane %v791, 2
    %v2993 = vsel %vm1257, %v2990, %v2992
    %v2994 = vrot.slane %v795, 2
    %v2995 = vsel %vm1257, %v2992, %v2994
    %v2996 = vrot.slane %v801, 2
    %v2997 = vsel %vm1257, %v2994, %v2996
    %v2998 = vrot.slane %v805, 2
    %v2999 = vsel %vm1257, %v2996, %v2998
    %v3000 = vrot.slane %v811, 2
    %v3001 = vsel %vm1257, %v2998, %v3000
    %v3002 = vrot.slane %v815, 2
    %v3003 = vsel %vm1257, %v3000, %v3002
    %v3004 = vrot.slane %v821, 2
    %v3005 = vsel %vm1257, %v3002, %v3004
    %v3006 = vrot.slane %v825, 2
    %v3007 = vsel %vm1257, %v3004, %v3006
    %v3008 = vrot.slane %v831, 2
    %v3009 = vsel %vm1257, %v3006, %v3008
    %v3010 = vrot.slane %v835, 2
    %v3011 = vsel %vm1257, %v3008, %v3010
    %v3072 = vadd.f32 %v2773, %v2895
    %v3073 = vadd.f32 %v2774, %v2897
    %v3074 = vadd.f32 %v2775, %v2899
    %v3075 = vadd.f32 %v2776, %v2901
    %v3076 = vadd.f32 %v2777, %v2903
    %v3077 = vadd.f32 %v2778, %v2905
    %v3078 = vadd.f32 %v2779, %v2907
    %v3079 = vadd.f32 %v2780, %v2909
    %v3080 = vadd.f32 %v2781, %v2911
    %v3081 = vadd.f32 %v2782, %v2913
    %v3082 = vadd.f32 %v2783, %v2915
    %v3083 = vadd.f32 %v2784, %v2917
    %v3084 = vadd.f32 %v2785, %v2919
    %v3085 = vadd.f32 %v2786, %v2921
    %v3086 = vadd.f32 %v2787, %v2923
    %v3087 = vadd.f32 %v2788, %v2925
    %v3088 = vadd.f32 %v2789, %v2927
    %v3089 = vadd.f32 %v2790, %v2929
    %v3090 = vadd.f32 %v2791, %v2931
    %v3091 = vadd.f32 %v2792, %v2933
    %v3092 = vadd.f32 %v2793, %v2935
    %v3093 = vadd.f32 %v2794, %v2937
    %v3094 = vadd.f32 %v2795, %v2939
    %v3095 = vadd.f32 %v2796, %v2941
    %v3096 = vadd.f32 %v2797, %v2943
    %v3097 = vadd.f32 %v2798, %v2945
    %v3098 = vadd.f32 %v2799, %v2947
    %v3099 = vadd.f32 %v2800, %v2949
    %v3100 = vadd.f32 %v2801, %v2951
    %v3101 = vadd.f32 %v2802, %v2953
    %v3102 = vadd.f32 %v2803, %v2955
    %v3103 = vadd.f32 %v2804, %v2957
    %v3104 = vadd.f32 %v2805, %v2959
    %v3105 = vadd.f32 %v2806, %v2961
    %v3106 = vadd.f32 %v2807, %v2963
    %v3107 = vadd.f32 %v2808, %v2965
    %v3108 = vadd.f32 %v2809, %v2967
    %v3109 = vadd.f32 %v2810, %v2969
    %v3110 = vadd.f32 %v2811, %v2971
    %v3111 = vadd.f32 %v2812, %v2973
    %v3112 = vadd.f32 %v2813, %v2975
    %v3113 = vadd.f32 %v2814, %v2977
    %v3114 = vadd.f32 %v2815, %v2979
    %v3115 = vadd.f32 %v2816, %v2981
    %v3116 = vadd.f32 %v2817, %v2983
    %v3117 = vadd.f32 %v2818, %v2985
    %v3118 = vadd.f32 %v2819, %v2987
    %v3119 = vadd.f32 %v2820, %v2989
    %v3120 = vadd.f32 %v2821, %v2991
    %v3121 = vadd.f32 %v2822, %v2993
    %v3122 = vadd.f32 %v2823, %v2995
    %v3123 = vadd.f32 %v2824, %v2997
    %v3124 = vadd.f32 %v2825, %v2999
    %v3125 = vadd.f32 %v2826, %v3001
    %v3126 = vadd.f32 %v2827, %v3003
    %v3127 = vadd.f32 %v2828, %v3005
    %v3128 = vadd.f32 %v2829, %v3007
    %v3129 = vadd.f32 %v2830, %v3009
    %v3130 = vadd.f32 %v2831, %v3011
    %v3131 = vadd.f32 %v2832, %v3010
    %v3132 = vld [vmem:[#allocation5] sm:$0x1]
    %v3134 = vlaneseq
    %v3135 = vshrl.u32 %v3134, 7
    %v3136 = vsub.s32 0, %v3135
    %v3137 = vrot.slane %v3132, %v3136
    %v3139 = vadd.f32 %v3072, %v3137
    %v3140 = vadd.f32 %v3073, %v3137
    %v3141 = vadd.f32 %v3074, %v3137
    %v3142 = vadd.f32 %v3075, %v3137
    %v3143 = vadd.f32 %v3076, %v3137
    %v3144 = vadd.f32 %v3077, %v3137
    %v3145 = vadd.f32 %v3078, %v3137
    %v3146 = vadd.f32 %v3079, %v3137
    %v3147 = vadd.f32 %v3080, %v3137
    %v3148 = vadd.f32 %v3081, %v3137
    %v3149 = vadd.f32 %v3082, %v3137
    %v3150 = vadd.f32 %v3083, %v3137
    %v3151 = vadd.f32 %v3084, %v3137
    %v3152 = vadd.f32 %v3085, %v3137
    %v3153 = vadd.f32 %v3086, %v3137
    %v3154 = vadd.f32 %v3087, %v3137
    %v3155 = vadd.f32 %v3088, %v3137
    %v3156 = vadd.f32 %v3089, %v3137
    %v3157 = vadd.f32 %v3090, %v3137
    %v3158 = vadd.f32 %v3091, %v3137
    %v3159 = vadd.f32 %v3092, %v3137
    %v3160 = vadd.f32 %v3093, %v3137
    %v3161 = vadd.f32 %v3094, %v3137
    %v3162 = vadd.f32 %v3095, %v3137
    %v3163 = vadd.f32 %v3096, %v3137
    %v3164 = vadd.f32 %v3097, %v3137
    %v3165 = vadd.f32 %v3098, %v3137
    %v3166 = vadd.f32 %v3099, %v3137
    %v3167 = vadd.f32 %v3100, %v3137
    %v3168 = vadd.f32 %v3101, %v3137
    %v3169 = vadd.f32 %v3102, %v3137
    %v3170 = vadd.f32 %v3103, %v3137
    %v3171 = vadd.f32 %v3104, %v3137
    %v3172 = vadd.f32 %v3105, %v3137
    %v3173 = vadd.f32 %v3106, %v3137
    %v3174 = vadd.f32 %v3107, %v3137
    %v3175 = vadd.f32 %v3108, %v3137
    %v3176 = vadd.f32 %v3109, %v3137
    %v3177 = vadd.f32 %v3110, %v3137
    %v3178 = vadd.f32 %v3111, %v3137
    %v3179 = vadd.f32 %v3112, %v3137
    %v3180 = vadd.f32 %v3113, %v3137
    %v3181 = vadd.f32 %v3114, %v3137
    %v3182 = vadd.f32 %v3115, %v3137
    %v3183 = vadd.f32 %v3116, %v3137
    %v3184 = vadd.f32 %v3117, %v3137
    %v3185 = vadd.f32 %v3118, %v3137
    %v3186 = vadd.f32 %v3119, %v3137
    %v3187 = vadd.f32 %v3120, %v3137
    %v3188 = vadd.f32 %v3121, %v3137
    %v3189 = vadd.f32 %v3122, %v3137
    %v3190 = vadd.f32 %v3123, %v3137
    %v3191 = vadd.f32 %v3124, %v3137
    %v3192 = vadd.f32 %v3125, %v3137
    %v3193 = vadd.f32 %v3126, %v3137
    %v3194 = vadd.f32 %v3127, %v3137
    %v3195 = vadd.f32 %v3128, %v3137
    %v3196 = vadd.f32 %v3129, %v3137
    %v3197 = vadd.f32 %v3130, %v3137
    %v3198 = vadd.f32 %v3131, %v3137
    %v3199 = vmax.f32 %v3139, 0.0
    %v3200 = vmax.f32 %v3140, 0.0
    %v3201 = vmax.f32 %v3141, 0.0
    %v3202 = vmax.f32 %v3142, 0.0
    %v3203 = vmax.f32 %v3143, 0.0
    %v3204 = vmax.f32 %v3144, 0.0
    %v3205 = vmax.f32 %v3145, 0.0
    %v3206 = vmax.f32 %v3146, 0.0
    %v3207 = vmax.f32 %v3147, 0.0
    %v3208 = vmax.f32 %v3148, 0.0
    %v3209 = vmax.f32 %v3149, 0.0
    %v3210 = vmax.f32 %v3150, 0.0
    %v3211 = vmax.f32 %v3151, 0.0
    %v3212 = vmax.f32 %v3152, 0.0
    %v3213 = vmax.f32 %v3153, 0.0
    %v3214 = vmax.f32 %v3154, 0.0
    %v3215 = vmax.f32 %v3155, 0.0
    %v3216 = vmax.f32 %v3156, 0.0
    %v3217 = vmax.f32 %v3157, 0.0
    %v3218 = vmax.f32 %v3158, 0.0
    %v3219 = vmax.f32 %v3159, 0.0
    %v3220 = vmax.f32 %v3160, 0.0
    %v3221 = vmax.f32 %v3161, 0.0
    %v3222 = vmax.f32 %v3162, 0.0
    %v3223 = vmax.f32 %v3163, 0.0
    %v3224 = vmax.f32 %v3164, 0.0
    %v3225 = vmax.f32 %v3165, 0.0
    %v3226 = vmax.f32 %v3166, 0.0
    %v3227 = vmax.f32 %v3167, 0.0
    %v3228 = vmax.f32 %v3168, 0.0
    %v3229 = vmax.f32 %v3169, 0.0
    %v3230 = vmax.f32 %v3170, 0.0
    %v3231 = vmax.f32 %v3171, 0.0
    %v3232 = vmax.f32 %v3172, 0.0
    %v3233 = vmax.f32 %v3173, 0.0
    %v3234 = vmax.f32 %v3174, 0.0
    %v3235 = vmax.f32 %v3175, 0.0
    %v3236 = vmax.f32 %v3176, 0.0
    %v3237 = vmax.f32 %v3177, 0.0
    %v3238 = vmax.f32 %v3178, 0.0
    %v3239 = vmax.f32 %v3179, 0.0
    %v3240 = vmax.f32 %v3180, 0.0
    %v3241 = vmax.f32 %v3181, 0.0
    %v3242 = vmax.f32 %v3182, 0.0
    %v3243 = vmax.f32 %v3183, 0.0
    %v3244 = vmax.f32 %v3184, 0.0
    %v3245 = vmax.f32 %v3185, 0.0
    %v3246 = vmax.f32 %v3186, 0.0
    %v3247 = vmax.f32 %v3187, 0.0
    %v3248 = vmax.f32 %v3188, 0.0
    %v3249 = vmax.f32 %v3189, 0.0
    %v3250 = vmax.f32 %v3190, 0.0
    %v3251 = vmax.f32 %v3191, 0.0
    %v3252 = vmax.f32 %v3192, 0.0
    %v3253 = vmax.f32 %v3193, 0.0
    %v3254 = vmax.f32 %v3194, 0.0
    %v3255 = vmax.f32 %v3195, 0.0
    %v3256 = vmax.f32 %v3196, 0.0
    %v3257 = vmax.f32 %v3197, 0.0
    %v3258 = vmax.f32 %v3198, 0.0
    %v3259 = vpack.c.bf16 %v3200, %v3199
    %v3260 = vpack.c.bf16 %v3202, %v3201
    %v3261 = vpack.c.bf16 %v3204, %v3203
    %v3262 = vpack.c.bf16 %v3206, %v3205
    %v3263 = vpack.c.bf16 %v3208, %v3207
    %v3264 = vpack.c.bf16 %v3210, %v3209
    %v3265 = vpack.c.bf16 %v3212, %v3211
    %v3266 = vpack.c.bf16 %v3214, %v3213
    %v3267 = vpack.c.bf16 %v3216, %v3215
    %v3268 = vpack.c.bf16 %v3218, %v3217
    %v3269 = vpack.c.bf16 %v3220, %v3219
    %v3270 = vpack.c.bf16 %v3222, %v3221
    %v3271 = vpack.c.bf16 %v3224, %v3223
    %v3272 = vpack.c.bf16 %v3226, %v3225
    %v3273 = vpack.c.bf16 %v3228, %v3227
    %v3274 = vpack.c.bf16 %v3230, %v3229
    %v3275 = vpack.c.bf16 %v3232, %v3231
    %v3276 = vpack.c.bf16 %v3234, %v3233
    %v3277 = vpack.c.bf16 %v3236, %v3235
    %v3278 = vpack.c.bf16 %v3238, %v3237
    %v3279 = vpack.c.bf16 %v3240, %v3239
    %v3280 = vpack.c.bf16 %v3242, %v3241
    %v3281 = vpack.c.bf16 %v3244, %v3243
    %v3282 = vpack.c.bf16 %v3246, %v3245
    %v3283 = vpack.c.bf16 %v3248, %v3247
    %v3284 = vpack.c.bf16 %v3250, %v3249
    %v3285 = vpack.c.bf16 %v3252, %v3251
    %v3286 = vpack.c.bf16 %v3254, %v3253
    %v3287 = vpack.c.bf16 %v3256, %v3255
    %v3288 = vpack.c.bf16 %v3258, %v3257
    %v3289 = vld [vmem:[#allocation7] sm:$0xff]
    %v3290 = vld [vmem:[#allocation7 + $0x8] sm:$0xf]
    %v3291 = vld [vmem:[#allocation7 + $0xc] sm:$0xff]
    %v3292 = vld [vmem:[#allocation7 + $0x14] sm:$0xf]
    %v3297 = vunpack.c.l.b16 %v3289
    %v3298 = vunpack.c.h.b16 %v3289
    %v3299 = vunpack.c.l.b16 %v3290
    %v3300 = vunpack.c.l.b16 %v3291
    %v3301 = vunpack.c.h.b16 %v3291
    %v3302 = vunpack.c.l.b16 %v3292
    %v3303 = vpack.c.b16 %v3300, %v3297
    %v3304 = vpack.c.b16 %v3301, %v3298
    %v3305 = vpack.c.b16 %v3302, %v3299
    %vm3309 = vcmask 130048
    %v3311 = vsel %vm3309, %v3259, 0
    %v3314 = vsel %vm3309, %v3260, 0
    %v3317 = vsel %vm3309, %v3261, 0
    %v3320 = vsel %vm3309, %v3262, 0
    %v3323 = vsel %vm3309, %v3263, 0
    %v3326 = vsel %vm3309, %v3264, 0
    %v3329 = vsel %vm3309, %v3265, 0
    %v3332 = vsel %vm3309, %v3266, 0
    %v3335 = vsel %vm3309, %v3267, 0
    %v3338 = vsel %vm3309, %v3268, 0
    %v3341 = vsel %vm3309, %v3269, 0
    %v3344 = vsel %vm3309, %v3270, 0
    %v3347 = vsel %vm3309, %v3271, 0
    %v3350 = vsel %vm3309, %v3272, 0
    %v3353 = vsel %vm3309, %v3273, 0
    %v3356 = vsel %vm3309, %v3274, 0
    %v3359 = vsel %vm3309, %v3275, 0
    %v3362 = vsel %vm3309, %v3276, 0
    %v3365 = vsel %vm3309, %v3277, 0
    %v3368 = vsel %vm3309, %v3278, 0
    %v3371 = vsel %vm3309, %v3279, 0
    %v3374 = vsel %vm3309, %v3280, 0
    %v3377 = vsel %vm3309, %v3281, 0
    %v3380 = vsel %vm3309, %v3282, 0
    %v3383 = vsel %vm3309, %v3283, 0
    %v3386 = vsel %vm3309, %v3284, 0
    %v3389 = vsel %vm3309, %v3285, 0
    %v3392 = vsel %vm3309, %v3286, 0
    %v3395 = vsel %vm3309, %v3287, 0
    %v3398 = vsel %vm3309, %v3288, 0
    %3400 = vmatprep.subr.bf16.mxu0 %v3304
    %3401 = vmatpush1.bf16.msra.mxu0 %v3303
    %3402 = vmatprep.subr.bf16.mxu0 0
    %3403 = vmatpush1.bf16.msra.mxu0 0
    %3404 = vmatprep.subr.bf16.mxu0 0
    %3405 = vmatpush1.bf16.msra.mxu0 0
    %3406 = vmatprep.subr.bf16.mxu0 0
    %3407 = vmatpush1.bf16.msra.mxu0 0
    %3408 = vmatprep.subr.bf16.mxu0 0
    %3409 = vmatpush1.bf16.msra.mxu0 0
    %3410 = vmatprep.subr.bf16.mxu0 0
    %3411 = vmatpush1.bf16.msra.mxu0 0
    %3412 = vmatprep.subr.bf16.mxu0 0
    %3413 = vmatpush1.bf16.msra.mxu0 0
    %3414 = vmatprep.subr.bf16.mxu0 0
    %3415 = vmatpush1.bf16.msra.mxu0 0
    %3416 = vmatprep.subr.bf16.mxu0 0
    %3417 = vmatpush1.bf16.msra.mxu0 0
    %3418 = vmatprep.subr.bf16.mxu0 0
    %3419 = vmatpush1.bf16.msra.mxu0 0
    %3420 = vmatprep.subr.bf16.mxu0 0
    %3421 = vmatpush1.bf16.msra.mxu0 0
    %3422 = vmatprep.subr.bf16.mxu0 0
    %3423 = vmatpush1.bf16.msra.mxu0 0
    %3424 = vmatprep.subr.bf16.mxu0 0
    %3425 = vmatpush1.bf16.msra.mxu0 0
    %3426 = vmatprep.subr.bf16.mxu0 0
    %3427 = vmatpush1.bf16.msra.mxu0 0
    %3428 = vmatprep.subr.bf16.mxu0 0
    %3429 = vmatpush1.bf16.msra.mxu0 0
    %3430 = vmatprep.subr.bf16.mxu0 0
    %3431 = vmatpush1.bf16.msra.mxu0 0
    %3432 = vmatprep.mubr.bf16.mxu0 0
    %3433 = vmatmul.mubr.bf16.gmra.mrb[0].mxu0 %v3311
    %v3434 = vpop.f32.mrb[0].mxu0
    %v3435 = vadd.f32 0.0, %v3434
    %v3436 = vpop.f32.mrb[0].mxu0
    %v3437 = vpop.f32.mrb[0].mxu0
    %v3438 = vadd.f32 0.0, %v3437
    %v3439 = vpop.f32.mrb[0].mxu0
    %3440 = vmatprep.mubr.bf16.mxu0 0
    %3441 = vmatmul.mubr.bf16.gmra.mrb[0].mxu0 %v3314
    %v3442 = vpop.f32.mrb[0].mxu0
    %v3443 = vadd.f32 0.0, %v3442
    %v3444 = vpop.f32.mrb[0].mxu0
    %v3445 = vadd.f32 0.0, %v3444
    %v3446 = vpop.f32.mrb[0].mxu0
    %v3447 = vadd.f32 0.0, %v3446
    %v3448 = vpop.f32.mrb[0].mxu0
    %v3449 = vadd.f32 0.0, %v3448
    %3450 = vmatprep.mubr.bf16.mxu0 0
    %3451 = vmatmul.mubr.bf16.gmra.mrb[0].mxu0 %v3317
    %v3452 = vpop.f32.mrb[0].mxu0
    %v3453 = vadd.f32 0.0, %v3452
    %v3454 = vpop.f32.mrb[0].mxu0
    %v3455 = vadd.f32 0.0, %v3454
    %v3456 = vpop.f32.mrb[0].mxu0
    %v3457 = vadd.f32 0.0, %v3456
    %v3458 = vpop.f32.mrb[0].mxu0
    %v3459 = vadd.f32 0.0, %v3458
    %3460 = vmatprep.mubr.bf16.mxu0 0
    %3461 = vmatmul.mubr.bf16.gmra.mrb[0].mxu0 %v3320
    %v3462 = vpop.f32.mrb[0].mxu0
    %v3463 = vadd.f32 0.0, %v3462
    %v3464 = vpop.f32.mrb[0].mxu0
    %v3465 = vadd.f32 0.0, %v3464
    %v3466 = vpop.f32.mrb[0].mxu0
    %v3467 = vadd.f32 0.0, %v3466
    %v3468 = vpop.f32.mrb[0].mxu0
    %v3469 = vadd.f32 0.0, %v3468
    %3470 = vmatprep.mubr.bf16.mxu0 0
    %3471 = vmatmul.mubr.bf16.gmra.mrb[0].mxu0 %v3323
    %v3472 = vpop.f32.mrb[0].mxu0
    %v3473 = vadd.f32 0.0, %v3472
    %v3474 = vpop.f32.mrb[0].mxu0
    %v3475 = vadd.f32 0.0, %v3474
    %v3476 = vpop.f32.mrb[0].mxu0
    %v3477 = vadd.f32 0.0, %v3476
    %v3478 = vpop.f32.mrb[0].mxu0
    %v3479 = vadd.f32 0.0, %v3478
    %3480 = vmatprep.mubr.bf16.mxu0 0
    %3481 = vmatmul.mubr.bf16.gmra.mrb[0].mxu0 %v3326
    %v3482 = vpop.f32.mrb[0].mxu0
    %v3483 = vadd.f32 0.0, %v3482
    %v3484 = vpop.f32.mrb[0].mxu0
    %v3485 = vadd.f32 0.0, %v3484
    %v3486 = vpop.f32.mrb[0].mxu0
    %v3487 = vadd.f32 0.0, %v3486
    %v3488 = vpop.f32.mrb[0].mxu0
    %v3489 = vadd.f32 0.0, %v3488
    %3490 = vmatprep.mubr.bf16.mxu0 0
    %3491 = vmatmul.mubr.bf16.gmra.mrb[0].mxu0 %v3329
    %v3492 = vpop.f32.mrb[0].mxu0
    %v3493 = vadd.f32 0.0, %v3492
    %v3494 = vpop.f32.mrb[0].mxu0
    %v3495 = vadd.f32 0.0, %v3494
    %v3496 = vpop.f32.mrb[0].mxu0
    %v3497 = vadd.f32 0.0, %v3496
    %v3498 = vpop.f32.mrb[0].mxu0
    %v3499 = vadd.f32 0.0, %v3498
    %3500 = vmatprep.mubr.bf16.mxu0 0
    %3501 = vmatmul.mubr.bf16.gmra.mrb[0].mxu0 %v3332
    %v3502 = vpop.f32.mrb[0].mxu0
    %v3503 = vadd.f32 0.0, %v3502
    %v3504 = vpop.f32.mrb[0].mxu0
    %v3505 = vadd.f32 0.0, %v3504
    %v3506 = vpop.f32.mrb[0].mxu0
    %v3507 = vadd.f32 0.0, %v3506
    %v3508 = vpop.f32.mrb[0].mxu0
    %v3509 = vadd.f32 0.0, %v3508
    %3510 = vmatprep.mubr.bf16.mxu0 0
    %3511 = vmatmul.mubr.bf16.gmra.mrb[0].mxu0 %v3335
    %v3512 = vpop.f32.mrb[0].mxu0
    %v3513 = vadd.f32 0.0, %v3512
    %v3514 = vpop.f32.mrb[0].mxu0
    %v3515 = vadd.f32 0.0, %v3514
    %v3516 = vpop.f32.mrb[0].mxu0
    %v3517 = vadd.f32 0.0, %v3516
    %v3518 = vpop.f32.mrb[0].mxu0
    %v3519 = vadd.f32 0.0, %v3518
    %3520 = vmatprep.mubr.bf16.mxu0 0
    %3521 = vmatmul.mubr.bf16.gmra.mrb[0].mxu0 %v3338
    %v3522 = vpop.f32.mrb[0].mxu0
    %v3523 = vadd.f32 0.0, %v3522
    %v3524 = vpop.f32.mrb[0].mxu0
    %v3525 = vadd.f32 0.0, %v3524
    %v3526 = vpop.f32.mrb[0].mxu0
    %v3527 = vadd.f32 0.0, %v3526
    %v3528 = vpop.f32.mrb[0].mxu0
    %v3529 = vadd.f32 0.0, %v3528
    %3530 = vmatprep.mubr.bf16.mxu0 0
    %3531 = vmatmul.mubr.bf16.gmra.mrb[0].mxu0 %v3341
    %v3532 = vpop.f32.mrb[0].mxu0
    %v3533 = vadd.f32 0.0, %v3532
    %v3534 = vpop.f32.mrb[0].mxu0
    %v3535 = vadd.f32 0.0, %v3534
    %v3536 = vpop.f32.mrb[0].mxu0
    %v3537 = vadd.f32 0.0, %v3536
    %v3538 = vpop.f32.mrb[0].mxu0
    %v3539 = vadd.f32 0.0, %v3538
    %3540 = vmatprep.mubr.bf16.mxu0 0
    %3541 = vmatmul.mubr.bf16.gmra.mrb[0].mxu0 %v3344
    %v3542 = vpop.f32.mrb[0].mxu0
    %v3543 = vadd.f32 0.0, %v3542
    %v3544 = vpop.f32.mrb[0].mxu0
    %v3545 = vadd.f32 0.0, %v3544
    %v3546 = vpop.f32.mrb[0].mxu0
    %v3547 = vadd.f32 0.0, %v3546
    %v3548 = vpop.f32.mrb[0].mxu0
    %v3549 = vadd.f32 0.0, %v3548
    %3550 = vmatprep.mubr.bf16.mxu0 0
    %3551 = vmatmul.mubr.bf16.gmra.mrb[0].mxu0 %v3347
    %v3552 = vpop.f32.mrb[0].mxu0
    %v3553 = vadd.f32 0.0, %v3552
    %v3554 = vpop.f32.mrb[0].mxu0
    %v3555 = vadd.f32 0.0, %v3554
    %v3556 = vpop.f32.mrb[0].mxu0
    %v3557 = vadd.f32 0.0, %v3556
    %v3558 = vpop.f32.mrb[0].mxu0
    %v3559 = vadd.f32 0.0, %v3558
    %3560 = vmatprep.mubr.bf16.mxu0 0
    %3561 = vmatmul.mubr.bf16.gmra.mrb[0].mxu0 %v3350
    %v3562 = vpop.f32.mrb[0].mxu0
    %v3563 = vpop.f32.mrb[0].mxu0
    %v3564 = vadd.f32 0.0, %v3563
    %v3565 = vpop.f32.mrb[0].mxu0
    %v3566 = vpop.f32.mrb[0].mxu0
    %v3567 = vadd.f32 0.0, %v3566
    %3568 = vmatprep.mubr.bf16.mxu0 0
    %3569 = vmatmul.mubr.bf16.gmra.mrb[0].mxu0 %v3353
    %v3570 = vpop.f32.mrb[0].mxu0
    %v3571 = vpop.f32.mrb[0].mxu0
    %v3572 = vadd.f32 0.0, %v3571
    %v3573 = vpop.f32.mrb[0].mxu0
    %v3574 = vpop.f32.mrb[0].mxu0
    %3575 = vmatprep.mubr.bf16.mxu0 0
    %3576 = vmatmul.mubr.bf16.gmra.mrb[0].mxu0 %v3356
    %v3577 = vpop.f32.mrb[0].mxu0
    %v3578 = vpop.f32.mrb[0].mxu0
    %v3579 = vpop.f32.mrb[0].mxu0
    %v3580 = vpop.f32.mrb[0].mxu0
    %3581 = vmatprep.mubr.bf16.mxu0 0
    %3582 = vmatmul.mubr.bf16.gmra.mrb[0].mxu0 %v3359
    %v3583 = vpop.f32.mrb[0].mxu0
    %v3584 = vadd.f32 0.0, %v3583
    %v3585 = vpop.f32.mrb[0].mxu0
    %v3586 = vpop.f32.mrb[0].mxu0
    %v3587 = vadd.f32 0.0, %v3586
    %v3588 = vpop.f32.mrb[0].mxu0
    %3589 = vmatprep.mubr.bf16.mxu0 0
    %3590 = vmatmul.mubr.bf16.gmra.mrb[0].mxu0 %v3362
    %v3591 = vpop.f32.mrb[0].mxu0
    %v3592 = vadd.f32 0.0, %v3591
    %v3593 = vpop.f32.mrb[0].mxu0
    %v3594 = vadd.f32 0.0, %v3593
    %v3595 = vpop.f32.mrb[0].mxu0
    %v3596 = vadd.f32 0.0, %v3595
    %v3597 = vpop.f32.mrb[0].mxu0
    %v3598 = vadd.f32 0.0, %v3597
    %3599 = vmatprep.mubr.bf16.mxu0 0
    %3600 = vmatmul.mubr.bf16.gmra.mrb[0].mxu0 %v3365
    %v3601 = vpop.f32.mrb[0].mxu0
    %v3602 = vadd.f32 0.0, %v3601
    %v3603 = vpop.f32.mrb[0].mxu0
    %v3604 = vadd.f32 0.0, %v3603
    %v3605 = vpop.f32.mrb[0].mxu0
    %v3606 = vadd.f32 0.0, %v3605
    %v3607 = vpop.f32.mrb[0].mxu0
    %v3608 = vadd.f32 0.0, %v3607
    %3609 = vmatprep.mubr.bf16.mxu0 0
    %3610 = vmatmul.mubr.bf16.gmra.mrb[0].mxu0 %v3368
    %v3611 = vpop.f32.mrb[0].mxu0
    %v3612 = vadd.f32 0.0, %v3611
    %v3613 = vpop.f32.mrb[0].mxu0
    %v3614 = vadd.f32 0.0, %v3613
    %v3615 = vpop.f32.mrb[0].mxu0
    %v3616 = vadd.f32 0.0, %v3615
    %v3617 = vpop.f32.mrb[0].mxu0
    %v3618 = vadd.f32 0.0, %v3617
    %3619 = vmatprep.mubr.bf16.mxu0 0
    %3620 = vmatmul.mubr.bf16.gmra.mrb[0].mxu0 %v3371
    %v3621 = vpop.f32.mrb[0].mxu0
    %v3622 = vadd.f32 0.0, %v3621
    %v3623 = vpop.f32.mrb[0].mxu0
    %v3624 = vadd.f32 0.0, %v3623
    %v3625 = vpop.f32.mrb[0].mxu0
    %v3626 = vadd.f32 0.0, %v3625
    %v3627 = vpop.f32.mrb[0].mxu0
    %v3628 = vadd.f32 0.0, %v3627
    %3629 = vmatprep.mubr.bf16.mxu0 0
    %3630 = vmatmul.mubr.bf16.gmra.mrb[0].mxu0 %v3374
    %v3631 = vpop.f32.mrb[0].mxu0
    %v3632 = vadd.f32 0.0, %v3631
    %v3633 = vpop.f32.mrb[0].mxu0
    %v3634 = vadd.f32 0.0, %v3633
    %v3635 = vpop.f32.mrb[0].mxu0
    %v3636 = vadd.f32 0.0, %v3635
    %v3637 = vpop.f32.mrb[0].mxu0
    %v3638 = vadd.f32 0.0, %v3637
    %3639 = vmatprep.mubr.bf16.mxu0 0
    %3640 = vmatmul.mubr.bf16.gmra.mrb[0].mxu0 %v3377
    %v3641 = vpop.f32.mrb[0].mxu0
    %v3642 = vadd.f32 0.0, %v3641
    %v3643 = vpop.f32.mrb[0].mxu0
    %v3644 = vadd.f32 0.0, %v3643
    %v3645 = vpop.f32.mrb[0].mxu0
    %v3646 = vadd.f32 0.0, %v3645
    %v3647 = vpop.f32.mrb[0].mxu0
    %v3648 = vadd.f32 0.0, %v3647
    %3649 = vmatprep.mubr.bf16.mxu0 0
    %3650 = vmatmul.mubr.bf16.gmra.mrb[0].mxu0 %v3380
    %v3651 = vpop.f32.mrb[0].mxu0
    %v3652 = vadd.f32 0.0, %v3651
    %v3653 = vpop.f32.mrb[0].mxu0
    %v3654 = vadd.f32 0.0, %v3653
    %v3655 = vpop.f32.mrb[0].mxu0
    %v3656 = vadd.f32 0.0, %v3655
    %v3657 = vpop.f32.mrb[0].mxu0
    %v3658 = vadd.f32 0.0, %v3657
    %3659 = vmatprep.mubr.bf16.mxu0 0
    %3660 = vmatmul.mubr.bf16.gmra.mrb[0].mxu0 %v3383
    %v3661 = vpop.f32.mrb[0].mxu0
    %v3662 = vadd.f32 0.0, %v3661
    %v3663 = vpop.f32.mrb[0].mxu0
    %v3664 = vadd.f32 0.0, %v3663
    %v3665 = vpop.f32.mrb[0].mxu0
    %v3666 = vadd.f32 0.0, %v3665
    %v3667 = vpop.f32.mrb[0].mxu0
    %v3668 = vadd.f32 0.0, %v3667
    %3669 = vmatprep.mubr.bf16.mxu0 0
    %3670 = vmatmul.mubr.bf16.gmra.mrb[0].mxu0 %v3386
    %v3671 = vpop.f32.mrb[0].mxu0
    %v3672 = vadd.f32 0.0, %v3671
    %v3673 = vpop.f32.mrb[0].mxu0
    %v3674 = vadd.f32 0.0, %v3673
    %v3675 = vpop.f32.mrb[0].mxu0
    %v3676 = vadd.f32 0.0, %v3675
    %v3677 = vpop.f32.mrb[0].mxu0
    %v3678 = vadd.f32 0.0, %v3677
    %3679 = vmatprep.mubr.bf16.mxu0 0
    %3680 = vmatmul.mubr.bf16.gmra.mrb[0].mxu0 %v3389
    %v3681 = vpop.f32.mrb[0].mxu0
    %v3682 = vadd.f32 0.0, %v3681
    %v3683 = vpop.f32.mrb[0].mxu0
    %v3684 = vadd.f32 0.0, %v3683
    %v3685 = vpop.f32.mrb[0].mxu0
    %v3686 = vadd.f32 0.0, %v3685
    %v3687 = vpop.f32.mrb[0].mxu0
    %v3688 = vadd.f32 0.0, %v3687
    %3689 = vmatprep.mubr.bf16.mxu0 0
    %3690 = vmatmul.mubr.bf16.gmra.mrb[0].mxu0 %v3392
    %v3691 = vpop.f32.mrb[0].mxu0
    %v3692 = vadd.f32 0.0, %v3691
    %v3693 = vpop.f32.mrb[0].mxu0
    %v3694 = vadd.f32 0.0, %v3693
    %v3695 = vpop.f32.mrb[0].mxu0
    %v3696 = vadd.f32 0.0, %v3695
    %v3697 = vpop.f32.mrb[0].mxu0
    %v3698 = vadd.f32 0.0, %v3697
    %3699 = vmatprep.mubr.bf16.mxu0 0
    %3700 = vmatmul.mubr.bf16.gmra.mrb[0].mxu0 %v3395
    %v3701 = vpop.f32.mrb[0].mxu0
    %v3702 = vadd.f32 0.0, %v3701
    %v3703 = vpop.f32.mrb[0].mxu0
    %v3704 = vadd.f32 0.0, %v3703
    %v3705 = vpop.f32.mrb[0].mxu0
    %v3706 = vadd.f32 0.0, %v3705
    %v3707 = vpop.f32.mrb[0].mxu0
    %v3708 = vadd.f32 0.0, %v3707
    %3709 = vmatprep.mubr.bf16.mxu0 0
    %3710 = vmatmul.mubr.bf16.gmra.mrb[0].mxu0 %v3398
    %v3711 = vpop.f32.mrb[0].mxu0
    %v3712 = vpop.f32.mrb[0].mxu0
    %v3713 = vadd.f32 0.0, %v3712
    %v3714 = vpop.f32.mrb[0].mxu0
    %v3715 = vpop.f32.mrb[0].mxu0
    %v3716 = vadd.f32 0.0, %v3715
    %3717 = vdwg.mxu0
    %3718 = vmatprep.subr.bf16.mxu0 0
    %3719 = vmatpush1.bf16.msra.mxu0 %v3305
    %3720 = vmatprep.subr.bf16.mxu0 0
    %3721 = vmatpush1.bf16.msra.mxu0 0
    %3722 = vmatprep.subr.bf16.mxu0 0
    %3723 = vmatpush1.bf16.msra.mxu0 0
    %3724 = vmatprep.subr.bf16.mxu0 0
    %3725 = vmatpush1.bf16.msra.mxu0 0
    %3726 = vmatprep.subr.bf16.mxu0 0
    %3727 = vmatpush1.bf16.msra.mxu0 0
    %3728 = vmatprep.subr.bf16.mxu0 0
    %3729 = vmatpush1.bf16.msra.mxu0 0
    %3730 = vmatprep.subr.bf16.mxu0 0
    %3731 = vmatpush1.bf16.msra.mxu0 0
    %3732 = vmatprep.subr.bf16.mxu0 0
    %3733 = vmatpush1.bf16.msra.mxu0 0
    %3734 = vmatprep.subr.bf16.mxu0 0
    %3735 = vmatpush1.bf16.msra.mxu0 0
    %3736 = vmatprep.subr.bf16.mxu0 0
    %3737 = vmatpush1.bf16.msra.mxu0 0
    %3738 = vmatprep.subr.bf16.mxu0 0
    %3739 = vmatpush1.bf16.msra.mxu0 0
    %3740 = vmatprep.subr.bf16.mxu0 0
    %3741 = vmatpush1.bf16.msra.mxu0 0
    %3742 = vmatprep.subr.bf16.mxu0 0
    %3743 = vmatpush1.bf16.msra.mxu0 0
    %3744 = vmatprep.subr.bf16.mxu0 0
    %3745 = vmatpush1.bf16.msra.mxu0 0
    %3746 = vmatprep.subr.bf16.mxu0 0
    %3747 = vmatpush1.bf16.msra.mxu0 0
    %3748 = vmatprep.subr.bf16.mxu0 0
    %3749 = vmatpush1.bf16.msra.mxu0 0
    %3750 = vmatprep.mubr.bf16.mxu0 0
    %3751 = vmatmul.mubr.bf16.gmra.mrb[0].mxu0 %v3311
    %v3752 = vpop.f32.mrb[0].mxu0
    %v3753 = vpop.f32.mrb[0].mxu0
    %v3754 = vpop.f32.mrb[0].mxu0
    %v3755 = vpop.f32.mrb[0].mxu0
    %3756 = vmatprep.mubr.bf16.mxu0 0
    %3757 = vmatmul.mubr.bf16.gmra.mrb[0].mxu0 %v3314
    %v3758 = vpop.f32.mrb[0].mxu0
    %v3759 = vpop.f32.mrb[0].mxu0
    %v3760 = vpop.f32.mrb[0].mxu0
    %v3761 = vpop.f32.mrb[0].mxu0
    %3762 = vmatprep.mubr.bf16.mxu0 0
    %3763 = vmatmul.mubr.bf16.gmra.mrb[0].mxu0 %v3317
    %v3764 = vpop.f32.mrb[0].mxu0
    %v3765 = vadd.f32 0.0, %v3764
    %v3766 = vpop.f32.mrb[0].mxu0
    %v3767 = vpop.f32.mrb[0].mxu0
    %v3768 = vadd.f32 0.0, %v3767
    %v3769 = vpop.f32.mrb[0].mxu0
    %3770 = vmatprep.mubr.bf16.mxu0 0
    %3771 = vmatmul.mubr.bf16.gmra.mrb[0].mxu0 %v3320
    %v3772 = vpop.f32.mrb[0].mxu0
    %v3773 = vadd.f32 0.0, %v3772
    %v3774 = vpop.f32.mrb[0].mxu0
    %v3775 = vpop.f32.mrb[0].mxu0
    %v3776 = vadd.f32 0.0, %v3775
    %v3777 = vpop.f32.mrb[0].mxu0
    %3778 = vmatprep.mubr.bf16.mxu0 0
    %3779 = vmatmul.mubr.bf16.gmra.mrb[0].mxu0 %v3323
    %v3780 = vpop.f32.mrb[0].mxu0
    %v3781 = vadd.f32 0.0, %v3780
    %v3782 = vpop.f32.mrb[0].mxu0
    %v3783 = vpop.f32.mrb[0].mxu0
    %v3784 = vadd.f32 0.0, %v3783
    %v3785 = vpop.f32.mrb[0].mxu0
    %3786 = vmatprep.mubr.bf16.mxu0 0
    %3787 = vmatmul.mubr.bf16.gmra.mrb[0].mxu0 %v3326
    %v3788 = vpop.f32.mrb[0].mxu0
    %v3789 = vadd.f32 0.0, %v3788
    %v3790 = vpop.f32.mrb[0].mxu0
    %v3791 = vpop.f32.mrb[0].mxu0
    %v3792 = vadd.f32 0.0, %v3791
    %v3793 = vpop.f32.mrb[0].mxu0
    %3794 = vmatprep.mubr.bf16.mxu0 0
    %3795 = vmatmul.mubr.bf16.gmra.mrb[0].mxu0 %v3329
    %v3796 = vpop.f32.mrb[0].mxu0
    %v3797 = vadd.f32 0.0, %v3796
    %v3798 = vpop.f32.mrb[0].mxu0
    %v3799 = vpop.f32.mrb[0].mxu0
    %v3800 = vadd.f32 0.0, %v3799
    %v3801 = vpop.f32.mrb[0].mxu0
    %3802 = vmatprep.mubr.bf16.mxu0 0
    %3803 = vmatmul.mubr.bf16.gmra.mrb[0].mxu0 %v3332
    %v3804 = vpop.f32.mrb[0].mxu0
    %v3805 = vadd.f32 0.0, %v3804
    %v3806 = vpop.f32.mrb[0].mxu0
    %v3807 = vpop.f32.mrb[0].mxu0
    %v3808 = vadd.f32 0.0, %v3807
    %v3809 = vpop.f32.mrb[0].mxu0
    %3810 = vmatprep.mubr.bf16.mxu0 0
    %3811 = vmatmul.mubr.bf16.gmra.mrb[0].mxu0 %v3335
    %v3812 = vpop.f32.mrb[0].mxu0
    %v3813 = vadd.f32 0.0, %v3812
    %v3814 = vpop.f32.mrb[0].mxu0
    %v3815 = vpop.f32.mrb[0].mxu0
    %v3816 = vadd.f32 0.0, %v3815
    %v3817 = vpop.f32.mrb[0].mxu0
    %3818 = vmatprep.mubr.bf16.mxu0 0
    %3819 = vmatmul.mubr.bf16.gmra.mrb[0].mxu0 %v3338
    %v3820 = vpop.f32.mrb[0].mxu0
    %v3821 = vadd.f32 0.0, %v3820
    %v3822 = vpop.f32.mrb[0].mxu0
    %v3823 = vpop.f32.mrb[0].mxu0
    %v3824 = vadd.f32 0.0, %v3823
    %v3825 = vpop.f32.mrb[0].mxu0
    %3826 = vmatprep.mubr.bf16.mxu0 0
    %3827 = vmatmul.mubr.bf16.gmra.mrb[0].mxu0 %v3341
    %v3828 = vpop.f32.mrb[0].mxu0
    %v3829 = vadd.f32 0.0, %v3828
    %v3830 = vpop.f32.mrb[0].mxu0
    %v3831 = vpop.f32.mrb[0].mxu0
    %v3832 = vadd.f32 0.0, %v3831
    %v3833 = vpop.f32.mrb[0].mxu0
    %3834 = vmatprep.mubr.bf16.mxu0 0
    %3835 = vmatmul.mubr.bf16.gmra.mrb[0].mxu0 %v3344
    %v3836 = vpop.f32.mrb[0].mxu0
    %v3837 = vadd.f32 0.0, %v3836
    %v3838 = vpop.f32.mrb[0].mxu0
    %v3839 = vpop.f32.mrb[0].mxu0
    %v3840 = vadd.f32 0.0, %v3839
    %v3841 = vpop.f32.mrb[0].mxu0
    %3842 = vmatprep.mubr.bf16.mxu0 0
    %3843 = vmatmul.mubr.bf16.gmra.mrb[0].mxu0 %v3347
    %v3844 = vpop.f32.mrb[0].mxu0
    %v3845 = vadd.f32 0.0, %v3844
    %v3846 = vpop.f32.mrb[0].mxu0
    %v3847 = vpop.f32.mrb[0].mxu0
    %v3848 = vadd.f32 0.0, %v3847
    %v3849 = vpop.f32.mrb[0].mxu0
    %3850 = vmatprep.mubr.bf16.mxu0 0
    %3851 = vmatmul.mubr.bf16.gmra.mrb[0].mxu0 %v3350
    %v3852 = vpop.f32.mrb[0].mxu0
    %v3853 = vadd.f32 0.0, %v3852
    %v3854 = vpop.f32.mrb[0].mxu0
    %v3855 = vpop.f32.mrb[0].mxu0
    %v3856 = vadd.f32 0.0, %v3855
    %v3857 = vpop.f32.mrb[0].mxu0
    %3858 = vmatprep.mubr.bf16.mxu0 0
    %3859 = vmatmul.mubr.bf16.gmra.mrb[0].mxu0 %v3353
    %v3860 = vpop.f32.mrb[0].mxu0
    %v3861 = vadd.f32 0.0, %v3860
    %v3862 = vpop.f32.mrb[0].mxu0
    %v3863 = vpop.f32.mrb[0].mxu0
    %v3864 = vpop.f32.mrb[0].mxu0
    %3865 = vmatprep.mubr.bf16.mxu0 0
    %3866 = vmatmul.mubr.bf16.gmra.mrb[0].mxu0 %v3356
    %v3867 = vpop.f32.mrb[0].mxu0
    %v3868 = vpop.f32.mrb[0].mxu0
    %v3869 = vpop.f32.mrb[0].mxu0
    %v3870 = vpop.f32.mrb[0].mxu0
    %3871 = vmatprep.mubr.bf16.mxu0 0
    %3872 = vmatmul.mubr.bf16.gmra.mrb[0].mxu0 %v3359
    %v3873 = vpop.f32.mrb[0].mxu0
    %v3874 = vpop.f32.mrb[0].mxu0
    %v3875 = vpop.f32.mrb[0].mxu0
    %v3876 = vpop.f32.mrb[0].mxu0
    %3877 = vmatprep.mubr.bf16.mxu0 0
    %3878 = vmatmul.mubr.bf16.gmra.mrb[0].mxu0 %v3362
    %v3879 = vpop.f32.mrb[0].mxu0
    %v3880 = vpop.f32.mrb[0].mxu0
    %v3881 = vpop.f32.mrb[0].mxu0
    %v3882 = vpop.f32.mrb[0].mxu0
    %3883 = vmatprep.mubr.bf16.mxu0 0
    %3884 = vmatmul.mubr.bf16.gmra.mrb[0].mxu0 %v3365
    %v3885 = vpop.f32.mrb[0].mxu0
    %v3886 = vadd.f32 0.0, %v3885
    %v3887 = vpop.f32.mrb[0].mxu0
    %v3888 = vpop.f32.mrb[0].mxu0
    %v3889 = vadd.f32 0.0, %v3888
    %v3890 = vpop.f32.mrb[0].mxu0
    %3891 = vmatprep.mubr.bf16.mxu0 0
    %3892 = vmatmul.mubr.bf16.gmra.mrb[0].mxu0 %v3368
    %v3893 = vpop.f32.mrb[0].mxu0
    %v3894 = vadd.f32 0.0, %v3893
    %v3895 = vpop.f32.mrb[0].mxu0
    %v3896 = vpop.f32.mrb[0].mxu0
    %v3897 = vadd.f32 0.0, %v3896
    %v3898 = vpop.f32.mrb[0].mxu0
    %3899 = vmatprep.mubr.bf16.mxu0 0
    %3900 = vmatmul.mubr.bf16.gmra.mrb[0].mxu0 %v3371
    %v3901 = vpop.f32.mrb[0].mxu0
    %v3902 = vadd.f32 0.0, %v3901
    %v3903 = vpop.f32.mrb[0].mxu0
    %v3904 = vpop.f32.mrb[0].mxu0
    %v3905 = vadd.f32 0.0, %v3904
    %v3906 = vpop.f32.mrb[0].mxu0
    %3907 = vmatprep.mubr.bf16.mxu0 0
    %3908 = vmatmul.mubr.bf16.gmra.mrb[0].mxu0 %v3374
    %v3909 = vpop.f32.mrb[0].mxu0
    %v3910 = vadd.f32 0.0, %v3909
    %v3911 = vpop.f32.mrb[0].mxu0
    %v3912 = vpop.f32.mrb[0].mxu0
    %v3913 = vadd.f32 0.0, %v3912
    %v3914 = vpop.f32.mrb[0].mxu0
    %3915 = vmatprep.mubr.bf16.mxu0 0
    %3916 = vmatmul.mubr.bf16.gmra.mrb[0].mxu0 %v3377
    %v3917 = vpop.f32.mrb[0].mxu0
    %v3918 = vadd.f32 0.0, %v3917
    %v3919 = vpop.f32.mrb[0].mxu0
    %v3920 = vpop.f32.mrb[0].mxu0
    %v3921 = vadd.f32 0.0, %v3920
    %v3922 = vpop.f32.mrb[0].mxu0
    %3923 = vmatprep.mubr.bf16.mxu0 0
    %3924 = vmatmul.mubr.bf16.gmra.mrb[0].mxu0 %v3380
    %v3925 = vpop.f32.mrb[0].mxu0
    %v3926 = vadd.f32 0.0, %v3925
    %v3927 = vpop.f32.mrb[0].mxu0
    %v3928 = vpop.f32.mrb[0].mxu0
    %v3929 = vadd.f32 0.0, %v3928
    %v3930 = vpop.f32.mrb[0].mxu0
    %3931 = vmatprep.mubr.bf16.mxu0 0
    %3932 = vmatmul.mubr.bf16.gmra.mrb[0].mxu0 %v3383
    %v3933 = vpop.f32.mrb[0].mxu0
    %v3934 = vadd.f32 0.0, %v3933
    %v3935 = vpop.f32.mrb[0].mxu0
    %v3936 = vpop.f32.mrb[0].mxu0
    %v3937 = vadd.f32 0.0, %v3936
    %v3938 = vpop.f32.mrb[0].mxu0
    %3939 = vmatprep.mubr.bf16.mxu0 0
    %3940 = vmatmul.mubr.bf16.gmra.mrb[0].mxu0 %v3386
    %v3941 = vpop.f32.mrb[0].mxu0
    %v3942 = vadd.f32 0.0, %v3941
    %v3943 = vpop.f32.mrb[0].mxu0
    %v3944 = vpop.f32.mrb[0].mxu0
    %v3945 = vadd.f32 0.0, %v3944
    %v3946 = vpop.f32.mrb[0].mxu0
    %3947 = vmatprep.mubr.bf16.mxu0 0
    %3948 = vmatmul.mubr.bf16.gmra.mrb[0].mxu0 %v3389
    %v3949 = vpop.f32.mrb[0].mxu0
    %v3950 = vadd.f32 0.0, %v3949
    %v3951 = vpop.f32.mrb[0].mxu0
    %v3952 = vpop.f32.mrb[0].mxu0
    %v3953 = vadd.f32 0.0, %v3952
    %v3954 = vpop.f32.mrb[0].mxu0
    %3955 = vmatprep.mubr.bf16.mxu0 0
    %3956 = vmatmul.mubr.bf16.gmra.mrb[0].mxu0 %v3392
    %v3957 = vpop.f32.mrb[0].mxu0
    %v3958 = vadd.f32 0.0, %v3957
    %v3959 = vpop.f32.mrb[0].mxu0
    %v3960 = vpop.f32.mrb[0].mxu0
    %v3961 = vadd.f32 0.0, %v3960
    %v3962 = vpop.f32.mrb[0].mxu0
    %3963 = vmatprep.mubr.bf16.mxu0 0
    %3964 = vmatmul.mubr.bf16.gmra.mrb[0].mxu0 %v3395
    %v3965 = vpop.f32.mrb[0].mxu0
    %v3966 = vadd.f32 0.0, %v3965
    %v3967 = vpop.f32.mrb[0].mxu0
    %v3968 = vpop.f32.mrb[0].mxu0
    %v3969 = vadd.f32 0.0, %v3968
    %v3970 = vpop.f32.mrb[0].mxu0
    %3971 = vmatprep.mubr.bf16.mxu0 0
    %3972 = vmatmul.mubr.bf16.gmra.mrb[0].mxu0 %v3398
    %v3973 = vpop.f32.mrb[0].mxu0
    %v3974 = vadd.f32 0.0, %v3973
    %v3975 = vpop.f32.mrb[0].mxu0
    %v3976 = vpop.f32.mrb[0].mxu0
    %v3977 = vadd.f32 0.0, %v3976
    %v3978 = vpop.f32.mrb[0].mxu0
    %3979 = vdwg.mxu0
    %v4029 = vrot.slane %v3435, 1
    %v4030 = vrot.slane %v3438, 1
    %v4031 = vsel %vm897, %v4029, %v4030
    %v4032 = vrot.slane %v3443, 1
    %v4033 = vsel %vm897, %v4030, %v4032
    %v4034 = vrot.slane %v3447, 1
    %v4035 = vsel %vm897, %v4032, %v4034
    %v4036 = vrot.slane %v3453, 1
    %v4037 = vsel %vm897, %v4034, %v4036
    %v4038 = vrot.slane %v3457, 1
    %v4039 = vsel %vm897, %v4036, %v4038
    %v4040 = vrot.slane %v3463, 1
    %v4041 = vsel %vm897, %v4038, %v4040
    %v4042 = vrot.slane %v3467, 1
    %v4043 = vsel %vm897, %v4040, %v4042
    %v4044 = vrot.slane %v3473, 1
    %v4045 = vsel %vm897, %v4042, %v4044
    %v4046 = vrot.slane %v3477, 1
    %v4047 = vsel %vm897, %v4044, %v4046
    %v4048 = vrot.slane %v3483, 1
    %v4049 = vsel %vm897, %v4046, %v4048
    %v4050 = vrot.slane %v3487, 1
    %v4051 = vsel %vm897, %v4048, %v4050
    %v4052 = vrot.slane %v3493, 1
    %v4053 = vsel %vm897, %v4050, %v4052
    %v4054 = vrot.slane %v3497, 1
    %v4055 = vsel %vm897, %v4052, %v4054
    %v4056 = vrot.slane %v3503, 1
    %v4057 = vsel %vm897, %v4054, %v4056
    %v4058 = vrot.slane %v3507, 1
    %v4059 = vsel %vm897, %v4056, %v4058
    %v4060 = vrot.slane %v3513, 1
    %v4061 = vsel %vm897, %v4058, %v4060
    %v4062 = vrot.slane %v3517, 1
    %v4063 = vsel %vm897, %v4060, %v4062
    %v4064 = vrot.slane %v3523, 1
    %v4065 = vsel %vm897, %v4062, %v4064
    %v4066 = vrot.slane %v3527, 1
    %v4067 = vsel %vm897, %v4064, %v4066
    %v4068 = vrot.slane %v3533, 1
    %v4069 = vsel %vm897, %v4066, %v4068
    %v4070 = vrot.slane %v3537, 1
    %v4071 = vsel %vm897, %v4068, %v4070
    %v4072 = vrot.slane %v3543, 1
    %v4073 = vsel %vm897, %v4070, %v4072
    %v4074 = vrot.slane %v3547, 1
    %v4075 = vsel %vm897, %v4072, %v4074
    %v4076 = vrot.slane %v3553, 1
    %v4077 = vsel %vm897, %v4074, %v4076
    %v4078 = vrot.slane %v3584, 1
    %v4079 = vrot.slane %v3587, 1
    %v4080 = vsel %vm897, %v4078, %v4079
    %v4081 = vrot.slane %v3592, 1
    %v4082 = vsel %vm897, %v4079, %v4081
    %v4083 = vrot.slane %v3596, 1
    %v4084 = vsel %vm897, %v4081, %v4083
    %v4085 = vrot.slane %v3602, 1
    %v4086 = vsel %vm897, %v4083, %v4085
    %v4087 = vrot.slane %v3606, 1
    %v4088 = vsel %vm897, %v4085, %v4087
    %v4089 = vrot.slane %v3612, 1
    %v4090 = vsel %vm897, %v4087, %v4089
    %v4091 = vrot.slane %v3616, 1
    %v4092 = vsel %vm897, %v4089, %v4091
    %v4093 = vrot.slane %v3622, 1
    %v4094 = vsel %vm897, %v4091, %v4093
    %v4095 = vrot.slane %v3626, 1
    %v4096 = vsel %vm897, %v4093, %v4095
    %v4097 = vrot.slane %v3632, 1
    %v4098 = vsel %vm897, %v4095, %v4097
    %v4099 = vrot.slane %v3636, 1
    %v4100 = vsel %vm897, %v4097, %v4099
    %v4101 = vrot.slane %v3642, 1
    %v4102 = vsel %vm897, %v4099, %v4101
    %v4103 = vrot.slane %v3646, 1
    %v4104 = vsel %vm897, %v4101, %v4103
    %v4105 = vrot.slane %v3652, 1
    %v4106 = vsel %vm897, %v4103, %v4105
    %v4107 = vrot.slane %v3656, 1
    %v4108 = vsel %vm897, %v4105, %v4107
    %v4109 = vrot.slane %v3662, 1
    %v4110 = vsel %vm897, %v4107, %v4109
    %v4111 = vrot.slane %v3666, 1
    %v4112 = vsel %vm897, %v4109, %v4111
    %v4113 = vrot.slane %v3672, 1
    %v4114 = vsel %vm897, %v4111, %v4113
    %v4115 = vrot.slane %v3676, 1
    %v4116 = vsel %vm897, %v4113, %v4115
    %v4117 = vrot.slane %v3682, 1
    %v4118 = vsel %vm897, %v4115, %v4117
    %v4119 = vrot.slane %v3686, 1
    %v4120 = vsel %vm897, %v4117, %v4119
    %v4121 = vrot.slane %v3692, 1
    %v4122 = vsel %vm897, %v4119, %v4121
    %v4123 = vrot.slane %v3696, 1
    %v4124 = vsel %vm897, %v4121, %v4123
    %4125 = vrot.lane.b32.xlu0 %v4031, 96
    %v4126 = vpop.permute.xlu0 %4125
    %4127 = vrot.lane.b32.xlu0 %v4033, 96
    %v4128 = vpop.permute.xlu0 %4127
    %4129 = vrot.lane.b32.xlu0 %v4035, 96
    %v4130 = vpop.permute.xlu0 %4129
    %4131 = vrot.lane.b32.xlu0 %v4037, 96
    %v4132 = vpop.permute.xlu0 %4131
    %4133 = vrot.lane.b32.xlu0 %v4039, 96
    %v4134 = vpop.permute.xlu0 %4133
    %4135 = vrot.lane.b32.xlu0 %v4041, 96
    %v4136 = vpop.permute.xlu0 %4135
    %4137 = vrot.lane.b32.xlu0 %v4043, 96
    %v4138 = vpop.permute.xlu0 %4137
    %4139 = vrot.lane.b32.xlu0 %v4045, 96
    %v4140 = vpop.permute.xlu0 %4139
    %4141 = vrot.lane.b32.xlu0 %v4047, 96
    %v4142 = vpop.permute.xlu0 %4141
    %4143 = vrot.lane.b32.xlu0 %v4049, 96
    %v4144 = vpop.permute.xlu0 %4143
    %4145 = vrot.lane.b32.xlu0 %v4051, 96
    %v4146 = vpop.permute.xlu0 %4145
    %4147 = vrot.lane.b32.xlu0 %v4053, 96
    %v4148 = vpop.permute.xlu0 %4147
    %4149 = vrot.lane.b32.xlu0 %v4055, 96
    %v4150 = vpop.permute.xlu0 %4149
    %4151 = vrot.lane.b32.xlu0 %v4057, 96
    %v4152 = vpop.permute.xlu0 %4151
    %4153 = vrot.lane.b32.xlu0 %v4059, 96
    %v4154 = vpop.permute.xlu0 %4153
    %4155 = vrot.lane.b32.xlu0 %v4061, 96
    %v4156 = vpop.permute.xlu0 %4155
    %4157 = vrot.lane.b32.xlu0 %v4063, 96
    %v4158 = vpop.permute.xlu0 %4157
    %4159 = vrot.lane.b32.xlu0 %v4065, 96
    %v4160 = vpop.permute.xlu0 %4159
    %4161 = vrot.lane.b32.xlu0 %v4067, 96
    %v4162 = vpop.permute.xlu0 %4161
    %4163 = vrot.lane.b32.xlu0 %v4069, 96
    %v4164 = vpop.permute.xlu0 %4163
    %4165 = vrot.lane.b32.xlu0 %v4071, 96
    %v4166 = vpop.permute.xlu0 %4165
    %4167 = vrot.lane.b32.xlu0 %v4073, 96
    %v4168 = vpop.permute.xlu0 %4167
    %4169 = vrot.lane.b32.xlu0 %v4075, 96
    %v4170 = vpop.permute.xlu0 %4169
    %4171 = vrot.lane.b32.xlu0 %v4077, 96
    %v4172 = vpop.permute.xlu0 %4171
    %4173 = vrot.lane.b32.xlu0 %v4080, 96
    %v4174 = vpop.permute.xlu0 %4173
    %4175 = vrot.lane.b32.xlu0 %v4082, 96
    %v4176 = vpop.permute.xlu0 %4175
    %4177 = vrot.lane.b32.xlu0 %v4084, 96
    %v4178 = vpop.permute.xlu0 %4177
    %4179 = vrot.lane.b32.xlu0 %v4086, 96
    %v4180 = vpop.permute.xlu0 %4179
    %4181 = vrot.lane.b32.xlu0 %v4088, 96
    %v4182 = vpop.permute.xlu0 %4181
    %4183 = vrot.lane.b32.xlu0 %v4090, 96
    %v4184 = vpop.permute.xlu0 %4183
    %4185 = vrot.lane.b32.xlu0 %v4092, 96
    %v4186 = vpop.permute.xlu0 %4185
    %4187 = vrot.lane.b32.xlu0 %v4094, 96
    %v4188 = vpop.permute.xlu0 %4187
    %4189 = vrot.lane.b32.xlu0 %v4096, 96
    %v4190 = vpop.permute.xlu0 %4189
    %4191 = vrot.lane.b32.xlu0 %v4098, 96
    %v4192 = vpop.permute.xlu0 %4191
    %4193 = vrot.lane.b32.xlu0 %v4100, 96
    %v4194 = vpop.permute.xlu0 %4193
    %4195 = vrot.lane.b32.xlu0 %v4102, 96
    %v4196 = vpop.permute.xlu0 %4195
    %4197 = vrot.lane.b32.xlu0 %v4104, 96
    %v4198 = vpop.permute.xlu0 %4197
    %4199 = vrot.lane.b32.xlu0 %v4106, 96
    %v4200 = vpop.permute.xlu0 %4199
    %4201 = vrot.lane.b32.xlu0 %v4108, 96
    %v4202 = vpop.permute.xlu0 %4201
    %4203 = vrot.lane.b32.xlu0 %v4110, 96
    %v4204 = vpop.permute.xlu0 %4203
    %4205 = vrot.lane.b32.xlu0 %v4112, 96
    %v4206 = vpop.permute.xlu0 %4205
    %4207 = vrot.lane.b32.xlu0 %v4114, 96
    %v4208 = vpop.permute.xlu0 %4207
    %4209 = vrot.lane.b32.xlu0 %v4116, 96
    %v4210 = vpop.permute.xlu0 %4209
    %4211 = vrot.lane.b32.xlu0 %v4118, 96
    %v4212 = vpop.permute.xlu0 %4211
    %4213 = vrot.lane.b32.xlu0 %v4120, 96
    %v4214 = vpop.permute.xlu0 %4213
    %4215 = vrot.lane.b32.xlu0 %v4122, 96
    %v4216 = vpop.permute.xlu0 %4215
    %4217 = vrot.lane.b32.xlu0 %v4124, 96
    %v4218 = vpop.permute.xlu0 %4217
    %4219 = vrot.lane.b32.xlu0 %v4123, 96
    %v4220 = vpop.permute.xlu0 %4219
    %v4269 = vadd.f32 %v3435, %v4126
    %v4270 = vadd.f32 %v3438, %v4128
    %v4271 = vadd.f32 %v3443, %v4130
    %v4272 = vadd.f32 %v3447, %v4132
    %v4273 = vadd.f32 %v3453, %v4134
    %v4274 = vadd.f32 %v3457, %v4136
    %v4275 = vadd.f32 %v3463, %v4138
    %v4276 = vadd.f32 %v3467, %v4140
    %v4277 = vadd.f32 %v3473, %v4142
    %v4278 = vadd.f32 %v3477, %v4144
    %v4279 = vadd.f32 %v3483, %v4146
    %v4280 = vadd.f32 %v3487, %v4148
    %v4281 = vadd.f32 %v3493, %v4150
    %v4282 = vadd.f32 %v3497, %v4152
    %v4283 = vadd.f32 %v3503, %v4154
    %v4284 = vadd.f32 %v3507, %v4156
    %v4285 = vadd.f32 %v3513, %v4158
    %v4286 = vadd.f32 %v3517, %v4160
    %v4287 = vadd.f32 %v3523, %v4162
    %v4288 = vadd.f32 %v3527, %v4164
    %v4289 = vadd.f32 %v3533, %v4166
    %v4290 = vadd.f32 %v3537, %v4168
    %v4291 = vadd.f32 %v3543, %v4170
    %v4292 = vadd.f32 %v3547, %v4172
    %v4293 = vadd.f32 %v3584, %v4174
    %v4294 = vadd.f32 %v3587, %v4176
    %v4295 = vadd.f32 %v3592, %v4178
    %v4296 = vadd.f32 %v3596, %v4180
    %v4297 = vadd.f32 %v3602, %v4182
    %v4298 = vadd.f32 %v3606, %v4184
    %v4299 = vadd.f32 %v3612, %v4186
    %v4300 = vadd.f32 %v3616, %v4188
    %v4301 = vadd.f32 %v3622, %v4190
    %v4302 = vadd.f32 %v3626, %v4192
    %v4303 = vadd.f32 %v3632, %v4194
    %v4304 = vadd.f32 %v3636, %v4196
    %v4305 = vadd.f32 %v3642, %v4198
    %v4306 = vadd.f32 %v3646, %v4200
    %v4307 = vadd.f32 %v3652, %v4202
    %v4308 = vadd.f32 %v3656, %v4204
    %v4309 = vadd.f32 %v3662, %v4206
    %v4310 = vadd.f32 %v3666, %v4208
    %v4311 = vadd.f32 %v3672, %v4210
    %v4312 = vadd.f32 %v3676, %v4212
    %v4313 = vadd.f32 %v3682, %v4214
    %v4314 = vadd.f32 %v3686, %v4216
    %v4315 = vadd.f32 %v3692, %v4218
    %v4316 = vadd.f32 %v3696, %v4220
    %v4317 = vrot.slane %v3435, 2
    %v4318 = vrot.slane %v3438, 2
    %v4319 = vsel %vm1257, %v4317, %v4318
    %v4320 = vrot.slane %v3443, 2
    %v4321 = vsel %vm1257, %v4318, %v4320
    %v4322 = vrot.slane %v3447, 2
    %v4323 = vsel %vm1257, %v4320, %v4322
    %v4324 = vrot.slane %v3453, 2
    %v4325 = vsel %vm1257, %v4322, %v4324
    %v4326 = vrot.slane %v3457, 2
    %v4327 = vsel %vm1257, %v4324, %v4326
    %v4328 = vrot.slane %v3463, 2
    %v4329 = vsel %vm1257, %v4326, %v4328
    %v4330 = vrot.slane %v3467, 2
    %v4331 = vsel %vm1257, %v4328, %v4330
    %v4332 = vrot.slane %v3473, 2
    %v4333 = vsel %vm1257, %v4330, %v4332
    %v4334 = vrot.slane %v3477, 2
    %v4335 = vsel %vm1257, %v4332, %v4334
    %v4336 = vrot.slane %v3483, 2
    %v4337 = vsel %vm1257, %v4334, %v4336
    %v4338 = vrot.slane %v3487, 2
    %v4339 = vsel %vm1257, %v4336, %v4338
    %v4340 = vrot.slane %v3493, 2
    %v4341 = vsel %vm1257, %v4338, %v4340
    %v4342 = vrot.slane %v3497, 2
    %v4343 = vsel %vm1257, %v4340, %v4342
    %v4344 = vrot.slane %v3503, 2
    %v4345 = vsel %vm1257, %v4342, %v4344
    %v4346 = vrot.slane %v3507, 2
    %v4347 = vsel %vm1257, %v4344, %v4346
    %v4348 = vrot.slane %v3513, 2
    %v4349 = vsel %vm1257, %v4346, %v4348
    %v4350 = vrot.slane %v3517, 2
    %v4351 = vsel %vm1257, %v4348, %v4350
    %v4352 = vrot.slane %v3523, 2
    %v4353 = vsel %vm1257, %v4350, %v4352
    %v4354 = vrot.slane %v3527, 2
    %v4355 = vsel %vm1257, %v4352, %v4354
    %v4356 = vrot.slane %v3533, 2
    %v4357 = vsel %vm1257, %v4354, %v4356
    %v4358 = vrot.slane %v3537, 2
    %v4359 = vsel %vm1257, %v4356, %v4358
    %v4360 = vrot.slane %v3543, 2
    %v4361 = vsel %vm1257, %v4358, %v4360
    %v4362 = vrot.slane %v3547, 2
    %v4363 = vsel %vm1257, %v4360, %v4362
    %v4364 = vrot.slane %v3553, 2
    %v4365 = vsel %vm1257, %v4362, %v4364
    %v4366 = vrot.slane %v3584, 2
    %v4367 = vrot.slane %v3587, 2
    %v4368 = vsel %vm1257, %v4366, %v4367
    %v4369 = vrot.slane %v3592, 2
    %v4370 = vsel %vm1257, %v4367, %v4369
    %v4371 = vrot.slane %v3596, 2
    %v4372 = vsel %vm1257, %v4369, %v4371
    %v4373 = vrot.slane %v3602, 2
    %v4374 = vsel %vm1257, %v4371, %v4373
    %v4375 = vrot.slane %v3606, 2
    %v4376 = vsel %vm1257, %v4373, %v4375
    %v4377 = vrot.slane %v3612, 2
    %v4378 = vsel %vm1257, %v4375, %v4377
    %v4379 = vrot.slane %v3616, 2
    %v4380 = vsel %vm1257, %v4377, %v4379
    %v4381 = vrot.slane %v3622, 2
    %v4382 = vsel %vm1257, %v4379, %v4381
    %v4383 = vrot.slane %v3626, 2
    %v4384 = vsel %vm1257, %v4381, %v4383
    %v4385 = vrot.slane %v3632, 2
    %v4386 = vsel %vm1257, %v4383, %v4385
    %v4387 = vrot.slane %v3636, 2
    %v4388 = vsel %vm1257, %v4385, %v4387
    %v4389 = vrot.slane %v3642, 2
    %v4390 = vsel %vm1257, %v4387, %v4389
    %v4391 = vrot.slane %v3646, 2
    %v4392 = vsel %vm1257, %v4389, %v4391
    %v4393 = vrot.slane %v3652, 2
    %v4394 = vsel %vm1257, %v4391, %v4393
    %v4395 = vrot.slane %v3656, 2
    %v4396 = vsel %vm1257, %v4393, %v4395
    %v4397 = vrot.slane %v3662, 2
    %v4398 = vsel %vm1257, %v4395, %v4397
    %v4399 = vrot.slane %v3666, 2
    %v4400 = vsel %vm1257, %v4397, %v4399
    %v4401 = vrot.slane %v3672, 2
    %v4402 = vsel %vm1257, %v4399, %v4401
    %v4403 = vrot.slane %v3676, 2
    %v4404 = vsel %vm1257, %v4401, %v4403
    %v4405 = vrot.slane %v3682, 2
    %v4406 = vsel %vm1257, %v4403, %v4405
    %v4407 = vrot.slane %v3686, 2
    %v4408 = vsel %vm1257, %v4405, %v4407
    %v4409 = vrot.slane %v3692, 2
    %v4410 = vsel %vm1257, %v4407, %v4409
    %v4411 = vrot.slane %v3696, 2
    %v4412 = vsel %vm1257, %v4409, %v4411
    %4413 = vrot.lane.b32.xlu0 %v4319, 64
    %v4414 = vpop.permute.xlu0 %4413
    %4415 = vrot.lane.b32.xlu0 %v4321, 64
    %v4416 = vpop.permute.xlu0 %4415
    %4417 = vrot.lane.b32.xlu0 %v4323, 64
    %v4418 = vpop.permute.xlu0 %4417
    %4419 = vrot.lane.b32.xlu0 %v4325, 64
    %v4420 = vpop.permute.xlu0 %4419
    %4421 = vrot.lane.b32.xlu0 %v4327, 64
    %v4422 = vpop.permute.xlu0 %4421
    %4423 = vrot.lane.b32.xlu0 %v4329, 64
    %v4424 = vpop.permute.xlu0 %4423
    %4425 = vrot.lane.b32.xlu0 %v4331, 64
    %v4426 = vpop.permute.xlu0 %4425
    %4427 = vrot.lane.b32.xlu0 %v4333, 64
    %v4428 = vpop.permute.xlu0 %4427
    %4429 = vrot.lane.b32.xlu0 %v4335, 64
    %v4430 = vpop.permute.xlu0 %4429
    %4431 = vrot.lane.b32.xlu0 %v4337, 64
    %v4432 = vpop.permute.xlu0 %4431
    %4433 = vrot.lane.b32.xlu0 %v4339, 64
    %v4434 = vpop.permute.xlu0 %4433
    %4435 = vrot.lane.b32.xlu0 %v4341, 64
    %v4436 = vpop.permute.xlu0 %4435
    %4437 = vrot.lane.b32.xlu0 %v4343, 64
    %v4438 = vpop.permute.xlu0 %4437
    %4439 = vrot.lane.b32.xlu0 %v4345, 64
    %v4440 = vpop.permute.xlu0 %4439
    %4441 = vrot.lane.b32.xlu0 %v4347, 64
    %v4442 = vpop.permute.xlu0 %4441
    %4443 = vrot.lane.b32.xlu0 %v4349, 64
    %v4444 = vpop.permute.xlu0 %4443
    %4445 = vrot.lane.b32.xlu0 %v4351, 64
    %v4446 = vpop.permute.xlu0 %4445
    %4447 = vrot.lane.b32.xlu0 %v4353, 64
    %v4448 = vpop.permute.xlu0 %4447
    %4449 = vrot.lane.b32.xlu0 %v4355, 64
    %v4450 = vpop.permute.xlu0 %4449
    %4451 = vrot.lane.b32.xlu0 %v4357, 64
    %v4452 = vpop.permute.xlu0 %4451
    %4453 = vrot.lane.b32.xlu0 %v4359, 64
    %v4454 = vpop.permute.xlu0 %4453
    %4455 = vrot.lane.b32.xlu0 %v4361, 64
    %v4456 = vpop.permute.xlu0 %4455
    %4457 = vrot.lane.b32.xlu0 %v4363, 64
    %v4458 = vpop.permute.xlu0 %4457
    %4459 = vrot.lane.b32.xlu0 %v4365, 64
    %v4460 = vpop.permute.xlu0 %4459
    %4461 = vrot.lane.b32.xlu0 %v4368, 64
    %v4462 = vpop.permute.xlu0 %4461
    %4463 = vrot.lane.b32.xlu0 %v4370, 64
    %v4464 = vpop.permute.xlu0 %4463
    %4465 = vrot.lane.b32.xlu0 %v4372, 64
    %v4466 = vpop.permute.xlu0 %4465
    %4467 = vrot.lane.b32.xlu0 %v4374, 64
    %v4468 = vpop.permute.xlu0 %4467
    %4469 = vrot.lane.b32.xlu0 %v4376, 64
    %v4470 = vpop.permute.xlu0 %4469
    %4471 = vrot.lane.b32.xlu0 %v4378, 64
    %v4472 = vpop.permute.xlu0 %4471
    %4473 = vrot.lane.b32.xlu0 %v4380, 64
    %v4474 = vpop.permute.xlu0 %4473
    %4475 = vrot.lane.b32.xlu0 %v4382, 64
    %v4476 = vpop.permute.xlu0 %4475
    %4477 = vrot.lane.b32.xlu0 %v4384, 64
    %v4478 = vpop.permute.xlu0 %4477
    %4479 = vrot.lane.b32.xlu0 %v4386, 64
    %v4480 = vpop.permute.xlu0 %4479
    %4481 = vrot.lane.b32.xlu0 %v4388, 64
    %v4482 = vpop.permute.xlu0 %4481
    %4483 = vrot.lane.b32.xlu0 %v4390, 64
    %v4484 = vpop.permute.xlu0 %4483
    %4485 = vrot.lane.b32.xlu0 %v4392, 64
    %v4486 = vpop.permute.xlu0 %4485
    %4487 = vrot.lane.b32.xlu0 %v4394, 64
    %v4488 = vpop.permute.xlu0 %4487
    %4489 = vrot.lane.b32.xlu0 %v4396, 64
    %v4490 = vpop.permute.xlu0 %4489
    %4491 = vrot.lane.b32.xlu0 %v4398, 64
    %v4492 = vpop.permute.xlu0 %4491
    %4493 = vrot.lane.b32.xlu0 %v4400, 64
    %v4494 = vpop.permute.xlu0 %4493
    %4495 = vrot.lane.b32.xlu0 %v4402, 64
    %v4496 = vpop.permute.xlu0 %4495
    %4497 = vrot.lane.b32.xlu0 %v4404, 64
    %v4498 = vpop.permute.xlu0 %4497
    %4499 = vrot.lane.b32.xlu0 %v4406, 64
    %v4500 = vpop.permute.xlu0 %4499
    %4501 = vrot.lane.b32.xlu0 %v4408, 64
    %v4502 = vpop.permute.xlu0 %4501
    %4503 = vrot.lane.b32.xlu0 %v4410, 64
    %v4504 = vpop.permute.xlu0 %4503
    %4505 = vrot.lane.b32.xlu0 %v4412, 64
    %v4506 = vpop.permute.xlu0 %4505
    %4507 = vrot.lane.b32.xlu0 %v4411, 64
    %v4508 = vpop.permute.xlu0 %4507
    %v4557 = vadd.f32 %v4269, %v4414
    %v4558 = vadd.f32 %v4270, %v4416
    %v4559 = vadd.f32 %v4271, %v4418
    %v4560 = vadd.f32 %v4272, %v4420
    %v4561 = vadd.f32 %v4273, %v4422
    %v4562 = vadd.f32 %v4274, %v4424
    %v4563 = vadd.f32 %v4275, %v4426
    %v4564 = vadd.f32 %v4276, %v4428
    %v4565 = vadd.f32 %v4277, %v4430
    %v4566 = vadd.f32 %v4278, %v4432
    %v4567 = vadd.f32 %v4279, %v4434
    %v4568 = vadd.f32 %v4280, %v4436
    %v4569 = vadd.f32 %v4281, %v4438
    %v4570 = vadd.f32 %v4282, %v4440
    %v4571 = vadd.f32 %v4283, %v4442
    %v4572 = vadd.f32 %v4284, %v4444
    %v4573 = vadd.f32 %v4285, %v4446
    %v4574 = vadd.f32 %v4286, %v4448
    %v4575 = vadd.f32 %v4287, %v4450
    %v4576 = vadd.f32 %v4288, %v4452
    %v4577 = vadd.f32 %v4289, %v4454
    %v4578 = vadd.f32 %v4290, %v4456
    %v4579 = vadd.f32 %v4291, %v4458
    %v4580 = vadd.f32 %v4292, %v4460
    %v4581 = vadd.f32 %v4293, %v4462
    %v4582 = vadd.f32 %v4294, %v4464
    %v4583 = vadd.f32 %v4295, %v4466
    %v4584 = vadd.f32 %v4296, %v4468
    %v4585 = vadd.f32 %v4297, %v4470
    %v4586 = vadd.f32 %v4298, %v4472
    %v4587 = vadd.f32 %v4299, %v4474
    %v4588 = vadd.f32 %v4300, %v4476
    %v4589 = vadd.f32 %v4301, %v4478
    %v4590 = vadd.f32 %v4302, %v4480
    %v4591 = vadd.f32 %v4303, %v4482
    %v4592 = vadd.f32 %v4304, %v4484
    %v4593 = vadd.f32 %v4305, %v4486
    %v4594 = vadd.f32 %v4306, %v4488
    %v4595 = vadd.f32 %v4307, %v4490
    %v4596 = vadd.f32 %v4308, %v4492
    %v4597 = vadd.f32 %v4309, %v4494
    %v4598 = vadd.f32 %v4310, %v4496
    %v4599 = vadd.f32 %v4311, %v4498
    %v4600 = vadd.f32 %v4312, %v4500
    %v4601 = vadd.f32 %v4313, %v4502
    %v4602 = vadd.f32 %v4314, %v4504
    %v4603 = vadd.f32 %v4315, %v4506
    %v4604 = vadd.f32 %v4316, %v4508
    %4608 = vrot.lane.b32.xlu0 %v3443, 32
    %v4609 = vpop.permute.xlu0 %4608
    %4610 = vrot.lane.b32.xlu0 %v3447, 32
    %v4611 = vpop.permute.xlu0 %4610
    %4612 = vrot.lane.b32.xlu0 %v3453, 32
    %v4613 = vpop.permute.xlu0 %4612
    %4614 = vrot.lane.b32.xlu0 %v3457, 32
    %v4615 = vpop.permute.xlu0 %4614
    %4616 = vrot.lane.b32.xlu0 %v3463, 32
    %v4617 = vpop.permute.xlu0 %4616
    %4618 = vrot.lane.b32.xlu0 %v3467, 32
    %v4619 = vpop.permute.xlu0 %4618
    %4620 = vrot.lane.b32.xlu0 %v3473, 32
    %v4621 = vpop.permute.xlu0 %4620
    %4622 = vrot.lane.b32.xlu0 %v3477, 32
    %v4623 = vpop.permute.xlu0 %4622
    %4624 = vrot.lane.b32.xlu0 %v3483, 32
    %v4625 = vpop.permute.xlu0 %4624
    %4626 = vrot.lane.b32.xlu0 %v3487, 32
    %v4627 = vpop.permute.xlu0 %4626
    %4628 = vrot.lane.b32.xlu0 %v3493, 32
    %v4629 = vpop.permute.xlu0 %4628
    %4630 = vrot.lane.b32.xlu0 %v3497, 32
    %v4631 = vpop.permute.xlu0 %4630
    %4632 = vrot.lane.b32.xlu0 %v3503, 32
    %v4633 = vpop.permute.xlu0 %4632
    %4634 = vrot.lane.b32.xlu0 %v3507, 32
    %v4635 = vpop.permute.xlu0 %4634
    %4636 = vrot.lane.b32.xlu0 %v3513, 32
    %v4637 = vpop.permute.xlu0 %4636
    %4638 = vrot.lane.b32.xlu0 %v3517, 32
    %v4639 = vpop.permute.xlu0 %4638
    %4640 = vrot.lane.b32.xlu0 %v3523, 32
    %v4641 = vpop.permute.xlu0 %4640
    %4642 = vrot.lane.b32.xlu0 %v3527, 32
    %v4643 = vpop.permute.xlu0 %4642
    %4644 = vrot.lane.b32.xlu0 %v3533, 32
    %v4645 = vpop.permute.xlu0 %4644
    %4646 = vrot.lane.b32.xlu0 %v3537, 32
    %v4647 = vpop.permute.xlu0 %4646
    %4648 = vrot.lane.b32.xlu0 %v3543, 32
    %v4649 = vpop.permute.xlu0 %4648
    %4650 = vrot.lane.b32.xlu0 %v3547, 32
    %v4651 = vpop.permute.xlu0 %4650
    %4652 = vrot.lane.b32.xlu0 %v3553, 32
    %v4653 = vpop.permute.xlu0 %4652
    %4654 = vrot.lane.b32.xlu0 %v3557, 32
    %v4655 = vpop.permute.xlu0 %4654
    %4656 = vrot.lane.b32.xlu0 %v3592, 32
    %v4657 = vpop.permute.xlu0 %4656
    %4658 = vrot.lane.b32.xlu0 %v3596, 32
    %v4659 = vpop.permute.xlu0 %4658
    %4660 = vrot.lane.b32.xlu0 %v3602, 32
    %v4661 = vpop.permute.xlu0 %4660
    %4662 = vrot.lane.b32.xlu0 %v3606, 32
    %v4663 = vpop.permute.xlu0 %4662
    %4664 = vrot.lane.b32.xlu0 %v3612, 32
    %v4665 = vpop.permute.xlu0 %4664
    %4666 = vrot.lane.b32.xlu0 %v3616, 32
    %v4667 = vpop.permute.xlu0 %4666
    %4668 = vrot.lane.b32.xlu0 %v3622, 32
    %v4669 = vpop.permute.xlu0 %4668
    %4670 = vrot.lane.b32.xlu0 %v3626, 32
    %v4671 = vpop.permute.xlu0 %4670
    %4672 = vrot.lane.b32.xlu0 %v3632, 32
    %v4673 = vpop.permute.xlu0 %4672
    %4674 = vrot.lane.b32.xlu0 %v3636, 32
    %v4675 = vpop.permute.xlu0 %4674
    %4676 = vrot.lane.b32.xlu0 %v3642, 32
    %v4677 = vpop.permute.xlu0 %4676
    %4678 = vrot.lane.b32.xlu0 %v3646, 32
    %v4679 = vpop.permute.xlu0 %4678
    %4680 = vrot.lane.b32.xlu0 %v3652, 32
    %v4681 = vpop.permute.xlu0 %4680
    %4682 = vrot.lane.b32.xlu0 %v3656, 32
    %v4683 = vpop.permute.xlu0 %4682
    %4684 = vrot.lane.b32.xlu0 %v3662, 32
    %v4685 = vpop.permute.xlu0 %4684
    %4686 = vrot.lane.b32.xlu0 %v3666, 32
    %v4687 = vpop.permute.xlu0 %4686
    %4688 = vrot.lane.b32.xlu0 %v3672, 32
    %v4689 = vpop.permute.xlu0 %4688
    %4690 = vrot.lane.b32.xlu0 %v3676, 32
    %v4691 = vpop.permute.xlu0 %4690
    %4692 = vrot.lane.b32.xlu0 %v3682, 32
    %v4693 = vpop.permute.xlu0 %4692
    %4694 = vrot.lane.b32.xlu0 %v3686, 32
    %v4695 = vpop.permute.xlu0 %4694
    %4696 = vrot.lane.b32.xlu0 %v3692, 32
    %v4697 = vpop.permute.xlu0 %4696
    %4698 = vrot.lane.b32.xlu0 %v3696, 32
    %v4699 = vpop.permute.xlu0 %4698
    %4700 = vrot.lane.b32.xlu0 %v3702, 32
    %v4701 = vpop.permute.xlu0 %4700
    %4702 = vrot.lane.b32.xlu0 %v3706, 32
    %v4703 = vpop.permute.xlu0 %4702
    %v4752 = vadd.f32 %v4557, %v4609
    %v4753 = vadd.f32 %v4558, %v4611
    %v4754 = vadd.f32 %v4559, %v4613
    %v4755 = vadd.f32 %v4560, %v4615
    %v4756 = vadd.f32 %v4561, %v4617
    %v4757 = vadd.f32 %v4562, %v4619
    %v4758 = vadd.f32 %v4563, %v4621
    %v4759 = vadd.f32 %v4564, %v4623
    %v4760 = vadd.f32 %v4565, %v4625
    %v4761 = vadd.f32 %v4566, %v4627
    %v4762 = vadd.f32 %v4567, %v4629
    %v4763 = vadd.f32 %v4568, %v4631
    %v4764 = vadd.f32 %v4569, %v4633
    %v4765 = vadd.f32 %v4570, %v4635
    %v4766 = vadd.f32 %v4571, %v4637
    %v4767 = vadd.f32 %v4572, %v4639
    %v4768 = vadd.f32 %v4573, %v4641
    %v4769 = vadd.f32 %v4574, %v4643
    %v4770 = vadd.f32 %v4575, %v4645
    %v4771 = vadd.f32 %v4576, %v4647
    %v4772 = vadd.f32 %v4577, %v4649
    %v4773 = vadd.f32 %v4578, %v4651
    %v4774 = vadd.f32 %v4579, %v4653
    %v4775 = vadd.f32 %v4580, %v4655
    %v4776 = vadd.f32 %v4581, %v4657
    %v4777 = vadd.f32 %v4582, %v4659
    %v4778 = vadd.f32 %v4583, %v4661
    %v4779 = vadd.f32 %v4584, %v4663
    %v4780 = vadd.f32 %v4585, %v4665
    %v4781 = vadd.f32 %v4586, %v4667
    %v4782 = vadd.f32 %v4587, %v4669
    %v4783 = vadd.f32 %v4588, %v4671
    %v4784 = vadd.f32 %v4589, %v4673
    %v4785 = vadd.f32 %v4590, %v4675
    %v4786 = vadd.f32 %v4591, %v4677
    %v4787 = vadd.f32 %v4592, %v4679
    %v4788 = vadd.f32 %v4593, %v4681
    %v4789 = vadd.f32 %v4594, %v4683
    %v4790 = vadd.f32 %v4595, %v4685
    %v4791 = vadd.f32 %v4596, %v4687
    %v4792 = vadd.f32 %v4597, %v4689
    %v4793 = vadd.f32 %v4598, %v4691
    %v4794 = vadd.f32 %v4599, %v4693
    %v4795 = vadd.f32 %v4600, %v4695
    %v4796 = vadd.f32 %v4601, %v4697
    %v4797 = vadd.f32 %v4602, %v4699
    %v4798 = vadd.f32 %v4603, %v4701
    %v4799 = vadd.f32 %v4604, %v4703
    %v4849 = vrot.slane %v3445, 1
    %v4850 = vrot.slane %v3449, 1
    %v4851 = vsel %vm897, %v4849, %v4850
    %v4852 = vrot.slane %v3455, 1
    %v4853 = vsel %vm897, %v4850, %v4852
    %v4854 = vrot.slane %v3459, 1
    %v4855 = vsel %vm897, %v4852, %v4854
    %v4856 = vrot.slane %v3465, 1
    %v4857 = vsel %vm897, %v4854, %v4856
    %v4858 = vrot.slane %v3469, 1
    %v4859 = vsel %vm897, %v4856, %v4858
    %v4860 = vrot.slane %v3475, 1
    %v4861 = vsel %vm897, %v4858, %v4860
    %v4862 = vrot.slane %v3479, 1
    %v4863 = vsel %vm897, %v4860, %v4862
    %v4864 = vrot.slane %v3485, 1
    %v4865 = vsel %vm897, %v4862, %v4864
    %v4866 = vrot.slane %v3489, 1
    %v4867 = vsel %vm897, %v4864, %v4866
    %v4868 = vrot.slane %v3495, 1
    %v4869 = vsel %vm897, %v4866, %v4868
    %v4870 = vrot.slane %v3499, 1
    %v4871 = vsel %vm897, %v4868, %v4870
    %v4872 = vrot.slane %v3505, 1
    %v4873 = vsel %vm897, %v4870, %v4872
    %v4874 = vrot.slane %v3509, 1
    %v4875 = vsel %vm897, %v4872, %v4874
    %v4876 = vrot.slane %v3515, 1
    %v4877 = vsel %vm897, %v4874, %v4876
    %v4878 = vrot.slane %v3519, 1
    %v4879 = vsel %vm897, %v4876, %v4878
    %v4880 = vrot.slane %v3525, 1
    %v4881 = vsel %vm897, %v4878, %v4880
    %v4882 = vrot.slane %v3529, 1
    %v4883 = vsel %vm897, %v4880, %v4882
    %v4884 = vrot.slane %v3535, 1
    %v4885 = vsel %vm897, %v4882, %v4884
    %v4886 = vrot.slane %v3539, 1
    %v4887 = vsel %vm897, %v4884, %v4886
    %v4888 = vrot.slane %v3545, 1
    %v4889 = vsel %vm897, %v4886, %v4888
    %v4890 = vrot.slane %v3549, 1
    %v4891 = vsel %vm897, %v4888, %v4890
    %v4892 = vrot.slane %v3555, 1
    %v4893 = vsel %vm897, %v4890, %v4892
    %v4894 = vrot.slane %v3559, 1
    %v4895 = vsel %vm897, %v4892, %v4894
    %v4896 = vrot.slane %v3564, 1
    %v4897 = vsel %vm897, %v4894, %v4896
    %v4898 = vrot.slane %v3594, 1
    %v4899 = vrot.slane %v3598, 1
    %v4900 = vsel %vm897, %v4898, %v4899
    %v4901 = vrot.slane %v3604, 1
    %v4902 = vsel %vm897, %v4899, %v4901
    %v4903 = vrot.slane %v3608, 1
    %v4904 = vsel %vm897, %v4901, %v4903
    %v4905 = vrot.slane %v3614, 1
    %v4906 = vsel %vm897, %v4903, %v4905
    %v4907 = vrot.slane %v3618, 1
    %v4908 = vsel %vm897, %v4905, %v4907
    %v4909 = vrot.slane %v3624, 1
    %v4910 = vsel %vm897, %v4907, %v4909
    %v4911 = vrot.slane %v3628, 1
    %v4912 = vsel %vm897, %v4909, %v4911
    %v4913 = vrot.slane %v3634, 1
    %v4914 = vsel %vm897, %v4911, %v4913
    %v4915 = vrot.slane %v3638, 1
    %v4916 = vsel %vm897, %v4913, %v4915
    %v4917 = vrot.slane %v3644, 1
    %v4918 = vsel %vm897, %v4915, %v4917
    %v4919 = vrot.slane %v3648, 1
    %v4920 = vsel %vm897, %v4917, %v4919
    %v4921 = vrot.slane %v3654, 1
    %v4922 = vsel %vm897, %v4919, %v4921
    %v4923 = vrot.slane %v3658, 1
    %v4924 = vsel %vm897, %v4921, %v4923
    %v4925 = vrot.slane %v3664, 1
    %v4926 = vsel %vm897, %v4923, %v4925
    %v4927 = vrot.slane %v3668, 1
    %v4928 = vsel %vm897, %v4925, %v4927
    %v4929 = vrot.slane %v3674, 1
    %v4930 = vsel %vm897, %v4927, %v4929
    %v4931 = vrot.slane %v3678, 1
    %v4932 = vsel %vm897, %v4929, %v4931
    %v4933 = vrot.slane %v3684, 1
    %v4934 = vsel %vm897, %v4931, %v4933
    %v4935 = vrot.slane %v3688, 1
    %v4936 = vsel %vm897, %v4933, %v4935
    %v4937 = vrot.slane %v3694, 1
    %v4938 = vsel %vm897, %v4935, %v4937
    %v4939 = vrot.slane %v3698, 1
    %v4940 = vsel %vm897, %v4937, %v4939
    %v4941 = vrot.slane %v3704, 1
    %v4942 = vsel %vm897, %v4939, %v4941
    %v4943 = vrot.slane %v3708, 1
    %v4944 = vsel %vm897, %v4941, %v4943
    %v4993 = vadd.f32 %v4752, %v4851
    %v4994 = vadd.f32 %v4753, %v4853
    %v4995 = vadd.f32 %v4754, %v4855
    %v4996 = vadd.f32 %v4755, %v4857
    %v4997 = vadd.f32 %v4756, %v4859
    %v4998 = vadd.f32 %v4757, %v4861
    %v4999 = vadd.f32 %v4758, %v4863
    %v5000 = vadd.f32 %v4759, %v4865
    %v5001 = vadd.f32 %v4760, %v4867
    %v5002 = vadd.f32 %v4761, %v4869
    %v5003 = vadd.f32 %v4762, %v4871
    %v5004 = vadd.f32 %v4763, %v4873
    %v5005 = vadd.f32 %v4764, %v4875
    %v5006 = vadd.f32 %v4765, %v4877
    %v5007 = vadd.f32 %v4766, %v4879
    %v5008 = vadd.f32 %v4767, %v4881
    %v5009 = vadd.f32 %v4768, %v4883
    %v5010 = vadd.f32 %v4769, %v4885
    %v5011 = vadd.f32 %v4770, %v4887
    %v5012 = vadd.f32 %v4771, %v4889
    %v5013 = vadd.f32 %v4772, %v4891
    %v5014 = vadd.f32 %v4773, %v4893
    %v5015 = vadd.f32 %v4774, %v4895
    %v5016 = vadd.f32 %v4775, %v4897
    %v5017 = vadd.f32 %v4776, %v4900
    %v5018 = vadd.f32 %v4777, %v4902
    %v5019 = vadd.f32 %v4778, %v4904
    %v5020 = vadd.f32 %v4779, %v4906
    %v5021 = vadd.f32 %v4780, %v4908
    %v5022 = vadd.f32 %v4781, %v4910
    %v5023 = vadd.f32 %v4782, %v4912
    %v5024 = vadd.f32 %v4783, %v4914
    %v5025 = vadd.f32 %v4784, %v4916
    %v5026 = vadd.f32 %v4785, %v4918
    %v5027 = vadd.f32 %v4786, %v4920
    %v5028 = vadd.f32 %v4787, %v4922
    %v5029 = vadd.f32 %v4788, %v4924
    %v5030 = vadd.f32 %v4789, %v4926
    %v5031 = vadd.f32 %v4790, %v4928
    %v5032 = vadd.f32 %v4791, %v4930
    %v5033 = vadd.f32 %v4792, %v4932
    %v5034 = vadd.f32 %v4793, %v4934
    %v5035 = vadd.f32 %v4794, %v4936
    %v5036 = vadd.f32 %v4795, %v4938
    %v5037 = vadd.f32 %v4796, %v4940
    %v5038 = vadd.f32 %v4797, %v4942
    %v5039 = vadd.f32 %v4798, %v4944
    %v5040 = vadd.f32 %v4799, %v4943
    %v5041 = vrot.slane %v3445, 2
    %v5042 = vrot.slane %v3449, 2
    %v5043 = vsel %vm1257, %v5041, %v5042
    %v5044 = vrot.slane %v3455, 2
    %v5045 = vsel %vm1257, %v5042, %v5044
    %v5046 = vrot.slane %v3459, 2
    %v5047 = vsel %vm1257, %v5044, %v5046
    %v5048 = vrot.slane %v3465, 2
    %v5049 = vsel %vm1257, %v5046, %v5048
    %v5050 = vrot.slane %v3469, 2
    %v5051 = vsel %vm1257, %v5048, %v5050
    %v5052 = vrot.slane %v3475, 2
    %v5053 = vsel %vm1257, %v5050, %v5052
    %v5054 = vrot.slane %v3479, 2
    %v5055 = vsel %vm1257, %v5052, %v5054
    %v5056 = vrot.slane %v3485, 2
    %v5057 = vsel %vm1257, %v5054, %v5056
    %v5058 = vrot.slane %v3489, 2
    %v5059 = vsel %vm1257, %v5056, %v5058
    %v5060 = vrot.slane %v3495, 2
    %v5061 = vsel %vm1257, %v5058, %v5060
    %v5062 = vrot.slane %v3499, 2
    %v5063 = vsel %vm1257, %v5060, %v5062
    %v5064 = vrot.slane %v3505, 2
    %v5065 = vsel %vm1257, %v5062, %v5064
    %v5066 = vrot.slane %v3509, 2
    %v5067 = vsel %vm1257, %v5064, %v5066
    %v5068 = vrot.slane %v3515, 2
    %v5069 = vsel %vm1257, %v5066, %v5068
    %v5070 = vrot.slane %v3519, 2
    %v5071 = vsel %vm1257, %v5068, %v5070
    %v5072 = vrot.slane %v3525, 2
    %v5073 = vsel %vm1257, %v5070, %v5072
    %v5074 = vrot.slane %v3529, 2
    %v5075 = vsel %vm1257, %v5072, %v5074
    %v5076 = vrot.slane %v3535, 2
    %v5077 = vsel %vm1257, %v5074, %v5076
    %v5078 = vrot.slane %v3539, 2
    %v5079 = vsel %vm1257, %v5076, %v5078
    %v5080 = vrot.slane %v3545, 2
    %v5081 = vsel %vm1257, %v5078, %v5080
    %v5082 = vrot.slane %v3549, 2
    %v5083 = vsel %vm1257, %v5080, %v5082
    %v5084 = vrot.slane %v3555, 2
    %v5085 = vsel %vm1257, %v5082, %v5084
    %v5086 = vrot.slane %v3559, 2
    %v5087 = vsel %vm1257, %v5084, %v5086
    %v5088 = vrot.slane %v3564, 2
    %v5089 = vsel %vm1257, %v5086, %v5088
    %v5090 = vrot.slane %v3594, 2
    %v5091 = vrot.slane %v3598, 2
    %v5092 = vsel %vm1257, %v5090, %v5091
    %v5093 = vrot.slane %v3604, 2
    %v5094 = vsel %vm1257, %v5091, %v5093
    %v5095 = vrot.slane %v3608, 2
    %v5096 = vsel %vm1257, %v5093, %v5095
    %v5097 = vrot.slane %v3614, 2
    %v5098 = vsel %vm1257, %v5095, %v5097
    %v5099 = vrot.slane %v3618, 2
    %v5100 = vsel %vm1257, %v5097, %v5099
    %v5101 = vrot.slane %v3624, 2
    %v5102 = vsel %vm1257, %v5099, %v5101
    %v5103 = vrot.slane %v3628, 2
    %v5104 = vsel %vm1257, %v5101, %v5103
    %v5105 = vrot.slane %v3634, 2
    %v5106 = vsel %vm1257, %v5103, %v5105
    %v5107 = vrot.slane %v3638, 2
    %v5108 = vsel %vm1257, %v5105, %v5107
    %v5109 = vrot.slane %v3644, 2
    %v5110 = vsel %vm1257, %v5107, %v5109
    %v5111 = vrot.slane %v3648, 2
    %v5112 = vsel %vm1257, %v5109, %v5111
    %v5113 = vrot.slane %v3654, 2
    %v5114 = vsel %vm1257, %v5111, %v5113
    %v5115 = vrot.slane %v3658, 2
    %v5116 = vsel %vm1257, %v5113, %v5115
    %v5117 = vrot.slane %v3664, 2
    %v5118 = vsel %vm1257, %v5115, %v5117
    %v5119 = vrot.slane %v3668, 2
    %v5120 = vsel %vm1257, %v5117, %v5119
    %v5121 = vrot.slane %v3674, 2
    %v5122 = vsel %vm1257, %v5119, %v5121
    %v5123 = vrot.slane %v3678, 2
    %v5124 = vsel %vm1257, %v5121, %v5123
    %v5125 = vrot.slane %v3684, 2
    %v5126 = vsel %vm1257, %v5123, %v5125
    %v5127 = vrot.slane %v3688, 2
    %v5128 = vsel %vm1257, %v5125, %v5127
    %v5129 = vrot.slane %v3694, 2
    %v5130 = vsel %vm1257, %v5127, %v5129
    %v5131 = vrot.slane %v3698, 2
    %v5132 = vsel %vm1257, %v5129, %v5131
    %v5133 = vrot.slane %v3704, 2
    %v5134 = vsel %vm1257, %v5131, %v5133
    %v5135 = vrot.slane %v3708, 2
    %v5136 = vsel %vm1257, %v5133, %v5135
    %5137 = vrot.lane.b32.xlu0 %v5043, 96
    %v5138 = vpop.permute.xlu0 %5137
    %5139 = vrot.lane.b32.xlu0 %v5045, 96
    %v5140 = vpop.permute.xlu0 %5139
    %5141 = vrot.lane.b32.xlu0 %v5047, 96
    %v5142 = vpop.permute.xlu0 %5141
    %5143 = vrot.lane.b32.xlu0 %v5049, 96
    %v5144 = vpop.permute.xlu0 %5143
    %5145 = vrot.lane.b32.xlu0 %v5051, 96
    %v5146 = vpop.permute.xlu0 %5145
    %5147 = vrot.lane.b32.xlu0 %v5053, 96
    %v5148 = vpop.permute.xlu0 %5147
    %5149 = vrot.lane.b32.xlu0 %v5055, 96
    %v5150 = vpop.permute.xlu0 %5149
    %5151 = vrot.lane.b32.xlu0 %v5057, 96
    %v5152 = vpop.permute.xlu0 %5151
    %5153 = vrot.lane.b32.xlu0 %v5059, 96
    %v5154 = vpop.permute.xlu0 %5153
    %5155 = vrot.lane.b32.xlu0 %v5061, 96
    %v5156 = vpop.permute.xlu0 %5155
    %5157 = vrot.lane.b32.xlu0 %v5063, 96
    %v5158 = vpop.permute.xlu0 %5157
    %5159 = vrot.lane.b32.xlu0 %v5065, 96
    %v5160 = vpop.permute.xlu0 %5159
    %5161 = vrot.lane.b32.xlu0 %v5067, 96
    %v5162 = vpop.permute.xlu0 %5161
    %5163 = vrot.lane.b32.xlu0 %v5069, 96
    %v5164 = vpop.permute.xlu0 %5163
    %5165 = vrot.lane.b32.xlu0 %v5071, 96
    %v5166 = vpop.permute.xlu0 %5165
    %5167 = vrot.lane.b32.xlu0 %v5073, 96
    %v5168 = vpop.permute.xlu0 %5167
    %5169 = vrot.lane.b32.xlu0 %v5075, 96
    %v5170 = vpop.permute.xlu0 %5169
    %5171 = vrot.lane.b32.xlu0 %v5077, 96
    %v5172 = vpop.permute.xlu0 %5171
    %5173 = vrot.lane.b32.xlu0 %v5079, 96
    %v5174 = vpop.permute.xlu0 %5173
    %5175 = vrot.lane.b32.xlu0 %v5081, 96
    %v5176 = vpop.permute.xlu0 %5175
    %5177 = vrot.lane.b32.xlu0 %v5083, 96
    %v5178 = vpop.permute.xlu0 %5177
    %5179 = vrot.lane.b32.xlu0 %v5085, 96
    %v5180 = vpop.permute.xlu0 %5179
    %5181 = vrot.lane.b32.xlu0 %v5087, 96
    %v5182 = vpop.permute.xlu0 %5181
    %5183 = vrot.lane.b32.xlu0 %v5089, 96
    %v5184 = vpop.permute.xlu0 %5183
    %5185 = vrot.lane.b32.xlu0 %v5092, 96
    %v5186 = vpop.permute.xlu0 %5185
    %5187 = vrot.lane.b32.xlu0 %v5094, 96
    %v5188 = vpop.permute.xlu0 %5187
    %5189 = vrot.lane.b32.xlu0 %v5096, 96
    %v5190 = vpop.permute.xlu0 %5189
    %5191 = vrot.lane.b32.xlu0 %v5098, 96
    %v5192 = vpop.permute.xlu0 %5191
    %5193 = vrot.lane.b32.xlu0 %v5100, 96
    %v5194 = vpop.permute.xlu0 %5193
    %5195 = vrot.lane.b32.xlu0 %v5102, 96
    %v5196 = vpop.permute.xlu0 %5195
    %5197 = vrot.lane.b32.xlu0 %v5104, 96
    %v5198 = vpop.permute.xlu0 %5197
    %5199 = vrot.lane.b32.xlu0 %v5106, 96
    %v5200 = vpop.permute.xlu0 %5199
    %5201 = vrot.lane.b32.xlu0 %v5108, 96
    %v5202 = vpop.permute.xlu0 %5201
    %5203 = vrot.lane.b32.xlu0 %v5110, 96
    %v5204 = vpop.permute.xlu0 %5203
    %5205 = vrot.lane.b32.xlu0 %v5112, 96
    %v5206 = vpop.permute.xlu0 %5205
    %5207 = vrot.lane.b32.xlu0 %v5114, 96
    %v5208 = vpop.permute.xlu0 %5207
    %5209 = vrot.lane.b32.xlu0 %v5116, 96
    %v5210 = vpop.permute.xlu0 %5209
    %5211 = vrot.lane.b32.xlu0 %v5118, 96
    %v5212 = vpop.permute.xlu0 %5211
    %5213 = vrot.lane.b32.xlu0 %v5120, 96
    %v5214 = vpop.permute.xlu0 %5213
    %5215 = vrot.lane.b32.xlu0 %v5122, 96
    %v5216 = vpop.permute.xlu0 %5215
    %5217 = vrot.lane.b32.xlu0 %v5124, 96
    %v5218 = vpop.permute.xlu0 %5217
    %5219 = vrot.lane.b32.xlu0 %v5126, 96
    %v5220 = vpop.permute.xlu0 %5219
    %5221 = vrot.lane.b32.xlu0 %v5128, 96
    %v5222 = vpop.permute.xlu0 %5221
    %5223 = vrot.lane.b32.xlu0 %v5130, 96
    %v5224 = vpop.permute.xlu0 %5223
    %5225 = vrot.lane.b32.xlu0 %v5132, 96
    %v5226 = vpop.permute.xlu0 %5225
    %5227 = vrot.lane.b32.xlu0 %v5134, 96
    %v5228 = vpop.permute.xlu0 %5227
    %5229 = vrot.lane.b32.xlu0 %v5136, 96
    %v5230 = vpop.permute.xlu0 %5229
    %5231 = vrot.lane.b32.xlu0 %v5135, 96
    %v5232 = vpop.permute.xlu0 %5231
    %v5281 = vadd.f32 %v4993, %v5138
    %v5282 = vadd.f32 %v4994, %v5140
    %v5283 = vadd.f32 %v4995, %v5142
    %v5284 = vadd.f32 %v4996, %v5144
    %v5285 = vadd.f32 %v4997, %v5146
    %v5286 = vadd.f32 %v4998, %v5148
    %v5287 = vadd.f32 %v4999, %v5150
    %v5288 = vadd.f32 %v5000, %v5152
    %v5289 = vadd.f32 %v5001, %v5154
    %v5290 = vadd.f32 %v5002, %v5156
    %v5291 = vadd.f32 %v5003, %v5158
    %v5292 = vadd.f32 %v5004, %v5160
    %v5293 = vadd.f32 %v5005, %v5162
    %v5294 = vadd.f32 %v5006, %v5164
    %v5295 = vadd.f32 %v5007, %v5166
    %v5296 = vadd.f32 %v5008, %v5168
    %v5297 = vadd.f32 %v5009, %v5170
    %v5298 = vadd.f32 %v5010, %v5172
    %v5299 = vadd.f32 %v5011, %v5174
    %v5300 = vadd.f32 %v5012, %v5176
    %v5301 = vadd.f32 %v5013, %v5178
    %v5302 = vadd.f32 %v5014, %v5180
    %v5303 = vadd.f32 %v5015, %v5182
    %v5304 = vadd.f32 %v5016, %v5184
    %v5305 = vadd.f32 %v5017, %v5186
    %v5306 = vadd.f32 %v5018, %v5188
    %v5307 = vadd.f32 %v5019, %v5190
    %v5308 = vadd.f32 %v5020, %v5192
    %v5309 = vadd.f32 %v5021, %v5194
    %v5310 = vadd.f32 %v5022, %v5196
    %v5311 = vadd.f32 %v5023, %v5198
    %v5312 = vadd.f32 %v5024, %v5200
    %v5313 = vadd.f32 %v5025, %v5202
    %v5314 = vadd.f32 %v5026, %v5204
    %v5315 = vadd.f32 %v5027, %v5206
    %v5316 = vadd.f32 %v5028, %v5208
    %v5317 = vadd.f32 %v5029, %v5210
    %v5318 = vadd.f32 %v5030, %v5212
    %v5319 = vadd.f32 %v5031, %v5214
    %v5320 = vadd.f32 %v5032, %v5216
    %v5321 = vadd.f32 %v5033, %v5218
    %v5322 = vadd.f32 %v5034, %v5220
    %v5323 = vadd.f32 %v5035, %v5222
    %v5324 = vadd.f32 %v5036, %v5224
    %v5325 = vadd.f32 %v5037, %v5226
    %v5326 = vadd.f32 %v5038, %v5228
    %v5327 = vadd.f32 %v5039, %v5230
    %v5328 = vadd.f32 %v5040, %v5232
    %5332 = vrot.lane.b32.xlu0 %v3455, 64
    %v5333 = vpop.permute.xlu0 %5332
    %5334 = vrot.lane.b32.xlu0 %v3459, 64
    %v5335 = vpop.permute.xlu0 %5334
    %5336 = vrot.lane.b32.xlu0 %v3465, 64
    %v5337 = vpop.permute.xlu0 %5336
    %5338 = vrot.lane.b32.xlu0 %v3469, 64
    %v5339 = vpop.permute.xlu0 %5338
    %5340 = vrot.lane.b32.xlu0 %v3475, 64
    %v5341 = vpop.permute.xlu0 %5340
    %5342 = vrot.lane.b32.xlu0 %v3479, 64
    %v5343 = vpop.permute.xlu0 %5342
    %5344 = vrot.lane.b32.xlu0 %v3485, 64
    %v5345 = vpop.permute.xlu0 %5344
    %5346 = vrot.lane.b32.xlu0 %v3489, 64
    %v5347 = vpop.permute.xlu0 %5346
    %5348 = vrot.lane.b32.xlu0 %v3495, 64
    %v5349 = vpop.permute.xlu0 %5348
    %5350 = vrot.lane.b32.xlu0 %v3499, 64
    %v5351 = vpop.permute.xlu0 %5350
    %5352 = vrot.lane.b32.xlu0 %v3505, 64
    %v5353 = vpop.permute.xlu0 %5352
    %5354 = vrot.lane.b32.xlu0 %v3509, 64
    %v5355 = vpop.permute.xlu0 %5354
    %5356 = vrot.lane.b32.xlu0 %v3515, 64
    %v5357 = vpop.permute.xlu0 %5356
    %5358 = vrot.lane.b32.xlu0 %v3519, 64
    %v5359 = vpop.permute.xlu0 %5358
    %5360 = vrot.lane.b32.xlu0 %v3525, 64
    %v5361 = vpop.permute.xlu0 %5360
    %5362 = vrot.lane.b32.xlu0 %v3529, 64
    %v5363 = vpop.permute.xlu0 %5362
    %5364 = vrot.lane.b32.xlu0 %v3535, 64
    %v5365 = vpop.permute.xlu0 %5364
    %5366 = vrot.lane.b32.xlu0 %v3539, 64
    %v5367 = vpop.permute.xlu0 %5366
    %5368 = vrot.lane.b32.xlu0 %v3545, 64
    %v5369 = vpop.permute.xlu0 %5368
    %5370 = vrot.lane.b32.xlu0 %v3549, 64
    %v5371 = vpop.permute.xlu0 %5370
    %5372 = vrot.lane.b32.xlu0 %v3555, 64
    %v5373 = vpop.permute.xlu0 %5372
    %5374 = vrot.lane.b32.xlu0 %v3559, 64
    %v5375 = vpop.permute.xlu0 %5374
    %5376 = vrot.lane.b32.xlu0 %v3564, 64
    %v5377 = vpop.permute.xlu0 %5376
    %5378 = vrot.lane.b32.xlu0 %v3567, 64
    %v5379 = vpop.permute.xlu0 %5378
    %5380 = vrot.lane.b32.xlu0 %v3604, 64
    %v5381 = vpop.permute.xlu0 %5380
    %5382 = vrot.lane.b32.xlu0 %v3608, 64
    %v5383 = vpop.permute.xlu0 %5382
    %5384 = vrot.lane.b32.xlu0 %v3614, 64
    %v5385 = vpop.permute.xlu0 %5384
    %5386 = vrot.lane.b32.xlu0 %v3618, 64
    %v5387 = vpop.permute.xlu0 %5386
    %5388 = vrot.lane.b32.xlu0 %v3624, 64
    %v5389 = vpop.permute.xlu0 %5388
    %5390 = vrot.lane.b32.xlu0 %v3628, 64
    %v5391 = vpop.permute.xlu0 %5390
    %5392 = vrot.lane.b32.xlu0 %v3634, 64
    %v5393 = vpop.permute.xlu0 %5392
    %5394 = vrot.lane.b32.xlu0 %v3638, 64
    %v5395 = vpop.permute.xlu0 %5394
    %5396 = vrot.lane.b32.xlu0 %v3644, 64
    %v5397 = vpop.permute.xlu0 %5396
    %5398 = vrot.lane.b32.xlu0 %v3648, 64
    %v5399 = vpop.permute.xlu0 %5398
    %5400 = vrot.lane.b32.xlu0 %v3654, 64
    %v5401 = vpop.permute.xlu0 %5400
    %5402 = vrot.lane.b32.xlu0 %v3658, 64
    %v5403 = vpop.permute.xlu0 %5402
    %5404 = vrot.lane.b32.xlu0 %v3664, 64
    %v5405 = vpop.permute.xlu0 %5404
    %5406 = vrot.lane.b32.xlu0 %v3668, 64
    %v5407 = vpop.permute.xlu0 %5406
    %5408 = vrot.lane.b32.xlu0 %v3674, 64
    %v5409 = vpop.permute.xlu0 %5408
    %5410 = vrot.lane.b32.xlu0 %v3678, 64
    %v5411 = vpop.permute.xlu0 %5410
    %5412 = vrot.lane.b32.xlu0 %v3684, 64
    %v5413 = vpop.permute.xlu0 %5412
    %5414 = vrot.lane.b32.xlu0 %v3688, 64
    %v5415 = vpop.permute.xlu0 %5414
    %5416 = vrot.lane.b32.xlu0 %v3694, 64
    %v5417 = vpop.permute.xlu0 %5416
    %5418 = vrot.lane.b32.xlu0 %v3698, 64
    %v5419 = vpop.permute.xlu0 %5418
    %5420 = vrot.lane.b32.xlu0 %v3704, 64
    %v5421 = vpop.permute.xlu0 %5420
    %5422 = vrot.lane.b32.xlu0 %v3708, 64
    %v5423 = vpop.permute.xlu0 %5422
    %5424 = vrot.lane.b32.xlu0 %v3713, 64
    %v5425 = vpop.permute.xlu0 %5424
    %5426 = vrot.lane.b32.xlu0 %v3716, 64
    %v5427 = vpop.permute.xlu0 %5426
    %v5476 = vadd.f32 %v5281, %v5333
    %v5477 = vadd.f32 %v5282, %v5335
    %v5478 = vadd.f32 %v5283, %v5337
    %v5479 = vadd.f32 %v5284, %v5339
    %v5480 = vadd.f32 %v5285, %v5341
    %v5481 = vadd.f32 %v5286, %v5343
    %v5482 = vadd.f32 %v5287, %v5345
    %v5483 = vadd.f32 %v5288, %v5347
    %v5484 = vadd.f32 %v5289, %v5349
    %v5485 = vadd.f32 %v5290, %v5351
    %v5486 = vadd.f32 %v5291, %v5353
    %v5487 = vadd.f32 %v5292, %v5355
    %v5488 = vadd.f32 %v5293, %v5357
    %v5489 = vadd.f32 %v5294, %v5359
    %v5490 = vadd.f32 %v5295, %v5361
    %v5491 = vadd.f32 %v5296, %v5363
    %v5492 = vadd.f32 %v5297, %v5365
    %v5493 = vadd.f32 %v5298, %v5367
    %v5494 = vadd.f32 %v5299, %v5369
    %v5495 = vadd.f32 %v5300, %v5371
    %v5496 = vadd.f32 %v5301, %v5373
    %v5497 = vadd.f32 %v5302, %v5375
    %v5498 = vadd.f32 %v5303, %v5377
    %v5499 = vadd.f32 %v5304, %v5379
    %v5500 = vadd.f32 %v5305, %v5381
    %v5501 = vadd.f32 %v5306, %v5383
    %v5502 = vadd.f32 %v5307, %v5385
    %v5503 = vadd.f32 %v5308, %v5387
    %v5504 = vadd.f32 %v5309, %v5389
    %v5505 = vadd.f32 %v5310, %v5391
    %v5506 = vadd.f32 %v5311, %v5393
    %v5507 = vadd.f32 %v5312, %v5395
    %v5508 = vadd.f32 %v5313, %v5397
    %v5509 = vadd.f32 %v5314, %v5399
    %v5510 = vadd.f32 %v5315, %v5401
    %v5511 = vadd.f32 %v5316, %v5403
    %v5512 = vadd.f32 %v5317, %v5405
    %v5513 = vadd.f32 %v5318, %v5407
    %v5514 = vadd.f32 %v5319, %v5409
    %v5515 = vadd.f32 %v5320, %v5411
    %v5516 = vadd.f32 %v5321, %v5413
    %v5517 = vadd.f32 %v5322, %v5415
    %v5518 = vadd.f32 %v5323, %v5417
    %v5519 = vadd.f32 %v5324, %v5419
    %v5520 = vadd.f32 %v5325, %v5421
    %v5521 = vadd.f32 %v5326, %v5423
    %v5522 = vadd.f32 %v5327, %v5425
    %v5523 = vadd.f32 %v5328, %v5427
    %v5525 = vrot.slane %v3567, 1
    %v5526 = vsel %vm897, %v4896, %v5525
    %v5527 = vrot.slane %v3572, 1
    %v5528 = vsel %vm897, %v5525, %v5527
    %v5529 = vrot.slane %v3713, 1
    %v5530 = vsel %vm897, %v4943, %v5529
    %v5531 = vrot.slane %v3716, 1
    %v5532 = vsel %vm897, %v5529, %v5531
    %5533 = vrot.lane.b32.xlu0 %v4855, 32
    %v5534 = vpop.permute.xlu0 %5533
    %5535 = vrot.lane.b32.xlu0 %v4857, 32
    %v5536 = vpop.permute.xlu0 %5535
    %5537 = vrot.lane.b32.xlu0 %v4859, 32
    %v5538 = vpop.permute.xlu0 %5537
    %5539 = vrot.lane.b32.xlu0 %v4861, 32
    %v5540 = vpop.permute.xlu0 %5539
    %5541 = vrot.lane.b32.xlu0 %v4863, 32
    %v5542 = vpop.permute.xlu0 %5541
    %5543 = vrot.lane.b32.xlu0 %v4865, 32
    %v5544 = vpop.permute.xlu0 %5543
    %5545 = vrot.lane.b32.xlu0 %v4867, 32
    %v5546 = vpop.permute.xlu0 %5545
    %5547 = vrot.lane.b32.xlu0 %v4869, 32
    %v5548 = vpop.permute.xlu0 %5547
    %5549 = vrot.lane.b32.xlu0 %v4871, 32
    %v5550 = vpop.permute.xlu0 %5549
    %5551 = vrot.lane.b32.xlu0 %v4873, 32
    %v5552 = vpop.permute.xlu0 %5551
    %5553 = vrot.lane.b32.xlu0 %v4875, 32
    %v5554 = vpop.permute.xlu0 %5553
    %5555 = vrot.lane.b32.xlu0 %v4877, 32
    %v5556 = vpop.permute.xlu0 %5555
    %5557 = vrot.lane.b32.xlu0 %v4879, 32
    %v5558 = vpop.permute.xlu0 %5557
    %5559 = vrot.lane.b32.xlu0 %v4881, 32
    %v5560 = vpop.permute.xlu0 %5559
    %5561 = vrot.lane.b32.xlu0 %v4883, 32
    %v5562 = vpop.permute.xlu0 %5561
    %5563 = vrot.lane.b32.xlu0 %v4885, 32
    %v5564 = vpop.permute.xlu0 %5563
    %5565 = vrot.lane.b32.xlu0 %v4887, 32
    %v5566 = vpop.permute.xlu0 %5565
    %5567 = vrot.lane.b32.xlu0 %v4889, 32
    %v5568 = vpop.permute.xlu0 %5567
    %5569 = vrot.lane.b32.xlu0 %v4891, 32
    %v5570 = vpop.permute.xlu0 %5569
    %5571 = vrot.lane.b32.xlu0 %v4893, 32
    %v5572 = vpop.permute.xlu0 %5571
    %5573 = vrot.lane.b32.xlu0 %v4895, 32
    %v5574 = vpop.permute.xlu0 %5573
    %5575 = vrot.lane.b32.xlu0 %v4897, 32
    %v5576 = vpop.permute.xlu0 %5575
    %5577 = vrot.lane.b32.xlu0 %v5526, 32
    %v5578 = vpop.permute.xlu0 %5577
    %5579 = vrot.lane.b32.xlu0 %v5528, 32
    %v5580 = vpop.permute.xlu0 %5579
    %5581 = vrot.lane.b32.xlu0 %v4904, 32
    %v5582 = vpop.permute.xlu0 %5581
    %5583 = vrot.lane.b32.xlu0 %v4906, 32
    %v5584 = vpop.permute.xlu0 %5583
    %5585 = vrot.lane.b32.xlu0 %v4908, 32
    %v5586 = vpop.permute.xlu0 %5585
    %5587 = vrot.lane.b32.xlu0 %v4910, 32
    %v5588 = vpop.permute.xlu0 %5587
    %5589 = vrot.lane.b32.xlu0 %v4912, 32
    %v5590 = vpop.permute.xlu0 %5589
    %5591 = vrot.lane.b32.xlu0 %v4914, 32
    %v5592 = vpop.permute.xlu0 %5591
    %5593 = vrot.lane.b32.xlu0 %v4916, 32
    %v5594 = vpop.permute.xlu0 %5593
    %5595 = vrot.lane.b32.xlu0 %v4918, 32
    %v5596 = vpop.permute.xlu0 %5595
    %5597 = vrot.lane.b32.xlu0 %v4920, 32
    %v5598 = vpop.permute.xlu0 %5597
    %5599 = vrot.lane.b32.xlu0 %v4922, 32
    %v5600 = vpop.permute.xlu0 %5599
    %5601 = vrot.lane.b32.xlu0 %v4924, 32
    %v5602 = vpop.permute.xlu0 %5601
    %5603 = vrot.lane.b32.xlu0 %v4926, 32
    %v5604 = vpop.permute.xlu0 %5603
    %5605 = vrot.lane.b32.xlu0 %v4928, 32
    %v5606 = vpop.permute.xlu0 %5605
    %5607 = vrot.lane.b32.xlu0 %v4930, 32
    %v5608 = vpop.permute.xlu0 %5607
    %5609 = vrot.lane.b32.xlu0 %v4932, 32
    %v5610 = vpop.permute.xlu0 %5609
    %5611 = vrot.lane.b32.xlu0 %v4934, 32
    %v5612 = vpop.permute.xlu0 %5611
    %5613 = vrot.lane.b32.xlu0 %v4936, 32
    %v5614 = vpop.permute.xlu0 %5613
    %5615 = vrot.lane.b32.xlu0 %v4938, 32
    %v5616 = vpop.permute.xlu0 %5615
    %5617 = vrot.lane.b32.xlu0 %v4940, 32
    %v5618 = vpop.permute.xlu0 %5617
    %5619 = vrot.lane.b32.xlu0 %v4942, 32
    %v5620 = vpop.permute.xlu0 %5619
    %5621 = vrot.lane.b32.xlu0 %v4944, 32
    %v5622 = vpop.permute.xlu0 %5621
    %5623 = vrot.lane.b32.xlu0 %v5530, 32
    %v5624 = vpop.permute.xlu0 %5623
    %5625 = vrot.lane.b32.xlu0 %v5532, 32
    %v5626 = vpop.permute.xlu0 %5625
    %5627 = vrot.lane.b32.xlu0 %v5531, 32
    %v5628 = vpop.permute.xlu0 %5627
    %v5677 = vadd.f32 %v5476, %v5534
    %v5678 = vadd.f32 %v5477, %v5536
    %v5679 = vadd.f32 %v5478, %v5538
    %v5680 = vadd.f32 %v5479, %v5540
    %v5681 = vadd.f32 %v5480, %v5542
    %v5682 = vadd.f32 %v5481, %v5544
    %v5683 = vadd.f32 %v5482, %v5546
    %v5684 = vadd.f32 %v5483, %v5548
    %v5685 = vadd.f32 %v5484, %v5550
    %v5686 = vadd.f32 %v5485, %v5552
    %v5687 = vadd.f32 %v5486, %v5554
    %v5688 = vadd.f32 %v5487, %v5556
    %v5689 = vadd.f32 %v5488, %v5558
    %v5690 = vadd.f32 %v5489, %v5560
    %v5691 = vadd.f32 %v5490, %v5562
    %v5692 = vadd.f32 %v5491, %v5564
    %v5693 = vadd.f32 %v5492, %v5566
    %v5694 = vadd.f32 %v5493, %v5568
    %v5695 = vadd.f32 %v5494, %v5570
    %v5696 = vadd.f32 %v5495, %v5572
    %v5697 = vadd.f32 %v5496, %v5574
    %v5698 = vadd.f32 %v5497, %v5576
    %v5699 = vadd.f32 %v5498, %v5578
    %v5700 = vadd.f32 %v5499, %v5580
    %v5701 = vadd.f32 %v5500, %v5582
    %v5702 = vadd.f32 %v5501, %v5584
    %v5703 = vadd.f32 %v5502, %v5586
    %v5704 = vadd.f32 %v5503, %v5588
    %v5705 = vadd.f32 %v5504, %v5590
    %v5706 = vadd.f32 %v5505, %v5592
    %v5707 = vadd.f32 %v5506, %v5594
    %v5708 = vadd.f32 %v5507, %v5596
    %v5709 = vadd.f32 %v5508, %v5598
    %v5710 = vadd.f32 %v5509, %v5600
    %v5711 = vadd.f32 %v5510, %v5602
    %v5712 = vadd.f32 %v5511, %v5604
    %v5713 = vadd.f32 %v5512, %v5606
    %v5714 = vadd.f32 %v5513, %v5608
    %v5715 = vadd.f32 %v5514, %v5610
    %v5716 = vadd.f32 %v5515, %v5612
    %v5717 = vadd.f32 %v5516, %v5614
    %v5718 = vadd.f32 %v5517, %v5616
    %v5719 = vadd.f32 %v5518, %v5618
    %v5720 = vadd.f32 %v5519, %v5620
    %v5721 = vadd.f32 %v5520, %v5622
    %v5722 = vadd.f32 %v5521, %v5624
    %v5723 = vadd.f32 %v5522, %v5626
    %v5724 = vadd.f32 %v5523, %v5628
    %v5774 = vrot.slane %v3765, 2
    %v5775 = vrot.slane %v3768, 2
    %v5776 = vsel %vm1257, %v5774, %v5775
    %v5777 = vrot.slane %v3773, 2
    %v5778 = vsel %vm1257, %v5775, %v5777
    %v5779 = vrot.slane %v3776, 2
    %v5780 = vsel %vm1257, %v5777, %v5779
    %v5781 = vrot.slane %v3781, 2
    %v5782 = vsel %vm1257, %v5779, %v5781
    %v5783 = vrot.slane %v3784, 2
    %v5784 = vsel %vm1257, %v5781, %v5783
    %v5785 = vrot.slane %v3789, 2
    %v5786 = vsel %vm1257, %v5783, %v5785
    %v5787 = vrot.slane %v3792, 2
    %v5788 = vsel %vm1257, %v5785, %v5787
    %v5789 = vrot.slane %v3797, 2
    %v5790 = vsel %vm1257, %v5787, %v5789
    %v5791 = vrot.slane %v3800, 2
    %v5792 = vsel %vm1257, %v5789, %v5791
    %v5793 = vrot.slane %v3805, 2
    %v5794 = vsel %vm1257, %v5791, %v5793
    %v5795 = vrot.slane %v3808, 2
    %v5796 = vsel %vm1257, %v5793, %v5795
    %v5797 = vrot.slane %v3813, 2
    %v5798 = vsel %vm1257, %v5795, %v5797
    %v5799 = vrot.slane %v3816, 2
    %v5800 = vsel %vm1257, %v5797, %v5799
    %v5801 = vrot.slane %v3821, 2
    %v5802 = vsel %vm1257, %v5799, %v5801
    %v5803 = vrot.slane %v3824, 2
    %v5804 = vsel %vm1257, %v5801, %v5803
    %v5805 = vrot.slane %v3829, 2
    %v5806 = vsel %vm1257, %v5803, %v5805
    %v5807 = vrot.slane %v3832, 2
    %v5808 = vsel %vm1257, %v5805, %v5807
    %v5809 = vrot.slane %v3837, 2
    %v5810 = vsel %vm1257, %v5807, %v5809
    %v5811 = vrot.slane %v3840, 2
    %v5812 = vsel %vm1257, %v5809, %v5811
    %v5813 = vrot.slane %v3845, 2
    %v5814 = vsel %vm1257, %v5811, %v5813
    %v5815 = vrot.slane %v3848, 2
    %v5816 = vsel %vm1257, %v5813, %v5815
    %v5817 = vrot.slane %v3853, 2
    %v5818 = vsel %vm1257, %v5815, %v5817
    %v5819 = vrot.slane %v3856, 2
    %v5820 = vsel %vm1257, %v5817, %v5819
    %v5821 = vrot.slane %v3861, 2
    %v5822 = vsel %vm1257, %v5819, %v5821
    %v5823 = vrot.slane %v3886, 2
    %v5824 = vrot.slane %v3889, 2
    %v5825 = vsel %vm1257, %v5823, %v5824
    %v5826 = vrot.slane %v3894, 2
    %v5827 = vsel %vm1257, %v5824, %v5826
    %v5828 = vrot.slane %v3897, 2
    %v5829 = vsel %vm1257, %v5826, %v5828
    %v5830 = vrot.slane %v3902, 2
    %v5831 = vsel %vm1257, %v5828, %v5830
    %v5832 = vrot.slane %v3905, 2
    %v5833 = vsel %vm1257, %v5830, %v5832
    %v5834 = vrot.slane %v3910, 2
    %v5835 = vsel %vm1257, %v5832, %v5834
    %v5836 = vrot.slane %v3913, 2
    %v5837 = vsel %vm1257, %v5834, %v5836
    %v5838 = vrot.slane %v3918, 2
    %v5839 = vsel %vm1257, %v5836, %v5838
    %v5840 = vrot.slane %v3921, 2
    %v5841 = vsel %vm1257, %v5838, %v5840
    %v5842 = vrot.slane %v3926, 2
    %v5843 = vsel %vm1257, %v5840, %v5842
    %v5844 = vrot.slane %v3929, 2
    %v5845 = vsel %vm1257, %v5842, %v5844
    %v5846 = vrot.slane %v3934, 2
    %v5847 = vsel %vm1257, %v5844, %v5846
    %v5848 = vrot.slane %v3937, 2
    %v5849 = vsel %vm1257, %v5846, %v5848
    %v5850 = vrot.slane %v3942, 2
    %v5851 = vsel %vm1257, %v5848, %v5850
    %v5852 = vrot.slane %v3945, 2
    %v5853 = vsel %vm1257, %v5850, %v5852
    %v5854 = vrot.slane %v3950, 2
    %v5855 = vsel %vm1257, %v5852, %v5854
    %v5856 = vrot.slane %v3953, 2
    %v5857 = vsel %vm1257, %v5854, %v5856
    %v5858 = vrot.slane %v3958, 2
    %v5859 = vsel %vm1257, %v5856, %v5858
    %v5860 = vrot.slane %v3961, 2
    %v5861 = vsel %vm1257, %v5858, %v5860
    %v5862 = vrot.slane %v3966, 2
    %v5863 = vsel %vm1257, %v5860, %v5862
    %v5864 = vrot.slane %v3969, 2
    %v5865 = vsel %vm1257, %v5862, %v5864
    %v5866 = vrot.slane %v3974, 2
    %v5867 = vsel %vm1257, %v5864, %v5866
    %v5868 = vrot.slane %v3977, 2
    %v5869 = vsel %vm1257, %v5866, %v5868
    %v5918 = vadd.f32 %v5677, %v5776
    %v5919 = vadd.f32 %v5678, %v5778
    %v5920 = vadd.f32 %v5679, %v5780
    %v5921 = vadd.f32 %v5680, %v5782
    %v5922 = vadd.f32 %v5681, %v5784
    %v5923 = vadd.f32 %v5682, %v5786
    %v5924 = vadd.f32 %v5683, %v5788
    %v5925 = vadd.f32 %v5684, %v5790
    %v5926 = vadd.f32 %v5685, %v5792
    %v5927 = vadd.f32 %v5686, %v5794
    %v5928 = vadd.f32 %v5687, %v5796
    %v5929 = vadd.f32 %v5688, %v5798
    %v5930 = vadd.f32 %v5689, %v5800
    %v5931 = vadd.f32 %v5690, %v5802
    %v5932 = vadd.f32 %v5691, %v5804
    %v5933 = vadd.f32 %v5692, %v5806
    %v5934 = vadd.f32 %v5693, %v5808
    %v5935 = vadd.f32 %v5694, %v5810
    %v5936 = vadd.f32 %v5695, %v5812
    %v5937 = vadd.f32 %v5696, %v5814
    %v5938 = vadd.f32 %v5697, %v5816
    %v5939 = vadd.f32 %v5698, %v5818
    %v5940 = vadd.f32 %v5699, %v5820
    %v5941 = vadd.f32 %v5700, %v5822
    %v5942 = vadd.f32 %v5701, %v5825
    %v5943 = vadd.f32 %v5702, %v5827
    %v5944 = vadd.f32 %v5703, %v5829
    %v5945 = vadd.f32 %v5704, %v5831
    %v5946 = vadd.f32 %v5705, %v5833
    %v5947 = vadd.f32 %v5706, %v5835
    %v5948 = vadd.f32 %v5707, %v5837
    %v5949 = vadd.f32 %v5708, %v5839
    %v5950 = vadd.f32 %v5709, %v5841
    %v5951 = vadd.f32 %v5710, %v5843
    %v5952 = vadd.f32 %v5711, %v5845
    %v5953 = vadd.f32 %v5712, %v5847
    %v5954 = vadd.f32 %v5713, %v5849
    %v5955 = vadd.f32 %v5714, %v5851
    %v5956 = vadd.f32 %v5715, %v5853
    %v5957 = vadd.f32 %v5716, %v5855
    %v5958 = vadd.f32 %v5717, %v5857
    %v5959 = vadd.f32 %v5718, %v5859
    %v5960 = vadd.f32 %v5719, %v5861
    %v5961 = vadd.f32 %v5720, %v5863
    %v5962 = vadd.f32 %v5721, %v5865
    %v5963 = vadd.f32 %v5722, %v5867
    %v5964 = vadd.f32 %v5723, %v5869
    %v5965 = vadd.f32 %v5724, %v5868
    %v5966 = vld [vmem:[#allocation8] sm:$0x1]
    %v5968 = vlaneseq
    %v5969 = vshrl.u32 %v5968, 7
    %v5970 = vsub.s32 0, %v5969
    %v5971 = vrot.slane %v5966, %v5970
    %v5973 = vadd.f32 %v5918, %v5971
    %v5974 = vadd.f32 %v5919, %v5971
    %v5975 = vadd.f32 %v5920, %v5971
    %v5976 = vadd.f32 %v5921, %v5971
    %v5977 = vadd.f32 %v5922, %v5971
    %v5978 = vadd.f32 %v5923, %v5971
    %v5979 = vadd.f32 %v5924, %v5971
    %v5980 = vadd.f32 %v5925, %v5971
    %v5981 = vadd.f32 %v5926, %v5971
    %v5982 = vadd.f32 %v5927, %v5971
    %v5983 = vadd.f32 %v5928, %v5971
    %v5984 = vadd.f32 %v5929, %v5971
    %v5985 = vadd.f32 %v5930, %v5971
    %v5986 = vadd.f32 %v5931, %v5971
    %v5987 = vadd.f32 %v5932, %v5971
    %v5988 = vadd.f32 %v5933, %v5971
    %v5989 = vadd.f32 %v5934, %v5971
    %v5990 = vadd.f32 %v5935, %v5971
    %v5991 = vadd.f32 %v5936, %v5971
    %v5992 = vadd.f32 %v5937, %v5971
    %v5993 = vadd.f32 %v5938, %v5971
    %v5994 = vadd.f32 %v5939, %v5971
    %v5995 = vadd.f32 %v5940, %v5971
    %v5996 = vadd.f32 %v5941, %v5971
    %v5997 = vadd.f32 %v5942, %v5971
    %v5998 = vadd.f32 %v5943, %v5971
    %v5999 = vadd.f32 %v5944, %v5971
    %v6000 = vadd.f32 %v5945, %v5971
    %v6001 = vadd.f32 %v5946, %v5971
    %v6002 = vadd.f32 %v5947, %v5971
    %v6003 = vadd.f32 %v5948, %v5971
    %v6004 = vadd.f32 %v5949, %v5971
    %v6005 = vadd.f32 %v5950, %v5971
    %v6006 = vadd.f32 %v5951, %v5971
    %v6007 = vadd.f32 %v5952, %v5971
    %v6008 = vadd.f32 %v5953, %v5971
    %v6009 = vadd.f32 %v5954, %v5971
    %v6010 = vadd.f32 %v5955, %v5971
    %v6011 = vadd.f32 %v5956, %v5971
    %v6012 = vadd.f32 %v5957, %v5971
    %v6013 = vadd.f32 %v5958, %v5971
    %v6014 = vadd.f32 %v5959, %v5971
    %v6015 = vadd.f32 %v5960, %v5971
    %v6016 = vadd.f32 %v5961, %v5971
    %v6017 = vadd.f32 %v5962, %v5971
    %v6018 = vadd.f32 %v5963, %v5971
    %v6019 = vadd.f32 %v5964, %v5971
    %v6020 = vadd.f32 %v5965, %v5971
    %v6021 = vmax.f32 %v5973, 0.0
    %v6022 = vmax.f32 %v5974, 0.0
    %v6023 = vmax.f32 %v5975, 0.0
    %v6024 = vmax.f32 %v5976, 0.0
    %v6025 = vmax.f32 %v5977, 0.0
    %v6026 = vmax.f32 %v5978, 0.0
    %v6027 = vmax.f32 %v5979, 0.0
    %v6028 = vmax.f32 %v5980, 0.0
    %v6029 = vmax.f32 %v5981, 0.0
    %v6030 = vmax.f32 %v5982, 0.0
    %v6031 = vmax.f32 %v5983, 0.0
    %v6032 = vmax.f32 %v5984, 0.0
    %v6033 = vmax.f32 %v5985, 0.0
    %v6034 = vmax.f32 %v5986, 0.0
    %v6035 = vmax.f32 %v5987, 0.0
    %v6036 = vmax.f32 %v5988, 0.0
    %v6037 = vmax.f32 %v5989, 0.0
    %v6038 = vmax.f32 %v5990, 0.0
    %v6039 = vmax.f32 %v5991, 0.0
    %v6040 = vmax.f32 %v5992, 0.0
    %v6041 = vmax.f32 %v5993, 0.0
    %v6042 = vmax.f32 %v5994, 0.0
    %v6043 = vmax.f32 %v5995, 0.0
    %v6044 = vmax.f32 %v5996, 0.0
    %v6045 = vmax.f32 %v5997, 0.0
    %v6046 = vmax.f32 %v5998, 0.0
    %v6047 = vmax.f32 %v5999, 0.0
    %v6048 = vmax.f32 %v6000, 0.0
    %v6049 = vmax.f32 %v6001, 0.0
    %v6050 = vmax.f32 %v6002, 0.0
    %v6051 = vmax.f32 %v6003, 0.0
    %v6052 = vmax.f32 %v6004, 0.0
    %v6053 = vmax.f32 %v6005, 0.0
    %v6054 = vmax.f32 %v6006, 0.0
    %v6055 = vmax.f32 %v6007, 0.0
    %v6056 = vmax.f32 %v6008, 0.0
    %v6057 = vmax.f32 %v6009, 0.0
    %v6058 = vmax.f32 %v6010, 0.0
    %v6059 = vmax.f32 %v6011, 0.0
    %v6060 = vmax.f32 %v6012, 0.0
    %v6061 = vmax.f32 %v6013, 0.0
    %v6062 = vmax.f32 %v6014, 0.0
    %v6063 = vmax.f32 %v6015, 0.0
    %v6064 = vmax.f32 %v6016, 0.0
    %v6065 = vmax.f32 %v6017, 0.0
    %v6066 = vmax.f32 %v6018, 0.0
    %v6067 = vmax.f32 %v6019, 0.0
    %v6068 = vmax.f32 %v6020, 0.0
    %vm6071 = vcmask 1043456
    %v6072 = vrot.slane %v6023, 4
    %v6073 = vrot.slane %v6024, 4
    %v6074 = vsel %vm6071, %v6072, %v6073
    %v6079 = vrot.slane %v6027, 4
    %v6080 = vrot.slane %v6028, 4
    %v6081 = vsel %vm6071, %v6079, %v6080
    %v6086 = vrot.slane %v6031, 4
    %v6087 = vrot.slane %v6032, 4
    %v6088 = vsel %vm6071, %v6086, %v6087
    %v6093 = vrot.slane %v6035, 4
    %v6094 = vrot.slane %v6036, 4
    %v6095 = vsel %vm6071, %v6093, %v6094
    %v6100 = vrot.slane %v6039, 4
    %v6101 = vrot.slane %v6040, 4
    %v6102 = vsel %vm6071, %v6100, %v6101
    %v6107 = vrot.slane %v6043, 4
    %v6108 = vrot.slane %v6044, 4
    %v6109 = vsel %vm6071, %v6107, %v6108
    %v6112 = vsel %vm6071, %v6022, %v6072
    %v6113 = vsel %vm6071, %v6026, %v6079
    %v6114 = vsel %vm6071, %v6030, %v6086
    %v6115 = vsel %vm6071, %v6034, %v6093
    %v6116 = vsel %vm6071, %v6038, %v6100
    %v6117 = vsel %vm6071, %v6042, %v6107
    %6118 = vxpose.xlu0.b32.start [1/16] %v6021, 128
    %6119 = vxpose.xlu0.b32.cont [2/16] %v6112, 128
    %6120 = vxpose.xlu0.b32.cont [3/16] %v6074, 128
    %6121 = vxpose.xlu0.b32.cont [4/16] %v6025, 128
    %6122 = vxpose.xlu0.b32.cont [5/16] %v6113, 128
    %6123 = vxpose.xlu0.b32.cont [6/16] %v6081, 128
    %6124 = vxpose.xlu0.b32.cont [7/16] %v6029, 128
    %6125 = vxpose.xlu0.b32.cont [8/16] %v6114, 128
    %6126 = vxpose.xlu0.b32.cont [9/16] %v6088, 128
    %6127 = vxpose.xlu0.b32.cont [10/16] %v6033, 128
    %6128 = vxpose.xlu0.b32.cont [11/16] %v6115, 128
    %6129 = vxpose.xlu0.b32.cont [12/16] %v6095, 128
    %6130 = vxpose.xlu0.b32.cont [13/16] %v6037, 128
    %6131 = vxpose.xlu0.b32.cont [14/16] %v6116, 128
    %6132 = vxpose.xlu0.b32.cont [15/16] %v6102, 128
    %6133 = vxpose.xlu0.b32.end [16/16] %v6041, 128
    %v6134 = vpop.trf.xlu0
    %v6135 = vpop.trf.xlu0
    %v6136 = vpop.trf.xlu0
    %v6137 = vpop.trf.xlu0
    %v6138 = vpop.trf.xlu0
    %v6139 = vpop.trf.xlu0
    %v6140 = vpop.trf.xlu0
    %v6141 = vpop.trf.xlu0
    %v6142 = vpop.trf.xlu0
    %v6143 = vpop.trf.xlu0
    %v6144 = vpop.trf.xlu0
    %v6145 = vpop.trf.xlu0
    %v6146 = vpop.trf.xlu0
    %v6147 = vpop.trf.xlu0
    %v6148 = vpop.trf.xlu0
    %v6149 = vpop.trf.xlu0
    %6150 = vxpose.xlu0.b32.start [1/16] %v6117, 128
    %6151 = vxpose.xlu0.b32.cont [2/16] %v6109, 128
    %6152 = vxpose.xlu0.b32.cont [3/16] 0.0, 128
    %6153 = vxpose.xlu0.b32.cont [4/16] 0.0, 128
    %6154 = vxpose.xlu0.b32.cont [5/16] 0.0, 128
    %6155 = vxpose.xlu0.b32.cont [6/16] 0.0, 128
    %6156 = vxpose.xlu0.b32.cont [7/16] 0.0, 128
    %6157 = vxpose.xlu0.b32.cont [8/16] 0.0, 128
    %6158 = vxpose.xlu0.b32.cont [9/16] 0.0, 128
    %6159 = vxpose.xlu0.b32.cont [10/16] 0.0, 128
    %6160 = vxpose.xlu0.b32.cont [11/16] 0.0, 128
    %6161 = vxpose.xlu0.b32.cont [12/16] 0.0, 128
    %6162 = vxpose.xlu0.b32.cont [13/16] 0.0, 128
    %6163 = vxpose.xlu0.b32.cont [14/16] 0.0, 128
    %6164 = vxpose.xlu0.b32.cont [15/16] 0.0, 128
    %6165 = vxpose.xlu0.b32.end [16/16] 0.0, 128
    %v6166 = vpop.trf.xlu0
    %v6167 = vpop.trf.xlu0
    %v6168 = vpop.trf.xlu0
    %v6169 = vpop.trf.xlu0
    %v6170 = vpop.trf.xlu0
    %v6171 = vpop.trf.xlu0
    %v6172 = vpop.trf.xlu0
    %v6173 = vpop.trf.xlu0
    %v6174 = vpop.trf.xlu0
    %v6175 = vpop.trf.xlu0
    %v6176 = vpop.trf.xlu0
    %v6177 = vpop.trf.xlu0
    %v6178 = vpop.trf.xlu0
    %v6179 = vpop.trf.xlu0
    %v6180 = vpop.trf.xlu0
    %v6181 = vpop.trf.xlu0
    %v6184 = vrot.slane %v6134, 1
    %v6185 = vrot.slane %v6166, 1
    %6186 = vrot.lane.b32.xlu0 %v6184, 16
    %v6187 = vpop.permute.xlu0 %6186
    %6188 = vrot.lane.b32.xlu0 %v6185, 16
    %v6189 = vpop.permute.xlu0 %6188
    %v6190 = vsel %vm3309, %v6187, %v6189
    %v6193 = vrot.slane %v6134, 2
    %v6194 = vrot.slane %v6166, 2
    %6195 = vrot.lane.b32.xlu0 %v6193, 32
    %v6196 = vpop.permute.xlu0 %6195
    %6197 = vrot.lane.b32.xlu0 %v6194, 32
    %v6198 = vpop.permute.xlu0 %6197
    %vm6199 = vcmask 261120
    %v6200 = vsel %vm6199, %v6196, %v6198
    %v6203 = vrot.slane %v6134, 3
    %v6204 = vrot.slane %v6166, 3
    %6205 = vrot.lane.b32.xlu0 %v6203, 48
    %v6206 = vpop.permute.xlu0 %6205
    %6207 = vrot.lane.b32.xlu0 %v6204, 48
    %v6208 = vpop.permute.xlu0 %6207
    %vm6209 = vcmask 392192
    %v6210 = vsel %vm6209, %v6206, %v6208
    %v6213 = vrot.slane %v6134, 4
    %v6214 = vrot.slane %v6166, 4
    %6215 = vrot.lane.b32.xlu0 %v6213, 64
    %v6216 = vpop.permute.xlu0 %6215
    %6217 = vrot.lane.b32.xlu0 %v6214, 64
    %v6218 = vpop.permute.xlu0 %6217
    %vm6219 = vcmask 523264
    %v6220 = vsel %vm6219, %v6216, %v6218
    %v6223 = vrot.slane %v6134, 5
    %v6224 = vrot.slane %v6166, 5
    %6225 = vrot.lane.b32.xlu0 %v6223, 80
    %v6226 = vpop.permute.xlu0 %6225
    %6227 = vrot.lane.b32.xlu0 %v6224, 80
    %v6228 = vpop.permute.xlu0 %6227
    %vm6229 = vcmask 654336
    %v6230 = vsel %vm6229, %v6226, %v6228
    %v6233 = vrot.slane %v6134, 6
    %v6234 = vrot.slane %v6166, 6
    %6235 = vrot.lane.b32.xlu0 %v6233, 96
    %v6236 = vpop.permute.xlu0 %6235
    %6237 = vrot.lane.b32.xlu0 %v6234, 96
    %v6238 = vpop.permute.xlu0 %6237
    %vm6239 = vcmask 785408
    %v6240 = vsel %vm6239, %v6236, %v6238
    %v6243 = vrot.slane %v6134, 7
    %v6244 = vrot.slane %v6166, 7
    %6245 = vrot.lane.b32.xlu0 %v6243, 112
    %v6246 = vpop.permute.xlu0 %6245
    %6247 = vrot.lane.b32.xlu0 %v6244, 112
    %v6248 = vpop.permute.xlu0 %6247
    %vm6249 = vcmask 916480
    %v6250 = vsel %vm6249, %v6246, %v6248
    %v6255 = vrot.slane %v6135, 1
    %v6256 = vrot.slane %v6167, 1
    %6257 = vrot.lane.b32.xlu0 %v6255, 16
    %v6258 = vpop.permute.xlu0 %6257
    %6259 = vrot.lane.b32.xlu0 %v6256, 16
    %v6260 = vpop.permute.xlu0 %6259
    %v6261 = vsel %vm3309, %v6258, %v6260
    %v6264 = vrot.slane %v6135, 2
    %v6265 = vrot.slane %v6167, 2
    %6266 = vrot.lane.b32.xlu0 %v6264, 32
    %v6267 = vpop.permute.xlu0 %6266
    %6268 = vrot.lane.b32.xlu0 %v6265, 32
    %v6269 = vpop.permute.xlu0 %6268
    %v6270 = vsel %vm6199, %v6267, %v6269
    %v6273 = vrot.slane %v6135, 3
    %v6274 = vrot.slane %v6167, 3
    %6275 = vrot.lane.b32.xlu0 %v6273, 48
    %v6276 = vpop.permute.xlu0 %6275
    %6277 = vrot.lane.b32.xlu0 %v6274, 48
    %v6278 = vpop.permute.xlu0 %6277
    %v6279 = vsel %vm6209, %v6276, %v6278
    %v6282 = vrot.slane %v6135, 4
    %v6283 = vrot.slane %v6167, 4
    %6284 = vrot.lane.b32.xlu0 %v6282, 64
    %v6285 = vpop.permute.xlu0 %6284
    %6286 = vrot.lane.b32.xlu0 %v6283, 64
    %v6287 = vpop.permute.xlu0 %6286
    %v6288 = vsel %vm6219, %v6285, %v6287
    %v6291 = vrot.slane %v6135, 5
    %v6292 = vrot.slane %v6167, 5
    %6293 = vrot.lane.b32.xlu0 %v6291, 80
    %v6294 = vpop.permute.xlu0 %6293
    %6295 = vrot.lane.b32.xlu0 %v6292, 80
    %v6296 = vpop.permute.xlu0 %6295
    %v6297 = vsel %vm6229, %v6294, %v6296
    %v6300 = vrot.slane %v6135, 6
    %v6301 = vrot.slane %v6167, 6
    %6302 = vrot.lane.b32.xlu0 %v6300, 96
    %v6303 = vpop.permute.xlu0 %6302
    %6304 = vrot.lane.b32.xlu0 %v6301, 96
    %v6305 = vpop.permute.xlu0 %6304
    %v6306 = vsel %vm6239, %v6303, %v6305
    %v6309 = vrot.slane %v6135, 7
    %v6310 = vrot.slane %v6167, 7
    %6311 = vrot.lane.b32.xlu0 %v6309, 112
    %v6312 = vpop.permute.xlu0 %6311
    %6313 = vrot.lane.b32.xlu0 %v6310, 112
    %v6314 = vpop.permute.xlu0 %6313
    %v6315 = vsel %vm6249, %v6312, %v6314
    %v6318 = vsel %vm3309, %v6166, %v6187
    %v6319 = vsel %vm6199, %v6190, %v6196
    %v6320 = vsel %vm6209, %v6200, %v6206
    %v6321 = vsel %vm6219, %v6210, %v6216
    %v6322 = vsel %vm6229, %v6220, %v6226
    %v6323 = vsel %vm6239, %v6230, %v6236
    %v6324 = vsel %vm6249, %v6240, %v6246
    %v6325 = vsel %vm3309, %v6167, %v6258
    %v6326 = vsel %vm6199, %v6261, %v6267
    %v6327 = vsel %vm6209, %v6270, %v6276
    %v6328 = vsel %vm6219, %v6279, %v6285
    %v6329 = vsel %vm6229, %v6288, %v6294
    %v6330 = vsel %vm6239, %v6297, %v6303
    %v6331 = vsel %vm6249, %v6306, %v6312
    %v6334 = vrot.slane %v6136, 1
    %v6335 = vrot.slane %v6168, 1
    %6336 = vrot.lane.b32.xlu0 %v6334, 16
    %v6337 = vpop.permute.xlu0 %6336
    %6338 = vrot.lane.b32.xlu0 %v6335, 16
    %v6339 = vpop.permute.xlu0 %6338
    %v6340 = vsel %vm3309, %v6337, %v6339
    %v6343 = vrot.slane %v6136, 2
    %v6344 = vrot.slane %v6168, 2
    %6345 = vrot.lane.b32.xlu0 %v6343, 32
    %v6346 = vpop.permute.xlu0 %6345
    %6347 = vrot.lane.b32.xlu0 %v6344, 32
    %v6348 = vpop.permute.xlu0 %6347
    %v6349 = vsel %vm6199, %v6346, %v6348
    %v6352 = vrot.slane %v6136, 3
    %v6353 = vrot.slane %v6168, 3
    %6354 = vrot.lane.b32.xlu0 %v6352, 48
    %v6355 = vpop.permute.xlu0 %6354
    %6356 = vrot.lane.b32.xlu0 %v6353, 48
    %v6357 = vpop.permute.xlu0 %6356
    %v6358 = vsel %vm6209, %v6355, %v6357
    %v6361 = vrot.slane %v6136, 4
    %v6362 = vrot.slane %v6168, 4
    %6363 = vrot.lane.b32.xlu0 %v6361, 64
    %v6364 = vpop.permute.xlu0 %6363
    %6365 = vrot.lane.b32.xlu0 %v6362, 64
    %v6366 = vpop.permute.xlu0 %6365
    %v6367 = vsel %vm6219, %v6364, %v6366
    %v6370 = vrot.slane %v6136, 5
    %v6371 = vrot.slane %v6168, 5
    %6372 = vrot.lane.b32.xlu0 %v6370, 80
    %v6373 = vpop.permute.xlu0 %6372
    %6374 = vrot.lane.b32.xlu0 %v6371, 80
    %v6375 = vpop.permute.xlu0 %6374
    %v6376 = vsel %vm6229, %v6373, %v6375
    %v6379 = vrot.slane %v6136, 6
    %v6380 = vrot.slane %v6168, 6
    %6381 = vrot.lane.b32.xlu0 %v6379, 96
    %v6382 = vpop.permute.xlu0 %6381
    %6383 = vrot.lane.b32.xlu0 %v6380, 96
    %v6384 = vpop.permute.xlu0 %6383
    %v6385 = vsel %vm6239, %v6382, %v6384
    %v6388 = vrot.slane %v6136, 7
    %v6389 = vrot.slane %v6168, 7
    %6390 = vrot.lane.b32.xlu0 %v6388, 112
    %v6391 = vpop.permute.xlu0 %6390
    %6392 = vrot.lane.b32.xlu0 %v6389, 112
    %v6393 = vpop.permute.xlu0 %6392
    %v6394 = vsel %vm6249, %v6391, %v6393
    %v6399 = vrot.slane %v6137, 1
    %v6400 = vrot.slane %v6169, 1
    %6401 = vrot.lane.b32.xlu0 %v6399, 16
    %v6402 = vpop.permute.xlu0 %6401
    %6403 = vrot.lane.b32.xlu0 %v6400, 16
    %v6404 = vpop.permute.xlu0 %6403
    %v6405 = vsel %vm3309, %v6402, %v6404
    %v6408 = vrot.slane %v6137, 2
    %v6409 = vrot.slane %v6169, 2
    %6410 = vrot.lane.b32.xlu0 %v6408, 32
    %v6411 = vpop.permute.xlu0 %6410
    %6412 = vrot.lane.b32.xlu0 %v6409, 32
    %v6413 = vpop.permute.xlu0 %6412
    %v6414 = vsel %vm6199, %v6411, %v6413
    %v6417 = vrot.slane %v6137, 3
    %v6418 = vrot.slane %v6169, 3
    %6419 = vrot.lane.b32.xlu0 %v6417, 48
    %v6420 = vpop.permute.xlu0 %6419
    %6421 = vrot.lane.b32.xlu0 %v6418, 48
    %v6422 = vpop.permute.xlu0 %6421
    %v6423 = vsel %vm6209, %v6420, %v6422
    %v6426 = vrot.slane %v6137, 4
    %v6427 = vrot.slane %v6169, 4
    %6428 = vrot.lane.b32.xlu0 %v6426, 64
    %v6429 = vpop.permute.xlu0 %6428
    %6430 = vrot.lane.b32.xlu0 %v6427, 64
    %v6431 = vpop.permute.xlu0 %6430
    %v6432 = vsel %vm6219, %v6429, %v6431
    %v6435 = vrot.slane %v6137, 5
    %v6436 = vrot.slane %v6169, 5
    %6437 = vrot.lane.b32.xlu0 %v6435, 80
    %v6438 = vpop.permute.xlu0 %6437
    %6439 = vrot.lane.b32.xlu0 %v6436, 80
    %v6440 = vpop.permute.xlu0 %6439
    %v6441 = vsel %vm6229, %v6438, %v6440
    %v6444 = vrot.slane %v6137, 6
    %v6445 = vrot.slane %v6169, 6
    %6446 = vrot.lane.b32.xlu0 %v6444, 96
    %v6447 = vpop.permute.xlu0 %6446
    %6448 = vrot.lane.b32.xlu0 %v6445, 96
    %v6449 = vpop.permute.xlu0 %6448
    %v6450 = vsel %vm6239, %v6447, %v6449
    %v6453 = vrot.slane %v6137, 7
    %v6454 = vrot.slane %v6169, 7
    %6455 = vrot.lane.b32.xlu0 %v6453, 112
    %v6456 = vpop.permute.xlu0 %6455
    %6457 = vrot.lane.b32.xlu0 %v6454, 112
    %v6458 = vpop.permute.xlu0 %6457
    %v6459 = vsel %vm6249, %v6456, %v6458
    %v6462 = vsel %vm3309, %v6168, %v6337
    %v6463 = vsel %vm6199, %v6340, %v6346
    %v6464 = vsel %vm6209, %v6349, %v6355
    %v6465 = vsel %vm6219, %v6358, %v6364
    %v6466 = vsel %vm6229, %v6367, %v6373
    %v6467 = vsel %vm6239, %v6376, %v6382
    %v6468 = vsel %vm6249, %v6385, %v6391
    %v6469 = vsel %vm3309, %v6169, %v6402
    %v6470 = vsel %vm6199, %v6405, %v6411
    %v6471 = vsel %vm6209, %v6414, %v6420
    %v6472 = vsel %vm6219, %v6423, %v6429
    %v6473 = vsel %vm6229, %v6432, %v6438
    %v6474 = vsel %vm6239, %v6441, %v6447
    %v6475 = vsel %vm6249, %v6450, %v6456
    %v6478 = vrot.slane %v6047, 4
    %v6479 = vrot.slane %v6048, 4
    %v6480 = vsel %vm6071, %v6478, %v6479
    %v6485 = vrot.slane %v6051, 4
    %v6486 = vrot.slane %v6052, 4
    %v6487 = vsel %vm6071, %v6485, %v6486
    %v6492 = vrot.slane %v6055, 4
    %v6493 = vrot.slane %v6056, 4
    %v6494 = vsel %vm6071, %v6492, %v6493
    %v6499 = vrot.slane %v6059, 4
    %v6500 = vrot.slane %v6060, 4
    %v6501 = vsel %vm6071, %v6499, %v6500
    %v6506 = vrot.slane %v6063, 4
    %v6507 = vrot.slane %v6064, 4
    %v6508 = vsel %vm6071, %v6506, %v6507
    %v6513 = vrot.slane %v6067, 4
    %v6514 = vrot.slane %v6068, 4
    %v6515 = vsel %vm6071, %v6513, %v6514
    %v6518 = vsel %vm6071, %v6046, %v6478
    %v6519 = vsel %vm6071, %v6050, %v6485
    %v6520 = vsel %vm6071, %v6054, %v6492
    %v6521 = vsel %vm6071, %v6058, %v6499
    %v6522 = vsel %vm6071, %v6062, %v6506
    %v6523 = vsel %vm6071, %v6066, %v6513
    %6524 = vxpose.xlu0.b32.start [1/16] %v6045, 128
    %6525 = vxpose.xlu0.b32.cont [2/16] %v6518, 128
    %6526 = vxpose.xlu0.b32.cont [3/16] %v6480, 128
    %6527 = vxpose.xlu0.b32.cont [4/16] %v6049, 128
    %6528 = vxpose.xlu0.b32.cont [5/16] %v6519, 128
    %6529 = vxpose.xlu0.b32.cont [6/16] %v6487, 128
    %6530 = vxpose.xlu0.b32.cont [7/16] %v6053, 128
    %6531 = vxpose.xlu0.b32.cont [8/16] %v6520, 128
    %6532 = vxpose.xlu0.b32.cont [9/16] %v6494, 128
    %6533 = vxpose.xlu0.b32.cont [10/16] %v6057, 128
    %6534 = vxpose.xlu0.b32.cont [11/16] %v6521, 128
    %6535 = vxpose.xlu0.b32.cont [12/16] %v6501, 128
    %6536 = vxpose.xlu0.b32.cont [13/16] %v6061, 128
    %6537 = vxpose.xlu0.b32.cont [14/16] %v6522, 128
    %6538 = vxpose.xlu0.b32.cont [15/16] %v6508, 128
    %6539 = vxpose.xlu0.b32.end [16/16] %v6065, 128
    %v6540 = vpop.trf.xlu0
    %v6541 = vpop.trf.xlu0
    %v6542 = vpop.trf.xlu0
    %v6543 = vpop.trf.xlu0
    %v6544 = vpop.trf.xlu0
    %v6545 = vpop.trf.xlu0
    %v6546 = vpop.trf.xlu0
    %v6547 = vpop.trf.xlu0
    %v6548 = vpop.trf.xlu0
    %v6549 = vpop.trf.xlu0
    %v6550 = vpop.trf.xlu0
    %v6551 = vpop.trf.xlu0
    %v6552 = vpop.trf.xlu0
    %v6553 = vpop.trf.xlu0
    %v6554 = vpop.trf.xlu0
    %v6555 = vpop.trf.xlu0
    %6556 = vxpose.xlu0.b32.start [1/16] %v6523, 128
    %6557 = vxpose.xlu0.b32.cont [2/16] %v6515, 128
    %6558 = vxpose.xlu0.b32.cont [3/16] 0.0, 128
    %6559 = vxpose.xlu0.b32.cont [4/16] 0.0, 128
    %6560 = vxpose.xlu0.b32.cont [5/16] 0.0, 128
    %6561 = vxpose.xlu0.b32.cont [6/16] 0.0, 128
    %6562 = vxpose.xlu0.b32.cont [7/16] 0.0, 128
    %6563 = vxpose.xlu0.b32.cont [8/16] 0.0, 128
    %6564 = vxpose.xlu0.b32.cont [9/16] 0.0, 128
    %6565 = vxpose.xlu0.b32.cont [10/16] 0.0, 128
    %6566 = vxpose.xlu0.b32.cont [11/16] 0.0, 128
    %6567 = vxpose.xlu0.b32.cont [12/16] 0.0, 128
    %6568 = vxpose.xlu0.b32.cont [13/16] 0.0, 128
    %6569 = vxpose.xlu0.b32.cont [14/16] 0.0, 128
    %6570 = vxpose.xlu0.b32.cont [15/16] 0.0, 128
    %6571 = vxpose.xlu0.b32.end [16/16] 0.0, 128
    %v6572 = vpop.trf.xlu0
    %v6573 = vpop.trf.xlu0
    %v6574 = vpop.trf.xlu0
    %v6575 = vpop.trf.xlu0
    %v6576 = vpop.trf.xlu0
    %v6577 = vpop.trf.xlu0
    %v6578 = vpop.trf.xlu0
    %v6579 = vpop.trf.xlu0
    %v6580 = vpop.trf.xlu0
    %v6581 = vpop.trf.xlu0
    %v6582 = vpop.trf.xlu0
    %v6583 = vpop.trf.xlu0
    %v6584 = vpop.trf.xlu0
    %v6585 = vpop.trf.xlu0
    %v6586 = vpop.trf.xlu0
    %v6587 = vpop.trf.xlu0
    %v6590 = vrot.slane %v6540, 1
    %v6591 = vrot.slane %v6572, 1
    %6592 = vrot.lane.b32.xlu0 %v6590, 16
    %v6593 = vpop.permute.xlu0 %6592
    %6594 = vrot.lane.b32.xlu0 %v6591, 16
    %v6595 = vpop.permute.xlu0 %6594
    %v6596 = vsel %vm3309, %v6593, %v6595
    %v6599 = vrot.slane %v6540, 2
    %v6600 = vrot.slane %v6572, 2
    %6601 = vrot.lane.b32.xlu0 %v6599, 32
    %v6602 = vpop.permute.xlu0 %6601
    %6603 = vrot.lane.b32.xlu0 %v6600, 32
    %v6604 = vpop.permute.xlu0 %6603
    %v6605 = vsel %vm6199, %v6602, %v6604
    %v6608 = vrot.slane %v6540, 3
    %v6609 = vrot.slane %v6572, 3
    %6610 = vrot.lane.b32.xlu0 %v6608, 48
    %v6611 = vpop.permute.xlu0 %6610
    %6612 = vrot.lane.b32.xlu0 %v6609, 48
    %v6613 = vpop.permute.xlu0 %6612
    %v6614 = vsel %vm6209, %v6611, %v6613
    %v6617 = vrot.slane %v6540, 4
    %v6618 = vrot.slane %v6572, 4
    %6619 = vrot.lane.b32.xlu0 %v6617, 64
    %v6620 = vpop.permute.xlu0 %6619
    %6621 = vrot.lane.b32.xlu0 %v6618, 64
    %v6622 = vpop.permute.xlu0 %6621
    %v6623 = vsel %vm6219, %v6620, %v6622
    %v6626 = vrot.slane %v6540, 5
    %v6627 = vrot.slane %v6572, 5
    %6628 = vrot.lane.b32.xlu0 %v6626, 80
    %v6629 = vpop.permute.xlu0 %6628
    %6630 = vrot.lane.b32.xlu0 %v6627, 80
    %v6631 = vpop.permute.xlu0 %6630
    %v6632 = vsel %vm6229, %v6629, %v6631
    %v6635 = vrot.slane %v6540, 6
    %v6636 = vrot.slane %v6572, 6
    %6637 = vrot.lane.b32.xlu0 %v6635, 96
    %v6638 = vpop.permute.xlu0 %6637
    %6639 = vrot.lane.b32.xlu0 %v6636, 96
    %v6640 = vpop.permute.xlu0 %6639
    %v6641 = vsel %vm6239, %v6638, %v6640
    %v6644 = vrot.slane %v6540, 7
    %v6645 = vrot.slane %v6572, 7
    %6646 = vrot.lane.b32.xlu0 %v6644, 112
    %v6647 = vpop.permute.xlu0 %6646
    %6648 = vrot.lane.b32.xlu0 %v6645, 112
    %v6649 = vpop.permute.xlu0 %6648
    %v6650 = vsel %vm6249, %v6647, %v6649
    %v6654 = vrot.slane %v6541, 1
    %v6655 = vrot.slane %v6573, 1
    %6656 = vrot.lane.b32.xlu0 %v6654, 16
    %v6657 = vpop.permute.xlu0 %6656
    %6658 = vrot.lane.b32.xlu0 %v6655, 16
    %v6659 = vpop.permute.xlu0 %6658
    %v6660 = vsel %vm3309, %v6657, %v6659
    %v6663 = vrot.slane %v6541, 2
    %v6664 = vrot.slane %v6573, 2
    %6665 = vrot.lane.b32.xlu0 %v6663, 32
    %v6666 = vpop.permute.xlu0 %6665
    %6667 = vrot.lane.b32.xlu0 %v6664, 32
    %v6668 = vpop.permute.xlu0 %6667
    %v6669 = vsel %vm6199, %v6666, %v6668
    %v6672 = vrot.slane %v6541, 3
    %v6673 = vrot.slane %v6573, 3
    %6674 = vrot.lane.b32.xlu0 %v6672, 48
    %v6675 = vpop.permute.xlu0 %6674
    %6676 = vrot.lane.b32.xlu0 %v6673, 48
    %v6677 = vpop.permute.xlu0 %6676
    %v6678 = vsel %vm6209, %v6675, %v6677
    %v6681 = vrot.slane %v6541, 4
    %v6682 = vrot.slane %v6573, 4
    %6683 = vrot.lane.b32.xlu0 %v6681, 64
    %v6684 = vpop.permute.xlu0 %6683
    %6685 = vrot.lane.b32.xlu0 %v6682, 64
    %v6686 = vpop.permute.xlu0 %6685
    %v6687 = vsel %vm6219, %v6684, %v6686
    %v6690 = vrot.slane %v6541, 5
    %v6691 = vrot.slane %v6573, 5
    %6692 = vrot.lane.b32.xlu0 %v6690, 80
    %v6693 = vpop.permute.xlu0 %6692
    %6694 = vrot.lane.b32.xlu0 %v6691, 80
    %v6695 = vpop.permute.xlu0 %6694
    %v6696 = vsel %vm6229, %v6693, %v6695
    %v6699 = vrot.slane %v6541, 6
    %v6700 = vrot.slane %v6573, 6
    %6701 = vrot.lane.b32.xlu0 %v6699, 96
    %v6702 = vpop.permute.xlu0 %6701
    %6703 = vrot.lane.b32.xlu0 %v6700, 96
    %v6704 = vpop.permute.xlu0 %6703
    %v6705 = vsel %vm6239, %v6702, %v6704
    %v6708 = vrot.slane %v6541, 7
    %v6709 = vrot.slane %v6573, 7
    %6710 = vrot.lane.b32.xlu0 %v6708, 112
    %v6711 = vpop.permute.xlu0 %6710
    %6712 = vrot.lane.b32.xlu0 %v6709, 112
    %v6713 = vpop.permute.xlu0 %6712
    %v6714 = vsel %vm6249, %v6711, %v6713
    %v6716 = vsel %vm3309, %v6572, %v6593
    %v6717 = vsel %vm6199, %v6596, %v6602
    %v6718 = vsel %vm6209, %v6605, %v6611
    %v6719 = vsel %vm6219, %v6614, %v6620
    %v6720 = vsel %vm6229, %v6623, %v6629
    %v6721 = vsel %vm6239, %v6632, %v6638
    %v6722 = vsel %vm6249, %v6641, %v6647
    %v6723 = vsel %vm3309, %v6573, %v6657
    %v6724 = vsel %vm6199, %v6660, %v6666
    %v6725 = vsel %vm6209, %v6669, %v6675
    %v6726 = vsel %vm6219, %v6678, %v6684
    %v6727 = vsel %vm6229, %v6687, %v6693
    %v6728 = vsel %vm6239, %v6696, %v6702
    %v6729 = vsel %vm6249, %v6705, %v6711
    %v6732 = vrot.slane %v6542, 1
    %v6733 = vrot.slane %v6574, 1
    %6734 = vrot.lane.b32.xlu0 %v6732, 16
    %v6735 = vpop.permute.xlu0 %6734
    %6736 = vrot.lane.b32.xlu0 %v6733, 16
    %v6737 = vpop.permute.xlu0 %6736
    %v6738 = vsel %vm3309, %v6735, %v6737
    %v6741 = vrot.slane %v6542, 2
    %v6742 = vrot.slane %v6574, 2
    %6743 = vrot.lane.b32.xlu0 %v6741, 32
    %v6744 = vpop.permute.xlu0 %6743
    %6745 = vrot.lane.b32.xlu0 %v6742, 32
    %v6746 = vpop.permute.xlu0 %6745
    %v6747 = vsel %vm6199, %v6744, %v6746
    %v6750 = vrot.slane %v6542, 3
    %v6751 = vrot.slane %v6574, 3
    %6752 = vrot.lane.b32.xlu0 %v6750, 48
    %v6753 = vpop.permute.xlu0 %6752
    %6754 = vrot.lane.b32.xlu0 %v6751, 48
    %v6755 = vpop.permute.xlu0 %6754
    %v6756 = vsel %vm6209, %v6753, %v6755
    %v6759 = vrot.slane %v6542, 4
    %v6760 = vrot.slane %v6574, 4
    %6761 = vrot.lane.b32.xlu0 %v6759, 64
    %v6762 = vpop.permute.xlu0 %6761
    %6763 = vrot.lane.b32.xlu0 %v6760, 64
    %v6764 = vpop.permute.xlu0 %6763
    %v6765 = vsel %vm6219, %v6762, %v6764
    %v6768 = vrot.slane %v6542, 5
    %v6769 = vrot.slane %v6574, 5
    %6770 = vrot.lane.b32.xlu0 %v6768, 80
    %v6771 = vpop.permute.xlu0 %6770
    %6772 = vrot.lane.b32.xlu0 %v6769, 80
    %v6773 = vpop.permute.xlu0 %6772
    %v6774 = vsel %vm6229, %v6771, %v6773
    %v6777 = vrot.slane %v6542, 6
    %v6778 = vrot.slane %v6574, 6
    %6779 = vrot.lane.b32.xlu0 %v6777, 96
    %v6780 = vpop.permute.xlu0 %6779
    %6781 = vrot.lane.b32.xlu0 %v6778, 96
    %v6782 = vpop.permute.xlu0 %6781
    %v6783 = vsel %vm6239, %v6780, %v6782
    %v6786 = vrot.slane %v6542, 7
    %v6787 = vrot.slane %v6574, 7
    %6788 = vrot.lane.b32.xlu0 %v6786, 112
    %v6789 = vpop.permute.xlu0 %6788
    %6790 = vrot.lane.b32.xlu0 %v6787, 112
    %v6791 = vpop.permute.xlu0 %6790
    %v6792 = vsel %vm6249, %v6789, %v6791
    %v6796 = vrot.slane %v6543, 1
    %v6797 = vrot.slane %v6575, 1
    %6798 = vrot.lane.b32.xlu0 %v6796, 16
    %v6799 = vpop.permute.xlu0 %6798
    %6800 = vrot.lane.b32.xlu0 %v6797, 16
    %v6801 = vpop.permute.xlu0 %6800
    %v6802 = vsel %vm3309, %v6799, %v6801
    %v6805 = vrot.slane %v6543, 2
    %v6806 = vrot.slane %v6575, 2
    %6807 = vrot.lane.b32.xlu0 %v6805, 32
    %v6808 = vpop.permute.xlu0 %6807
    %6809 = vrot.lane.b32.xlu0 %v6806, 32
    %v6810 = vpop.permute.xlu0 %6809
    %v6811 = vsel %vm6199, %v6808, %v6810
    %v6814 = vrot.slane %v6543, 3
    %v6815 = vrot.slane %v6575, 3
    %6816 = vrot.lane.b32.xlu0 %v6814, 48
    %v6817 = vpop.permute.xlu0 %6816
    %6818 = vrot.lane.b32.xlu0 %v6815, 48
    %v6819 = vpop.permute.xlu0 %6818
    %v6820 = vsel %vm6209, %v6817, %v6819
    %v6823 = vrot.slane %v6543, 4
    %v6824 = vrot.slane %v6575, 4
    %6825 = vrot.lane.b32.xlu0 %v6823, 64
    %v6826 = vpop.permute.xlu0 %6825
    %6827 = vrot.lane.b32.xlu0 %v6824, 64
    %v6828 = vpop.permute.xlu0 %6827
    %v6829 = vsel %vm6219, %v6826, %v6828
    %v6832 = vrot.slane %v6543, 5
    %v6833 = vrot.slane %v6575, 5
    %6834 = vrot.lane.b32.xlu0 %v6832, 80
    %v6835 = vpop.permute.xlu0 %6834
    %6836 = vrot.lane.b32.xlu0 %v6833, 80
    %v6837 = vpop.permute.xlu0 %6836
    %v6838 = vsel %vm6229, %v6835, %v6837
    %v6841 = vrot.slane %v6543, 6
    %v6842 = vrot.slane %v6575, 6
    %6843 = vrot.lane.b32.xlu0 %v6841, 96
    %v6844 = vpop.permute.xlu0 %6843
    %6845 = vrot.lane.b32.xlu0 %v6842, 96
    %v6846 = vpop.permute.xlu0 %6845
    %v6847 = vsel %vm6239, %v6844, %v6846
    %v6850 = vrot.slane %v6543, 7
    %v6851 = vrot.slane %v6575, 7
    %6852 = vrot.lane.b32.xlu0 %v6850, 112
    %v6853 = vpop.permute.xlu0 %6852
    %6854 = vrot.lane.b32.xlu0 %v6851, 112
    %v6855 = vpop.permute.xlu0 %6854
    %v6856 = vsel %vm6249, %v6853, %v6855
    %v6858 = vsel %vm3309, %v6574, %v6735
    %v6859 = vsel %vm6199, %v6738, %v6744
    %v6860 = vsel %vm6209, %v6747, %v6753
    %v6861 = vsel %vm6219, %v6756, %v6762
    %v6862 = vsel %vm6229, %v6765, %v6771
    %v6863 = vsel %vm6239, %v6774, %v6780
    %v6864 = vsel %vm6249, %v6783, %v6789
    %v6865 = vsel %vm3309, %v6575, %v6799
    %v6866 = vsel %vm6199, %v6802, %v6808
    %v6867 = vsel %vm6209, %v6811, %v6817
    %v6868 = vsel %vm6219, %v6820, %v6826
    %v6869 = vsel %vm6229, %v6829, %v6835
    %v6870 = vsel %vm6239, %v6838, %v6844
    %v6871 = vsel %vm6249, %v6847, %v6853
    %v6900 = vrot.slane %v6716, 7
    %v6901 = vrot.slane %v6717, 7
    %v6902 = vrot.slane %v6718, 7
    %v6903 = vrot.slane %v6719, 7
    %v6904 = vrot.slane %v6720, 7
    %v6905 = vrot.slane %v6721, 7
    %v6906 = vrot.slane %v6722, 7
    %v6907 = vrot.slane %v6650, 7
    %v6908 = vrot.slane %v6723, 7
    %v6909 = vrot.slane %v6724, 7
    %v6910 = vrot.slane %v6725, 7
    %v6911 = vrot.slane %v6726, 7
    %v6912 = vrot.slane %v6727, 7
    %v6913 = vrot.slane %v6728, 7
    %v6914 = vrot.slane %v6729, 7
    %v6915 = vrot.slane %v6714, 7
    %v6916 = vrot.slane %v6858, 7
    %v6917 = vrot.slane %v6859, 7
    %v6918 = vrot.slane %v6860, 7
    %v6919 = vrot.slane %v6861, 7
    %v6920 = vrot.slane %v6862, 7
    %v6921 = vrot.slane %v6863, 7
    %v6922 = vrot.slane %v6864, 7
    %v6923 = vrot.slane %v6792, 7
    %v6924 = vrot.slane %v6865, 7
    %v6925 = vrot.slane %v6866, 7
    %v6926 = vrot.slane %v6867, 7
    %v6927 = vrot.slane %v6868, 7
    %v6928 = vrot.slane %v6869, 7
    %v6929 = vrot.slane %v6870, 7
    %v6930 = vrot.slane %v6871, 7
    %v6931 = vrot.slane %v6856, 7
    %vm6968 = vcmask 1040384
    %v6969 = vsel %vm6968, %v6134, %v6644
    %v6970 = vsel %vm6968, %v6318, %v6900
    %v6971 = vsel %vm6968, %v6319, %v6901
    %v6972 = vsel %vm6968, %v6320, %v6902
    %v6973 = vsel %vm6968, %v6321, %v6903
    %v6974 = vsel %vm6968, %v6322, %v6904
    %v6975 = vsel %vm6968, %v6323, %v6905
    %v6976 = vsel %vm6968, %v6324, %v6906
    %v6977 = vsel %vm6968, %v6250, %v6907
    %v6978 = vsel %vm6968, %v6135, %v6708
    %v6979 = vsel %vm6968, %v6325, %v6908
    %v6980 = vsel %vm6968, %v6326, %v6909
    %v6981 = vsel %vm6968, %v6327, %v6910
    %v6982 = vsel %vm6968, %v6328, %v6911
    %v6983 = vsel %vm6968, %v6329, %v6912
    %v6984 = vsel %vm6968, %v6330, %v6913
    %v6985 = vsel %vm6968, %v6331, %v6914
    %v6986 = vsel %vm6968, %v6315, %v6915
    %v6987 = vsel %vm6968, %v6136, %v6786
    %v6988 = vsel %vm6968, %v6462, %v6916
    %v6989 = vsel %vm6968, %v6463, %v6917
    %v6990 = vsel %vm6968, %v6464, %v6918
    %v6991 = vsel %vm6968, %v6465, %v6919
    %v6992 = vsel %vm6968, %v6466, %v6920
    %v6993 = vsel %vm6968, %v6467, %v6921
    %v6994 = vsel %vm6968, %v6468, %v6922
    %v6995 = vsel %vm6968, %v6394, %v6923
    %v6996 = vsel %vm6968, %v6137, %v6850
    %v6997 = vsel %vm6968, %v6469, %v6924
    %v6998 = vsel %vm6968, %v6470, %v6925
    %v6999 = vsel %vm6968, %v6471, %v6926
    %v7000 = vsel %vm6968, %v6472, %v6927
    %v7001 = vsel %vm6968, %v6473, %v6928
    %v7002 = vsel %vm6968, %v6474, %v6929
    %v7003 = vsel %vm6968, %v6475, %v6930
    %v7004 = vsel %vm6968, %v6459, %v6931
    %v7005 = vpack.c.bf16 %v6969, %v6969
    %v7006 = vpack.c.bf16 %v6970, %v6970
    %v7007 = vpack.c.bf16 %v6971, %v6971
    %v7008 = vpack.c.bf16 %v6972, %v6972
    %v7009 = vpack.c.bf16 %v6973, %v6973
    %v7010 = vpack.c.bf16 %v6974, %v6974
    %v7011 = vpack.c.bf16 %v6975, %v6975
    %v7012 = vpack.c.bf16 %v6976, %v6976
    %v7013 = vpack.c.bf16 %v6977, %v6977
    %v7014 = vpack.c.bf16 %v6978, %v6978
    %v7015 = vpack.c.bf16 %v6979, %v6979
    %v7016 = vpack.c.bf16 %v6980, %v6980
    %v7017 = vpack.c.bf16 %v6981, %v6981
    %v7018 = vpack.c.bf16 %v6982, %v6982
    %v7019 = vpack.c.bf16 %v6983, %v6983
    %v7020 = vpack.c.bf16 %v6984, %v6984
    %v7021 = vpack.c.bf16 %v6985, %v6985
    %v7022 = vpack.c.bf16 %v6986, %v6986
    %v7023 = vpack.c.bf16 %v6987, %v6987
    %v7024 = vpack.c.bf16 %v6988, %v6988
    %v7025 = vpack.c.bf16 %v6989, %v6989
    %v7026 = vpack.c.bf16 %v6990, %v6990
    %v7027 = vpack.c.bf16 %v6991, %v6991
    %v7028 = vpack.c.bf16 %v6992, %v6992
    %v7029 = vpack.c.bf16 %v6993, %v6993
    %v7030 = vpack.c.bf16 %v6994, %v6994
    %v7031 = vpack.c.bf16 %v6995, %v6995
    %v7032 = vpack.c.bf16 %v6996, %v6996
    %v7033 = vpack.c.bf16 %v6997, %v6997
    %v7034 = vpack.c.bf16 %v6998, %v6998
    %v7035 = vpack.c.bf16 %v6999, %v6999
    %v7036 = vpack.c.bf16 %v7000, %v7000
    %v7037 = vpack.c.bf16 %v7001, %v7001
    %v7038 = vpack.c.bf16 %v7002, %v7002
    %v7039 = vpack.c.bf16 %v7003, %v7003
    %v7040 = vpack.c.bf16 %v7004, %v7004
    %v7041 = vld [vmem:[#allocation10] sm:$0xff]
    %v7042 = vld [vmem:[#allocation10 + $0x8] sm:$0xff]
    %v7043 = vld [vmem:[#allocation10 + $0x10] sm:$0xff]
    %v7044 = vld [vmem:[#allocation10 + $0x18] sm:$0xff]
    %v7045 = vld [vmem:[#allocation10 + $0x20] sm:$0xff]
    %v7046 = vld [vmem:[#allocation10 + $0x28] sm:$0xff]
    %v7047 = vld [vmem:[#allocation10 + $0x30] sm:$0xff]
    %v7048 = vld [vmem:[#allocation10 + $0x38] sm:$0xff]
    %v7049 = vld [vmem:[#allocation10 + $0x40] sm:$0xff]
    %v7050 = vld [vmem:[#allocation10 + $0x48] sm:$0xff]
    %v7051 = vld [vmem:[#allocation10 + $0x50] sm:$0xff]
    %v7052 = vld [vmem:[#allocation10 + $0x58] sm:$0xff]
    %v7053 = vld [vmem:[#allocation10 + $0x60] sm:$0xff]
    %v7054 = vld [vmem:[#allocation10 + $0x68] sm:$0xff]
    %v7055 = vld [vmem:[#allocation10 + $0x70] sm:$0xff]
    %v7056 = vld [vmem:[#allocation10 + $0x78] sm:$0xff]
    %v7057 = vld [vmem:[#allocation10 + $0x80] sm:$0xff]
    %v7058 = vld [vmem:[#allocation10 + $0x88] sm:$0xff]
    %v7059 = vld [vmem:[#allocation10 + $0x90] sm:$0xff]
    %v7060 = vld [vmem:[#allocation10 + $0x98] sm:$0xff]
    %v7061 = vld [vmem:[#allocation10 + $0xa0] sm:$0xff]
    %v7062 = vld [vmem:[#allocation10 + $0xa8] sm:$0xff]
    %v7063 = vld [vmem:[#allocation10 + $0xb0] sm:$0xff]
    %v7064 = vld [vmem:[#allocation10 + $0xb8] sm:$0xff]
    %v7065 = vld [vmem:[#allocation10 + $0xc0] sm:$0xff]
    %v7066 = vld [vmem:[#allocation10 + $0xc8] sm:$0xff]
    %v7067 = vld [vmem:[#allocation10 + $0xd0] sm:$0xff]
    %v7068 = vld [vmem:[#allocation10 + $0xd8] sm:$0xff]
    %v7069 = vld [vmem:[#allocation10 + $0xe0] sm:$0xff]
    %v7070 = vld [vmem:[#allocation10 + $0xe8] sm:$0xff]
    %v7071 = vld [vmem:[#allocation10 + $0xf0] sm:$0xff]
    %v7072 = vld [vmem:[#allocation10 + $0xf8] sm:$0xff]
    %v7073 = vld [vmem:[#allocation10 + $0x100] sm:$0xff]
    %v7074 = vld [vmem:[#allocation10 + $0x108] sm:$0xff]
    %v7075 = vld [vmem:[#allocation10 + $0x110] sm:$0xff]
    %v7076 = vld [vmem:[#allocation10 + $0x118] sm:$0xff]
    %v7077 = vld [vmem:[#allocation10 + $0x120] sm:$0xff]
    %v7078 = vld [vmem:[#allocation10 + $0x128] sm:$0xff]
    %v7079 = vld [vmem:[#allocation10 + $0x130] sm:$0xff]
    %v7080 = vld [vmem:[#allocation10 + $0x138] sm:$0xff]
    %v7081 = vld [vmem:[#allocation10 + $0x140] sm:$0xff]
    %v7082 = vld [vmem:[#allocation10 + $0x148] sm:$0xff]
    %v7083 = vld [vmem:[#allocation10 + $0x150] sm:$0xff]
    %v7084 = vld [vmem:[#allocation10 + $0x158] sm:$0xff]
    %v7085 = vld [vmem:[#allocation10 + $0x160] sm:$0xff]
    %v7086 = vld [vmem:[#allocation10 + $0x168] sm:$0xff]
    %v7087 = vld [vmem:[#allocation10 + $0x170] sm:$0xff]
    %v7088 = vld [vmem:[#allocation10 + $0x178] sm:$0xff]
    %v7089 = vld [vmem:[#allocation10 + $0x180] sm:$0xff]
    %v7090 = vld [vmem:[#allocation10 + $0x188] sm:$0xff]
    %v7091 = vld [vmem:[#allocation10 + $0x190] sm:$0xff]
    %v7092 = vld [vmem:[#allocation10 + $0x198] sm:$0xff]
    %v7093 = vld [vmem:[#allocation10 + $0x1a0] sm:$0xff]
    %v7094 = vld [vmem:[#allocation10 + $0x1a8] sm:$0xff]
    %v7095 = vld [vmem:[#allocation10 + $0x1b0] sm:$0xff]
    %v7096 = vld [vmem:[#allocation10 + $0x1b8] sm:$0xff]
    %v7097 = vld [vmem:[#allocation10 + $0x1c0] sm:$0xff]
    %v7098 = vld [vmem:[#allocation10 + $0x1c8] sm:$0xff]
    %v7099 = vld [vmem:[#allocation10 + $0x1d0] sm:$0xff]
    %v7100 = vld [vmem:[#allocation10 + $0x1d8] sm:$0xff]
    %v7101 = vld [vmem:[#allocation10 + $0x1e0] sm:$0xff]
    %v7102 = vld [vmem:[#allocation10 + $0x1e8] sm:$0xff]
    %v7103 = vld [vmem:[#allocation10 + $0x1f0] sm:$0xff]
    %v7104 = vld [vmem:[#allocation10 + $0x1f8] sm:$0xff]
    %v7105 = vld [vmem:[#allocation10 + $0x200] sm:$0xff]
    %v7106 = vld [vmem:[#allocation10 + $0x208] sm:$0xff]
    %v7107 = vld [vmem:[#allocation10 + $0x210] sm:$0xff]
    %v7108 = vld [vmem:[#allocation10 + $0x218] sm:$0xff]
    %v7109 = vld [vmem:[#allocation10 + $0x220] sm:$0xff]
    %v7110 = vld [vmem:[#allocation10 + $0x228] sm:$0xff]
    %v7111 = vld [vmem:[#allocation10 + $0x230] sm:$0xff]
    %v7112 = vld [vmem:[#allocation10 + $0x238] sm:$0xff]
    %v7113 = vld [vmem:[#allocation10 + $0x240] sm:$0xff]
    %v7114 = vld [vmem:[#allocation10 + $0x248] sm:$0xff]
    %v7115 = vld [vmem:[#allocation10 + $0x250] sm:$0xff]
    %v7116 = vld [vmem:[#allocation10 + $0x258] sm:$0xff]
    %v7117 = vld [vmem:[#allocation10 + $0x260] sm:$0xff]
    %v7118 = vld [vmem:[#allocation10 + $0x268] sm:$0xff]
    %v7119 = vld [vmem:[#allocation10 + $0x270] sm:$0xff]
    %v7120 = vld [vmem:[#allocation10 + $0x278] sm:$0xff]
    %v7121 = vld [vmem:[#allocation10 + $0x280] sm:$0xff]
    %v7122 = vld [vmem:[#allocation10 + $0x288] sm:$0xff]
    %v7123 = vld [vmem:[#allocation10 + $0x290] sm:$0xff]
    %v7124 = vld [vmem:[#allocation10 + $0x298] sm:$0xff]
    %v7125 = vld [vmem:[#allocation10 + $0x2a0] sm:$0xff]
    %v7126 = vld [vmem:[#allocation10 + $0x2a8] sm:$0xff]
    %v7127 = vld [vmem:[#allocation10 + $0x2b0] sm:$0xff]
    %v7128 = vld [vmem:[#allocation10 + $0x2b8] sm:$0xff]
    %v7129 = vld [vmem:[#allocation10 + $0x2c0] sm:$0xff]
    %v7130 = vld [vmem:[#allocation10 + $0x2c8] sm:$0xff]
    %v7131 = vld [vmem:[#allocation10 + $0x2d0] sm:$0xff]
    %v7132 = vld [vmem:[#allocation10 + $0x2d8] sm:$0xff]
    %v7133 = vld [vmem:[#allocation10 + $0x2e0] sm:$0xff]
    %v7134 = vld [vmem:[#allocation10 + $0x2e8] sm:$0xff]
    %v7135 = vld [vmem:[#allocation10 + $0x2f0] sm:$0xff]
    %v7136 = vld [vmem:[#allocation10 + $0x2f8] sm:$0xff]
    %v7137 = vld [vmem:[#allocation10 + $0x300] sm:$0xff]
    %v7138 = vld [vmem:[#allocation10 + $0x308] sm:$0xff]
    %v7139 = vld [vmem:[#allocation10 + $0x310] sm:$0xff]
    %v7140 = vld [vmem:[#allocation10 + $0x318] sm:$0xff]
    %v7141 = vld [vmem:[#allocation10 + $0x320] sm:$0xff]
    %v7142 = vld [vmem:[#allocation10 + $0x328] sm:$0xff]
    %v7143 = vld [vmem:[#allocation10 + $0x330] sm:$0xff]
    %v7144 = vld [vmem:[#allocation10 + $0x338] sm:$0xff]
    %v7145 = vld [vmem:[#allocation10 + $0x340] sm:$0xff]
    %v7146 = vld [vmem:[#allocation10 + $0x348] sm:$0xff]
    %v7147 = vld [vmem:[#allocation10 + $0x350] sm:$0xff]
    %v7148 = vld [vmem:[#allocation10 + $0x358] sm:$0xff]
    %v7149 = vld [vmem:[#allocation10 + $0x360] sm:$0xff]
    %v7150 = vld [vmem:[#allocation10 + $0x368] sm:$0xff]
    %v7151 = vld [vmem:[#allocation10 + $0x370] sm:$0xff]
    %v7152 = vld [vmem:[#allocation10 + $0x378] sm:$0xff]
    %v7153 = vld [vmem:[#allocation10 + $0x380] sm:$0xff]
    %v7154 = vld [vmem:[#allocation10 + $0x388] sm:$0xff]
    %v7155 = vld [vmem:[#allocation10 + $0x390] sm:$0xff]
    %v7156 = vld [vmem:[#allocation10 + $0x398] sm:$0xff]
    %v7157 = vld [vmem:[#allocation10 + $0x3a0] sm:$0xff]
    %v7158 = vld [vmem:[#allocation10 + $0x3a8] sm:$0xff]
    %v7159 = vld [vmem:[#allocation10 + $0x3b0] sm:$0xff]
    %v7160 = vld [vmem:[#allocation10 + $0x3b8] sm:$0xff]
    %v7161 = vld [vmem:[#allocation10 + $0x3c0] sm:$0xff]
    %v7162 = vld [vmem:[#allocation10 + $0x3c8] sm:$0xff]
    %v7163 = vld [vmem:[#allocation10 + $0x3d0] sm:$0xff]
    %v7164 = vld [vmem:[#allocation10 + $0x3d8] sm:$0xff]
    %v7165 = vld [vmem:[#allocation10 + $0x3e0] sm:$0xff]
    %v7166 = vld [vmem:[#allocation10 + $0x3e8] sm:$0xff]
    %v7167 = vld [vmem:[#allocation10 + $0x3f0] sm:$0xff]
    %v7168 = vld [vmem:[#allocation10 + $0x3f8] sm:$0xff]
    %v7169 = vld [vmem:[#allocation10 + $0x400] sm:$0xff]
    %v7170 = vld [vmem:[#allocation10 + $0x408] sm:$0xff]
    %v7171 = vld [vmem:[#allocation10 + $0x410] sm:$0xff]
    %v7172 = vld [vmem:[#allocation10 + $0x418] sm:$0xff]
    %v7173 = vld [vmem:[#allocation10 + $0x420] sm:$0xff]
    %v7174 = vld [vmem:[#allocation10 + $0x428] sm:$0xff]
    %v7175 = vld [vmem:[#allocation10 + $0x430] sm:$0xff]
    %v7176 = vld [vmem:[#allocation10 + $0x438] sm:$0xff]
    %v7177 = vld [vmem:[#allocation10 + $0x440] sm:$0xff]
    %v7178 = vld [vmem:[#allocation10 + $0x448] sm:$0xff]
    %v7179 = vld [vmem:[#allocation10 + $0x450] sm:$0xff]
    %v7180 = vld [vmem:[#allocation10 + $0x458] sm:$0xff]
    %v7181 = vld [vmem:[#allocation10 + $0x460] sm:$0xff]
    %v7182 = vld [vmem:[#allocation10 + $0x468] sm:$0xff]
    %v7183 = vld [vmem:[#allocation10 + $0x470] sm:$0xff]
    %v7184 = vld [vmem:[#allocation10 + $0x478] sm:$0xff]
    %v7185 = vld [vmem:[#allocation10 + $0x480] sm:$0xff]
    %v7186 = vld [vmem:[#allocation10 + $0x488] sm:$0xff]
    %v7187 = vld [vmem:[#allocation10 + $0x490] sm:$0xff]
    %v7188 = vld [vmem:[#allocation10 + $0x498] sm:$0xff]
    %v7189 = vld [vmem:[#allocation10 + $0x4a0] sm:$0xff]
    %v7190 = vld [vmem:[#allocation10 + $0x4a8] sm:$0xff]
    %v7191 = vld [vmem:[#allocation10 + $0x4b0] sm:$0xff]
    %v7192 = vld [vmem:[#allocation10 + $0x4b8] sm:$0xff]
    %v7193 = vld [vmem:[#allocation10 + $0x4c0] sm:$0xff]
    %v7194 = vld [vmem:[#allocation10 + $0x4c8] sm:$0xff]
    %v7195 = vld [vmem:[#allocation10 + $0x4d0] sm:$0xff]
    %v7196 = vld [vmem:[#allocation10 + $0x4d8] sm:$0xff]
    %v7197 = vld [vmem:[#allocation10 + $0x4e0] sm:$0xff]
    %v7198 = vld [vmem:[#allocation10 + $0x4e8] sm:$0xff]
    %v7199 = vld [vmem:[#allocation10 + $0x4f0] sm:$0xff]
    %v7200 = vld [vmem:[#allocation10 + $0x4f8] sm:$0xff]
    %v7201 = vld [vmem:[#allocation10 + $0x500] sm:$0xff]
    %v7202 = vld [vmem:[#allocation10 + $0x508] sm:$0xff]
    %v7203 = vld [vmem:[#allocation10 + $0x510] sm:$0xff]
    %v7204 = vld [vmem:[#allocation10 + $0x518] sm:$0xff]
    %v7205 = vld [vmem:[#allocation10 + $0x520] sm:$0xff]
    %v7206 = vld [vmem:[#allocation10 + $0x528] sm:$0xff]
    %v7207 = vld [vmem:[#allocation10 + $0x530] sm:$0xff]
    %v7208 = vld [vmem:[#allocation10 + $0x538] sm:$0xff]
    %v7209 = vld [vmem:[#allocation10 + $0x540] sm:$0xff]
    %v7210 = vld [vmem:[#allocation10 + $0x548] sm:$0xff]
    %v7211 = vld [vmem:[#allocation10 + $0x550] sm:$0xff]
    %v7212 = vld [vmem:[#allocation10 + $0x558] sm:$0xff]
    %v7213 = vld [vmem:[#allocation10 + $0x560] sm:$0xff]
    %v7214 = vld [vmem:[#allocation10 + $0x568] sm:$0xff]
    %v7215 = vld [vmem:[#allocation10 + $0x570] sm:$0xff]
    %v7216 = vld [vmem:[#allocation10 + $0x578] sm:$0xff]
    %v7217 = vld [vmem:[#allocation10 + $0x580] sm:$0xff]
    %v7218 = vld [vmem:[#allocation10 + $0x588] sm:$0xff]
    %v7219 = vld [vmem:[#allocation10 + $0x590] sm:$0xff]
    %v7220 = vld [vmem:[#allocation10 + $0x598] sm:$0xff]
    %v7221 = vld [vmem:[#allocation10 + $0x5a0] sm:$0xff]
    %v7222 = vld [vmem:[#allocation10 + $0x5a8] sm:$0xff]
    %v7223 = vld [vmem:[#allocation10 + $0x5b0] sm:$0xff]
    %v7224 = vld [vmem:[#allocation10 + $0x5b8] sm:$0xff]
    %v7225 = vld [vmem:[#allocation10 + $0x5c0] sm:$0xff]
    %v7226 = vld [vmem:[#allocation10 + $0x5c8] sm:$0xff]
    %v7227 = vld [vmem:[#allocation10 + $0x5d0] sm:$0xff]
    %v7228 = vld [vmem:[#allocation10 + $0x5d8] sm:$0xff]
    %v7229 = vld [vmem:[#allocation10 + $0x5e0] sm:$0xff]
    %v7230 = vld [vmem:[#allocation10 + $0x5e8] sm:$0xff]
    %v7231 = vld [vmem:[#allocation10 + $0x5f0] sm:$0xff]
    %v7232 = vld [vmem:[#allocation10 + $0x5f8] sm:$0xff]
    %v7233 = vld [vmem:[#allocation10 + $0x600] sm:$0xff]
    %v7234 = vld [vmem:[#allocation10 + $0x608] sm:$0xff]
    %v7235 = vld [vmem:[#allocation10 + $0x610] sm:$0xff]
    %v7236 = vld [vmem:[#allocation10 + $0x618] sm:$0xff]
    %v7237 = vld [vmem:[#allocation10 + $0x620] sm:$0xff]
    %v7238 = vld [vmem:[#allocation10 + $0x628] sm:$0xff]
    %v7239 = vld [vmem:[#allocation10 + $0x630] sm:$0xff]
    %v7240 = vld [vmem:[#allocation10 + $0x638] sm:$0xff]
    %v7241 = vld [vmem:[#allocation10 + $0x640] sm:$0xff]
    %v7242 = vld [vmem:[#allocation10 + $0x648] sm:$0xff]
    %v7243 = vld [vmem:[#allocation10 + $0x650] sm:$0xff]
    %v7244 = vld [vmem:[#allocation10 + $0x658] sm:$0xff]
    %v7245 = vld [vmem:[#allocation10 + $0x660] sm:$0xff]
    %v7246 = vld [vmem:[#allocation10 + $0x668] sm:$0xff]
    %v7247 = vld [vmem:[#allocation10 + $0x670] sm:$0xff]
    %v7248 = vld [vmem:[#allocation10 + $0x678] sm:$0xff]
    %v7249 = vld [vmem:[#allocation10 + $0x680] sm:$0xff]
    %v7250 = vld [vmem:[#allocation10 + $0x688] sm:$0xff]
    %v7251 = vld [vmem:[#allocation10 + $0x690] sm:$0xff]
    %v7252 = vld [vmem:[#allocation10 + $0x698] sm:$0xff]
    %v7253 = vld [vmem:[#allocation10 + $0x6a0] sm:$0xff]
    %v7254 = vld [vmem:[#allocation10 + $0x6a8] sm:$0xff]
    %v7255 = vld [vmem:[#allocation10 + $0x6b0] sm:$0xff]
    %v7256 = vld [vmem:[#allocation10 + $0x6b8] sm:$0xff]
    %v7257 = vld [vmem:[#allocation10 + $0x6c0] sm:$0xff]
    %v7258 = vld [vmem:[#allocation10 + $0x6c8] sm:$0xff]
    %v7259 = vld [vmem:[#allocation10 + $0x6d0] sm:$0xff]
    %v7260 = vld [vmem:[#allocation10 + $0x6d8] sm:$0xff]
    %v7261 = vld [vmem:[#allocation10 + $0x6e0] sm:$0xff]
    %v7262 = vld [vmem:[#allocation10 + $0x6e8] sm:$0xff]
    %v7263 = vld [vmem:[#allocation10 + $0x6f0] sm:$0xff]
    %v7264 = vld [vmem:[#allocation10 + $0x6f8] sm:$0xff]
    %v7265 = vld [vmem:[#allocation10 + $0x700] sm:$0xff]
    %v7266 = vld [vmem:[#allocation10 + $0x708] sm:$0xff]
    %v7267 = vld [vmem:[#allocation10 + $0x710] sm:$0xff]
    %v7268 = vld [vmem:[#allocation10 + $0x718] sm:$0xff]
    %v7269 = vld [vmem:[#allocation10 + $0x720] sm:$0xff]
    %v7270 = vld [vmem:[#allocation10 + $0x728] sm:$0xff]
    %v7271 = vld [vmem:[#allocation10 + $0x730] sm:$0xff]
    %v7272 = vld [vmem:[#allocation10 + $0x738] sm:$0xff]
    %v7273 = vld [vmem:[#allocation10 + $0x740] sm:$0xff]
    %v7274 = vld [vmem:[#allocation10 + $0x748] sm:$0xff]
    %v7275 = vld [vmem:[#allocation10 + $0x750] sm:$0xff]
    %v7276 = vld [vmem:[#allocation10 + $0x758] sm:$0xff]
    %v7277 = vld [vmem:[#allocation10 + $0x760] sm:$0xff]
    %v7278 = vld [vmem:[#allocation10 + $0x768] sm:$0xff]
    %v7279 = vld [vmem:[#allocation10 + $0x770] sm:$0xff]
    %v7280 = vld [vmem:[#allocation10 + $0x778] sm:$0xff]
    %v7281 = vld [vmem:[#allocation10 + $0x780] sm:$0xff]
    %v7282 = vld [vmem:[#allocation10 + $0x788] sm:$0xff]
    %v7283 = vld [vmem:[#allocation10 + $0x790] sm:$0xff]
    %v7284 = vld [vmem:[#allocation10 + $0x798] sm:$0xff]
    %v7285 = vld [vmem:[#allocation10 + $0x7a0] sm:$0xff]
    %v7286 = vld [vmem:[#allocation10 + $0x7a8] sm:$0xff]
    %v7287 = vld [vmem:[#allocation10 + $0x7b0] sm:$0xff]
    %v7288 = vld [vmem:[#allocation10 + $0x7b8] sm:$0xff]
    %v7289 = vld [vmem:[#allocation10 + $0x7c0] sm:$0xff]
    %v7290 = vld [vmem:[#allocation10 + $0x7c8] sm:$0xff]
    %v7291 = vld [vmem:[#allocation10 + $0x7d0] sm:$0xff]
    %v7292 = vld [vmem:[#allocation10 + $0x7d8] sm:$0xff]
    %v7293 = vld [vmem:[#allocation10 + $0x7e0] sm:$0xff]
    %v7294 = vld [vmem:[#allocation10 + $0x7e8] sm:$0xff]
    %v7295 = vld [vmem:[#allocation10 + $0x7f0] sm:$0xff]
    %v7296 = vld [vmem:[#allocation10 + $0x7f8] sm:$0xff]
    %v7297 = vld [vmem:[#allocation10 + $0x800] sm:$0xff]
    %v7298 = vld [vmem:[#allocation10 + $0x808] sm:$0xff]
    %v7299 = vld [vmem:[#allocation10 + $0x810] sm:$0xff]
    %v7300 = vld [vmem:[#allocation10 + $0x818] sm:$0xff]
    %v7301 = vld [vmem:[#allocation10 + $0x820] sm:$0xff]
    %v7302 = vld [vmem:[#allocation10 + $0x828] sm:$0xff]
    %v7303 = vld [vmem:[#allocation10 + $0x830] sm:$0xff]
    %v7304 = vld [vmem:[#allocation10 + $0x838] sm:$0xff]
    %v7305 = vld [vmem:[#allocation10 + $0x840] sm:$0xff]
    %v7306 = vld [vmem:[#allocation10 + $0x848] sm:$0xff]
    %v7307 = vld [vmem:[#allocation10 + $0x850] sm:$0xff]
    %v7308 = vld [vmem:[#allocation10 + $0x858] sm:$0xff]
    %v7309 = vld [vmem:[#allocation10 + $0x860] sm:$0xff]
    %v7310 = vld [vmem:[#allocation10 + $0x868] sm:$0xff]
    %v7311 = vld [vmem:[#allocation10 + $0x870] sm:$0xff]
    %v7312 = vld [vmem:[#allocation10 + $0x878] sm:$0xff]
    %v7313 = vld [vmem:[#allocation10 + $0x880] sm:$0xff]
    %v7314 = vld [vmem:[#allocation10 + $0x888] sm:$0xff]
    %v7315 = vld [vmem:[#allocation10 + $0x890] sm:$0xff]
    %v7316 = vld [vmem:[#allocation10 + $0x898] sm:$0xff]
    %v7317 = vld [vmem:[#allocation10 + $0x8a0] sm:$0xff]
    %v7318 = vld [vmem:[#allocation10 + $0x8a8] sm:$0xff]
    %v7319 = vld [vmem:[#allocation10 + $0x8b0] sm:$0xff]
    %v7320 = vld [vmem:[#allocation10 + $0x8b8] sm:$0xff]
    %v7321 = vld [vmem:[#allocation10 + $0x8c0] sm:$0xff]
    %v7322 = vld [vmem:[#allocation10 + $0x8c8] sm:$0xff]
    %v7323 = vld [vmem:[#allocation10 + $0x8d0] sm:$0xff]
    %v7324 = vld [vmem:[#allocation10 + $0x8d8] sm:$0xff]
    %v7325 = vld [vmem:[#allocation10 + $0x8e0] sm:$0xff]
    %v7326 = vld [vmem:[#allocation10 + $0x8e8] sm:$0xff]
    %v7327 = vld [vmem:[#allocation10 + $0x8f0] sm:$0xff]
    %v7328 = vld [vmem:[#allocation10 + $0x8f8] sm:$0xff]
    %v7329 = vld [vmem:[#allocation10 + $0x900] sm:$0xff]
    %v7330 = vld [vmem:[#allocation10 + $0x908] sm:$0xff]
    %v7331 = vld [vmem:[#allocation10 + $0x910] sm:$0xff]
    %v7332 = vld [vmem:[#allocation10 + $0x918] sm:$0xff]
    %v7333 = vld [vmem:[#allocation10 + $0x920] sm:$0xff]
    %v7334 = vld [vmem:[#allocation10 + $0x928] sm:$0xff]
    %v7335 = vld [vmem:[#allocation10 + $0x930] sm:$0xff]
    %v7336 = vld [vmem:[#allocation10 + $0x938] sm:$0xff]
    %v7337 = vld [vmem:[#allocation10 + $0x940] sm:$0xff]
    %v7338 = vld [vmem:[#allocation10 + $0x948] sm:$0xff]
    %v7339 = vld [vmem:[#allocation10 + $0x950] sm:$0xff]
    %v7340 = vld [vmem:[#allocation10 + $0x958] sm:$0xff]
    %v7341 = vld [vmem:[#allocation10 + $0x960] sm:$0xff]
    %v7342 = vld [vmem:[#allocation10 + $0x968] sm:$0xff]
    %v7343 = vld [vmem:[#allocation10 + $0x970] sm:$0xff]
    %v7344 = vld [vmem:[#allocation10 + $0x978] sm:$0xff]
    %v7345 = vld [vmem:[#allocation10 + $0x980] sm:$0xff]
    %v7346 = vld [vmem:[#allocation10 + $0x988] sm:$0xff]
    %v7347 = vld [vmem:[#allocation10 + $0x990] sm:$0xff]
    %v7348 = vld [vmem:[#allocation10 + $0x998] sm:$0xff]
    %v7349 = vld [vmem:[#allocation10 + $0x9a0] sm:$0xff]
    %v7350 = vld [vmem:[#allocation10 + $0x9a8] sm:$0xff]
    %v7351 = vld [vmem:[#allocation10 + $0x9b0] sm:$0xff]
    %v7352 = vld [vmem:[#allocation10 + $0x9b8] sm:$0xff]
    %v7353 = vld [vmem:[#allocation10 + $0x9c0] sm:$0xff]
    %v7354 = vld [vmem:[#allocation10 + $0x9c8] sm:$0xff]
    %v7355 = vld [vmem:[#allocation10 + $0x9d0] sm:$0xff]
    %v7356 = vld [vmem:[#allocation10 + $0x9d8] sm:$0xff]
    %v7357 = vld [vmem:[#allocation10 + $0x9e0] sm:$0xff]
    %v7358 = vld [vmem:[#allocation10 + $0x9e8] sm:$0xff]
    %v7359 = vld [vmem:[#allocation10 + $0x9f0] sm:$0xff]
    %v7360 = vld [vmem:[#allocation10 + $0x9f8] sm:$0xff]
    %v7361 = vld [vmem:[#allocation10 + $0xa00] sm:$0xff]
    %v7362 = vld [vmem:[#allocation10 + $0xa08] sm:$0xff]
    %v7363 = vld [vmem:[#allocation10 + $0xa10] sm:$0xff]
    %v7364 = vld [vmem:[#allocation10 + $0xa18] sm:$0xff]
    %v7365 = vld [vmem:[#allocation10 + $0xa20] sm:$0xff]
    %v7366 = vld [vmem:[#allocation10 + $0xa28] sm:$0xff]
    %v7367 = vld [vmem:[#allocation10 + $0xa30] sm:$0xff]
    %v7368 = vld [vmem:[#allocation10 + $0xa38] sm:$0xff]
    %v7369 = vld [vmem:[#allocation10 + $0xa40] sm:$0xff]
    %v7370 = vld [vmem:[#allocation10 + $0xa48] sm:$0xff]
    %v7371 = vld [vmem:[#allocation10 + $0xa50] sm:$0xff]
    %v7372 = vld [vmem:[#allocation10 + $0xa58] sm:$0xff]
    %v7373 = vld [vmem:[#allocation10 + $0xa60] sm:$0xff]
    %v7374 = vld [vmem:[#allocation10 + $0xa68] sm:$0xff]
    %v7375 = vld [vmem:[#allocation10 + $0xa70] sm:$0xff]
    %v7376 = vld [vmem:[#allocation10 + $0xa78] sm:$0xff]
    %v7377 = vld [vmem:[#allocation10 + $0xa80] sm:$0xff]
    %v7378 = vld [vmem:[#allocation10 + $0xa88] sm:$0xff]
    %v7379 = vld [vmem:[#allocation10 + $0xa90] sm:$0xff]
    %v7380 = vld [vmem:[#allocation10 + $0xa98] sm:$0xff]
    %v7381 = vld [vmem:[#allocation10 + $0xaa0] sm:$0xff]
    %v7382 = vld [vmem:[#allocation10 + $0xaa8] sm:$0xff]
    %v7383 = vld [vmem:[#allocation10 + $0xab0] sm:$0xff]
    %v7384 = vld [vmem:[#allocation10 + $0xab8] sm:$0xff]
    %v7385 = vld [vmem:[#allocation10 + $0xac0] sm:$0xff]
    %v7386 = vld [vmem:[#allocation10 + $0xac8] sm:$0xff]
    %v7387 = vld [vmem:[#allocation10 + $0xad0] sm:$0xff]
    %v7388 = vld [vmem:[#allocation10 + $0xad8] sm:$0xff]
    %v7389 = vld [vmem:[#allocation10 + $0xae0] sm:$0xff]
    %v7390 = vld [vmem:[#allocation10 + $0xae8] sm:$0xff]
    %v7391 = vld [vmem:[#allocation10 + $0xaf0] sm:$0xff]
    %v7392 = vld [vmem:[#allocation10 + $0xaf8] sm:$0xff]
    %v7393 = vld [vmem:[#allocation10 + $0xb00] sm:$0xff]
    %v7394 = vld [vmem:[#allocation10 + $0xb08] sm:$0xff]
    %v7395 = vld [vmem:[#allocation10 + $0xb10] sm:$0xff]
    %v7396 = vld [vmem:[#allocation10 + $0xb18] sm:$0xff]
    %v7397 = vld [vmem:[#allocation10 + $0xb20] sm:$0xff]
    %v7398 = vld [vmem:[#allocation10 + $0xb28] sm:$0xff]
    %v7399 = vld [vmem:[#allocation10 + $0xb30] sm:$0xff]
    %v7400 = vld [vmem:[#allocation10 + $0xb38] sm:$0xff]
    %v7401 = vld [vmem:[#allocation10 + $0xb40] sm:$0xff]
    %v7402 = vld [vmem:[#allocation10 + $0xb48] sm:$0xff]
    %v7403 = vld [vmem:[#allocation10 + $0xb50] sm:$0xff]
    %v7404 = vld [vmem:[#allocation10 + $0xb58] sm:$0xff]
    %v7405 = vld [vmem:[#allocation10 + $0xb60] sm:$0xff]
    %v7406 = vld [vmem:[#allocation10 + $0xb68] sm:$0xff]
    %v7407 = vld [vmem:[#allocation10 + $0xb70] sm:$0xff]
    %v7408 = vld [vmem:[#allocation10 + $0xb78] sm:$0xff]
    %v7409 = vld [vmem:[#allocation10 + $0xb80] sm:$0xff]
    %v7410 = vld [vmem:[#allocation10 + $0xb88] sm:$0xff]
    %v7411 = vld [vmem:[#allocation10 + $0xb90] sm:$0xff]
    %v7412 = vld [vmem:[#allocation10 + $0xb98] sm:$0xff]
    %v7413 = vld [vmem:[#allocation10 + $0xba0] sm:$0xff]
    %v7414 = vld [vmem:[#allocation10 + $0xba8] sm:$0xff]
    %v7415 = vld [vmem:[#allocation10 + $0xbb0] sm:$0xff]
    %v7416 = vld [vmem:[#allocation10 + $0xbb8] sm:$0xff]
    %v7417 = vld [vmem:[#allocation10 + $0xbc0] sm:$0xff]
    %v7418 = vld [vmem:[#allocation10 + $0xbc8] sm:$0xff]
    %v7419 = vld [vmem:[#allocation10 + $0xbd0] sm:$0xff]
    %v7420 = vld [vmem:[#allocation10 + $0xbd8] sm:$0xff]
    %v7421 = vld [vmem:[#allocation10 + $0xbe0] sm:$0xff]
    %v7422 = vld [vmem:[#allocation10 + $0xbe8] sm:$0xff]
    %v7423 = vld [vmem:[#allocation10 + $0xbf0] sm:$0xff]
    %v7424 = vld [vmem:[#allocation10 + $0xbf8] sm:$0xff]
    %v7425 = vld [vmem:[#allocation10 + $0xc00] sm:$0xff]
    %v7426 = vld [vmem:[#allocation10 + $0xc08] sm:$0xff]
    %v7427 = vld [vmem:[#allocation10 + $0xc10] sm:$0xff]
    %v7428 = vld [vmem:[#allocation10 + $0xc18] sm:$0xff]
    %v7429 = vld [vmem:[#allocation10 + $0xc20] sm:$0xff]
    %v7430 = vld [vmem:[#allocation10 + $0xc28] sm:$0xff]
    %v7431 = vld [vmem:[#allocation10 + $0xc30] sm:$0xff]
    %v7432 = vld [vmem:[#allocation10 + $0xc38] sm:$0xff]
    %v7433 = vld [vmem:[#allocation10 + $0xc40] sm:$0xff]
    %v7434 = vld [vmem:[#allocation10 + $0xc48] sm:$0xff]
    %v7435 = vld [vmem:[#allocation10 + $0xc50] sm:$0xff]
    %v7436 = vld [vmem:[#allocation10 + $0xc58] sm:$0xff]
    %v7437 = vld [vmem:[#allocation10 + $0xc60] sm:$0xff]
    %v7438 = vld [vmem:[#allocation10 + $0xc68] sm:$0xff]
    %v7439 = vld [vmem:[#allocation10 + $0xc70] sm:$0xff]
    %v7440 = vld [vmem:[#allocation10 + $0xc78] sm:$0xff]
    %v7441 = vld [vmem:[#allocation10 + $0xc80] sm:$0xff]
    %v7442 = vld [vmem:[#allocation10 + $0xc88] sm:$0xff]
    %v7443 = vld [vmem:[#allocation10 + $0xc90] sm:$0xff]
    %v7444 = vld [vmem:[#allocation10 + $0xc98] sm:$0xff]
    %v7445 = vld [vmem:[#allocation10 + $0xca0] sm:$0xff]
    %v7446 = vld [vmem:[#allocation10 + $0xca8] sm:$0xff]
    %v7447 = vld [vmem:[#allocation10 + $0xcb0] sm:$0xff]
    %v7448 = vld [vmem:[#allocation10 + $0xcb8] sm:$0xff]
    %v7449 = vld [vmem:[#allocation10 + $0xcc0] sm:$0xff]
    %v7450 = vld [vmem:[#allocation10 + $0xcc8] sm:$0xff]
    %v7451 = vld [vmem:[#allocation10 + $0xcd0] sm:$0xff]
    %v7452 = vld [vmem:[#allocation10 + $0xcd8] sm:$0xff]
    %v7453 = vld [vmem:[#allocation10 + $0xce0] sm:$0xff]
    %v7454 = vld [vmem:[#allocation10 + $0xce8] sm:$0xff]
    %v7455 = vld [vmem:[#allocation10 + $0xcf0] sm:$0xff]
    %v7456 = vld [vmem:[#allocation10 + $0xcf8] sm:$0xff]
    %v7457 = vld [vmem:[#allocation10 + $0xd00] sm:$0xff]
    %v7458 = vld [vmem:[#allocation10 + $0xd08] sm:$0xff]
    %v7459 = vld [vmem:[#allocation10 + $0xd10] sm:$0xff]
    %v7460 = vld [vmem:[#allocation10 + $0xd18] sm:$0xff]
    %v7461 = vld [vmem:[#allocation10 + $0xd20] sm:$0xff]
    %v7462 = vld [vmem:[#allocation10 + $0xd28] sm:$0xff]
    %v7463 = vld [vmem:[#allocation10 + $0xd30] sm:$0xff]
    %v7464 = vld [vmem:[#allocation10 + $0xd38] sm:$0xff]
    %v7465 = vld [vmem:[#allocation10 + $0xd40] sm:$0xff]
    %v7466 = vld [vmem:[#allocation10 + $0xd48] sm:$0xff]
    %v7467 = vld [vmem:[#allocation10 + $0xd50] sm:$0xff]
    %v7468 = vld [vmem:[#allocation10 + $0xd58] sm:$0xff]
    %v7469 = vld [vmem:[#allocation10 + $0xd60] sm:$0xff]
    %v7470 = vld [vmem:[#allocation10 + $0xd68] sm:$0xff]
    %v7471 = vld [vmem:[#allocation10 + $0xd70] sm:$0xff]
    %v7472 = vld [vmem:[#allocation10 + $0xd78] sm:$0xff]
    %v7473 = vld [vmem:[#allocation10 + $0xd80] sm:$0xff]
    %v7474 = vld [vmem:[#allocation10 + $0xd88] sm:$0xff]
    %v7475 = vld [vmem:[#allocation10 + $0xd90] sm:$0xff]
    %v7476 = vld [vmem:[#allocation10 + $0xd98] sm:$0xff]
    %v7477 = vld [vmem:[#allocation10 + $0xda0] sm:$0xff]
    %v7478 = vld [vmem:[#allocation10 + $0xda8] sm:$0xff]
    %v7479 = vld [vmem:[#allocation10 + $0xdb0] sm:$0xff]
    %v7480 = vld [vmem:[#allocation10 + $0xdb8] sm:$0xff]
    %v7481 = vld [vmem:[#allocation10 + $0xdc0] sm:$0xff]
    %v7482 = vld [vmem:[#allocation10 + $0xdc8] sm:$0xff]
    %v7483 = vld [vmem:[#allocation10 + $0xdd0] sm:$0xff]
    %v7484 = vld [vmem:[#allocation10 + $0xdd8] sm:$0xff]
    %v7485 = vld [vmem:[#allocation10 + $0xde0] sm:$0xff]
    %v7486 = vld [vmem:[#allocation10 + $0xde8] sm:$0xff]
    %v7487 = vld [vmem:[#allocation10 + $0xdf0] sm:$0xff]
    %v7488 = vld [vmem:[#allocation10 + $0xdf8] sm:$0xff]
    %v7489 = vld [vmem:[#allocation10 + $0xe00] sm:$0xff]
    %v7490 = vld [vmem:[#allocation10 + $0xe08] sm:$0xff]
    %v7491 = vld [vmem:[#allocation10 + $0xe10] sm:$0xff]
    %v7492 = vld [vmem:[#allocation10 + $0xe18] sm:$0xff]
    %v7493 = vld [vmem:[#allocation10 + $0xe20] sm:$0xff]
    %v7494 = vld [vmem:[#allocation10 + $0xe28] sm:$0xff]
    %v7495 = vld [vmem:[#allocation10 + $0xe30] sm:$0xff]
    %v7496 = vld [vmem:[#allocation10 + $0xe38] sm:$0xff]
    %v7497 = vld [vmem:[#allocation10 + $0xe40] sm:$0xff]
    %v7498 = vld [vmem:[#allocation10 + $0xe48] sm:$0xff]
    %v7499 = vld [vmem:[#allocation10 + $0xe50] sm:$0xff]
    %v7500 = vld [vmem:[#allocation10 + $0xe58] sm:$0xff]
    %v7501 = vld [vmem:[#allocation10 + $0xe60] sm:$0xff]
    %v7502 = vld [vmem:[#allocation10 + $0xe68] sm:$0xff]
    %v7503 = vld [vmem:[#allocation10 + $0xe70] sm:$0xff]
    %v7504 = vld [vmem:[#allocation10 + $0xe78] sm:$0xff]
    %v7505 = vld [vmem:[#allocation10 + $0xe80] sm:$0xff]
    %v7506 = vld [vmem:[#allocation10 + $0xe88] sm:$0xff]
    %v7507 = vld [vmem:[#allocation10 + $0xe90] sm:$0xff]
    %v7508 = vld [vmem:[#allocation10 + $0xe98] sm:$0xff]
    %v7509 = vld [vmem:[#allocation10 + $0xea0] sm:$0xff]
    %v7510 = vld [vmem:[#allocation10 + $0xea8] sm:$0xff]
    %v7511 = vld [vmem:[#allocation10 + $0xeb0] sm:$0xff]
    %v7512 = vld [vmem:[#allocation10 + $0xeb8] sm:$0xff]
    %v7513 = vld [vmem:[#allocation10 + $0xec0] sm:$0xff]
    %v7514 = vld [vmem:[#allocation10 + $0xec8] sm:$0xff]
    %v7515 = vld [vmem:[#allocation10 + $0xed0] sm:$0xff]
    %v7516 = vld [vmem:[#allocation10 + $0xed8] sm:$0xff]
    %v7517 = vld [vmem:[#allocation10 + $0xee0] sm:$0xff]
    %v7518 = vld [vmem:[#allocation10 + $0xee8] sm:$0xff]
    %v7519 = vld [vmem:[#allocation10 + $0xef0] sm:$0xff]
    %v7520 = vld [vmem:[#allocation10 + $0xef8] sm:$0xff]
    %v7521 = vld [vmem:[#allocation10 + $0xf00] sm:$0xff]
    %v7522 = vld [vmem:[#allocation10 + $0xf08] sm:$0xff]
    %v7523 = vld [vmem:[#allocation10 + $0xf10] sm:$0xff]
    %v7524 = vld [vmem:[#allocation10 + $0xf18] sm:$0xff]
    %v7525 = vld [vmem:[#allocation10 + $0xf20] sm:$0xff]
    %v7526 = vld [vmem:[#allocation10 + $0xf28] sm:$0xff]
    %v7527 = vld [vmem:[#allocation10 + $0xf30] sm:$0xff]
    %v7528 = vld [vmem:[#allocation10 + $0xf38] sm:$0xff]
    %v7529 = vld [vmem:[#allocation10 + $0xf40] sm:$0xff]
    %v7530 = vld [vmem:[#allocation10 + $0xf48] sm:$0xff]
    %v7531 = vld [vmem:[#allocation10 + $0xf50] sm:$0xff]
    %v7532 = vld [vmem:[#allocation10 + $0xf58] sm:$0xff]
    %v7533 = vld [vmem:[#allocation10 + $0xf60] sm:$0xff]
    %v7534 = vld [vmem:[#allocation10 + $0xf68] sm:$0xff]
    %v7535 = vld [vmem:[#allocation10 + $0xf70] sm:$0xff]
    %v7536 = vld [vmem:[#allocation10 + $0xf78] sm:$0xff]
    %v7537 = vld [vmem:[#allocation10 + $0xf80] sm:$0xff]
    %v7538 = vld [vmem:[#allocation10 + $0xf88] sm:$0xff]
    %v7539 = vld [vmem:[#allocation10 + $0xf90] sm:$0xff]
    %v7540 = vld [vmem:[#allocation10 + $0xf98] sm:$0xff]
    %v7541 = vld [vmem:[#allocation10 + $0xfa0] sm:$0xff]
    %v7542 = vld [vmem:[#allocation10 + $0xfa8] sm:$0xff]
    %v7543 = vld [vmem:[#allocation10 + $0xfb0] sm:$0xff]
    %v7544 = vld [vmem:[#allocation10 + $0xfb8] sm:$0xff]
    %v7545 = vld [vmem:[#allocation10 + $0xfc0] sm:$0xff]
    %v7546 = vld [vmem:[#allocation10 + $0xfc8] sm:$0xff]
    %v7547 = vld [vmem:[#allocation10 + $0xfd0] sm:$0xff]
    %v7548 = vld [vmem:[#allocation10 + $0xfd8] sm:$0xff]
    %v7549 = vld [vmem:[#allocation10 + $0xfe0] sm:$0xff]
    %v7550 = vld [vmem:[#allocation10 + $0xfe8] sm:$0xff]
    %v7551 = vld [vmem:[#allocation10 + $0xff0] sm:$0xff]
    %v7552 = vld [vmem:[#allocation10 + $0xff8] sm:$0xff]
    %v7553 = vld [vmem:[#allocation10 + $0x1000] sm:$0xff]
    %v7554 = vld [vmem:[#allocation10 + $0x1008] sm:$0xff]
    %v7555 = vld [vmem:[#allocation10 + $0x1010] sm:$0xff]
    %v7556 = vld [vmem:[#allocation10 + $0x1018] sm:$0xff]
    %v7557 = vld [vmem:[#allocation10 + $0x1020] sm:$0xff]
    %v7558 = vld [vmem:[#allocation10 + $0x1028] sm:$0xff]
    %v7559 = vld [vmem:[#allocation10 + $0x1030] sm:$0xff]
    %v7560 = vld [vmem:[#allocation10 + $0x1038] sm:$0xff]
    %v7561 = vld [vmem:[#allocation10 + $0x1040] sm:$0xff]
    %v7562 = vld [vmem:[#allocation10 + $0x1048] sm:$0xff]
    %v7563 = vld [vmem:[#allocation10 + $0x1050] sm:$0xff]
    %v7564 = vld [vmem:[#allocation10 + $0x1058] sm:$0xff]
    %v7565 = vld [vmem:[#allocation10 + $0x1060] sm:$0xff]
    %v7566 = vld [vmem:[#allocation10 + $0x1068] sm:$0xff]
    %v7567 = vld [vmem:[#allocation10 + $0x1070] sm:$0xff]
    %v7568 = vld [vmem:[#allocation10 + $0x1078] sm:$0xff]
    %v7569 = vld [vmem:[#allocation10 + $0x1080] sm:$0xff]
    %v7570 = vld [vmem:[#allocation10 + $0x1088] sm:$0xff]
    %v7571 = vld [vmem:[#allocation10 + $0x1090] sm:$0xff]
    %v7572 = vld [vmem:[#allocation10 + $0x1098] sm:$0xff]
    %v7573 = vld [vmem:[#allocation10 + $0x10a0] sm:$0xff]
    %v7574 = vld [vmem:[#allocation10 + $0x10a8] sm:$0xff]
    %v7575 = vld [vmem:[#allocation10 + $0x10b0] sm:$0xff]
    %v7576 = vld [vmem:[#allocation10 + $0x10b8] sm:$0xff]
    %v7577 = vld [vmem:[#allocation10 + $0x10c0] sm:$0xff]
    %v7578 = vld [vmem:[#allocation10 + $0x10c8] sm:$0xff]
    %v7579 = vld [vmem:[#allocation10 + $0x10d0] sm:$0xff]
    %v7580 = vld [vmem:[#allocation10 + $0x10d8] sm:$0xff]
    %v7581 = vld [vmem:[#allocation10 + $0x10e0] sm:$0xff]
    %v7582 = vld [vmem:[#allocation10 + $0x10e8] sm:$0xff]
    %v7583 = vld [vmem:[#allocation10 + $0x10f0] sm:$0xff]
    %v7584 = vld [vmem:[#allocation10 + $0x10f8] sm:$0xff]
    %v7585 = vld [vmem:[#allocation10 + $0x1100] sm:$0xff]
    %v7586 = vld [vmem:[#allocation10 + $0x1108] sm:$0xff]
    %v7587 = vld [vmem:[#allocation10 + $0x1110] sm:$0xff]
    %v7588 = vld [vmem:[#allocation10 + $0x1118] sm:$0xff]
    %v7589 = vld [vmem:[#allocation10 + $0x1120] sm:$0xff]
    %v7590 = vld [vmem:[#allocation10 + $0x1128] sm:$0xff]
    %v7591 = vld [vmem:[#allocation10 + $0x1130] sm:$0xff]
    %v7592 = vld [vmem:[#allocation10 + $0x1138] sm:$0xff]
    %v7593 = vld [vmem:[#allocation10 + $0x1140] sm:$0xff]
    %v7594 = vld [vmem:[#allocation10 + $0x1148] sm:$0xff]
    %v7595 = vld [vmem:[#allocation10 + $0x1150] sm:$0xff]
    %v7596 = vld [vmem:[#allocation10 + $0x1158] sm:$0xff]
    %v7597 = vld [vmem:[#allocation10 + $0x1160] sm:$0xff]
    %v7598 = vld [vmem:[#allocation10 + $0x1168] sm:$0xff]
    %v7599 = vld [vmem:[#allocation10 + $0x1170] sm:$0xff]
    %v7600 = vld [vmem:[#allocation10 + $0x1178] sm:$0xff]
    %v7601 = vld [vmem:[#allocation10 + $0x1180] sm:$0xff]
    %v7602 = vld [vmem:[#allocation10 + $0x1188] sm:$0xff]
    %v7603 = vld [vmem:[#allocation10 + $0x1190] sm:$0xff]
    %v7604 = vld [vmem:[#allocation10 + $0x1198] sm:$0xff]
    %v7605 = vld [vmem:[#allocation10 + $0x11a0] sm:$0xff]
    %v7606 = vld [vmem:[#allocation10 + $0x11a8] sm:$0xff]
    %v7607 = vld [vmem:[#allocation10 + $0x11b0] sm:$0xff]
    %v7608 = vld [vmem:[#allocation10 + $0x11b8] sm:$0xff]
    %v7609 = vld [vmem:[#allocation10 + $0x11c0] sm:$0xff]
    %v7610 = vld [vmem:[#allocation10 + $0x11c8] sm:$0xff]
    %v7611 = vld [vmem:[#allocation10 + $0x11d0] sm:$0xff]
    %v7612 = vld [vmem:[#allocation10 + $0x11d8] sm:$0xff]
    %v7613 = vld [vmem:[#allocation10 + $0x11e0] sm:$0xff]
    %v7614 = vld [vmem:[#allocation10 + $0x11e8] sm:$0xff]
    %v7615 = vld [vmem:[#allocation10 + $0x11f0] sm:$0xff]
    %v7616 = vld [vmem:[#allocation10 + $0x11f8] sm:$0xff]
    %v7617 = vld [vmem:[#allocation11] sm:$0x3]
    %v7619 = vlaneseq
    %v7620 = vshrl.u32 %v7619, 7
    %v7621 = vsub.s32 0, %v7620
    %v7622 = vrot.slane %v7617, %v7621
    %v7623 = vlaneseq
    %v7624 = vshrl.u32 %v7623, 7
    %v7625 = vsub.s32 1, %v7624
    %v7626 = vrot.slane %v7617, %v7625
    %v8205 = vunpack.c.l.b16 %v7041
    %v8206 = vunpack.c.h.b16 %v7041
    %v8207 = vunpack.c.l.b16 %v7042
    %v8208 = vunpack.c.h.b16 %v7042
    %v8209 = vunpack.c.l.b16 %v7043
    %v8210 = vunpack.c.h.b16 %v7043
    %v8211 = vunpack.c.l.b16 %v7044
    %v8212 = vunpack.c.h.b16 %v7044
    %v8213 = vunpack.c.l.b16 %v7045
    %v8214 = vunpack.c.h.b16 %v7045
    %v8215 = vunpack.c.l.b16 %v7046
    %v8216 = vunpack.c.h.b16 %v7046
    %v8217 = vunpack.c.l.b16 %v7047
    %v8218 = vunpack.c.h.b16 %v7047
    %v8219 = vunpack.c.l.b16 %v7048
    %v8220 = vunpack.c.h.b16 %v7048
    %v8221 = vunpack.c.l.b16 %v7049
    %v8222 = vunpack.c.h.b16 %v7049
    %v8223 = vunpack.c.l.b16 %v7050
    %v8224 = vunpack.c.h.b16 %v7050
    %v8225 = vunpack.c.l.b16 %v7051
    %v8226 = vunpack.c.h.b16 %v7051
    %v8227 = vunpack.c.l.b16 %v7052
    %v8228 = vunpack.c.h.b16 %v7052
    %v8229 = vunpack.c.l.b16 %v7053
    %v8230 = vunpack.c.h.b16 %v7053
    %v8231 = vunpack.c.l.b16 %v7054
    %v8232 = vunpack.c.h.b16 %v7054
    %v8233 = vunpack.c.l.b16 %v7055
    %v8234 = vunpack.c.h.b16 %v7055
    %v8235 = vunpack.c.l.b16 %v7056
    %v8236 = vunpack.c.h.b16 %v7056
    %v8237 = vunpack.c.l.b16 %v7057
    %v8238 = vunpack.c.h.b16 %v7057
    %v8239 = vunpack.c.l.b16 %v7058
    %v8240 = vunpack.c.h.b16 %v7058
    %v8241 = vunpack.c.l.b16 %v7059
    %v8242 = vunpack.c.h.b16 %v7059
    %v8243 = vunpack.c.l.b16 %v7060
    %v8244 = vunpack.c.h.b16 %v7060
    %v8245 = vunpack.c.l.b16 %v7061
    %v8246 = vunpack.c.h.b16 %v7061
    %v8247 = vunpack.c.l.b16 %v7062
    %v8248 = vunpack.c.h.b16 %v7062
    %v8249 = vunpack.c.l.b16 %v7063
    %v8250 = vunpack.c.h.b16 %v7063
    %v8251 = vunpack.c.l.b16 %v7064
    %v8252 = vunpack.c.h.b16 %v7064
    %v8253 = vunpack.c.l.b16 %v7065
    %v8254 = vunpack.c.h.b16 %v7065
    %v8255 = vunpack.c.l.b16 %v7066
    %v8256 = vunpack.c.h.b16 %v7066
    %v8257 = vunpack.c.l.b16 %v7067
    %v8258 = vunpack.c.h.b16 %v7067
    %v8259 = vunpack.c.l.b16 %v7068
    %v8260 = vunpack.c.h.b16 %v7068
    %v8261 = vunpack.c.l.b16 %v7069
    %v8262 = vunpack.c.h.b16 %v7069
    %v8263 = vunpack.c.l.b16 %v7070
    %v8264 = vunpack.c.h.b16 %v7070
    %v8265 = vunpack.c.l.b16 %v7071
    %v8266 = vunpack.c.h.b16 %v7071
    %v8267 = vunpack.c.l.b16 %v7072
    %v8268 = vunpack.c.h.b16 %v7072
    %v8269 = vunpack.c.l.b16 %v7073
    %v8270 = vunpack.c.h.b16 %v7073
    %v8271 = vunpack.c.l.b16 %v7074
    %v8272 = vunpack.c.h.b16 %v7074
    %v8273 = vunpack.c.l.b16 %v7075
    %v8274 = vunpack.c.h.b16 %v7075
    %v8275 = vunpack.c.l.b16 %v7076
    %v8276 = vunpack.c.h.b16 %v7076
    %v8277 = vunpack.c.l.b16 %v7077
    %v8278 = vunpack.c.h.b16 %v7077
    %v8279 = vunpack.c.l.b16 %v7078
    %v8280 = vunpack.c.h.b16 %v7078
    %v8281 = vunpack.c.l.b16 %v7079
    %v8282 = vunpack.c.h.b16 %v7079
    %v8283 = vunpack.c.l.b16 %v7080
    %v8284 = vunpack.c.h.b16 %v7080
    %v8285 = vunpack.c.l.b16 %v7081
    %v8286 = vunpack.c.h.b16 %v7081
    %v8287 = vunpack.c.l.b16 %v7082
    %v8288 = vunpack.c.h.b16 %v7082
    %v8289 = vunpack.c.l.b16 %v7083
    %v8290 = vunpack.c.h.b16 %v7083
    %v8291 = vunpack.c.l.b16 %v7084
    %v8292 = vunpack.c.h.b16 %v7084
    %v8293 = vunpack.c.l.b16 %v7085
    %v8294 = vunpack.c.h.b16 %v7085
    %v8295 = vunpack.c.l.b16 %v7086
    %v8296 = vunpack.c.h.b16 %v7086
    %v8297 = vunpack.c.l.b16 %v7087
    %v8298 = vunpack.c.h.b16 %v7087
    %v8299 = vunpack.c.l.b16 %v7088
    %v8300 = vunpack.c.h.b16 %v7088
    %v8301 = vunpack.c.l.b16 %v7089
    %v8302 = vunpack.c.h.b16 %v7089
    %v8303 = vunpack.c.l.b16 %v7090
    %v8304 = vunpack.c.h.b16 %v7090
    %v8305 = vunpack.c.l.b16 %v7091
    %v8306 = vunpack.c.h.b16 %v7091
    %v8307 = vunpack.c.l.b16 %v7092
    %v8308 = vunpack.c.h.b16 %v7092
    %v8309 = vunpack.c.l.b16 %v7093
    %v8310 = vunpack.c.h.b16 %v7093
    %v8311 = vunpack.c.l.b16 %v7094
    %v8312 = vunpack.c.h.b16 %v7094
    %v8313 = vunpack.c.l.b16 %v7095
    %v8314 = vunpack.c.h.b16 %v7095
    %v8315 = vunpack.c.l.b16 %v7096
    %v8316 = vunpack.c.h.b16 %v7096
    %v8317 = vunpack.c.l.b16 %v7097
    %v8318 = vunpack.c.h.b16 %v7097
    %v8319 = vunpack.c.l.b16 %v7098
    %v8320 = vunpack.c.h.b16 %v7098
    %v8321 = vunpack.c.l.b16 %v7099
    %v8322 = vunpack.c.h.b16 %v7099
    %v8323 = vunpack.c.l.b16 %v7100
    %v8324 = vunpack.c.h.b16 %v7100
    %v8325 = vunpack.c.l.b16 %v7101
    %v8326 = vunpack.c.h.b16 %v7101
    %v8327 = vunpack.c.l.b16 %v7102
    %v8328 = vunpack.c.h.b16 %v7102
    %v8329 = vunpack.c.l.b16 %v7103
    %v8330 = vunpack.c.h.b16 %v7103
    %v8331 = vunpack.c.l.b16 %v7104
    %v8332 = vunpack.c.h.b16 %v7104
    %v8333 = vunpack.c.l.b16 %v7105
    %v8334 = vunpack.c.h.b16 %v7105
    %v8335 = vunpack.c.l.b16 %v7106
    %v8336 = vunpack.c.h.b16 %v7106
    %v8337 = vunpack.c.l.b16 %v7107
    %v8338 = vunpack.c.h.b16 %v7107
    %v8339 = vunpack.c.l.b16 %v7108
    %v8340 = vunpack.c.h.b16 %v7108
    %v8341 = vunpack.c.l.b16 %v7109
    %v8342 = vunpack.c.h.b16 %v7109
    %v8343 = vunpack.c.l.b16 %v7110
    %v8344 = vunpack.c.h.b16 %v7110
    %v8345 = vunpack.c.l.b16 %v7111
    %v8346 = vunpack.c.h.b16 %v7111
    %v8347 = vunpack.c.l.b16 %v7112
    %v8348 = vunpack.c.h.b16 %v7112
    %v8349 = vunpack.c.l.b16 %v7113
    %v8350 = vunpack.c.h.b16 %v7113
    %v8351 = vunpack.c.l.b16 %v7114
    %v8352 = vunpack.c.h.b16 %v7114
    %v8353 = vunpack.c.l.b16 %v7115
    %v8354 = vunpack.c.h.b16 %v7115
    %v8355 = vunpack.c.l.b16 %v7116
    %v8356 = vunpack.c.h.b16 %v7116
    %v8357 = vunpack.c.l.b16 %v7117
    %v8358 = vunpack.c.h.b16 %v7117
    %v8359 = vunpack.c.l.b16 %v7118
    %v8360 = vunpack.c.h.b16 %v7118
    %v8361 = vunpack.c.l.b16 %v7119
    %v8362 = vunpack.c.h.b16 %v7119
    %v8363 = vunpack.c.l.b16 %v7120
    %v8364 = vunpack.c.h.b16 %v7120
    %v8365 = vunpack.c.l.b16 %v7121
    %v8366 = vunpack.c.h.b16 %v7121
    %v8367 = vunpack.c.l.b16 %v7122
    %v8368 = vunpack.c.h.b16 %v7122
    %v8369 = vunpack.c.l.b16 %v7123
    %v8370 = vunpack.c.h.b16 %v7123
    %v8371 = vunpack.c.l.b16 %v7124
    %v8372 = vunpack.c.h.b16 %v7124
    %v8373 = vunpack.c.l.b16 %v7125
    %v8374 = vunpack.c.h.b16 %v7125
    %v8375 = vunpack.c.l.b16 %v7126
    %v8376 = vunpack.c.h.b16 %v7126
    %v8377 = vunpack.c.l.b16 %v7127
    %v8378 = vunpack.c.h.b16 %v7127
    %v8379 = vunpack.c.l.b16 %v7128
    %v8380 = vunpack.c.h.b16 %v7128
    %v8381 = vunpack.c.l.b16 %v7129
    %v8382 = vunpack.c.h.b16 %v7129
    %v8383 = vunpack.c.l.b16 %v7130
    %v8384 = vunpack.c.h.b16 %v7130
    %v8385 = vunpack.c.l.b16 %v7131
    %v8386 = vunpack.c.h.b16 %v7131
    %v8387 = vunpack.c.l.b16 %v7132
    %v8388 = vunpack.c.h.b16 %v7132
    %v8389 = vunpack.c.l.b16 %v7133
    %v8390 = vunpack.c.h.b16 %v7133
    %v8391 = vunpack.c.l.b16 %v7134
    %v8392 = vunpack.c.h.b16 %v7134
    %v8393 = vunpack.c.l.b16 %v7135
    %v8394 = vunpack.c.h.b16 %v7135
    %v8395 = vunpack.c.l.b16 %v7136
    %v8396 = vunpack.c.h.b16 %v7136
    %v8397 = vunpack.c.l.b16 %v7137
    %v8398 = vunpack.c.h.b16 %v7137
    %v8399 = vunpack.c.l.b16 %v7138
    %v8400 = vunpack.c.h.b16 %v7138
    %v8401 = vunpack.c.l.b16 %v7139
    %v8402 = vunpack.c.h.b16 %v7139
    %v8403 = vunpack.c.l.b16 %v7140
    %v8404 = vunpack.c.h.b16 %v7140
    %v8405 = vunpack.c.l.b16 %v7141
    %v8406 = vunpack.c.h.b16 %v7141
    %v8407 = vunpack.c.l.b16 %v7142
    %v8408 = vunpack.c.h.b16 %v7142
    %v8409 = vunpack.c.l.b16 %v7143
    %v8410 = vunpack.c.h.b16 %v7143
    %v8411 = vunpack.c.l.b16 %v7144
    %v8412 = vunpack.c.h.b16 %v7144
    %v8413 = vunpack.c.l.b16 %v7145
    %v8414 = vunpack.c.h.b16 %v7145
    %v8415 = vunpack.c.l.b16 %v7146
    %v8416 = vunpack.c.h.b16 %v7146
    %v8417 = vunpack.c.l.b16 %v7147
    %v8418 = vunpack.c.h.b16 %v7147
    %v8419 = vunpack.c.l.b16 %v7148
    %v8420 = vunpack.c.h.b16 %v7148
    %v8421 = vunpack.c.l.b16 %v7149
    %v8422 = vunpack.c.h.b16 %v7149
    %v8423 = vunpack.c.l.b16 %v7150
    %v8424 = vunpack.c.h.b16 %v7150
    %v8425 = vunpack.c.l.b16 %v7151
    %v8426 = vunpack.c.h.b16 %v7151
    %v8427 = vunpack.c.l.b16 %v7152
    %v8428 = vunpack.c.h.b16 %v7152
    %v8429 = vunpack.c.l.b16 %v7153
    %v8430 = vunpack.c.h.b16 %v7153
    %v8431 = vunpack.c.l.b16 %v7154
    %v8432 = vunpack.c.h.b16 %v7154
    %v8433 = vunpack.c.l.b16 %v7155
    %v8434 = vunpack.c.h.b16 %v7155
    %v8435 = vunpack.c.l.b16 %v7156
    %v8436 = vunpack.c.h.b16 %v7156
    %v8437 = vunpack.c.l.b16 %v7157
    %v8438 = vunpack.c.h.b16 %v7157
    %v8439 = vunpack.c.l.b16 %v7158
    %v8440 = vunpack.c.h.b16 %v7158
    %v8441 = vunpack.c.l.b16 %v7159
    %v8442 = vunpack.c.h.b16 %v7159
    %v8443 = vunpack.c.l.b16 %v7160
    %v8444 = vunpack.c.h.b16 %v7160
    %v8445 = vunpack.c.l.b16 %v7161
    %v8446 = vunpack.c.h.b16 %v7161
    %v8447 = vunpack.c.l.b16 %v7162
    %v8448 = vunpack.c.h.b16 %v7162
    %v8449 = vunpack.c.l.b16 %v7163
    %v8450 = vunpack.c.h.b16 %v7163
    %v8451 = vunpack.c.l.b16 %v7164
    %v8452 = vunpack.c.h.b16 %v7164
    %v8453 = vunpack.c.l.b16 %v7165
    %v8454 = vunpack.c.h.b16 %v7165
    %v8455 = vunpack.c.l.b16 %v7166
    %v8456 = vunpack.c.h.b16 %v7166
    %v8457 = vunpack.c.l.b16 %v7167
    %v8458 = vunpack.c.h.b16 %v7167
    %v8459 = vunpack.c.l.b16 %v7168
    %v8460 = vunpack.c.h.b16 %v7168
    %v8461 = vunpack.c.l.b16 %v7169
    %v8462 = vunpack.c.h.b16 %v7169
    %v8463 = vunpack.c.l.b16 %v7170
    %v8464 = vunpack.c.h.b16 %v7170
    %v8465 = vunpack.c.l.b16 %v7171
    %v8466 = vunpack.c.h.b16 %v7171
    %v8467 = vunpack.c.l.b16 %v7172
    %v8468 = vunpack.c.h.b16 %v7172
    %v8469 = vunpack.c.l.b16 %v7173
    %v8470 = vunpack.c.h.b16 %v7173
    %v8471 = vunpack.c.l.b16 %v7174
    %v8472 = vunpack.c.h.b16 %v7174
    %v8473 = vunpack.c.l.b16 %v7175
    %v8474 = vunpack.c.h.b16 %v7175
    %v8475 = vunpack.c.l.b16 %v7176
    %v8476 = vunpack.c.h.b16 %v7176
    %v8477 = vunpack.c.l.b16 %v7177
    %v8478 = vunpack.c.h.b16 %v7177
    %v8479 = vunpack.c.l.b16 %v7178
    %v8480 = vunpack.c.h.b16 %v7178
    %v8481 = vunpack.c.l.b16 %v7179
    %v8482 = vunpack.c.h.b16 %v7179
    %v8483 = vunpack.c.l.b16 %v7180
    %v8484 = vunpack.c.h.b16 %v7180
    %v8485 = vunpack.c.l.b16 %v7181
    %v8486 = vunpack.c.h.b16 %v7181
    %v8487 = vunpack.c.l.b16 %v7182
    %v8488 = vunpack.c.h.b16 %v7182
    %v8489 = vunpack.c.l.b16 %v7183
    %v8490 = vunpack.c.h.b16 %v7183
    %v8491 = vunpack.c.l.b16 %v7184
    %v8492 = vunpack.c.h.b16 %v7184
    %v8493 = vunpack.c.l.b16 %v7185
    %v8494 = vunpack.c.h.b16 %v7185
    %v8495 = vunpack.c.l.b16 %v7186
    %v8496 = vunpack.c.h.b16 %v7186
    %v8497 = vunpack.c.l.b16 %v7187
    %v8498 = vunpack.c.h.b16 %v7187
    %v8499 = vunpack.c.l.b16 %v7188
    %v8500 = vunpack.c.h.b16 %v7188
    %v8501 = vunpack.c.l.b16 %v7189
    %v8502 = vunpack.c.h.b16 %v7189
    %v8503 = vunpack.c.l.b16 %v7190
    %v8504 = vunpack.c.h.b16 %v7190
    %v8505 = vunpack.c.l.b16 %v7191
    %v8506 = vunpack.c.h.b16 %v7191
    %v8507 = vunpack.c.l.b16 %v7192
    %v8508 = vunpack.c.h.b16 %v7192
    %v8509 = vunpack.c.l.b16 %v7193
    %v8510 = vunpack.c.h.b16 %v7193
    %v8511 = vunpack.c.l.b16 %v7194
    %v8512 = vunpack.c.h.b16 %v7194
    %v8513 = vunpack.c.l.b16 %v7195
    %v8514 = vunpack.c.h.b16 %v7195
    %v8515 = vunpack.c.l.b16 %v7196
    %v8516 = vunpack.c.h.b16 %v7196
    %v8517 = vunpack.c.l.b16 %v7197
    %v8518 = vunpack.c.h.b16 %v7197
    %v8519 = vunpack.c.l.b16 %v7198
    %v8520 = vunpack.c.h.b16 %v7198
    %v8521 = vunpack.c.l.b16 %v7199
    %v8522 = vunpack.c.h.b16 %v7199
    %v8523 = vunpack.c.l.b16 %v7200
    %v8524 = vunpack.c.h.b16 %v7200
    %v8525 = vunpack.c.l.b16 %v7201
    %v8526 = vunpack.c.h.b16 %v7201
    %v8527 = vunpack.c.l.b16 %v7202
    %v8528 = vunpack.c.h.b16 %v7202
    %v8529 = vunpack.c.l.b16 %v7203
    %v8530 = vunpack.c.h.b16 %v7203
    %v8531 = vunpack.c.l.b16 %v7204
    %v8532 = vunpack.c.h.b16 %v7204
    %v8533 = vunpack.c.l.b16 %v7205
    %v8534 = vunpack.c.h.b16 %v7205
    %v8535 = vunpack.c.l.b16 %v7206
    %v8536 = vunpack.c.h.b16 %v7206
    %v8537 = vunpack.c.l.b16 %v7207
    %v8538 = vunpack.c.h.b16 %v7207
    %v8539 = vunpack.c.l.b16 %v7208
    %v8540 = vunpack.c.h.b16 %v7208
    %v8541 = vunpack.c.l.b16 %v7209
    %v8542 = vunpack.c.h.b16 %v7209
    %v8543 = vunpack.c.l.b16 %v7210
    %v8544 = vunpack.c.h.b16 %v7210
    %v8545 = vunpack.c.l.b16 %v7211
    %v8546 = vunpack.c.h.b16 %v7211
    %v8547 = vunpack.c.l.b16 %v7212
    %v8548 = vunpack.c.h.b16 %v7212
    %v8549 = vunpack.c.l.b16 %v7213
    %v8550 = vunpack.c.h.b16 %v7213
    %v8551 = vunpack.c.l.b16 %v7214
    %v8552 = vunpack.c.h.b16 %v7214
    %v8553 = vunpack.c.l.b16 %v7215
    %v8554 = vunpack.c.h.b16 %v7215
    %v8555 = vunpack.c.l.b16 %v7216
    %v8556 = vunpack.c.h.b16 %v7216
    %v8557 = vunpack.c.l.b16 %v7217
    %v8558 = vunpack.c.h.b16 %v7217
    %v8559 = vunpack.c.l.b16 %v7218
    %v8560 = vunpack.c.h.b16 %v7218
    %v8561 = vunpack.c.l.b16 %v7219
    %v8562 = vunpack.c.h.b16 %v7219
    %v8563 = vunpack.c.l.b16 %v7220
    %v8564 = vunpack.c.h.b16 %v7220
    %v8565 = vunpack.c.l.b16 %v7221
    %v8566 = vunpack.c.h.b16 %v7221
    %v8567 = vunpack.c.l.b16 %v7222
    %v8568 = vunpack.c.h.b16 %v7222
    %v8569 = vunpack.c.l.b16 %v7223
    %v8570 = vunpack.c.h.b16 %v7223
    %v8571 = vunpack.c.l.b16 %v7224
    %v8572 = vunpack.c.h.b16 %v7224
    %v8573 = vunpack.c.l.b16 %v7225
    %v8574 = vunpack.c.h.b16 %v7225
    %v8575 = vunpack.c.l.b16 %v7226
    %v8576 = vunpack.c.h.b16 %v7226
    %v8577 = vunpack.c.l.b16 %v7227
    %v8578 = vunpack.c.h.b16 %v7227
    %v8579 = vunpack.c.l.b16 %v7228
    %v8580 = vunpack.c.h.b16 %v7228
    %v8581 = vunpack.c.l.b16 %v7229
    %v8582 = vunpack.c.h.b16 %v7229
    %v8583 = vunpack.c.l.b16 %v7230
    %v8584 = vunpack.c.h.b16 %v7230
    %v8585 = vunpack.c.l.b16 %v7231
    %v8586 = vunpack.c.h.b16 %v7231
    %v8587 = vunpack.c.l.b16 %v7232
    %v8588 = vunpack.c.h.b16 %v7232
    %v8589 = vunpack.c.l.b16 %v7233
    %v8590 = vunpack.c.h.b16 %v7233
    %v8591 = vunpack.c.l.b16 %v7234
    %v8592 = vunpack.c.h.b16 %v7234
    %v8593 = vunpack.c.l.b16 %v7235
    %v8594 = vunpack.c.h.b16 %v7235
    %v8595 = vunpack.c.l.b16 %v7236
    %v8596 = vunpack.c.h.b16 %v7236
    %v8597 = vunpack.c.l.b16 %v7237
    %v8598 = vunpack.c.h.b16 %v7237
    %v8599 = vunpack.c.l.b16 %v7238
    %v8600 = vunpack.c.h.b16 %v7238
    %v8601 = vunpack.c.l.b16 %v7239
    %v8602 = vunpack.c.h.b16 %v7239
    %v8603 = vunpack.c.l.b16 %v7240
    %v8604 = vunpack.c.h.b16 %v7240
    %v8605 = vunpack.c.l.b16 %v7241
    %v8606 = vunpack.c.h.b16 %v7241
    %v8607 = vunpack.c.l.b16 %v7242
    %v8608 = vunpack.c.h.b16 %v7242
    %v8609 = vunpack.c.l.b16 %v7243
    %v8610 = vunpack.c.h.b16 %v7243
    %v8611 = vunpack.c.l.b16 %v7244
    %v8612 = vunpack.c.h.b16 %v7244
    %v8613 = vunpack.c.l.b16 %v7245
    %v8614 = vunpack.c.h.b16 %v7245
    %v8615 = vunpack.c.l.b16 %v7246
    %v8616 = vunpack.c.h.b16 %v7246
    %v8617 = vunpack.c.l.b16 %v7247
    %v8618 = vunpack.c.h.b16 %v7247
    %v8619 = vunpack.c.l.b16 %v7248
    %v8620 = vunpack.c.h.b16 %v7248
    %v8621 = vunpack.c.l.b16 %v7249
    %v8622 = vunpack.c.h.b16 %v7249
    %v8623 = vunpack.c.l.b16 %v7250
    %v8624 = vunpack.c.h.b16 %v7250
    %v8625 = vunpack.c.l.b16 %v7251
    %v8626 = vunpack.c.h.b16 %v7251
    %v8627 = vunpack.c.l.b16 %v7252
    %v8628 = vunpack.c.h.b16 %v7252
    %v8629 = vunpack.c.l.b16 %v7253
    %v8630 = vunpack.c.h.b16 %v7253
    %v8631 = vunpack.c.l.b16 %v7254
    %v8632 = vunpack.c.h.b16 %v7254
    %v8633 = vunpack.c.l.b16 %v7255
    %v8634 = vunpack.c.h.b16 %v7255
    %v8635 = vunpack.c.l.b16 %v7256
    %v8636 = vunpack.c.h.b16 %v7256
    %v8637 = vunpack.c.l.b16 %v7257
    %v8638 = vunpack.c.h.b16 %v7257
    %v8639 = vunpack.c.l.b16 %v7258
    %v8640 = vunpack.c.h.b16 %v7258
    %v8641 = vunpack.c.l.b16 %v7259
    %v8642 = vunpack.c.h.b16 %v7259
    %v8643 = vunpack.c.l.b16 %v7260
    %v8644 = vunpack.c.h.b16 %v7260
    %v8645 = vunpack.c.l.b16 %v7261
    %v8646 = vunpack.c.h.b16 %v7261
    %v8647 = vunpack.c.l.b16 %v7262
    %v8648 = vunpack.c.h.b16 %v7262
    %v8649 = vunpack.c.l.b16 %v7263
    %v8650 = vunpack.c.h.b16 %v7263
    %v8651 = vunpack.c.l.b16 %v7264
    %v8652 = vunpack.c.h.b16 %v7264
    %v8653 = vunpack.c.l.b16 %v7265
    %v8654 = vunpack.c.h.b16 %v7265
    %v8655 = vunpack.c.l.b16 %v7266
    %v8656 = vunpack.c.h.b16 %v7266
    %v8657 = vunpack.c.l.b16 %v7267
    %v8658 = vunpack.c.h.b16 %v7267
    %v8659 = vunpack.c.l.b16 %v7268
    %v8660 = vunpack.c.h.b16 %v7268
    %v8661 = vunpack.c.l.b16 %v7269
    %v8662 = vunpack.c.h.b16 %v7269
    %v8663 = vunpack.c.l.b16 %v7270
    %v8664 = vunpack.c.h.b16 %v7270
    %v8665 = vunpack.c.l.b16 %v7271
    %v8666 = vunpack.c.h.b16 %v7271
    %v8667 = vunpack.c.l.b16 %v7272
    %v8668 = vunpack.c.h.b16 %v7272
    %v8669 = vunpack.c.l.b16 %v7273
    %v8670 = vunpack.c.h.b16 %v7273
    %v8671 = vunpack.c.l.b16 %v7274
    %v8672 = vunpack.c.h.b16 %v7274
    %v8673 = vunpack.c.l.b16 %v7275
    %v8674 = vunpack.c.h.b16 %v7275
    %v8675 = vunpack.c.l.b16 %v7276
    %v8676 = vunpack.c.h.b16 %v7276
    %v8677 = vunpack.c.l.b16 %v7277
    %v8678 = vunpack.c.h.b16 %v7277
    %v8679 = vunpack.c.l.b16 %v7278
    %v8680 = vunpack.c.h.b16 %v7278
    %v8681 = vunpack.c.l.b16 %v7279
    %v8682 = vunpack.c.h.b16 %v7279
    %v8683 = vunpack.c.l.b16 %v7280
    %v8684 = vunpack.c.h.b16 %v7280
    %v8685 = vunpack.c.l.b16 %v7281
    %v8686 = vunpack.c.h.b16 %v7281
    %v8687 = vunpack.c.l.b16 %v7282
    %v8688 = vunpack.c.h.b16 %v7282
    %v8689 = vunpack.c.l.b16 %v7283
    %v8690 = vunpack.c.h.b16 %v7283
    %v8691 = vunpack.c.l.b16 %v7284
    %v8692 = vunpack.c.h.b16 %v7284
    %v8693 = vunpack.c.l.b16 %v7285
    %v8694 = vunpack.c.h.b16 %v7285
    %v8695 = vunpack.c.l.b16 %v7286
    %v8696 = vunpack.c.h.b16 %v7286
    %v8697 = vunpack.c.l.b16 %v7287
    %v8698 = vunpack.c.h.b16 %v7287
    %v8699 = vunpack.c.l.b16 %v7288
    %v8700 = vunpack.c.h.b16 %v7288
    %v8701 = vunpack.c.l.b16 %v7289
    %v8702 = vunpack.c.h.b16 %v7289
    %v8703 = vunpack.c.l.b16 %v7290
    %v8704 = vunpack.c.h.b16 %v7290
    %v8705 = vunpack.c.l.b16 %v7291
    %v8706 = vunpack.c.h.b16 %v7291
    %v8707 = vunpack.c.l.b16 %v7292
    %v8708 = vunpack.c.h.b16 %v7292
    %v8709 = vunpack.c.l.b16 %v7293
    %v8710 = vunpack.c.h.b16 %v7293
    %v8711 = vunpack.c.l.b16 %v7294
    %v8712 = vunpack.c.h.b16 %v7294
    %v8713 = vunpack.c.l.b16 %v7295
    %v8714 = vunpack.c.h.b16 %v7295
    %v8715 = vunpack.c.l.b16 %v7296
    %v8716 = vunpack.c.h.b16 %v7296
    %v8717 = vunpack.c.l.b16 %v7297
    %v8718 = vunpack.c.h.b16 %v7297
    %v8719 = vunpack.c.l.b16 %v7298
    %v8720 = vunpack.c.h.b16 %v7298
    %v8721 = vunpack.c.l.b16 %v7299
    %v8722 = vunpack.c.h.b16 %v7299
    %v8723 = vunpack.c.l.b16 %v7300
    %v8724 = vunpack.c.h.b16 %v7300
    %v8725 = vunpack.c.l.b16 %v7301
    %v8726 = vunpack.c.h.b16 %v7301
    %v8727 = vunpack.c.l.b16 %v7302
    %v8728 = vunpack.c.h.b16 %v7302
    %v8729 = vunpack.c.l.b16 %v7303
    %v8730 = vunpack.c.h.b16 %v7303
    %v8731 = vunpack.c.l.b16 %v7304
    %v8732 = vunpack.c.h.b16 %v7304
    %v8733 = vunpack.c.l.b16 %v7305
    %v8734 = vunpack.c.h.b16 %v7305
    %v8735 = vunpack.c.l.b16 %v7306
    %v8736 = vunpack.c.h.b16 %v7306
    %v8737 = vunpack.c.l.b16 %v7307
    %v8738 = vunpack.c.h.b16 %v7307
    %v8739 = vunpack.c.l.b16 %v7308
    %v8740 = vunpack.c.h.b16 %v7308
    %v8741 = vunpack.c.l.b16 %v7309
    %v8742 = vunpack.c.h.b16 %v7309
    %v8743 = vunpack.c.l.b16 %v7310
    %v8744 = vunpack.c.h.b16 %v7310
    %v8745 = vunpack.c.l.b16 %v7311
    %v8746 = vunpack.c.h.b16 %v7311
    %v8747 = vunpack.c.l.b16 %v7312
    %v8748 = vunpack.c.h.b16 %v7312
    %v8749 = vunpack.c.l.b16 %v7313
    %v8750 = vunpack.c.h.b16 %v7313
    %v8751 = vunpack.c.l.b16 %v7314
    %v8752 = vunpack.c.h.b16 %v7314
    %v8753 = vunpack.c.l.b16 %v7315
    %v8754 = vunpack.c.h.b16 %v7315
    %v8755 = vunpack.c.l.b16 %v7316
    %v8756 = vunpack.c.h.b16 %v7316
    %v8757 = vunpack.c.l.b16 %v7317
    %v8758 = vunpack.c.h.b16 %v7317
    %v8759 = vunpack.c.l.b16 %v7318
    %v8760 = vunpack.c.h.b16 %v7318
    %v8761 = vunpack.c.l.b16 %v7319
    %v8762 = vunpack.c.h.b16 %v7319
    %v8763 = vunpack.c.l.b16 %v7320
    %v8764 = vunpack.c.h.b16 %v7320
    %v8765 = vunpack.c.l.b16 %v7321
    %v8766 = vunpack.c.h.b16 %v7321
    %v8767 = vunpack.c.l.b16 %v7322
    %v8768 = vunpack.c.h.b16 %v7322
    %v8769 = vunpack.c.l.b16 %v7323
    %v8770 = vunpack.c.h.b16 %v7323
    %v8771 = vunpack.c.l.b16 %v7324
    %v8772 = vunpack.c.h.b16 %v7324
    %v8773 = vunpack.c.l.b16 %v7325
    %v8774 = vunpack.c.h.b16 %v7325
    %v8775 = vunpack.c.l.b16 %v7326
    %v8776 = vunpack.c.h.b16 %v7326
    %v8777 = vunpack.c.l.b16 %v7327
    %v8778 = vunpack.c.h.b16 %v7327
    %v8779 = vunpack.c.l.b16 %v7328
    %v8780 = vunpack.c.h.b16 %v7328
    %v8781 = vunpack.c.l.b16 %v7329
    %v8782 = vunpack.c.h.b16 %v7329
    %v8783 = vunpack.c.l.b16 %v7330
    %v8784 = vunpack.c.h.b16 %v7330
    %v8785 = vunpack.c.l.b16 %v7331
    %v8786 = vunpack.c.h.b16 %v7331
    %v8787 = vunpack.c.l.b16 %v7332
    %v8788 = vunpack.c.h.b16 %v7332
    %v8789 = vunpack.c.l.b16 %v7333
    %v8790 = vunpack.c.h.b16 %v7333
    %v8791 = vunpack.c.l.b16 %v7334
    %v8792 = vunpack.c.h.b16 %v7334
    %v8793 = vunpack.c.l.b16 %v7335
    %v8794 = vunpack.c.h.b16 %v7335
    %v8795 = vunpack.c.l.b16 %v7336
    %v8796 = vunpack.c.h.b16 %v7336
    %v8797 = vunpack.c.l.b16 %v7337
    %v8798 = vunpack.c.h.b16 %v7337
    %v8799 = vunpack.c.l.b16 %v7338
    %v8800 = vunpack.c.h.b16 %v7338
    %v8801 = vunpack.c.l.b16 %v7339
    %v8802 = vunpack.c.h.b16 %v7339
    %v8803 = vunpack.c.l.b16 %v7340
    %v8804 = vunpack.c.h.b16 %v7340
    %v8805 = vunpack.c.l.b16 %v7341
    %v8806 = vunpack.c.h.b16 %v7341
    %v8807 = vunpack.c.l.b16 %v7342
    %v8808 = vunpack.c.h.b16 %v7342
    %v8809 = vunpack.c.l.b16 %v7343
    %v8810 = vunpack.c.h.b16 %v7343
    %v8811 = vunpack.c.l.b16 %v7344
    %v8812 = vunpack.c.h.b16 %v7344
    %v8813 = vunpack.c.l.b16 %v7345
    %v8814 = vunpack.c.h.b16 %v7345
    %v8815 = vunpack.c.l.b16 %v7346
    %v8816 = vunpack.c.h.b16 %v7346
    %v8817 = vunpack.c.l.b16 %v7347
    %v8818 = vunpack.c.h.b16 %v7347
    %v8819 = vunpack.c.l.b16 %v7348
    %v8820 = vunpack.c.h.b16 %v7348
    %v8821 = vunpack.c.l.b16 %v7349
    %v8822 = vunpack.c.h.b16 %v7349
    %v8823 = vunpack.c.l.b16 %v7350
    %v8824 = vunpack.c.h.b16 %v7350
    %v8825 = vunpack.c.l.b16 %v7351
    %v8826 = vunpack.c.h.b16 %v7351
    %v8827 = vunpack.c.l.b16 %v7352
    %v8828 = vunpack.c.h.b16 %v7352
    %v8829 = vunpack.c.l.b16 %v7353
    %v8830 = vunpack.c.h.b16 %v7353
    %v8831 = vunpack.c.l.b16 %v7354
    %v8832 = vunpack.c.h.b16 %v7354
    %v8833 = vunpack.c.l.b16 %v7355
    %v8834 = vunpack.c.h.b16 %v7355
    %v8835 = vunpack.c.l.b16 %v7356
    %v8836 = vunpack.c.h.b16 %v7356
    %v8837 = vunpack.c.l.b16 %v7357
    %v8838 = vunpack.c.h.b16 %v7357
    %v8839 = vunpack.c.l.b16 %v7358
    %v8840 = vunpack.c.h.b16 %v7358
    %v8841 = vunpack.c.l.b16 %v7359
    %v8842 = vunpack.c.h.b16 %v7359
    %v8843 = vunpack.c.l.b16 %v7360
    %v8844 = vunpack.c.h.b16 %v7360
    %v8845 = vunpack.c.l.b16 %v7361
    %v8846 = vunpack.c.h.b16 %v7361
    %v8847 = vunpack.c.l.b16 %v7362
    %v8848 = vunpack.c.h.b16 %v7362
    %v8849 = vunpack.c.l.b16 %v7363
    %v8850 = vunpack.c.h.b16 %v7363
    %v8851 = vunpack.c.l.b16 %v7364
    %v8852 = vunpack.c.h.b16 %v7364
    %v8853 = vunpack.c.l.b16 %v7365
    %v8854 = vunpack.c.h.b16 %v7365
    %v8855 = vunpack.c.l.b16 %v7366
    %v8856 = vunpack.c.h.b16 %v7366
    %v8857 = vunpack.c.l.b16 %v7367
    %v8858 = vunpack.c.h.b16 %v7367
    %v8859 = vunpack.c.l.b16 %v7368
    %v8860 = vunpack.c.h.b16 %v7368
    %v8861 = vunpack.c.l.b16 %v7369
    %v8862 = vunpack.c.h.b16 %v7369
    %v8863 = vunpack.c.l.b16 %v7370
    %v8864 = vunpack.c.h.b16 %v7370
    %v8865 = vunpack.c.l.b16 %v7371
    %v8866 = vunpack.c.h.b16 %v7371
    %v8867 = vunpack.c.l.b16 %v7372
    %v8868 = vunpack.c.h.b16 %v7372
    %v8869 = vunpack.c.l.b16 %v7373
    %v8870 = vunpack.c.h.b16 %v7373
    %v8871 = vunpack.c.l.b16 %v7374
    %v8872 = vunpack.c.h.b16 %v7374
    %v8873 = vunpack.c.l.b16 %v7375
    %v8874 = vunpack.c.h.b16 %v7375
    %v8875 = vunpack.c.l.b16 %v7376
    %v8876 = vunpack.c.h.b16 %v7376
    %v8877 = vunpack.c.l.b16 %v7377
    %v8878 = vunpack.c.h.b16 %v7377
    %v8879 = vunpack.c.l.b16 %v7378
    %v8880 = vunpack.c.h.b16 %v7378
    %v8881 = vunpack.c.l.b16 %v7379
    %v8882 = vunpack.c.h.b16 %v7379
    %v8883 = vunpack.c.l.b16 %v7380
    %v8884 = vunpack.c.h.b16 %v7380
    %v8885 = vunpack.c.l.b16 %v7381
    %v8886 = vunpack.c.h.b16 %v7381
    %v8887 = vunpack.c.l.b16 %v7382
    %v8888 = vunpack.c.h.b16 %v7382
    %v8889 = vunpack.c.l.b16 %v7383
    %v8890 = vunpack.c.h.b16 %v7383
    %v8891 = vunpack.c.l.b16 %v7384
    %v8892 = vunpack.c.h.b16 %v7384
    %v8893 = vunpack.c.l.b16 %v7385
    %v8894 = vunpack.c.h.b16 %v7385
    %v8895 = vunpack.c.l.b16 %v7386
    %v8896 = vunpack.c.h.b16 %v7386
    %v8897 = vunpack.c.l.b16 %v7387
    %v8898 = vunpack.c.h.b16 %v7387
    %v8899 = vunpack.c.l.b16 %v7388
    %v8900 = vunpack.c.h.b16 %v7388
    %v8901 = vunpack.c.l.b16 %v7389
    %v8902 = vunpack.c.h.b16 %v7389
    %v8903 = vunpack.c.l.b16 %v7390
    %v8904 = vunpack.c.h.b16 %v7390
    %v8905 = vunpack.c.l.b16 %v7391
    %v8906 = vunpack.c.h.b16 %v7391
    %v8907 = vunpack.c.l.b16 %v7392
    %v8908 = vunpack.c.h.b16 %v7392
    %v8909 = vunpack.c.l.b16 %v7393
    %v8910 = vunpack.c.h.b16 %v7393
    %v8911 = vunpack.c.l.b16 %v7394
    %v8912 = vunpack.c.h.b16 %v7394
    %v8913 = vunpack.c.l.b16 %v7395
    %v8914 = vunpack.c.h.b16 %v7395
    %v8915 = vunpack.c.l.b16 %v7396
    %v8916 = vunpack.c.h.b16 %v7396
    %v8917 = vunpack.c.l.b16 %v7397
    %v8918 = vunpack.c.h.b16 %v7397
    %v8919 = vunpack.c.l.b16 %v7398
    %v8920 = vunpack.c.h.b16 %v7398
    %v8921 = vunpack.c.l.b16 %v7399
    %v8922 = vunpack.c.h.b16 %v7399
    %v8923 = vunpack.c.l.b16 %v7400
    %v8924 = vunpack.c.h.b16 %v7400
    %v8925 = vunpack.c.l.b16 %v7401
    %v8926 = vunpack.c.h.b16 %v7401
    %v8927 = vunpack.c.l.b16 %v7402
    %v8928 = vunpack.c.h.b16 %v7402
    %v8929 = vunpack.c.l.b16 %v7403
    %v8930 = vunpack.c.h.b16 %v7403
    %v8931 = vunpack.c.l.b16 %v7404
    %v8932 = vunpack.c.h.b16 %v7404
    %v8933 = vunpack.c.l.b16 %v7405
    %v8934 = vunpack.c.h.b16 %v7405
    %v8935 = vunpack.c.l.b16 %v7406
    %v8936 = vunpack.c.h.b16 %v7406
    %v8937 = vunpack.c.l.b16 %v7407
    %v8938 = vunpack.c.h.b16 %v7407
    %v8939 = vunpack.c.l.b16 %v7408
    %v8940 = vunpack.c.h.b16 %v7408
    %v8941 = vunpack.c.l.b16 %v7409
    %v8942 = vunpack.c.h.b16 %v7409
    %v8943 = vunpack.c.l.b16 %v7410
    %v8944 = vunpack.c.h.b16 %v7410
    %v8945 = vunpack.c.l.b16 %v7411
    %v8946 = vunpack.c.h.b16 %v7411
    %v8947 = vunpack.c.l.b16 %v7412
    %v8948 = vunpack.c.h.b16 %v7412
    %v8949 = vunpack.c.l.b16 %v7413
    %v8950 = vunpack.c.h.b16 %v7413
    %v8951 = vunpack.c.l.b16 %v7414
    %v8952 = vunpack.c.h.b16 %v7414
    %v8953 = vunpack.c.l.b16 %v7415
    %v8954 = vunpack.c.h.b16 %v7415
    %v8955 = vunpack.c.l.b16 %v7416
    %v8956 = vunpack.c.h.b16 %v7416
    %v8957 = vunpack.c.l.b16 %v7417
    %v8958 = vunpack.c.h.b16 %v7417
    %v8959 = vunpack.c.l.b16 %v7418
    %v8960 = vunpack.c.h.b16 %v7418
    %v8961 = vunpack.c.l.b16 %v7419
    %v8962 = vunpack.c.h.b16 %v7419
    %v8963 = vunpack.c.l.b16 %v7420
    %v8964 = vunpack.c.h.b16 %v7420
    %v8965 = vunpack.c.l.b16 %v7421
    %v8966 = vunpack.c.h.b16 %v7421
    %v8967 = vunpack.c.l.b16 %v7422
    %v8968 = vunpack.c.h.b16 %v7422
    %v8969 = vunpack.c.l.b16 %v7423
    %v8970 = vunpack.c.h.b16 %v7423
    %v8971 = vunpack.c.l.b16 %v7424
    %v8972 = vunpack.c.h.b16 %v7424
    %v8973 = vunpack.c.l.b16 %v7425
    %v8974 = vunpack.c.h.b16 %v7425
    %v8975 = vunpack.c.l.b16 %v7426
    %v8976 = vunpack.c.h.b16 %v7426
    %v8977 = vunpack.c.l.b16 %v7427
    %v8978 = vunpack.c.h.b16 %v7427
    %v8979 = vunpack.c.l.b16 %v7428
    %v8980 = vunpack.c.h.b16 %v7428
    %v8981 = vunpack.c.l.b16 %v7429
    %v8982 = vunpack.c.h.b16 %v7429
    %v8983 = vunpack.c.l.b16 %v7430
    %v8984 = vunpack.c.h.b16 %v7430
    %v8985 = vunpack.c.l.b16 %v7431
    %v8986 = vunpack.c.h.b16 %v7431
    %v8987 = vunpack.c.l.b16 %v7432
    %v8988 = vunpack.c.h.b16 %v7432
    %v8989 = vunpack.c.l.b16 %v7433
    %v8990 = vunpack.c.h.b16 %v7433
    %v8991 = vunpack.c.l.b16 %v7434
    %v8992 = vunpack.c.h.b16 %v7434
    %v8993 = vunpack.c.l.b16 %v7435
    %v8994 = vunpack.c.h.b16 %v7435
    %v8995 = vunpack.c.l.b16 %v7436
    %v8996 = vunpack.c.h.b16 %v7436
    %v8997 = vunpack.c.l.b16 %v7437
    %v8998 = vunpack.c.h.b16 %v7437
    %v8999 = vunpack.c.l.b16 %v7438
    %v9000 = vunpack.c.h.b16 %v7438
    %v9001 = vunpack.c.l.b16 %v7439
    %v9002 = vunpack.c.h.b16 %v7439
    %v9003 = vunpack.c.l.b16 %v7440
    %v9004 = vunpack.c.h.b16 %v7440
    %v9005 = vunpack.c.l.b16 %v7441
    %v9006 = vunpack.c.h.b16 %v7441
    %v9007 = vunpack.c.l.b16 %v7442
    %v9008 = vunpack.c.h.b16 %v7442
    %v9009 = vunpack.c.l.b16 %v7443
    %v9010 = vunpack.c.h.b16 %v7443
    %v9011 = vunpack.c.l.b16 %v7444
    %v9012 = vunpack.c.h.b16 %v7444
    %v9013 = vunpack.c.l.b16 %v7445
    %v9014 = vunpack.c.h.b16 %v7445
    %v9015 = vunpack.c.l.b16 %v7446
    %v9016 = vunpack.c.h.b16 %v7446
    %v9017 = vunpack.c.l.b16 %v7447
    %v9018 = vunpack.c.h.b16 %v7447
    %v9019 = vunpack.c.l.b16 %v7448
    %v9020 = vunpack.c.h.b16 %v7448
    %v9021 = vunpack.c.l.b16 %v7449
    %v9022 = vunpack.c.h.b16 %v7449
    %v9023 = vunpack.c.l.b16 %v7450
    %v9024 = vunpack.c.h.b16 %v7450
    %v9025 = vunpack.c.l.b16 %v7451
    %v9026 = vunpack.c.h.b16 %v7451
    %v9027 = vunpack.c.l.b16 %v7452
    %v9028 = vunpack.c.h.b16 %v7452
    %v9029 = vunpack.c.l.b16 %v7453
    %v9030 = vunpack.c.h.b16 %v7453
    %v9031 = vunpack.c.l.b16 %v7454
    %v9032 = vunpack.c.h.b16 %v7454
    %v9033 = vunpack.c.l.b16 %v7455
    %v9034 = vunpack.c.h.b16 %v7455
    %v9035 = vunpack.c.l.b16 %v7456
    %v9036 = vunpack.c.h.b16 %v7456
    %v9037 = vunpack.c.l.b16 %v7457
    %v9038 = vunpack.c.h.b16 %v7457
    %v9039 = vunpack.c.l.b16 %v7458
    %v9040 = vunpack.c.h.b16 %v7458
    %v9041 = vunpack.c.l.b16 %v7459
    %v9042 = vunpack.c.h.b16 %v7459
    %v9043 = vunpack.c.l.b16 %v7460
    %v9044 = vunpack.c.h.b16 %v7460
    %v9045 = vunpack.c.l.b16 %v7461
    %v9046 = vunpack.c.h.b16 %v7461
    %v9047 = vunpack.c.l.b16 %v7462
    %v9048 = vunpack.c.h.b16 %v7462
    %v9049 = vunpack.c.l.b16 %v7463
    %v9050 = vunpack.c.h.b16 %v7463
    %v9051 = vunpack.c.l.b16 %v7464
    %v9052 = vunpack.c.h.b16 %v7464
    %v9053 = vunpack.c.l.b16 %v7465
    %v9054 = vunpack.c.h.b16 %v7465
    %v9055 = vunpack.c.l.b16 %v7466
    %v9056 = vunpack.c.h.b16 %v7466
    %v9057 = vunpack.c.l.b16 %v7467
    %v9058 = vunpack.c.h.b16 %v7467
    %v9059 = vunpack.c.l.b16 %v7468
    %v9060 = vunpack.c.h.b16 %v7468
    %v9061 = vunpack.c.l.b16 %v7469
    %v9062 = vunpack.c.h.b16 %v7469
    %v9063 = vunpack.c.l.b16 %v7470
    %v9064 = vunpack.c.h.b16 %v7470
    %v9065 = vunpack.c.l.b16 %v7471
    %v9066 = vunpack.c.h.b16 %v7471
    %v9067 = vunpack.c.l.b16 %v7472
    %v9068 = vunpack.c.h.b16 %v7472
    %v9069 = vunpack.c.l.b16 %v7473
    %v9070 = vunpack.c.h.b16 %v7473
    %v9071 = vunpack.c.l.b16 %v7474
    %v9072 = vunpack.c.h.b16 %v7474
    %v9073 = vunpack.c.l.b16 %v7475
    %v9074 = vunpack.c.h.b16 %v7475
    %v9075 = vunpack.c.l.b16 %v7476
    %v9076 = vunpack.c.h.b16 %v7476
    %v9077 = vunpack.c.l.b16 %v7477
    %v9078 = vunpack.c.h.b16 %v7477
    %v9079 = vunpack.c.l.b16 %v7478
    %v9080 = vunpack.c.h.b16 %v7478
    %v9081 = vunpack.c.l.b16 %v7479
    %v9082 = vunpack.c.h.b16 %v7479
    %v9083 = vunpack.c.l.b16 %v7480
    %v9084 = vunpack.c.h.b16 %v7480
    %v9085 = vunpack.c.l.b16 %v7481
    %v9086 = vunpack.c.h.b16 %v7481
    %v9087 = vunpack.c.l.b16 %v7482
    %v9088 = vunpack.c.h.b16 %v7482
    %v9089 = vunpack.c.l.b16 %v7483
    %v9090 = vunpack.c.h.b16 %v7483
    %v9091 = vunpack.c.l.b16 %v7484
    %v9092 = vunpack.c.h.b16 %v7484
    %v9093 = vunpack.c.l.b16 %v7485
    %v9094 = vunpack.c.h.b16 %v7485
    %v9095 = vunpack.c.l.b16 %v7486
    %v9096 = vunpack.c.h.b16 %v7486
    %v9097 = vunpack.c.l.b16 %v7487
    %v9098 = vunpack.c.h.b16 %v7487
    %v9099 = vunpack.c.l.b16 %v7488
    %v9100 = vunpack.c.h.b16 %v7488
    %v9101 = vunpack.c.l.b16 %v7489
    %v9102 = vunpack.c.h.b16 %v7489
    %v9103 = vunpack.c.l.b16 %v7490
    %v9104 = vunpack.c.h.b16 %v7490
    %v9105 = vunpack.c.l.b16 %v7491
    %v9106 = vunpack.c.h.b16 %v7491
    %v9107 = vunpack.c.l.b16 %v7492
    %v9108 = vunpack.c.h.b16 %v7492
    %v9109 = vunpack.c.l.b16 %v7493
    %v9110 = vunpack.c.h.b16 %v7493
    %v9111 = vunpack.c.l.b16 %v7494
    %v9112 = vunpack.c.h.b16 %v7494
    %v9113 = vunpack.c.l.b16 %v7495
    %v9114 = vunpack.c.h.b16 %v7495
    %v9115 = vunpack.c.l.b16 %v7496
    %v9116 = vunpack.c.h.b16 %v7496
    %v9117 = vunpack.c.l.b16 %v7497
    %v9118 = vunpack.c.h.b16 %v7497
    %v9119 = vunpack.c.l.b16 %v7498
    %v9120 = vunpack.c.h.b16 %v7498
    %v9121 = vunpack.c.l.b16 %v7499
    %v9122 = vunpack.c.h.b16 %v7499
    %v9123 = vunpack.c.l.b16 %v7500
    %v9124 = vunpack.c.h.b16 %v7500
    %v9125 = vunpack.c.l.b16 %v7501
    %v9126 = vunpack.c.h.b16 %v7501
    %v9127 = vunpack.c.l.b16 %v7502
    %v9128 = vunpack.c.h.b16 %v7502
    %v9129 = vunpack.c.l.b16 %v7503
    %v9130 = vunpack.c.h.b16 %v7503
    %v9131 = vunpack.c.l.b16 %v7504
    %v9132 = vunpack.c.h.b16 %v7504
    %v9133 = vunpack.c.l.b16 %v7505
    %v9134 = vunpack.c.h.b16 %v7505
    %v9135 = vunpack.c.l.b16 %v7506
    %v9136 = vunpack.c.h.b16 %v7506
    %v9137 = vunpack.c.l.b16 %v7507
    %v9138 = vunpack.c.h.b16 %v7507
    %v9139 = vunpack.c.l.b16 %v7508
    %v9140 = vunpack.c.h.b16 %v7508
    %v9141 = vunpack.c.l.b16 %v7509
    %v9142 = vunpack.c.h.b16 %v7509
    %v9143 = vunpack.c.l.b16 %v7510
    %v9144 = vunpack.c.h.b16 %v7510
    %v9145 = vunpack.c.l.b16 %v7511
    %v9146 = vunpack.c.h.b16 %v7511
    %v9147 = vunpack.c.l.b16 %v7512
    %v9148 = vunpack.c.h.b16 %v7512
    %v9149 = vunpack.c.l.b16 %v7513
    %v9150 = vunpack.c.h.b16 %v7513
    %v9151 = vunpack.c.l.b16 %v7514
    %v9152 = vunpack.c.h.b16 %v7514
    %v9153 = vunpack.c.l.b16 %v7515
    %v9154 = vunpack.c.h.b16 %v7515
    %v9155 = vunpack.c.l.b16 %v7516
    %v9156 = vunpack.c.h.b16 %v7516
    %v9157 = vunpack.c.l.b16 %v7517
    %v9158 = vunpack.c.h.b16 %v7517
    %v9159 = vunpack.c.l.b16 %v7518
    %v9160 = vunpack.c.h.b16 %v7518
    %v9161 = vunpack.c.l.b16 %v7519
    %v9162 = vunpack.c.h.b16 %v7519
    %v9163 = vunpack.c.l.b16 %v7520
    %v9164 = vunpack.c.h.b16 %v7520
    %v9165 = vunpack.c.l.b16 %v7521
    %v9166 = vunpack.c.h.b16 %v7521
    %v9167 = vunpack.c.l.b16 %v7522
    %v9168 = vunpack.c.h.b16 %v7522
    %v9169 = vunpack.c.l.b16 %v7523
    %v9170 = vunpack.c.h.b16 %v7523
    %v9171 = vunpack.c.l.b16 %v7524
    %v9172 = vunpack.c.h.b16 %v7524
    %v9173 = vunpack.c.l.b16 %v7525
    %v9174 = vunpack.c.h.b16 %v7525
    %v9175 = vunpack.c.l.b16 %v7526
    %v9176 = vunpack.c.h.b16 %v7526
    %v9177 = vunpack.c.l.b16 %v7527
    %v9178 = vunpack.c.h.b16 %v7527
    %v9179 = vunpack.c.l.b16 %v7528
    %v9180 = vunpack.c.h.b16 %v7528
    %v9181 = vunpack.c.l.b16 %v7529
    %v9182 = vunpack.c.h.b16 %v7529
    %v9183 = vunpack.c.l.b16 %v7530
    %v9184 = vunpack.c.h.b16 %v7530
    %v9185 = vunpack.c.l.b16 %v7531
    %v9186 = vunpack.c.h.b16 %v7531
    %v9187 = vunpack.c.l.b16 %v7532
    %v9188 = vunpack.c.h.b16 %v7532
    %v9189 = vunpack.c.l.b16 %v7533
    %v9190 = vunpack.c.h.b16 %v7533
    %v9191 = vunpack.c.l.b16 %v7534
    %v9192 = vunpack.c.h.b16 %v7534
    %v9193 = vunpack.c.l.b16 %v7535
    %v9194 = vunpack.c.h.b16 %v7535
    %v9195 = vunpack.c.l.b16 %v7536
    %v9196 = vunpack.c.h.b16 %v7536
    %v9197 = vunpack.c.l.b16 %v7537
    %v9198 = vunpack.c.h.b16 %v7537
    %v9199 = vunpack.c.l.b16 %v7538
    %v9200 = vunpack.c.h.b16 %v7538
    %v9201 = vunpack.c.l.b16 %v7539
    %v9202 = vunpack.c.h.b16 %v7539
    %v9203 = vunpack.c.l.b16 %v7540
    %v9204 = vunpack.c.h.b16 %v7540
    %v9205 = vunpack.c.l.b16 %v7541
    %v9206 = vunpack.c.h.b16 %v7541
    %v9207 = vunpack.c.l.b16 %v7542
    %v9208 = vunpack.c.h.b16 %v7542
    %v9209 = vunpack.c.l.b16 %v7543
    %v9210 = vunpack.c.h.b16 %v7543
    %v9211 = vunpack.c.l.b16 %v7544
    %v9212 = vunpack.c.h.b16 %v7544
    %v9213 = vunpack.c.l.b16 %v7545
    %v9214 = vunpack.c.h.b16 %v7545
    %v9215 = vunpack.c.l.b16 %v7546
    %v9216 = vunpack.c.h.b16 %v7546
    %v9217 = vunpack.c.l.b16 %v7547
    %v9218 = vunpack.c.h.b16 %v7547
    %v9219 = vunpack.c.l.b16 %v7548
    %v9220 = vunpack.c.h.b16 %v7548
    %v9221 = vunpack.c.l.b16 %v7549
    %v9222 = vunpack.c.h.b16 %v7549
    %v9223 = vunpack.c.l.b16 %v7550
    %v9224 = vunpack.c.h.b16 %v7550
    %v9225 = vunpack.c.l.b16 %v7551
    %v9226 = vunpack.c.h.b16 %v7551
    %v9227 = vunpack.c.l.b16 %v7552
    %v9228 = vunpack.c.h.b16 %v7552
    %v9229 = vunpack.c.l.b16 %v7553
    %v9230 = vunpack.c.h.b16 %v7553
    %v9231 = vunpack.c.l.b16 %v7554
    %v9232 = vunpack.c.h.b16 %v7554
    %v9233 = vunpack.c.l.b16 %v7555
    %v9234 = vunpack.c.h.b16 %v7555
    %v9235 = vunpack.c.l.b16 %v7556
    %v9236 = vunpack.c.h.b16 %v7556
    %v9237 = vunpack.c.l.b16 %v7557
    %v9238 = vunpack.c.h.b16 %v7557
    %v9239 = vunpack.c.l.b16 %v7558
    %v9240 = vunpack.c.h.b16 %v7558
    %v9241 = vunpack.c.l.b16 %v7559
    %v9242 = vunpack.c.h.b16 %v7559
    %v9243 = vunpack.c.l.b16 %v7560
    %v9244 = vunpack.c.h.b16 %v7560
    %v9245 = vunpack.c.l.b16 %v7561
    %v9246 = vunpack.c.h.b16 %v7561
    %v9247 = vunpack.c.l.b16 %v7562
    %v9248 = vunpack.c.h.b16 %v7562
    %v9249 = vunpack.c.l.b16 %v7563
    %v9250 = vunpack.c.h.b16 %v7563
    %v9251 = vunpack.c.l.b16 %v7564
    %v9252 = vunpack.c.h.b16 %v7564
    %v9253 = vunpack.c.l.b16 %v7565
    %v9254 = vunpack.c.h.b16 %v7565
    %v9255 = vunpack.c.l.b16 %v7566
    %v9256 = vunpack.c.h.b16 %v7566
    %v9257 = vunpack.c.l.b16 %v7567
    %v9258 = vunpack.c.h.b16 %v7567
    %v9259 = vunpack.c.l.b16 %v7568
    %v9260 = vunpack.c.h.b16 %v7568
    %v9261 = vunpack.c.l.b16 %v7569
    %v9262 = vunpack.c.h.b16 %v7569
    %v9263 = vunpack.c.l.b16 %v7570
    %v9264 = vunpack.c.h.b16 %v7570
    %v9265 = vunpack.c.l.b16 %v7571
    %v9266 = vunpack.c.h.b16 %v7571
    %v9267 = vunpack.c.l.b16 %v7572
    %v9268 = vunpack.c.h.b16 %v7572
    %v9269 = vunpack.c.l.b16 %v7573
    %v9270 = vunpack.c.h.b16 %v7573
    %v9271 = vunpack.c.l.b16 %v7574
    %v9272 = vunpack.c.h.b16 %v7574
    %v9273 = vunpack.c.l.b16 %v7575
    %v9274 = vunpack.c.h.b16 %v7575
    %v9275 = vunpack.c.l.b16 %v7576
    %v9276 = vunpack.c.h.b16 %v7576
    %v9277 = vunpack.c.l.b16 %v7577
    %v9278 = vunpack.c.h.b16 %v7577
    %v9279 = vunpack.c.l.b16 %v7578
    %v9280 = vunpack.c.h.b16 %v7578
    %v9281 = vunpack.c.l.b16 %v7579
    %v9282 = vunpack.c.h.b16 %v7579
    %v9283 = vunpack.c.l.b16 %v7580
    %v9284 = vunpack.c.h.b16 %v7580
    %v9285 = vunpack.c.l.b16 %v7581
    %v9286 = vunpack.c.h.b16 %v7581
    %v9287 = vunpack.c.l.b16 %v7582
    %v9288 = vunpack.c.h.b16 %v7582
    %v9289 = vunpack.c.l.b16 %v7583
    %v9290 = vunpack.c.h.b16 %v7583
    %v9291 = vunpack.c.l.b16 %v7584
    %v9292 = vunpack.c.h.b16 %v7584
    %v9293 = vunpack.c.l.b16 %v7585
    %v9294 = vunpack.c.h.b16 %v7585
    %v9295 = vunpack.c.l.b16 %v7586
    %v9296 = vunpack.c.h.b16 %v7586
    %v9297 = vunpack.c.l.b16 %v7587
    %v9298 = vunpack.c.h.b16 %v7587
    %v9299 = vunpack.c.l.b16 %v7588
    %v9300 = vunpack.c.h.b16 %v7588
    %v9301 = vunpack.c.l.b16 %v7589
    %v9302 = vunpack.c.h.b16 %v7589
    %v9303 = vunpack.c.l.b16 %v7590
    %v9304 = vunpack.c.h.b16 %v7590
    %v9305 = vunpack.c.l.b16 %v7591
    %v9306 = vunpack.c.h.b16 %v7591
    %v9307 = vunpack.c.l.b16 %v7592
    %v9308 = vunpack.c.h.b16 %v7592
    %v9309 = vunpack.c.l.b16 %v7593
    %v9310 = vunpack.c.h.b16 %v7593
    %v9311 = vunpack.c.l.b16 %v7594
    %v9312 = vunpack.c.h.b16 %v7594
    %v9313 = vunpack.c.l.b16 %v7595
    %v9314 = vunpack.c.h.b16 %v7595
    %v9315 = vunpack.c.l.b16 %v7596
    %v9316 = vunpack.c.h.b16 %v7596
    %v9317 = vunpack.c.l.b16 %v7597
    %v9318 = vunpack.c.h.b16 %v7597
    %v9319 = vunpack.c.l.b16 %v7598
    %v9320 = vunpack.c.h.b16 %v7598
    %v9321 = vunpack.c.l.b16 %v7599
    %v9322 = vunpack.c.h.b16 %v7599
    %v9323 = vunpack.c.l.b16 %v7600
    %v9324 = vunpack.c.h.b16 %v7600
    %v9325 = vunpack.c.l.b16 %v7601
    %v9326 = vunpack.c.h.b16 %v7601
    %v9327 = vunpack.c.l.b16 %v7602
    %v9328 = vunpack.c.h.b16 %v7602
    %v9329 = vunpack.c.l.b16 %v7603
    %v9330 = vunpack.c.h.b16 %v7603
    %v9331 = vunpack.c.l.b16 %v7604
    %v9332 = vunpack.c.h.b16 %v7604
    %v9333 = vunpack.c.l.b16 %v7605
    %v9334 = vunpack.c.h.b16 %v7605
    %v9335 = vunpack.c.l.b16 %v7606
    %v9336 = vunpack.c.h.b16 %v7606
    %v9337 = vunpack.c.l.b16 %v7607
    %v9338 = vunpack.c.h.b16 %v7607
    %v9339 = vunpack.c.l.b16 %v7608
    %v9340 = vunpack.c.h.b16 %v7608
    %v9341 = vunpack.c.l.b16 %v7609
    %v9342 = vunpack.c.h.b16 %v7609
    %v9343 = vunpack.c.l.b16 %v7610
    %v9344 = vunpack.c.h.b16 %v7610
    %v9345 = vunpack.c.l.b16 %v7611
    %v9346 = vunpack.c.h.b16 %v7611
    %v9347 = vunpack.c.l.b16 %v7612
    %v9348 = vunpack.c.h.b16 %v7612
    %v9349 = vunpack.c.l.b16 %v7613
    %v9350 = vunpack.c.h.b16 %v7613
    %v9351 = vunpack.c.l.b16 %v7614
    %v9352 = vunpack.c.h.b16 %v7614
    %v9353 = vunpack.c.l.b16 %v7615
    %v9354 = vunpack.c.h.b16 %v7615
    %v9355 = vunpack.c.l.b16 %v7616
    %v9356 = vunpack.c.h.b16 %v7616
    %v9357 = vpack.c.b16 %v8207, %v8205
    %v9358 = vpack.c.b16 %v8208, %v8206
    %v9359 = vpack.c.b16 %v8211, %v8209
    %v9360 = vpack.c.b16 %v8212, %v8210
    %v9361 = vpack.c.b16 %v8215, %v8213
    %v9362 = vpack.c.b16 %v8216, %v8214
    %v9363 = vpack.c.b16 %v8219, %v8217
    %v9364 = vpack.c.b16 %v8220, %v8218
    %v9365 = vpack.c.b16 %v8223, %v8221
    %v9366 = vpack.c.b16 %v8224, %v8222
    %v9367 = vpack.c.b16 %v8227, %v8225
    %v9368 = vpack.c.b16 %v8228, %v8226
    %v9369 = vpack.c.b16 %v8231, %v8229
    %v9370 = vpack.c.b16 %v8232, %v8230
    %v9371 = vpack.c.b16 %v8235, %v8233
    %v9372 = vpack.c.b16 %v8236, %v8234
    %v9373 = vpack.c.b16 %v8239, %v8237
    %v9374 = vpack.c.b16 %v8240, %v8238
    %v9375 = vpack.c.b16 %v8243, %v8241
    %v9376 = vpack.c.b16 %v8244, %v8242
    %v9377 = vpack.c.b16 %v8247, %v8245
    %v9378 = vpack.c.b16 %v8248, %v8246
    %v9379 = vpack.c.b16 %v8251, %v8249
    %v9380 = vpack.c.b16 %v8252, %v8250
    %v9381 = vpack.c.b16 %v8255, %v8253
    %v9382 = vpack.c.b16 %v8256, %v8254
    %v9383 = vpack.c.b16 %v8259, %v8257
    %v9384 = vpack.c.b16 %v8260, %v8258
    %v9385 = vpack.c.b16 %v8263, %v8261
    %v9386 = vpack.c.b16 %v8264, %v8262
    %v9387 = vpack.c.b16 %v8267, %v8265
    %v9388 = vpack.c.b16 %v8268, %v8266
    %v9389 = vpack.c.b16 %v8271, %v8269
    %v9390 = vpack.c.b16 %v8272, %v8270
    %v9391 = vpack.c.b16 %v8275, %v8273
    %v9392 = vpack.c.b16 %v8276, %v8274
    %v9393 = vpack.c.b16 %v8279, %v8277
    %v9394 = vpack.c.b16 %v8280, %v8278
    %v9395 = vpack.c.b16 %v8283, %v8281
    %v9396 = vpack.c.b16 %v8284, %v8282
    %v9397 = vpack.c.b16 %v8287, %v8285
    %v9398 = vpack.c.b16 %v8288, %v8286
    %v9399 = vpack.c.b16 %v8291, %v8289
    %v9400 = vpack.c.b16 %v8292, %v8290
    %v9401 = vpack.c.b16 %v8295, %v8293
    %v9402 = vpack.c.b16 %v8296, %v8294
    %v9403 = vpack.c.b16 %v8299, %v8297
    %v9404 = vpack.c.b16 %v8300, %v8298
    %v9405 = vpack.c.b16 %v8303, %v8301
    %v9406 = vpack.c.b16 %v8304, %v8302
    %v9407 = vpack.c.b16 %v8307, %v8305
    %v9408 = vpack.c.b16 %v8308, %v8306
    %v9409 = vpack.c.b16 %v8311, %v8309
    %v9410 = vpack.c.b16 %v8312, %v8310
    %v9411 = vpack.c.b16 %v8315, %v8313
    %v9412 = vpack.c.b16 %v8316, %v8314
    %v9413 = vpack.c.b16 %v8319, %v8317
    %v9414 = vpack.c.b16 %v8320, %v8318
    %v9415 = vpack.c.b16 %v8323, %v8321
    %v9416 = vpack.c.b16 %v8324, %v8322
    %v9417 = vpack.c.b16 %v8327, %v8325
    %v9418 = vpack.c.b16 %v8328, %v8326
    %v9419 = vpack.c.b16 %v8331, %v8329
    %v9420 = vpack.c.b16 %v8332, %v8330
    %v9421 = vpack.c.b16 %v8335, %v8333
    %v9422 = vpack.c.b16 %v8336, %v8334
    %v9423 = vpack.c.b16 %v8339, %v8337
    %v9424 = vpack.c.b16 %v8340, %v8338
    %v9425 = vpack.c.b16 %v8343, %v8341
    %v9426 = vpack.c.b16 %v8344, %v8342
    %v9427 = vpack.c.b16 %v8347, %v8345
    %v9428 = vpack.c.b16 %v8348, %v8346
    %v9429 = vpack.c.b16 %v8351, %v8349
    %v9430 = vpack.c.b16 %v8352, %v8350
    %v9431 = vpack.c.b16 %v8355, %v8353
    %v9432 = vpack.c.b16 %v8356, %v8354
    %v9433 = vpack.c.b16 %v8359, %v8357
    %v9434 = vpack.c.b16 %v8360, %v8358
    %v9435 = vpack.c.b16 %v8363, %v8361
    %v9436 = vpack.c.b16 %v8364, %v8362
    %v9437 = vpack.c.b16 %v8367, %v8365
    %v9438 = vpack.c.b16 %v8368, %v8366
    %v9439 = vpack.c.b16 %v8371, %v8369
    %v9440 = vpack.c.b16 %v8372, %v8370
    %v9441 = vpack.c.b16 %v8375, %v8373
    %v9442 = vpack.c.b16 %v8376, %v8374
    %v9443 = vpack.c.b16 %v8379, %v8377
    %v9444 = vpack.c.b16 %v8380, %v8378
    %v9445 = vpack.c.b16 %v8383, %v8381
    %v9446 = vpack.c.b16 %v8384, %v8382
    %v9447 = vpack.c.b16 %v8387, %v8385
    %v9448 = vpack.c.b16 %v8388, %v8386
    %v9449 = vpack.c.b16 %v8391, %v8389
    %v9450 = vpack.c.b16 %v8392, %v8390
    %v9451 = vpack.c.b16 %v8395, %v8393
    %v9452 = vpack.c.b16 %v8396, %v8394
    %v9453 = vpack.c.b16 %v8399, %v8397
    %v9454 = vpack.c.b16 %v8400, %v8398
    %v9455 = vpack.c.b16 %v8403, %v8401
    %v9456 = vpack.c.b16 %v8404, %v8402
    %v9457 = vpack.c.b16 %v8407, %v8405
    %v9458 = vpack.c.b16 %v8408, %v8406
    %v9459 = vpack.c.b16 %v8411, %v8409
    %v9460 = vpack.c.b16 %v8412, %v8410
    %v9461 = vpack.c.b16 %v8415, %v8413
    %v9462 = vpack.c.b16 %v8416, %v8414
    %v9463 = vpack.c.b16 %v8419, %v8417
    %v9464 = vpack.c.b16 %v8420, %v8418
    %v9465 = vpack.c.b16 %v8423, %v8421
    %v9466 = vpack.c.b16 %v8424, %v8422
    %v9467 = vpack.c.b16 %v8427, %v8425
    %v9468 = vpack.c.b16 %v8428, %v8426
    %v9469 = vpack.c.b16 %v8431, %v8429
    %v9470 = vpack.c.b16 %v8432, %v8430
    %v9471 = vpack.c.b16 %v8435, %v8433
    %v9472 = vpack.c.b16 %v8436, %v8434
    %v9473 = vpack.c.b16 %v8439, %v8437
    %v9474 = vpack.c.b16 %v8440, %v8438
    %v9475 = vpack.c.b16 %v8443, %v8441
    %v9476 = vpack.c.b16 %v8444, %v8442
    %v9477 = vpack.c.b16 %v8447, %v8445
    %v9478 = vpack.c.b16 %v8448, %v8446
    %v9479 = vpack.c.b16 %v8451, %v8449
    %v9480 = vpack.c.b16 %v8452, %v8450
    %v9481 = vpack.c.b16 %v8455, %v8453
    %v9482 = vpack.c.b16 %v8456, %v8454
    %v9483 = vpack.c.b16 %v8459, %v8457
    %v9484 = vpack.c.b16 %v8460, %v8458
    %v9485 = vpack.c.b16 %v8463, %v8461
    %v9486 = vpack.c.b16 %v8464, %v8462
    %v9487 = vpack.c.b16 %v8467, %v8465
    %v9488 = vpack.c.b16 %v8468, %v8466
    %v9489 = vpack.c.b16 %v8471, %v8469
    %v9490 = vpack.c.b16 %v8472, %v8470
    %v9491 = vpack.c.b16 %v8475, %v8473
    %v9492 = vpack.c.b16 %v8476, %v8474
    %v9493 = vpack.c.b16 %v8479, %v8477
    %v9494 = vpack.c.b16 %v8480, %v8478
    %v9495 = vpack.c.b16 %v8483, %v8481
    %v9496 = vpack.c.b16 %v8484, %v8482
    %v9497 = vpack.c.b16 %v8487, %v8485
    %v9498 = vpack.c.b16 %v8488, %v8486
    %v9499 = vpack.c.b16 %v8491, %v8489
    %v9500 = vpack.c.b16 %v8492, %v8490
    %v9501 = vpack.c.b16 %v8495, %v8493
    %v9502 = vpack.c.b16 %v8496, %v8494
    %v9503 = vpack.c.b16 %v8499, %v8497
    %v9504 = vpack.c.b16 %v8500, %v8498
    %v9505 = vpack.c.b16 %v8503, %v8501
    %v9506 = vpack.c.b16 %v8504, %v8502
    %v9507 = vpack.c.b16 %v8507, %v8505
    %v9508 = vpack.c.b16 %v8508, %v8506
    %v9509 = vpack.c.b16 %v8511, %v8509
    %v9510 = vpack.c.b16 %v8512, %v8510
    %v9511 = vpack.c.b16 %v8515, %v8513
    %v9512 = vpack.c.b16 %v8516, %v8514
    %v9513 = vpack.c.b16 %v8519, %v8517
    %v9514 = vpack.c.b16 %v8520, %v8518
    %v9515 = vpack.c.b16 %v8523, %v8521
    %v9516 = vpack.c.b16 %v8524, %v8522
    %v9517 = vpack.c.b16 %v8527, %v8525
    %v9518 = vpack.c.b16 %v8528, %v8526
    %v9519 = vpack.c.b16 %v8531, %v8529
    %v9520 = vpack.c.b16 %v8532, %v8530
    %v9521 = vpack.c.b16 %v8535, %v8533
    %v9522 = vpack.c.b16 %v8536, %v8534
    %v9523 = vpack.c.b16 %v8539, %v8537
    %v9524 = vpack.c.b16 %v8540, %v8538
    %v9525 = vpack.c.b16 %v8543, %v8541
    %v9526 = vpack.c.b16 %v8544, %v8542
    %v9527 = vpack.c.b16 %v8547, %v8545
    %v9528 = vpack.c.b16 %v8548, %v8546
    %v9529 = vpack.c.b16 %v8551, %v8549
    %v9530 = vpack.c.b16 %v8552, %v8550
    %v9531 = vpack.c.b16 %v8555, %v8553
    %v9532 = vpack.c.b16 %v8556, %v8554
    %v9533 = vpack.c.b16 %v8559, %v8557
    %v9534 = vpack.c.b16 %v8560, %v8558
    %v9535 = vpack.c.b16 %v8563, %v8561
    %v9536 = vpack.c.b16 %v8564, %v8562
    %v9537 = vpack.c.b16 %v8567, %v8565
    %v9538 = vpack.c.b16 %v8568, %v8566
    %v9539 = vpack.c.b16 %v8571, %v8569
    %v9540 = vpack.c.b16 %v8572, %v8570
    %v9541 = vpack.c.b16 %v8575, %v8573
    %v9542 = vpack.c.b16 %v8576, %v8574
    %v9543 = vpack.c.b16 %v8579, %v8577
    %v9544 = vpack.c.b16 %v8580, %v8578
    %v9545 = vpack.c.b16 %v8583, %v8581
    %v9546 = vpack.c.b16 %v8584, %v8582
    %v9547 = vpack.c.b16 %v8587, %v8585
    %v9548 = vpack.c.b16 %v8588, %v8586
    %v9549 = vpack.c.b16 %v8591, %v8589
    %v9550 = vpack.c.b16 %v8592, %v8590
    %v9551 = vpack.c.b16 %v8595, %v8593
    %v9552 = vpack.c.b16 %v8596, %v8594
    %v9553 = vpack.c.b16 %v8599, %v8597
    %v9554 = vpack.c.b16 %v8600, %v8598
    %v9555 = vpack.c.b16 %v8603, %v8601
    %v9556 = vpack.c.b16 %v8604, %v8602
    %v9557 = vpack.c.b16 %v8607, %v8605
    %v9558 = vpack.c.b16 %v8608, %v8606
    %v9559 = vpack.c.b16 %v8611, %v8609
    %v9560 = vpack.c.b16 %v8612, %v8610
    %v9561 = vpack.c.b16 %v8615, %v8613
    %v9562 = vpack.c.b16 %v8616, %v8614
    %v9563 = vpack.c.b16 %v8619, %v8617
    %v9564 = vpack.c.b16 %v8620, %v8618
    %v9565 = vpack.c.b16 %v8623, %v8621
    %v9566 = vpack.c.b16 %v8624, %v8622
    %v9567 = vpack.c.b16 %v8627, %v8625
    %v9568 = vpack.c.b16 %v8628, %v8626
    %v9569 = vpack.c.b16 %v8631, %v8629
    %v9570 = vpack.c.b16 %v8632, %v8630
    %v9571 = vpack.c.b16 %v8635, %v8633
    %v9572 = vpack.c.b16 %v8636, %v8634
    %v9573 = vpack.c.b16 %v8639, %v8637
    %v9574 = vpack.c.b16 %v8640, %v8638
    %v9575 = vpack.c.b16 %v8643, %v8641
    %v9576 = vpack.c.b16 %v8644, %v8642
    %v9577 = vpack.c.b16 %v8647, %v8645
    %v9578 = vpack.c.b16 %v8648, %v8646
    %v9579 = vpack.c.b16 %v8651, %v8649
    %v9580 = vpack.c.b16 %v8652, %v8650
    %v9581 = vpack.c.b16 %v8655, %v8653
    %v9582 = vpack.c.b16 %v8656, %v8654
    %v9583 = vpack.c.b16 %v8659, %v8657
    %v9584 = vpack.c.b16 %v8660, %v8658
    %v9585 = vpack.c.b16 %v8663, %v8661
    %v9586 = vpack.c.b16 %v8664, %v8662
    %v9587 = vpack.c.b16 %v8667, %v8665
    %v9588 = vpack.c.b16 %v8668, %v8666
    %v9589 = vpack.c.b16 %v8671, %v8669
    %v9590 = vpack.c.b16 %v8672, %v8670
    %v9591 = vpack.c.b16 %v8675, %v8673
    %v9592 = vpack.c.b16 %v8676, %v8674
    %v9593 = vpack.c.b16 %v8679, %v8677
    %v9594 = vpack.c.b16 %v8680, %v8678
    %v9595 = vpack.c.b16 %v8683, %v8681
    %v9596 = vpack.c.b16 %v8684, %v8682
    %v9597 = vpack.c.b16 %v8687, %v8685
    %v9598 = vpack.c.b16 %v8688, %v8686
    %v9599 = vpack.c.b16 %v8691, %v8689
    %v9600 = vpack.c.b16 %v8692, %v8690
    %v9601 = vpack.c.b16 %v8695, %v8693
    %v9602 = vpack.c.b16 %v8696, %v8694
    %v9603 = vpack.c.b16 %v8699, %v8697
    %v9604 = vpack.c.b16 %v8700, %v8698
    %v9605 = vpack.c.b16 %v8703, %v8701
    %v9606 = vpack.c.b16 %v8704, %v8702
    %v9607 = vpack.c.b16 %v8707, %v8705
    %v9608 = vpack.c.b16 %v8708, %v8706
    %v9609 = vpack.c.b16 %v8711, %v8709
    %v9610 = vpack.c.b16 %v8712, %v8710
    %v9611 = vpack.c.b16 %v8715, %v8713
    %v9612 = vpack.c.b16 %v8716, %v8714
    %v9613 = vpack.c.b16 %v8719, %v8717
    %v9614 = vpack.c.b16 %v8720, %v8718
    %v9615 = vpack.c.b16 %v8723, %v8721
    %v9616 = vpack.c.b16 %v8724, %v8722
    %v9617 = vpack.c.b16 %v8727, %v8725
    %v9618 = vpack.c.b16 %v8728, %v8726
    %v9619 = vpack.c.b16 %v8731, %v8729
    %v9620 = vpack.c.b16 %v8732, %v8730
    %v9621 = vpack.c.b16 %v8735, %v8733
    %v9622 = vpack.c.b16 %v8736, %v8734
    %v9623 = vpack.c.b16 %v8739, %v8737
    %v9624 = vpack.c.b16 %v8740, %v8738
    %v9625 = vpack.c.b16 %v8743, %v8741
    %v9626 = vpack.c.b16 %v8744, %v8742
    %v9627 = vpack.c.b16 %v8747, %v8745
    %v9628 = vpack.c.b16 %v8748, %v8746
    %v9629 = vpack.c.b16 %v8751, %v8749
    %v9630 = vpack.c.b16 %v8752, %v8750
    %v9631 = vpack.c.b16 %v8755, %v8753
    %v9632 = vpack.c.b16 %v8756, %v8754
    %v9633 = vpack.c.b16 %v8759, %v8757
    %v9634 = vpack.c.b16 %v8760, %v8758
    %v9635 = vpack.c.b16 %v8763, %v8761
    %v9636 = vpack.c.b16 %v8764, %v8762
    %v9637 = vpack.c.b16 %v8767, %v8765
    %v9638 = vpack.c.b16 %v8768, %v8766
    %v9639 = vpack.c.b16 %v8771, %v8769
    %v9640 = vpack.c.b16 %v8772, %v8770
    %v9641 = vpack.c.b16 %v8775, %v8773
    %v9642 = vpack.c.b16 %v8776, %v8774
    %v9643 = vpack.c.b16 %v8779, %v8777
    %v9644 = vpack.c.b16 %v8780, %v8778
    %v9645 = vpack.c.b16 %v8783, %v8781
    %v9646 = vpack.c.b16 %v8784, %v8782
    %v9647 = vpack.c.b16 %v8787, %v8785
    %v9648 = vpack.c.b16 %v8788, %v8786
    %v9649 = vpack.c.b16 %v8791, %v8789
    %v9650 = vpack.c.b16 %v8792, %v8790
    %v9651 = vpack.c.b16 %v8795, %v8793
    %v9652 = vpack.c.b16 %v8796, %v8794
    %v9653 = vpack.c.b16 %v8799, %v8797
    %v9654 = vpack.c.b16 %v8800, %v8798
    %v9655 = vpack.c.b16 %v8803, %v8801
    %v9656 = vpack.c.b16 %v8804, %v8802
    %v9657 = vpack.c.b16 %v8807, %v8805
    %v9658 = vpack.c.b16 %v8808, %v8806
    %v9659 = vpack.c.b16 %v8811, %v8809
    %v9660 = vpack.c.b16 %v8812, %v8810
    %v9661 = vpack.c.b16 %v8815, %v8813
    %v9662 = vpack.c.b16 %v8816, %v8814
    %v9663 = vpack.c.b16 %v8819, %v8817
    %v9664 = vpack.c.b16 %v8820, %v8818
    %v9665 = vpack.c.b16 %v8823, %v8821
    %v9666 = vpack.c.b16 %v8824, %v8822
    %v9667 = vpack.c.b16 %v8827, %v8825
    %v9668 = vpack.c.b16 %v8828, %v8826
    %v9669 = vpack.c.b16 %v8831, %v8829
    %v9670 = vpack.c.b16 %v8832, %v8830
    %v9671 = vpack.c.b16 %v8835, %v8833
    %v9672 = vpack.c.b16 %v8836, %v8834
    %v9673 = vpack.c.b16 %v8839, %v8837
    %v9674 = vpack.c.b16 %v8840, %v8838
    %v9675 = vpack.c.b16 %v8843, %v8841
    %v9676 = vpack.c.b16 %v8844, %v8842
    %v9677 = vpack.c.b16 %v8847, %v8845
    %v9678 = vpack.c.b16 %v8848, %v8846
    %v9679 = vpack.c.b16 %v8851, %v8849
    %v9680 = vpack.c.b16 %v8852, %v8850
    %v9681 = vpack.c.b16 %v8855, %v8853
    %v9682 = vpack.c.b16 %v8856, %v8854
    %v9683 = vpack.c.b16 %v8859, %v8857
    %v9684 = vpack.c.b16 %v8860, %v8858
    %v9685 = vpack.c.b16 %v8863, %v8861
    %v9686 = vpack.c.b16 %v8864, %v8862
    %v9687 = vpack.c.b16 %v8867, %v8865
    %v9688 = vpack.c.b16 %v8868, %v8866
    %v9689 = vpack.c.b16 %v8871, %v8869
    %v9690 = vpack.c.b16 %v8872, %v8870
    %v9691 = vpack.c.b16 %v8875, %v8873
    %v9692 = vpack.c.b16 %v8876, %v8874
    %v9693 = vpack.c.b16 %v8879, %v8877
    %v9694 = vpack.c.b16 %v8880, %v8878
    %v9695 = vpack.c.b16 %v8883, %v8881
    %v9696 = vpack.c.b16 %v8884, %v8882
    %v9697 = vpack.c.b16 %v8887, %v8885
    %v9698 = vpack.c.b16 %v8888, %v8886
    %v9699 = vpack.c.b16 %v8891, %v8889
    %v9700 = vpack.c.b16 %v8892, %v8890
    %v9701 = vpack.c.b16 %v8895, %v8893
    %v9702 = vpack.c.b16 %v8896, %v8894
    %v9703 = vpack.c.b16 %v8899, %v8897
    %v9704 = vpack.c.b16 %v8900, %v8898
    %v9705 = vpack.c.b16 %v8903, %v8901
    %v9706 = vpack.c.b16 %v8904, %v8902
    %v9707 = vpack.c.b16 %v8907, %v8905
    %v9708 = vpack.c.b16 %v8908, %v8906
    %v9709 = vpack.c.b16 %v8911, %v8909
    %v9710 = vpack.c.b16 %v8912, %v8910
    %v9711 = vpack.c.b16 %v8915, %v8913
    %v9712 = vpack.c.b16 %v8916, %v8914
    %v9713 = vpack.c.b16 %v8919, %v8917
    %v9714 = vpack.c.b16 %v8920, %v8918
    %v9715 = vpack.c.b16 %v8923, %v8921
    %v9716 = vpack.c.b16 %v8924, %v8922
    %v9717 = vpack.c.b16 %v8927, %v8925
    %v9718 = vpack.c.b16 %v8928, %v8926
    %v9719 = vpack.c.b16 %v8931, %v8929
    %v9720 = vpack.c.b16 %v8932, %v8930
    %v9721 = vpack.c.b16 %v8935, %v8933
    %v9722 = vpack.c.b16 %v8936, %v8934
    %v9723 = vpack.c.b16 %v8939, %v8937
    %v9724 = vpack.c.b16 %v8940, %v8938
    %v9725 = vpack.c.b16 %v8943, %v8941
    %v9726 = vpack.c.b16 %v8944, %v8942
    %v9727 = vpack.c.b16 %v8947, %v8945
    %v9728 = vpack.c.b16 %v8948, %v8946
    %v9729 = vpack.c.b16 %v8951, %v8949
    %v9730 = vpack.c.b16 %v8952, %v8950
    %v9731 = vpack.c.b16 %v8955, %v8953
    %v9732 = vpack.c.b16 %v8956, %v8954
    %v9733 = vpack.c.b16 %v8959, %v8957
    %v9734 = vpack.c.b16 %v8960, %v8958
    %v9735 = vpack.c.b16 %v8963, %v8961
    %v9736 = vpack.c.b16 %v8964, %v8962
    %v9737 = vpack.c.b16 %v8967, %v8965
    %v9738 = vpack.c.b16 %v8968, %v8966
    %v9739 = vpack.c.b16 %v8971, %v8969
    %v9740 = vpack.c.b16 %v8972, %v8970
    %v9741 = vpack.c.b16 %v8975, %v8973
    %v9742 = vpack.c.b16 %v8976, %v8974
    %v9743 = vpack.c.b16 %v8979, %v8977
    %v9744 = vpack.c.b16 %v8980, %v8978
    %v9745 = vpack.c.b16 %v8983, %v8981
    %v9746 = vpack.c.b16 %v8984, %v8982
    %v9747 = vpack.c.b16 %v8987, %v8985
    %v9748 = vpack.c.b16 %v8988, %v8986
    %v9749 = vpack.c.b16 %v8991, %v8989
    %v9750 = vpack.c.b16 %v8992, %v8990
    %v9751 = vpack.c.b16 %v8995, %v8993
    %v9752 = vpack.c.b16 %v8996, %v8994
    %v9753 = vpack.c.b16 %v8999, %v8997
    %v9754 = vpack.c.b16 %v9000, %v8998
    %v9755 = vpack.c.b16 %v9003, %v9001
    %v9756 = vpack.c.b16 %v9004, %v9002
    %v9757 = vpack.c.b16 %v9007, %v9005
    %v9758 = vpack.c.b16 %v9008, %v9006
    %v9759 = vpack.c.b16 %v9011, %v9009
    %v9760 = vpack.c.b16 %v9012, %v9010
    %v9761 = vpack.c.b16 %v9015, %v9013
    %v9762 = vpack.c.b16 %v9016, %v9014
    %v9763 = vpack.c.b16 %v9019, %v9017
    %v9764 = vpack.c.b16 %v9020, %v9018
    %v9765 = vpack.c.b16 %v9023, %v9021
    %v9766 = vpack.c.b16 %v9024, %v9022
    %v9767 = vpack.c.b16 %v9027, %v9025
    %v9768 = vpack.c.b16 %v9028, %v9026
    %v9769 = vpack.c.b16 %v9031, %v9029
    %v9770 = vpack.c.b16 %v9032, %v9030
    %v9771 = vpack.c.b16 %v9035, %v9033
    %v9772 = vpack.c.b16 %v9036, %v9034
    %v9773 = vpack.c.b16 %v9039, %v9037
    %v9774 = vpack.c.b16 %v9040, %v9038
    %v9775 = vpack.c.b16 %v9043, %v9041
    %v9776 = vpack.c.b16 %v9044, %v9042
    %v9777 = vpack.c.b16 %v9047, %v9045
    %v9778 = vpack.c.b16 %v9048, %v9046
    %v9779 = vpack.c.b16 %v9051, %v9049
    %v9780 = vpack.c.b16 %v9052, %v9050
    %v9781 = vpack.c.b16 %v9055, %v9053
    %v9782 = vpack.c.b16 %v9056, %v9054
    %v9783 = vpack.c.b16 %v9059, %v9057
    %v9784 = vpack.c.b16 %v9060, %v9058
    %v9785 = vpack.c.b16 %v9063, %v9061
    %v9786 = vpack.c.b16 %v9064, %v9062
    %v9787 = vpack.c.b16 %v9067, %v9065
    %v9788 = vpack.c.b16 %v9068, %v9066
    %v9789 = vpack.c.b16 %v9071, %v9069
    %v9790 = vpack.c.b16 %v9072, %v9070
    %v9791 = vpack.c.b16 %v9075, %v9073
    %v9792 = vpack.c.b16 %v9076, %v9074
    %v9793 = vpack.c.b16 %v9079, %v9077
    %v9794 = vpack.c.b16 %v9080, %v9078
    %v9795 = vpack.c.b16 %v9083, %v9081
    %v9796 = vpack.c.b16 %v9084, %v9082
    %v9797 = vpack.c.b16 %v9087, %v9085
    %v9798 = vpack.c.b16 %v9088, %v9086
    %v9799 = vpack.c.b16 %v9091, %v9089
    %v9800 = vpack.c.b16 %v9092, %v9090
    %v9801 = vpack.c.b16 %v9095, %v9093
    %v9802 = vpack.c.b16 %v9096, %v9094
    %v9803 = vpack.c.b16 %v9099, %v9097
    %v9804 = vpack.c.b16 %v9100, %v9098
    %v9805 = vpack.c.b16 %v9103, %v9101
    %v9806 = vpack.c.b16 %v9104, %v9102
    %v9807 = vpack.c.b16 %v9107, %v9105
    %v9808 = vpack.c.b16 %v9108, %v9106
    %v9809 = vpack.c.b16 %v9111, %v9109
    %v9810 = vpack.c.b16 %v9112, %v9110
    %v9811 = vpack.c.b16 %v9115, %v9113
    %v9812 = vpack.c.b16 %v9116, %v9114
    %v9813 = vpack.c.b16 %v9119, %v9117
    %v9814 = vpack.c.b16 %v9120, %v9118
    %v9815 = vpack.c.b16 %v9123, %v9121
    %v9816 = vpack.c.b16 %v9124, %v9122
    %v9817 = vpack.c.b16 %v9127, %v9125
    %v9818 = vpack.c.b16 %v9128, %v9126
    %v9819 = vpack.c.b16 %v9131, %v9129
    %v9820 = vpack.c.b16 %v9132, %v9130
    %v9821 = vpack.c.b16 %v9135, %v9133
    %v9822 = vpack.c.b16 %v9136, %v9134
    %v9823 = vpack.c.b16 %v9139, %v9137
    %v9824 = vpack.c.b16 %v9140, %v9138
    %v9825 = vpack.c.b16 %v9143, %v9141
    %v9826 = vpack.c.b16 %v9144, %v9142
    %v9827 = vpack.c.b16 %v9147, %v9145
    %v9828 = vpack.c.b16 %v9148, %v9146
    %v9829 = vpack.c.b16 %v9151, %v9149
    %v9830 = vpack.c.b16 %v9152, %v9150
    %v9831 = vpack.c.b16 %v9155, %v9153
    %v9832 = vpack.c.b16 %v9156, %v9154
    %v9833 = vpack.c.b16 %v9159, %v9157
    %v9834 = vpack.c.b16 %v9160, %v9158
    %v9835 = vpack.c.b16 %v9163, %v9161
    %v9836 = vpack.c.b16 %v9164, %v9162
    %v9837 = vpack.c.b16 %v9167, %v9165
    %v9838 = vpack.c.b16 %v9168, %v9166
    %v9839 = vpack.c.b16 %v9171, %v9169
    %v9840 = vpack.c.b16 %v9172, %v9170
    %v9841 = vpack.c.b16 %v9175, %v9173
    %v9842 = vpack.c.b16 %v9176, %v9174
    %v9843 = vpack.c.b16 %v9179, %v9177
    %v9844 = vpack.c.b16 %v9180, %v9178
    %v9845 = vpack.c.b16 %v9183, %v9181
    %v9846 = vpack.c.b16 %v9184, %v9182
    %v9847 = vpack.c.b16 %v9187, %v9185
    %v9848 = vpack.c.b16 %v9188, %v9186
    %v9849 = vpack.c.b16 %v9191, %v9189
    %v9850 = vpack.c.b16 %v9192, %v9190
    %v9851 = vpack.c.b16 %v9195, %v9193
    %v9852 = vpack.c.b16 %v9196, %v9194
    %v9853 = vpack.c.b16 %v9199, %v9197
    %v9854 = vpack.c.b16 %v9200, %v9198
    %v9855 = vpack.c.b16 %v9203, %v9201
    %v9856 = vpack.c.b16 %v9204, %v9202
    %v9857 = vpack.c.b16 %v9207, %v9205
    %v9858 = vpack.c.b16 %v9208, %v9206
    %v9859 = vpack.c.b16 %v9211, %v9209
    %v9860 = vpack.c.b16 %v9212, %v9210
    %v9861 = vpack.c.b16 %v9215, %v9213
    %v9862 = vpack.c.b16 %v9216, %v9214
    %v9863 = vpack.c.b16 %v9219, %v9217
    %v9864 = vpack.c.b16 %v9220, %v9218
    %v9865 = vpack.c.b16 %v9223, %v9221
    %v9866 = vpack.c.b16 %v9224, %v9222
    %v9867 = vpack.c.b16 %v9227, %v9225
    %v9868 = vpack.c.b16 %v9228, %v9226
    %v9869 = vpack.c.b16 %v9231, %v9229
    %v9870 = vpack.c.b16 %v9232, %v9230
    %v9871 = vpack.c.b16 %v9235, %v9233
    %v9872 = vpack.c.b16 %v9236, %v9234
    %v9873 = vpack.c.b16 %v9239, %v9237
    %v9874 = vpack.c.b16 %v9240, %v9238
    %v9875 = vpack.c.b16 %v9243, %v9241
    %v9876 = vpack.c.b16 %v9244, %v9242
    %v9877 = vpack.c.b16 %v9247, %v9245
    %v9878 = vpack.c.b16 %v9248, %v9246
    %v9879 = vpack.c.b16 %v9251, %v9249
    %v9880 = vpack.c.b16 %v9252, %v9250
    %v9881 = vpack.c.b16 %v9255, %v9253
    %v9882 = vpack.c.b16 %v9256, %v9254
    %v9883 = vpack.c.b16 %v9259, %v9257
    %v9884 = vpack.c.b16 %v9260, %v9258
    %v9885 = vpack.c.b16 %v9263, %v9261
    %v9886 = vpack.c.b16 %v9264, %v9262
    %v9887 = vpack.c.b16 %v9267, %v9265
    %v9888 = vpack.c.b16 %v9268, %v9266
    %v9889 = vpack.c.b16 %v9271, %v9269
    %v9890 = vpack.c.b16 %v9272, %v9270
    %v9891 = vpack.c.b16 %v9275, %v9273
    %v9892 = vpack.c.b16 %v9276, %v9274
    %v9893 = vpack.c.b16 %v9279, %v9277
    %v9894 = vpack.c.b16 %v9280, %v9278
    %v9895 = vpack.c.b16 %v9283, %v9281
    %v9896 = vpack.c.b16 %v9284, %v9282
    %v9897 = vpack.c.b16 %v9287, %v9285
    %v9898 = vpack.c.b16 %v9288, %v9286
    %v9899 = vpack.c.b16 %v9291, %v9289
    %v9900 = vpack.c.b16 %v9292, %v9290
    %v9901 = vpack.c.b16 %v9295, %v9293
    %v9902 = vpack.c.b16 %v9296, %v9294
    %v9903 = vpack.c.b16 %v9299, %v9297
    %v9904 = vpack.c.b16 %v9300, %v9298
    %v9905 = vpack.c.b16 %v9303, %v9301
    %v9906 = vpack.c.b16 %v9304, %v9302
    %v9907 = vpack.c.b16 %v9307, %v9305
    %v9908 = vpack.c.b16 %v9308, %v9306
    %v9909 = vpack.c.b16 %v9311, %v9309
    %v9910 = vpack.c.b16 %v9312, %v9310
    %v9911 = vpack.c.b16 %v9315, %v9313
    %v9912 = vpack.c.b16 %v9316, %v9314
    %v9913 = vpack.c.b16 %v9319, %v9317
    %v9914 = vpack.c.b16 %v9320, %v9318
    %v9915 = vpack.c.b16 %v9323, %v9321
    %v9916 = vpack.c.b16 %v9324, %v9322
    %v9917 = vpack.c.b16 %v9327, %v9325
    %v9918 = vpack.c.b16 %v9328, %v9326
    %v9919 = vpack.c.b16 %v9331, %v9329
    %v9920 = vpack.c.b16 %v9332, %v9330
    %v9921 = vpack.c.b16 %v9335, %v9333
    %v9922 = vpack.c.b16 %v9336, %v9334
    %v9923 = vpack.c.b16 %v9339, %v9337
    %v9924 = vpack.c.b16 %v9340, %v9338
    %v9925 = vpack.c.b16 %v9343, %v9341
    %v9926 = vpack.c.b16 %v9344, %v9342
    %v9927 = vpack.c.b16 %v9347, %v9345
    %v9928 = vpack.c.b16 %v9348, %v9346
    %v9929 = vpack.c.b16 %v9351, %v9349
    %v9930 = vpack.c.b16 %v9352, %v9350
    %v9931 = vpack.c.b16 %v9355, %v9353
    %v9932 = vpack.c.b16 %v9356, %v9354
    %10509 = vmatprep.subr.bf16.mxu0 %v9358
    %10510 = vmatpush1.bf16.msra.mxu0 %v9357
    %10511 = vmatprep.subr.bf16.mxu0 %v9360
    %10512 = vmatpush1.bf16.msra.mxu0 %v9359
    %10513 = vmatprep.subr.bf16.mxu0 %v9362
    %10514 = vmatpush1.bf16.msra.mxu0 %v9361
    %10515 = vmatprep.subr.bf16.mxu0 %v9364
    %10516 = vmatpush1.bf16.msra.mxu0 %v9363
    %10517 = vmatprep.subr.bf16.mxu0 %v9366
    %10518 = vmatpush1.bf16.msra.mxu0 %v9365
    %10519 = vmatprep.subr.bf16.mxu0 %v9368
    %10520 = vmatpush1.bf16.msra.mxu0 %v9367
    %10521 = vmatprep.subr.bf16.mxu0 %v9370
    %10522 = vmatpush1.bf16.msra.mxu0 %v9369
    %10523 = vmatprep.subr.bf16.mxu0 %v9372
    %10524 = vmatpush1.bf16.msra.mxu0 %v9371
    %10525 = vmatprep.subr.bf16.mxu0 %v9374
    %10526 = vmatpush1.bf16.msra.mxu0 %v9373
    %10527 = vmatprep.subr.bf16.mxu0 %v9376
    %10528 = vmatpush1.bf16.msra.mxu0 %v9375
    %10529 = vmatprep.subr.bf16.mxu0 %v9378
    %10530 = vmatpush1.bf16.msra.mxu0 %v9377
    %10531 = vmatprep.subr.bf16.mxu0 %v9380
    %10532 = vmatpush1.bf16.msra.mxu0 %v9379
    %10533 = vmatprep.subr.bf16.mxu0 %v9382
    %10534 = vmatpush1.bf16.msra.mxu0 %v9381
    %10535 = vmatprep.subr.bf16.mxu0 %v9384
    %10536 = vmatpush1.bf16.msra.mxu0 %v9383
    %10537 = vmatprep.subr.bf16.mxu0 %v9386
    %10538 = vmatpush1.bf16.msra.mxu0 %v9385
    %10539 = vmatprep.subr.bf16.mxu0 %v9388
    %10540 = vmatpush1.bf16.msra.mxu0 %v9387
    %10541 = vmatprep.mubr.bf16.mxu0 %v7006
    %10542 = vmatmul.mubr.bf16.gmra.mrb[0].mxu0 %v7005
    %v10543 = vpop.f32.mrb[0].mxu0
    %v10544 = vadd.f32 %v7622, %v10543
    %v10545 = vpop.f32.mrb[0].mxu0
    %v10546 = vadd.f32 %v7626, %v10545
    %v10547 = vpop.f32.mrb[0].mxu0
    %v10548 = vpop.f32.mrb[0].mxu0
    %10549 = vdwg.mxu0
    %10550 = vmatprep.subr.bf16.mxu0 %v9390
    %10551 = vmatpush1.bf16.msra.mxu0 %v9389
    %10552 = vmatprep.subr.bf16.mxu0 %v9392
    %10553 = vmatpush1.bf16.msra.mxu0 %v9391
    %10554 = vmatprep.subr.bf16.mxu0 %v9394
    %10555 = vmatpush1.bf16.msra.mxu0 %v9393
    %10556 = vmatprep.subr.bf16.mxu0 %v9396
    %10557 = vmatpush1.bf16.msra.mxu0 %v9395
    %10558 = vmatprep.subr.bf16.mxu0 %v9398
    %10559 = vmatpush1.bf16.msra.mxu0 %v9397
    %10560 = vmatprep.subr.bf16.mxu0 %v9400
    %10561 = vmatpush1.bf16.msra.mxu0 %v9399
    %10562 = vmatprep.subr.bf16.mxu0 %v9402
    %10563 = vmatpush1.bf16.msra.mxu0 %v9401
    %10564 = vmatprep.subr.bf16.mxu0 %v9404
    %10565 = vmatpush1.bf16.msra.mxu0 %v9403
    %10566 = vmatprep.subr.bf16.mxu0 %v9406
    %10567 = vmatpush1.bf16.msra.mxu0 %v9405
    %10568 = vmatprep.subr.bf16.mxu0 %v9408
    %10569 = vmatpush1.bf16.msra.mxu0 %v9407
    %10570 = vmatprep.subr.bf16.mxu0 %v9410
    %10571 = vmatpush1.bf16.msra.mxu0 %v9409
    %10572 = vmatprep.subr.bf16.mxu0 %v9412
    %10573 = vmatpush1.bf16.msra.mxu0 %v9411
    %10574 = vmatprep.subr.bf16.mxu0 %v9414
    %10575 = vmatpush1.bf16.msra.mxu0 %v9413
    %10576 = vmatprep.subr.bf16.mxu0 %v9416
    %10577 = vmatpush1.bf16.msra.mxu0 %v9415
    %10578 = vmatprep.subr.bf16.mxu0 %v9418
    %10579 = vmatpush1.bf16.msra.mxu0 %v9417
    %10580 = vmatprep.subr.bf16.mxu0 %v9420
    %10581 = vmatpush1.bf16.msra.mxu0 %v9419
    %10582 = vmatprep.mubr.bf16.mxu0 %v7008
    %10583 = vmatmul.mubr.bf16.gmra.mrb[0].mxu0 %v7007
    %v10584 = vpop.f32.mrb[0].mxu0
    %v10585 = vadd.f32 %v10544, %v10584
    %v10586 = vpop.f32.mrb[0].mxu0
    %v10587 = vadd.f32 %v10546, %v10586
    %v10588 = vpop.f32.mrb[0].mxu0
    %v10589 = vpop.f32.mrb[0].mxu0
    %10590 = vdwg.mxu0
    %10591 = vmatprep.subr.bf16.mxu0 %v9422
    %10592 = vmatpush1.bf16.msra.mxu0 %v9421
    %10593 = vmatprep.subr.bf16.mxu0 %v9424
    %10594 = vmatpush1.bf16.msra.mxu0 %v9423
    %10595 = vmatprep.subr.bf16.mxu0 %v9426
    %10596 = vmatpush1.bf16.msra.mxu0 %v9425
    %10597 = vmatprep.subr.bf16.mxu0 %v9428
    %10598 = vmatpush1.bf16.msra.mxu0 %v9427
    %10599 = vmatprep.subr.bf16.mxu0 %v9430
    %10600 = vmatpush1.bf16.msra.mxu0 %v9429
    %10601 = vmatprep.subr.bf16.mxu0 %v9432
    %10602 = vmatpush1.bf16.msra.mxu0 %v9431
    %10603 = vmatprep.subr.bf16.mxu0 %v9434
    %10604 = vmatpush1.bf16.msra.mxu0 %v9433
    %10605 = vmatprep.subr.bf16.mxu0 %v9436
    %10606 = vmatpush1.bf16.msra.mxu0 %v9435
    %10607 = vmatprep.subr.bf16.mxu0 %v9438
    %10608 = vmatpush1.bf16.msra.mxu0 %v9437
    %10609 = vmatprep.subr.bf16.mxu0 %v9440
    %10610 = vmatpush1.bf16.msra.mxu0 %v9439
    %10611 = vmatprep.subr.bf16.mxu0 %v9442
    %10612 = vmatpush1.bf16.msra.mxu0 %v9441
    %10613 = vmatprep.subr.bf16.mxu0 %v9444
    %10614 = vmatpush1.bf16.msra.mxu0 %v9443
    %10615 = vmatprep.subr.bf16.mxu0 %v9446
    %10616 = vmatpush1.bf16.msra.mxu0 %v9445
    %10617 = vmatprep.subr.bf16.mxu0 %v9448
    %10618 = vmatpush1.bf16.msra.mxu0 %v9447
    %10619 = vmatprep.subr.bf16.mxu0 %v9450
    %10620 = vmatpush1.bf16.msra.mxu0 %v9449
    %10621 = vmatprep.subr.bf16.mxu0 %v9452
    %10622 = vmatpush1.bf16.msra.mxu0 %v9451
    %10623 = vmatprep.mubr.bf16.mxu0 %v7010
    %10624 = vmatmul.mubr.bf16.gmra.mrb[0].mxu0 %v7009
    %v10625 = vpop.f32.mrb[0].mxu0
    %v10626 = vadd.f32 %v10585, %v10625
    %v10627 = vpop.f32.mrb[0].mxu0
    %v10628 = vadd.f32 %v10587, %v10627
    %v10629 = vpop.f32.mrb[0].mxu0
    %v10630 = vpop.f32.mrb[0].mxu0
    %10631 = vdwg.mxu0
    %10632 = vmatprep.subr.bf16.mxu0 %v9454
    %10633 = vmatpush1.bf16.msra.mxu0 %v9453
    %10634 = vmatprep.subr.bf16.mxu0 %v9456
    %10635 = vmatpush1.bf16.msra.mxu0 %v9455
    %10636 = vmatprep.subr.bf16.mxu0 %v9458
    %10637 = vmatpush1.bf16.msra.mxu0 %v9457
    %10638 = vmatprep.subr.bf16.mxu0 %v9460
    %10639 = vmatpush1.bf16.msra.mxu0 %v9459
    %10640 = vmatprep.subr.bf16.mxu0 %v9462
    %10641 = vmatpush1.bf16.msra.mxu0 %v9461
    %10642 = vmatprep.subr.bf16.mxu0 %v9464
    %10643 = vmatpush1.bf16.msra.mxu0 %v9463
    %10644 = vmatprep.subr.bf16.mxu0 %v9466
    %10645 = vmatpush1.bf16.msra.mxu0 %v9465
    %10646 = vmatprep.subr.bf16.mxu0 %v9468
    %10647 = vmatpush1.bf16.msra.mxu0 %v9467
    %10648 = vmatprep.subr.bf16.mxu0 %v9470
    %10649 = vmatpush1.bf16.msra.mxu0 %v9469
    %10650 = vmatprep.subr.bf16.mxu0 %v9472
    %10651 = vmatpush1.bf16.msra.mxu0 %v9471
    %10652 = vmatprep.subr.bf16.mxu0 %v9474
    %10653 = vmatpush1.bf16.msra.mxu0 %v9473
    %10654 = vmatprep.subr.bf16.mxu0 %v9476
    %10655 = vmatpush1.bf16.msra.mxu0 %v9475
    %10656 = vmatprep.subr.bf16.mxu0 %v9478
    %10657 = vmatpush1.bf16.msra.mxu0 %v9477
    %10658 = vmatprep.subr.bf16.mxu0 %v9480
    %10659 = vmatpush1.bf16.msra.mxu0 %v9479
    %10660 = vmatprep.subr.bf16.mxu0 %v9482
    %10661 = vmatpush1.bf16.msra.mxu0 %v9481
    %10662 = vmatprep.subr.bf16.mxu0 %v9484
    %10663 = vmatpush1.bf16.msra.mxu0 %v9483
    %10664 = vmatprep.mubr.bf16.mxu0 %v7012
    %10665 = vmatmul.mubr.bf16.gmra.mrb[0].mxu0 %v7011
    %v10666 = vpop.f32.mrb[0].mxu0
    %v10667 = vadd.f32 %v10626, %v10666
    %v10668 = vpop.f32.mrb[0].mxu0
    %v10669 = vadd.f32 %v10628, %v10668
    %v10670 = vpop.f32.mrb[0].mxu0
    %v10671 = vpop.f32.mrb[0].mxu0
    %10672 = vdwg.mxu0
    %10673 = vmatprep.subr.bf16.mxu0 %v9486
    %10674 = vmatpush1.bf16.msra.mxu0 %v9485
    %10675 = vmatprep.subr.bf16.mxu0 %v9488
    %10676 = vmatpush1.bf16.msra.mxu0 %v9487
    %10677 = vmatprep.subr.bf16.mxu0 %v9490
    %10678 = vmatpush1.bf16.msra.mxu0 %v9489
    %10679 = vmatprep.subr.bf16.mxu0 %v9492
    %10680 = vmatpush1.bf16.msra.mxu0 %v9491
    %10681 = vmatprep.subr.bf16.mxu0 %v9494
    %10682 = vmatpush1.bf16.msra.mxu0 %v9493
    %10683 = vmatprep.subr.bf16.mxu0 %v9496
    %10684 = vmatpush1.bf16.msra.mxu0 %v9495
    %10685 = vmatprep.subr.bf16.mxu0 %v9498
    %10686 = vmatpush1.bf16.msra.mxu0 %v9497
    %10687 = vmatprep.subr.bf16.mxu0 %v9500
    %10688 = vmatpush1.bf16.msra.mxu0 %v9499
    %10689 = vmatprep.subr.bf16.mxu0 %v9502
    %10690 = vmatpush1.bf16.msra.mxu0 %v9501
    %10691 = vmatprep.subr.bf16.mxu0 %v9504
    %10692 = vmatpush1.bf16.msra.mxu0 %v9503
    %10693 = vmatprep.subr.bf16.mxu0 %v9506
    %10694 = vmatpush1.bf16.msra.mxu0 %v9505
    %10695 = vmatprep.subr.bf16.mxu0 %v9508
    %10696 = vmatpush1.bf16.msra.mxu0 %v9507
    %10697 = vmatprep.subr.bf16.mxu0 %v9510
    %10698 = vmatpush1.bf16.msra.mxu0 %v9509
    %10699 = vmatprep.subr.bf16.mxu0 %v9512
    %10700 = vmatpush1.bf16.msra.mxu0 %v9511
    %10701 = vmatprep.subr.bf16.mxu0 %v9514
    %10702 = vmatpush1.bf16.msra.mxu0 %v9513
    %10703 = vmatprep.subr.bf16.mxu0 %v9516
    %10704 = vmatpush1.bf16.msra.mxu0 %v9515
    %10705 = vmatprep.mubr.bf16.mxu0 %v7014
    %10706 = vmatmul.mubr.bf16.gmra.mrb[0].mxu0 %v7013
    %v10707 = vpop.f32.mrb[0].mxu0
    %v10708 = vadd.f32 %v10667, %v10707
    %v10709 = vpop.f32.mrb[0].mxu0
    %v10710 = vadd.f32 %v10669, %v10709
    %v10711 = vpop.f32.mrb[0].mxu0
    %v10712 = vpop.f32.mrb[0].mxu0
    %10713 = vdwg.mxu0
    %10714 = vmatprep.subr.bf16.mxu0 %v9518
    %10715 = vmatpush1.bf16.msra.mxu0 %v9517
    %10716 = vmatprep.subr.bf16.mxu0 %v9520
    %10717 = vmatpush1.bf16.msra.mxu0 %v9519
    %10718 = vmatprep.subr.bf16.mxu0 %v9522
    %10719 = vmatpush1.bf16.msra.mxu0 %v9521
    %10720 = vmatprep.subr.bf16.mxu0 %v9524
    %10721 = vmatpush1.bf16.msra.mxu0 %v9523
    %10722 = vmatprep.subr.bf16.mxu0 %v9526
    %10723 = vmatpush1.bf16.msra.mxu0 %v9525
    %10724 = vmatprep.subr.bf16.mxu0 %v9528
    %10725 = vmatpush1.bf16.msra.mxu0 %v9527
    %10726 = vmatprep.subr.bf16.mxu0 %v9530
    %10727 = vmatpush1.bf16.msra.mxu0 %v9529
    %10728 = vmatprep.subr.bf16.mxu0 %v9532
    %10729 = vmatpush1.bf16.msra.mxu0 %v9531
    %10730 = vmatprep.subr.bf16.mxu0 %v9534
    %10731 = vmatpush1.bf16.msra.mxu0 %v9533
    %10732 = vmatprep.subr.bf16.mxu0 %v9536
    %10733 = vmatpush1.bf16.msra.mxu0 %v9535
    %10734 = vmatprep.subr.bf16.mxu0 %v9538
    %10735 = vmatpush1.bf16.msra.mxu0 %v9537
    %10736 = vmatprep.subr.bf16.mxu0 %v9540
    %10737 = vmatpush1.bf16.msra.mxu0 %v9539
    %10738 = vmatprep.subr.bf16.mxu0 %v9542
    %10739 = vmatpush1.bf16.msra.mxu0 %v9541
    %10740 = vmatprep.subr.bf16.mxu0 %v9544
    %10741 = vmatpush1.bf16.msra.mxu0 %v9543
    %10742 = vmatprep.subr.bf16.mxu0 %v9546
    %10743 = vmatpush1.bf16.msra.mxu0 %v9545
    %10744 = vmatprep.subr.bf16.mxu0 %v9548
    %10745 = vmatpush1.bf16.msra.mxu0 %v9547
    %10746 = vmatprep.mubr.bf16.mxu0 %v7016
    %10747 = vmatmul.mubr.bf16.gmra.mrb[0].mxu0 %v7015
    %v10748 = vpop.f32.mrb[0].mxu0
    %v10749 = vadd.f32 %v10708, %v10748
    %v10750 = vpop.f32.mrb[0].mxu0
    %v10751 = vadd.f32 %v10710, %v10750
    %v10752 = vpop.f32.mrb[0].mxu0
    %v10753 = vpop.f32.mrb[0].mxu0
    %10754 = vdwg.mxu0
    %10755 = vmatprep.subr.bf16.mxu0 %v9550
    %10756 = vmatpush1.bf16.msra.mxu0 %v9549
    %10757 = vmatprep.subr.bf16.mxu0 %v9552
    %10758 = vmatpush1.bf16.msra.mxu0 %v9551
    %10759 = vmatprep.subr.bf16.mxu0 %v9554
    %10760 = vmatpush1.bf16.msra.mxu0 %v9553
    %10761 = vmatprep.subr.bf16.mxu0 %v9556
    %10762 = vmatpush1.bf16.msra.mxu0 %v9555
    %10763 = vmatprep.subr.bf16.mxu0 %v9558
    %10764 = vmatpush1.bf16.msra.mxu0 %v9557
    %10765 = vmatprep.subr.bf16.mxu0 %v9560
    %10766 = vmatpush1.bf16.msra.mxu0 %v9559
    %10767 = vmatprep.subr.bf16.mxu0 %v9562
    %10768 = vmatpush1.bf16.msra.mxu0 %v9561
    %10769 = vmatprep.subr.bf16.mxu0 %v9564
    %10770 = vmatpush1.bf16.msra.mxu0 %v9563
    %10771 = vmatprep.subr.bf16.mxu0 %v9566
    %10772 = vmatpush1.bf16.msra.mxu0 %v9565
    %10773 = vmatprep.subr.bf16.mxu0 %v9568
    %10774 = vmatpush1.bf16.msra.mxu0 %v9567
    %10775 = vmatprep.subr.bf16.mxu0 %v9570
    %10776 = vmatpush1.bf16.msra.mxu0 %v9569
    %10777 = vmatprep.subr.bf16.mxu0 %v9572
    %10778 = vmatpush1.bf16.msra.mxu0 %v9571
    %10779 = vmatprep.subr.bf16.mxu0 %v9574
    %10780 = vmatpush1.bf16.msra.mxu0 %v9573
    %10781 = vmatprep.subr.bf16.mxu0 %v9576
    %10782 = vmatpush1.bf16.msra.mxu0 %v9575
    %10783 = vmatprep.subr.bf16.mxu0 %v9578
    %10784 = vmatpush1.bf16.msra.mxu0 %v9577
    %10785 = vmatprep.subr.bf16.mxu0 %v9580
    %10786 = vmatpush1.bf16.msra.mxu0 %v9579
    %10787 = vmatprep.mubr.bf16.mxu0 %v7018
    %10788 = vmatmul.mubr.bf16.gmra.mrb[0].mxu0 %v7017
    %v10789 = vpop.f32.mrb[0].mxu0
    %v10790 = vadd.f32 %v10749, %v10789
    %v10791 = vpop.f32.mrb[0].mxu0
    %v10792 = vadd.f32 %v10751, %v10791
    %v10793 = vpop.f32.mrb[0].mxu0
    %v10794 = vpop.f32.mrb[0].mxu0
    %10795 = vdwg.mxu0
    %10796 = vmatprep.subr.bf16.mxu0 %v9582
    %10797 = vmatpush1.bf16.msra.mxu0 %v9581
    %10798 = vmatprep.subr.bf16.mxu0 %v9584
    %10799 = vmatpush1.bf16.msra.mxu0 %v9583
    %10800 = vmatprep.subr.bf16.mxu0 %v9586
    %10801 = vmatpush1.bf16.msra.mxu0 %v9585
    %10802 = vmatprep.subr.bf16.mxu0 %v9588
    %10803 = vmatpush1.bf16.msra.mxu0 %v9587
    %10804 = vmatprep.subr.bf16.mxu0 %v9590
    %10805 = vmatpush1.bf16.msra.mxu0 %v9589
    %10806 = vmatprep.subr.bf16.mxu0 %v9592
    %10807 = vmatpush1.bf16.msra.mxu0 %v9591
    %10808 = vmatprep.subr.bf16.mxu0 %v9594
    %10809 = vmatpush1.bf16.msra.mxu0 %v9593
    %10810 = vmatprep.subr.bf16.mxu0 %v9596
    %10811 = vmatpush1.bf16.msra.mxu0 %v9595
    %10812 = vmatprep.subr.bf16.mxu0 %v9598
    %10813 = vmatpush1.bf16.msra.mxu0 %v9597
    %10814 = vmatprep.subr.bf16.mxu0 %v9600
    %10815 = vmatpush1.bf16.msra.mxu0 %v9599
    %10816 = vmatprep.subr.bf16.mxu0 %v9602
    %10817 = vmatpush1.bf16.msra.mxu0 %v9601
    %10818 = vmatprep.subr.bf16.mxu0 %v9604
    %10819 = vmatpush1.bf16.msra.mxu0 %v9603
    %10820 = vmatprep.subr.bf16.mxu0 %v9606
    %10821 = vmatpush1.bf16.msra.mxu0 %v9605
    %10822 = vmatprep.subr.bf16.mxu0 %v9608
    %10823 = vmatpush1.bf16.msra.mxu0 %v9607
    %10824 = vmatprep.subr.bf16.mxu0 %v9610
    %10825 = vmatpush1.bf16.msra.mxu0 %v9609
    %10826 = vmatprep.subr.bf16.mxu0 %v9612
    %10827 = vmatpush1.bf16.msra.mxu0 %v9611
    %10828 = vmatprep.mubr.bf16.mxu0 %v7020
    %10829 = vmatmul.mubr.bf16.gmra.mrb[0].mxu0 %v7019
    %v10830 = vpop.f32.mrb[0].mxu0
    %v10831 = vadd.f32 %v10790, %v10830
    %v10832 = vpop.f32.mrb[0].mxu0
    %v10833 = vadd.f32 %v10792, %v10832
    %v10834 = vpop.f32.mrb[0].mxu0
    %v10835 = vpop.f32.mrb[0].mxu0
    %10836 = vdwg.mxu0
    %10837 = vmatprep.subr.bf16.mxu0 %v9614
    %10838 = vmatpush1.bf16.msra.mxu0 %v9613
    %10839 = vmatprep.subr.bf16.mxu0 %v9616
    %10840 = vmatpush1.bf16.msra.mxu0 %v9615
    %10841 = vmatprep.subr.bf16.mxu0 %v9618
    %10842 = vmatpush1.bf16.msra.mxu0 %v9617
    %10843 = vmatprep.subr.bf16.mxu0 %v9620
    %10844 = vmatpush1.bf16.msra.mxu0 %v9619
    %10845 = vmatprep.subr.bf16.mxu0 %v9622
    %10846 = vmatpush1.bf16.msra.mxu0 %v9621
    %10847 = vmatprep.subr.bf16.mxu0 %v9624
    %10848 = vmatpush1.bf16.msra.mxu0 %v9623
    %10849 = vmatprep.subr.bf16.mxu0 %v9626
    %10850 = vmatpush1.bf16.msra.mxu0 %v9625
    %10851 = vmatprep.subr.bf16.mxu0 %v9628
    %10852 = vmatpush1.bf16.msra.mxu0 %v9627
    %10853 = vmatprep.subr.bf16.mxu0 %v9630
    %10854 = vmatpush1.bf16.msra.mxu0 %v9629
    %10855 = vmatprep.subr.bf16.mxu0 %v9632
    %10856 = vmatpush1.bf16.msra.mxu0 %v9631
    %10857 = vmatprep.subr.bf16.mxu0 %v9634
    %10858 = vmatpush1.bf16.msra.mxu0 %v9633
    %10859 = vmatprep.subr.bf16.mxu0 %v9636
    %10860 = vmatpush1.bf16.msra.mxu0 %v9635
    %10861 = vmatprep.subr.bf16.mxu0 %v9638
    %10862 = vmatpush1.bf16.msra.mxu0 %v9637
    %10863 = vmatprep.subr.bf16.mxu0 %v9640
    %10864 = vmatpush1.bf16.msra.mxu0 %v9639
    %10865 = vmatprep.subr.bf16.mxu0 %v9642
    %10866 = vmatpush1.bf16.msra.mxu0 %v9641
    %10867 = vmatprep.subr.bf16.mxu0 %v9644
    %10868 = vmatpush1.bf16.msra.mxu0 %v9643
    %10869 = vmatprep.mubr.bf16.mxu0 %v7022
    %10870 = vmatmul.mubr.bf16.gmra.mrb[0].mxu0 %v7021
    %v10871 = vpop.f32.mrb[0].mxu0
    %v10872 = vadd.f32 %v10831, %v10871
    %v10873 = vpop.f32.mrb[0].mxu0
    %v10874 = vadd.f32 %v10833, %v10873
    %v10875 = vpop.f32.mrb[0].mxu0
    %v10876 = vpop.f32.mrb[0].mxu0
    %10877 = vdwg.mxu0
    %10878 = vmatprep.subr.bf16.mxu0 %v9646
    %10879 = vmatpush1.bf16.msra.mxu0 %v9645
    %10880 = vmatprep.subr.bf16.mxu0 %v9648
    %10881 = vmatpush1.bf16.msra.mxu0 %v9647
    %10882 = vmatprep.subr.bf16.mxu0 %v9650
    %10883 = vmatpush1.bf16.msra.mxu0 %v9649
    %10884 = vmatprep.subr.bf16.mxu0 %v9652
    %10885 = vmatpush1.bf16.msra.mxu0 %v9651
    %10886 = vmatprep.subr.bf16.mxu0 %v9654
    %10887 = vmatpush1.bf16.msra.mxu0 %v9653
    %10888 = vmatprep.subr.bf16.mxu0 %v9656
    %10889 = vmatpush1.bf16.msra.mxu0 %v9655
    %10890 = vmatprep.subr.bf16.mxu0 %v9658
    %10891 = vmatpush1.bf16.msra.mxu0 %v9657
    %10892 = vmatprep.subr.bf16.mxu0 %v9660
    %10893 = vmatpush1.bf16.msra.mxu0 %v9659
    %10894 = vmatprep.subr.bf16.mxu0 %v9662
    %10895 = vmatpush1.bf16.msra.mxu0 %v9661
    %10896 = vmatprep.subr.bf16.mxu0 %v9664
    %10897 = vmatpush1.bf16.msra.mxu0 %v9663
    %10898 = vmatprep.subr.bf16.mxu0 %v9666
    %10899 = vmatpush1.bf16.msra.mxu0 %v9665
    %10900 = vmatprep.subr.bf16.mxu0 %v9668
    %10901 = vmatpush1.bf16.msra.mxu0 %v9667
    %10902 = vmatprep.subr.bf16.mxu0 %v9670
    %10903 = vmatpush1.bf16.msra.mxu0 %v9669
    %10904 = vmatprep.subr.bf16.mxu0 %v9672
    %10905 = vmatpush1.bf16.msra.mxu0 %v9671
    %10906 = vmatprep.subr.bf16.mxu0 %v9674
    %10907 = vmatpush1.bf16.msra.mxu0 %v9673
    %10908 = vmatprep.subr.bf16.mxu0 %v9676
    %10909 = vmatpush1.bf16.msra.mxu0 %v9675
    %10910 = vmatprep.mubr.bf16.mxu0 %v7024
    %10911 = vmatmul.mubr.bf16.gmra.mrb[0].mxu0 %v7023
    %v10912 = vpop.f32.mrb[0].mxu0
    %v10913 = vadd.f32 %v10872, %v10912
    %v10914 = vpop.f32.mrb[0].mxu0
    %v10915 = vadd.f32 %v10874, %v10914
    %v10916 = vpop.f32.mrb[0].mxu0
    %v10917 = vpop.f32.mrb[0].mxu0
    %10918 = vdwg.mxu0
    %10919 = vmatprep.subr.bf16.mxu0 %v9678
    %10920 = vmatpush1.bf16.msra.mxu0 %v9677
    %10921 = vmatprep.subr.bf16.mxu0 %v9680
    %10922 = vmatpush1.bf16.msra.mxu0 %v9679
    %10923 = vmatprep.subr.bf16.mxu0 %v9682
    %10924 = vmatpush1.bf16.msra.mxu0 %v9681
    %10925 = vmatprep.subr.bf16.mxu0 %v9684
    %10926 = vmatpush1.bf16.msra.mxu0 %v9683
    %10927 = vmatprep.subr.bf16.mxu0 %v9686
    %10928 = vmatpush1.bf16.msra.mxu0 %v9685
    %10929 = vmatprep.subr.bf16.mxu0 %v9688
    %10930 = vmatpush1.bf16.msra.mxu0 %v9687
    %10931 = vmatprep.subr.bf16.mxu0 %v9690
    %10932 = vmatpush1.bf16.msra.mxu0 %v9689
    %10933 = vmatprep.subr.bf16.mxu0 %v9692
    %10934 = vmatpush1.bf16.msra.mxu0 %v9691
    %10935 = vmatprep.subr.bf16.mxu0 %v9694
    %10936 = vmatpush1.bf16.msra.mxu0 %v9693
    %10937 = vmatprep.subr.bf16.mxu0 %v9696
    %10938 = vmatpush1.bf16.msra.mxu0 %v9695
    %10939 = vmatprep.subr.bf16.mxu0 %v9698
    %10940 = vmatpush1.bf16.msra.mxu0 %v9697
    %10941 = vmatprep.subr.bf16.mxu0 %v9700
    %10942 = vmatpush1.bf16.msra.mxu0 %v9699
    %10943 = vmatprep.subr.bf16.mxu0 %v9702
    %10944 = vmatpush1.bf16.msra.mxu0 %v9701
    %10945 = vmatprep.subr.bf16.mxu0 %v9704
    %10946 = vmatpush1.bf16.msra.mxu0 %v9703
    %10947 = vmatprep.subr.bf16.mxu0 %v9706
    %10948 = vmatpush1.bf16.msra.mxu0 %v9705
    %10949 = vmatprep.subr.bf16.mxu0 %v9708
    %10950 = vmatpush1.bf16.msra.mxu0 %v9707
    %10951 = vmatprep.mubr.bf16.mxu0 %v7026
    %10952 = vmatmul.mubr.bf16.gmra.mrb[0].mxu0 %v7025
    %v10953 = vpop.f32.mrb[0].mxu0
    %v10954 = vadd.f32 %v10913, %v10953
    %v10955 = vpop.f32.mrb[0].mxu0
    %v10956 = vadd.f32 %v10915, %v10955
    %v10957 = vpop.f32.mrb[0].mxu0
    %v10958 = vpop.f32.mrb[0].mxu0
    %10959 = vdwg.mxu0
    %10960 = vmatprep.subr.bf16.mxu0 %v9710
    %10961 = vmatpush1.bf16.msra.mxu0 %v9709
    %10962 = vmatprep.subr.bf16.mxu0 %v9712
    %10963 = vmatpush1.bf16.msra.mxu0 %v9711
    %10964 = vmatprep.subr.bf16.mxu0 %v9714
    %10965 = vmatpush1.bf16.msra.mxu0 %v9713
    %10966 = vmatprep.subr.bf16.mxu0 %v9716
    %10967 = vmatpush1.bf16.msra.mxu0 %v9715
    %10968 = vmatprep.subr.bf16.mxu0 %v9718
    %10969 = vmatpush1.bf16.msra.mxu0 %v9717
    %10970 = vmatprep.subr.bf16.mxu0 %v9720
    %10971 = vmatpush1.bf16.msra.mxu0 %v9719
    %10972 = vmatprep.subr.bf16.mxu0 %v9722
    %10973 = vmatpush1.bf16.msra.mxu0 %v9721
    %10974 = vmatprep.subr.bf16.mxu0 %v9724
    %10975 = vmatpush1.bf16.msra.mxu0 %v9723
    %10976 = vmatprep.subr.bf16.mxu0 %v9726
    %10977 = vmatpush1.bf16.msra.mxu0 %v9725
    %10978 = vmatprep.subr.bf16.mxu0 %v9728
    %10979 = vmatpush1.bf16.msra.mxu0 %v9727
    %10980 = vmatprep.subr.bf16.mxu0 %v9730
    %10981 = vmatpush1.bf16.msra.mxu0 %v9729
    %10982 = vmatprep.subr.bf16.mxu0 %v9732
    %10983 = vmatpush1.bf16.msra.mxu0 %v9731
    %10984 = vmatprep.subr.bf16.mxu0 %v9734
    %10985 = vmatpush1.bf16.msra.mxu0 %v9733
    %10986 = vmatprep.subr.bf16.mxu0 %v9736
    %10987 = vmatpush1.bf16.msra.mxu0 %v9735
    %10988 = vmatprep.subr.bf16.mxu0 %v9738
    %10989 = vmatpush1.bf16.msra.mxu0 %v9737
    %10990 = vmatprep.subr.bf16.mxu0 %v9740
    %10991 = vmatpush1.bf16.msra.mxu0 %v9739
    %10992 = vmatprep.mubr.bf16.mxu0 %v7028
    %10993 = vmatmul.mubr.bf16.gmra.mrb[0].mxu0 %v7027
    %v10994 = vpop.f32.mrb[0].mxu0
    %v10995 = vadd.f32 %v10954, %v10994
    %v10996 = vpop.f32.mrb[0].mxu0
    %v10997 = vadd.f32 %v10956, %v10996
    %v10998 = vpop.f32.mrb[0].mxu0
    %v10999 = vpop.f32.mrb[0].mxu0
    %11000 = vdwg.mxu0
    %11001 = vmatprep.subr.bf16.mxu0 %v9742
    %11002 = vmatpush1.bf16.msra.mxu0 %v9741
    %11003 = vmatprep.subr.bf16.mxu0 %v9744
    %11004 = vmatpush1.bf16.msra.mxu0 %v9743
    %11005 = vmatprep.subr.bf16.mxu0 %v9746
    %11006 = vmatpush1.bf16.msra.mxu0 %v9745
    %11007 = vmatprep.subr.bf16.mxu0 %v9748
    %11008 = vmatpush1.bf16.msra.mxu0 %v9747
    %11009 = vmatprep.subr.bf16.mxu0 %v9750
    %11010 = vmatpush1.bf16.msra.mxu0 %v9749
    %11011 = vmatprep.subr.bf16.mxu0 %v9752
    %11012 = vmatpush1.bf16.msra.mxu0 %v9751
    %11013 = vmatprep.subr.bf16.mxu0 %v9754
    %11014 = vmatpush1.bf16.msra.mxu0 %v9753
    %11015 = vmatprep.subr.bf16.mxu0 %v9756
    %11016 = vmatpush1.bf16.msra.mxu0 %v9755
    %11017 = vmatprep.subr.bf16.mxu0 %v9758
    %11018 = vmatpush1.bf16.msra.mxu0 %v9757
    %11019 = vmatprep.subr.bf16.mxu0 %v9760
    %11020 = vmatpush1.bf16.msra.mxu0 %v9759
    %11021 = vmatprep.subr.bf16.mxu0 %v9762
    %11022 = vmatpush1.bf16.msra.mxu0 %v9761
    %11023 = vmatprep.subr.bf16.mxu0 %v9764
    %11024 = vmatpush1.bf16.msra.mxu0 %v9763
    %11025 = vmatprep.subr.bf16.mxu0 %v9766
    %11026 = vmatpush1.bf16.msra.mxu0 %v9765
    %11027 = vmatprep.subr.bf16.mxu0 %v9768
    %11028 = vmatpush1.bf16.msra.mxu0 %v9767
    %11029 = vmatprep.subr.bf16.mxu0 %v9770
    %11030 = vmatpush1.bf16.msra.mxu0 %v9769
    %11031 = vmatprep.subr.bf16.mxu0 %v9772
    %11032 = vmatpush1.bf16.msra.mxu0 %v9771
    %11033 = vmatprep.mubr.bf16.mxu0 %v7030
    %11034 = vmatmul.mubr.bf16.gmra.mrb[0].mxu0 %v7029
    %v11035 = vpop.f32.mrb[0].mxu0
    %v11036 = vadd.f32 %v10995, %v11035
    %v11037 = vpop.f32.mrb[0].mxu0
    %v11038 = vadd.f32 %v10997, %v11037
    %v11039 = vpop.f32.mrb[0].mxu0
    %v11040 = vpop.f32.mrb[0].mxu0
    %11041 = vdwg.mxu0
    %11042 = vmatprep.subr.bf16.mxu0 %v9774
    %11043 = vmatpush1.bf16.msra.mxu0 %v9773
    %11044 = vmatprep.subr.bf16.mxu0 %v9776
    %11045 = vmatpush1.bf16.msra.mxu0 %v9775
    %11046 = vmatprep.subr.bf16.mxu0 %v9778
    %11047 = vmatpush1.bf16.msra.mxu0 %v9777
    %11048 = vmatprep.subr.bf16.mxu0 %v9780
    %11049 = vmatpush1.bf16.msra.mxu0 %v9779
    %11050 = vmatprep.subr.bf16.mxu0 %v9782
    %11051 = vmatpush1.bf16.msra.mxu0 %v9781
    %11052 = vmatprep.subr.bf16.mxu0 %v9784
    %11053 = vmatpush1.bf16.msra.mxu0 %v9783
    %11054 = vmatprep.subr.bf16.mxu0 %v9786
    %11055 = vmatpush1.bf16.msra.mxu0 %v9785
    %11056 = vmatprep.subr.bf16.mxu0 %v9788
    %11057 = vmatpush1.bf16.msra.mxu0 %v9787
    %11058 = vmatprep.subr.bf16.mxu0 %v9790
    %11059 = vmatpush1.bf16.msra.mxu0 %v9789
    %11060 = vmatprep.subr.bf16.mxu0 %v9792
    %11061 = vmatpush1.bf16.msra.mxu0 %v9791
    %11062 = vmatprep.subr.bf16.mxu0 %v9794
    %11063 = vmatpush1.bf16.msra.mxu0 %v9793
    %11064 = vmatprep.subr.bf16.mxu0 %v9796
    %11065 = vmatpush1.bf16.msra.mxu0 %v9795
    %11066 = vmatprep.subr.bf16.mxu0 %v9798
    %11067 = vmatpush1.bf16.msra.mxu0 %v9797
    %11068 = vmatprep.subr.bf16.mxu0 %v9800
    %11069 = vmatpush1.bf16.msra.mxu0 %v9799
    %11070 = vmatprep.subr.bf16.mxu0 %v9802
    %11071 = vmatpush1.bf16.msra.mxu0 %v9801
    %11072 = vmatprep.subr.bf16.mxu0 %v9804
    %11073 = vmatpush1.bf16.msra.mxu0 %v9803
    %11074 = vmatprep.mubr.bf16.mxu0 %v7032
    %11075 = vmatmul.mubr.bf16.gmra.mrb[0].mxu0 %v7031
    %v11076 = vpop.f32.mrb[0].mxu0
    %v11077 = vadd.f32 %v11036, %v11076
    %v11078 = vpop.f32.mrb[0].mxu0
    %v11079 = vadd.f32 %v11038, %v11078
    %v11080 = vpop.f32.mrb[0].mxu0
    %v11081 = vpop.f32.mrb[0].mxu0
    %11082 = vdwg.mxu0
    %11083 = vmatprep.subr.bf16.mxu0 %v9806
    %11084 = vmatpush1.bf16.msra.mxu0 %v9805
    %11085 = vmatprep.subr.bf16.mxu0 %v9808
    %11086 = vmatpush1.bf16.msra.mxu0 %v9807
    %11087 = vmatprep.subr.bf16.mxu0 %v9810
    %11088 = vmatpush1.bf16.msra.mxu0 %v9809
    %11089 = vmatprep.subr.bf16.mxu0 %v9812
    %11090 = vmatpush1.bf16.msra.mxu0 %v9811
    %11091 = vmatprep.subr.bf16.mxu0 %v9814
    %11092 = vmatpush1.bf16.msra.mxu0 %v9813
    %11093 = vmatprep.subr.bf16.mxu0 %v9816
    %11094 = vmatpush1.bf16.msra.mxu0 %v9815
    %11095 = vmatprep.subr.bf16.mxu0 %v9818
    %11096 = vmatpush1.bf16.msra.mxu0 %v9817
    %11097 = vmatprep.subr.bf16.mxu0 %v9820
    %11098 = vmatpush1.bf16.msra.mxu0 %v9819
    %11099 = vmatprep.subr.bf16.mxu0 %v9822
    %11100 = vmatpush1.bf16.msra.mxu0 %v9821
    %11101 = vmatprep.subr.bf16.mxu0 %v9824
    %11102 = vmatpush1.bf16.msra.mxu0 %v9823
    %11103 = vmatprep.subr.bf16.mxu0 %v9826
    %11104 = vmatpush1.bf16.msra.mxu0 %v9825
    %11105 = vmatprep.subr.bf16.mxu0 %v9828
    %11106 = vmatpush1.bf16.msra.mxu0 %v9827
    %11107 = vmatprep.subr.bf16.mxu0 %v9830
    %11108 = vmatpush1.bf16.msra.mxu0 %v9829
    %11109 = vmatprep.subr.bf16.mxu0 %v9832
    %11110 = vmatpush1.bf16.msra.mxu0 %v9831
    %11111 = vmatprep.subr.bf16.mxu0 %v9834
    %11112 = vmatpush1.bf16.msra.mxu0 %v9833
    %11113 = vmatprep.subr.bf16.mxu0 %v9836
    %11114 = vmatpush1.bf16.msra.mxu0 %v9835
    %11115 = vmatprep.mubr.bf16.mxu0 %v7034
    %11116 = vmatmul.mubr.bf16.gmra.mrb[0].mxu0 %v7033
    %v11117 = vpop.f32.mrb[0].mxu0
    %v11118 = vadd.f32 %v11077, %v11117
    %v11119 = vpop.f32.mrb[0].mxu0
    %v11120 = vadd.f32 %v11079, %v11119
    %v11121 = vpop.f32.mrb[0].mxu0
    %v11122 = vpop.f32.mrb[0].mxu0
    %11123 = vdwg.mxu0
    %11124 = vmatprep.subr.bf16.mxu0 %v9838
    %11125 = vmatpush1.bf16.msra.mxu0 %v9837
    %11126 = vmatprep.subr.bf16.mxu0 %v9840
    %11127 = vmatpush1.bf16.msra.mxu0 %v9839
    %11128 = vmatprep.subr.bf16.mxu0 %v9842
    %11129 = vmatpush1.bf16.msra.mxu0 %v9841
    %11130 = vmatprep.subr.bf16.mxu0 %v9844
    %11131 = vmatpush1.bf16.msra.mxu0 %v9843
    %11132 = vmatprep.subr.bf16.mxu0 %v9846
    %11133 = vmatpush1.bf16.msra.mxu0 %v9845
    %11134 = vmatprep.subr.bf16.mxu0 %v9848
    %11135 = vmatpush1.bf16.msra.mxu0 %v9847
    %11136 = vmatprep.subr.bf16.mxu0 %v9850
    %11137 = vmatpush1.bf16.msra.mxu0 %v9849
    %11138 = vmatprep.subr.bf16.mxu0 %v9852
    %11139 = vmatpush1.bf16.msra.mxu0 %v9851
    %11140 = vmatprep.subr.bf16.mxu0 %v9854
    %11141 = vmatpush1.bf16.msra.mxu0 %v9853
    %11142 = vmatprep.subr.bf16.mxu0 %v9856
    %11143 = vmatpush1.bf16.msra.mxu0 %v9855
    %11144 = vmatprep.subr.bf16.mxu0 %v9858
    %11145 = vmatpush1.bf16.msra.mxu0 %v9857
    %11146 = vmatprep.subr.bf16.mxu0 %v9860
    %11147 = vmatpush1.bf16.msra.mxu0 %v9859
    %11148 = vmatprep.subr.bf16.mxu0 %v9862
    %11149 = vmatpush1.bf16.msra.mxu0 %v9861
    %11150 = vmatprep.subr.bf16.mxu0 %v9864
    %11151 = vmatpush1.bf16.msra.mxu0 %v9863
    %11152 = vmatprep.subr.bf16.mxu0 %v9866
    %11153 = vmatpush1.bf16.msra.mxu0 %v9865
    %11154 = vmatprep.subr.bf16.mxu0 %v9868
    %11155 = vmatpush1.bf16.msra.mxu0 %v9867
    %11156 = vmatprep.mubr.bf16.mxu0 %v7036
    %11157 = vmatmul.mubr.bf16.gmra.mrb[0].mxu0 %v7035
    %v11158 = vpop.f32.mrb[0].mxu0
    %v11159 = vadd.f32 %v11118, %v11158
    %v11160 = vpop.f32.mrb[0].mxu0
    %v11161 = vadd.f32 %v11120, %v11160
    %v11162 = vpop.f32.mrb[0].mxu0
    %v11163 = vpop.f32.mrb[0].mxu0
    %11164 = vdwg.mxu0
    %11165 = vmatprep.subr.bf16.mxu0 %v9870
    %11166 = vmatpush1.bf16.msra.mxu0 %v9869
    %11167 = vmatprep.subr.bf16.mxu0 %v9872
    %11168 = vmatpush1.bf16.msra.mxu0 %v9871
    %11169 = vmatprep.subr.bf16.mxu0 %v9874
    %11170 = vmatpush1.bf16.msra.mxu0 %v9873
    %11171 = vmatprep.subr.bf16.mxu0 %v9876
    %11172 = vmatpush1.bf16.msra.mxu0 %v9875
    %11173 = vmatprep.subr.bf16.mxu0 %v9878
    %11174 = vmatpush1.bf16.msra.mxu0 %v9877
    %11175 = vmatprep.subr.bf16.mxu0 %v9880
    %11176 = vmatpush1.bf16.msra.mxu0 %v9879
    %11177 = vmatprep.subr.bf16.mxu0 %v9882
    %11178 = vmatpush1.bf16.msra.mxu0 %v9881
    %11179 = vmatprep.subr.bf16.mxu0 %v9884
    %11180 = vmatpush1.bf16.msra.mxu0 %v9883
    %11181 = vmatprep.subr.bf16.mxu0 %v9886
    %11182 = vmatpush1.bf16.msra.mxu0 %v9885
    %11183 = vmatprep.subr.bf16.mxu0 %v9888
    %11184 = vmatpush1.bf16.msra.mxu0 %v9887
    %11185 = vmatprep.subr.bf16.mxu0 %v9890
    %11186 = vmatpush1.bf16.msra.mxu0 %v9889
    %11187 = vmatprep.subr.bf16.mxu0 %v9892
    %11188 = vmatpush1.bf16.msra.mxu0 %v9891
    %11189 = vmatprep.subr.bf16.mxu0 %v9894
    %11190 = vmatpush1.bf16.msra.mxu0 %v9893
    %11191 = vmatprep.subr.bf16.mxu0 %v9896
    %11192 = vmatpush1.bf16.msra.mxu0 %v9895
    %11193 = vmatprep.subr.bf16.mxu0 %v9898
    %11194 = vmatpush1.bf16.msra.mxu0 %v9897
    %11195 = vmatprep.subr.bf16.mxu0 %v9900
    %11196 = vmatpush1.bf16.msra.mxu0 %v9899
    %11197 = vmatprep.mubr.bf16.mxu0 %v7038
    %11198 = vmatmul.mubr.bf16.gmra.mrb[0].mxu0 %v7037
    %v11199 = vpop.f32.mrb[0].mxu0
    %v11200 = vadd.f32 %v11159, %v11199
    %v11201 = vpop.f32.mrb[0].mxu0
    %v11202 = vadd.f32 %v11161, %v11201
    %v11203 = vpop.f32.mrb[0].mxu0
    %v11204 = vpop.f32.mrb[0].mxu0
    %11205 = vdwg.mxu0
    %11206 = vmatprep.subr.bf16.mxu0 %v9902
    %11207 = vmatpush1.bf16.msra.mxu0 %v9901
    %11208 = vmatprep.subr.bf16.mxu0 %v9904
    %11209 = vmatpush1.bf16.msra.mxu0 %v9903
    %11210 = vmatprep.subr.bf16.mxu0 %v9906
    %11211 = vmatpush1.bf16.msra.mxu0 %v9905
    %11212 = vmatprep.subr.bf16.mxu0 %v9908
    %11213 = vmatpush1.bf16.msra.mxu0 %v9907
    %11214 = vmatprep.subr.bf16.mxu0 %v9910
    %11215 = vmatpush1.bf16.msra.mxu0 %v9909
    %11216 = vmatprep.subr.bf16.mxu0 %v9912
    %11217 = vmatpush1.bf16.msra.mxu0 %v9911
    %11218 = vmatprep.subr.bf16.mxu0 %v9914
    %11219 = vmatpush1.bf16.msra.mxu0 %v9913
    %11220 = vmatprep.subr.bf16.mxu0 %v9916
    %11221 = vmatpush1.bf16.msra.mxu0 %v9915
    %11222 = vmatprep.subr.bf16.mxu0 %v9918
    %11223 = vmatpush1.bf16.msra.mxu0 %v9917
    %11224 = vmatprep.subr.bf16.mxu0 %v9920
    %11225 = vmatpush1.bf16.msra.mxu0 %v9919
    %11226 = vmatprep.subr.bf16.mxu0 %v9922
    %11227 = vmatpush1.bf16.msra.mxu0 %v9921
    %11228 = vmatprep.subr.bf16.mxu0 %v9924
    %11229 = vmatpush1.bf16.msra.mxu0 %v9923
    %11230 = vmatprep.subr.bf16.mxu0 %v9926
    %11231 = vmatpush1.bf16.msra.mxu0 %v9925
    %11232 = vmatprep.subr.bf16.mxu0 %v9928
    %11233 = vmatpush1.bf16.msra.mxu0 %v9927
    %11234 = vmatprep.subr.bf16.mxu0 %v9930
    %11235 = vmatpush1.bf16.msra.mxu0 %v9929
    %11236 = vmatprep.subr.bf16.mxu0 %v9932
    %11237 = vmatpush1.bf16.msra.mxu0 %v9931
    %11238 = vmatprep.mubr.bf16.mxu0 %v7040
    %11239 = vmatmul.mubr.bf16.gmra.mrb[0].mxu0 %v7039
    %v11240 = vpop.f32.mrb[0].mxu0
    %v11241 = vadd.f32 %v11200, %v11240
    %v11242 = vpop.f32.mrb[0].mxu0
    %v11243 = vadd.f32 %v11202, %v11242
    %v11244 = vpop.f32.mrb[0].mxu0
    %v11245 = vpop.f32.mrb[0].mxu0
    %11246 = vdwg.mxu0
    %v11247 = vmax.f32 %v11241, 0.0
    %v11248 = vmax.f32 %v11243, 0.0
    %v11249 = vpack.c.bf16 %v11247, %v11247
    %v11250 = vpack.c.bf16 %v11248, %v11248
    %v11251 = vld [vmem:[#allocation13] sm:$0xf]
    %v11252 = vld [vmem:[#allocation13 + $0x4] sm:$0xf]
    %v11253 = vld [vmem:[#allocation13 + $0x8] sm:$0xf]
    %v11254 = vld [vmem:[#allocation13 + $0xc] sm:$0xf]
    %v11255 = vld [vmem:[#allocation13 + $0x10] sm:$0xf]
    %v11256 = vld [vmem:[#allocation13 + $0x14] sm:$0xf]
    %v11257 = vld [vmem:[#allocation13 + $0x18] sm:$0xf]
    %v11258 = vld [vmem:[#allocation13 + $0x1c] sm:$0xf]
    %v11259 = vld [vmem:[#allocation13 + $0x20] sm:$0xf]
    %v11260 = vld [vmem:[#allocation13 + $0x24] sm:$0xf]
    %v11261 = vld [vmem:[#allocation13 + $0x28] sm:$0xf]
    %v11262 = vld [vmem:[#allocation13 + $0x2c] sm:$0xf]
    %v11263 = vld [vmem:[#allocation13 + $0x30] sm:$0xf]
    %v11264 = vld [vmem:[#allocation13 + $0x34] sm:$0xf]
    %v11265 = vld [vmem:[#allocation13 + $0x38] sm:$0xf]
    %v11266 = vld [vmem:[#allocation13 + $0x3c] sm:$0xf]
    %v11267 = vld [vmem:[#allocation13 + $0x40] sm:$0xf]
    %v11268 = vld [vmem:[#allocation13 + $0x44] sm:$0xf]
    %v11269 = vld [vmem:[#allocation13 + $0x48] sm:$0xf]
    %v11270 = vld [vmem:[#allocation13 + $0x4c] sm:$0xf]
    %v11271 = vld [vmem:[#allocation13 + $0x50] sm:$0xf]
    %v11272 = vld [vmem:[#allocation13 + $0x54] sm:$0xf]
    %v11273 = vld [vmem:[#allocation13 + $0x58] sm:$0xf]
    %v11274 = vld [vmem:[#allocation13 + $0x5c] sm:$0xf]
    %v11275 = vld [vmem:[#allocation13 + $0x60] sm:$0xf]
    %v11276 = vld [vmem:[#allocation13 + $0x64] sm:$0xf]
    %v11277 = vld [vmem:[#allocation13 + $0x68] sm:$0xf]
    %v11278 = vld [vmem:[#allocation13 + $0x6c] sm:$0xf]
    %v11279 = vld [vmem:[#allocation13 + $0x70] sm:$0xf]
    %v11280 = vld [vmem:[#allocation13 + $0x74] sm:$0xf]
    %v11281 = vld [vmem:[#allocation13 + $0x78] sm:$0xf]
    %v11282 = vld [vmem:[#allocation13 + $0x7c] sm:$0xf]
    %v11283 = vld [vmem:[#allocation14] sm:$0x1]
    %v11285 = vlaneseq
    %v11286 = vshrl.u32 %v11285, 7
    %v11287 = vsub.s32 0, %v11286
    %v11288 = vrot.slane %v11283, %v11287
    %v11322 = vunpack.c.l.b16 %v11251
    %v11323 = vunpack.c.l.b16 %v11252
    %v11324 = vunpack.c.l.b16 %v11253
    %v11325 = vunpack.c.l.b16 %v11254
    %v11326 = vunpack.c.l.b16 %v11255
    %v11327 = vunpack.c.l.b16 %v11256
    %v11328 = vunpack.c.l.b16 %v11257
    %v11329 = vunpack.c.l.b16 %v11258
    %v11330 = vunpack.c.l.b16 %v11259
    %v11331 = vunpack.c.l.b16 %v11260
    %v11332 = vunpack.c.l.b16 %v11261
    %v11333 = vunpack.c.l.b16 %v11262
    %v11334 = vunpack.c.l.b16 %v11263
    %v11335 = vunpack.c.l.b16 %v11264
    %v11336 = vunpack.c.l.b16 %v11265
    %v11337 = vunpack.c.l.b16 %v11266
    %v11338 = vunpack.c.l.b16 %v11267
    %v11339 = vunpack.c.l.b16 %v11268
    %v11340 = vunpack.c.l.b16 %v11269
    %v11341 = vunpack.c.l.b16 %v11270
    %v11342 = vunpack.c.l.b16 %v11271
    %v11343 = vunpack.c.l.b16 %v11272
    %v11344 = vunpack.c.l.b16 %v11273
    %v11345 = vunpack.c.l.b16 %v11274
    %v11346 = vunpack.c.l.b16 %v11275
    %v11347 = vunpack.c.l.b16 %v11276
    %v11348 = vunpack.c.l.b16 %v11277
    %v11349 = vunpack.c.l.b16 %v11278
    %v11350 = vunpack.c.l.b16 %v11279
    %v11351 = vunpack.c.l.b16 %v11280
    %v11352 = vunpack.c.l.b16 %v11281
    %v11353 = vunpack.c.l.b16 %v11282
    %v11354 = vpack.c.b16 %v11323, %v11322
    %v11355 = vpack.c.b16 %v11325, %v11324
    %v11356 = vpack.c.b16 %v11327, %v11326
    %v11357 = vpack.c.b16 %v11329, %v11328
    %v11358 = vpack.c.b16 %v11331, %v11330
    %v11359 = vpack.c.b16 %v11333, %v11332
    %v11360 = vpack.c.b16 %v11335, %v11334
    %v11361 = vpack.c.b16 %v11337, %v11336
    %v11362 = vpack.c.b16 %v11339, %v11338
    %v11363 = vpack.c.b16 %v11341, %v11340
    %v11364 = vpack.c.b16 %v11343, %v11342
    %v11365 = vpack.c.b16 %v11345, %v11344
    %v11366 = vpack.c.b16 %v11347, %v11346
    %v11367 = vpack.c.b16 %v11349, %v11348
    %v11368 = vpack.c.b16 %v11351, %v11350
    %v11369 = vpack.c.b16 %v11353, %v11352
    %11386 = vmatprep.subr.bf16.mxu0 0
    %11387 = vmatpush1.bf16.msra.mxu0 %v11354
    %11388 = vmatprep.subr.bf16.mxu0 0
    %11389 = vmatpush1.bf16.msra.mxu0 %v11355
    %11390 = vmatprep.subr.bf16.mxu0 0
    %11391 = vmatpush1.bf16.msra.mxu0 %v11356
    %11392 = vmatprep.subr.bf16.mxu0 0
    %11393 = vmatpush1.bf16.msra.mxu0 %v11357
    %11394 = vmatprep.subr.bf16.mxu0 0
    %11395 = vmatpush1.bf16.msra.mxu0 %v11358
    %11396 = vmatprep.subr.bf16.mxu0 0
    %11397 = vmatpush1.bf16.msra.mxu0 %v11359
    %11398 = vmatprep.subr.bf16.mxu0 0
    %11399 = vmatpush1.bf16.msra.mxu0 %v11360
    %11400 = vmatprep.subr.bf16.mxu0 0
    %11401 = vmatpush1.bf16.msra.mxu0 %v11361
    %11402 = vmatprep.subr.bf16.mxu0 0
    %11403 = vmatpush1.bf16.msra.mxu0 %v11362
    %11404 = vmatprep.subr.bf16.mxu0 0
    %11405 = vmatpush1.bf16.msra.mxu0 %v11363
    %11406 = vmatprep.subr.bf16.mxu0 0
    %11407 = vmatpush1.bf16.msra.mxu0 %v11364
    %11408 = vmatprep.subr.bf16.mxu0 0
    %11409 = vmatpush1.bf16.msra.mxu0 %v11365
    %11410 = vmatprep.subr.bf16.mxu0 0
    %11411 = vmatpush1.bf16.msra.mxu0 %v11366
    %11412 = vmatprep.subr.bf16.mxu0 0
    %11413 = vmatpush1.bf16.msra.mxu0 %v11367
    %11414 = vmatprep.subr.bf16.mxu0 0
    %11415 = vmatpush1.bf16.msra.mxu0 %v11368
    %11416 = vmatprep.subr.bf16.mxu0 0
    %11417 = vmatpush1.bf16.msra.mxu0 %v11369
    %11418 = vmatprep.mubr.bf16.mxu0 %v11250
    %11419 = vmatmul.mubr.bf16.gmra.mrb[0].mxu0 %v11249
    %v11420 = vpop.f32.mrb[0].mxu0
    %v11421 = vadd.f32 %v11288, %v11420
    %v11422 = vpop.f32.mrb[0].mxu0
    %v11423 = vpop.f32.mrb[0].mxu0
    %v11424 = vpop.f32.mrb[0].mxu0
    %11425 = vdwg.mxu0
    %v11426 = vmax.f32 %v11421, 0.0
    %v11427 = vpack.c.bf16 %v11426, %v11426
    %v11428 = vld [vmem:[%s9] sm:$0xf]
    %v11429 = vld [vmem:[%s9 + $0x4] sm:$0xf]
    %v11430 = vld [vmem:[%s9 + $0x8] sm:$0xf]
    %v11431 = vld [vmem:[%s9 + $0xc] sm:$0xf]
    %v11432 = vld [vmem:[%s9 + $0x10] sm:$0xf]
    %v11433 = vld [vmem:[%s9 + $0x14] sm:$0xf]
    %v11434 = vld [vmem:[%s9 + $0x18] sm:$0xf]
    %v11435 = vld [vmem:[%s9 + $0x1c] sm:$0xf]
    %v11436 = vld [vmem:[%s9 + $0x20] sm:$0xf]
    %v11437 = vld [vmem:[%s9 + $0x24] sm:$0xf]
    %v11438 = vld [vmem:[%s9 + $0x28] sm:$0xf]
    %v11439 = vld [vmem:[%s9 + $0x2c] sm:$0xf]
    %v11440 = vld [vmem:[%s9 + $0x30] sm:$0xf]
    %v11441 = vld [vmem:[%s9 + $0x34] sm:$0xf]
    %v11442 = vld [vmem:[%s9 + $0x38] sm:$0xf]
    %v11443 = vld [vmem:[%s9 + $0x3c] sm:$0xf]
    %v11444 = vld [vmem:[#allocation16] sm:$0x1]
    %v11446 = vlaneseq
    %v11447 = vshrl.u32 %v11446, 7
    %v11448 = vsub.s32 0, %v11447
    %v11449 = vrot.slane %v11444, %v11448
    %v11467 = vunpack.c.l.b16 %v11428
    %v11468 = vunpack.c.l.b16 %v11429
    %v11469 = vunpack.c.l.b16 %v11430
    %v11470 = vunpack.c.l.b16 %v11431
    %v11471 = vunpack.c.l.b16 %v11432
    %v11472 = vunpack.c.l.b16 %v11433
    %v11473 = vunpack.c.l.b16 %v11434
    %v11474 = vunpack.c.l.b16 %v11435
    %v11475 = vunpack.c.l.b16 %v11436
    %v11476 = vunpack.c.l.b16 %v11437
    %v11477 = vunpack.c.l.b16 %v11438
    %v11478 = vunpack.c.l.b16 %v11439
    %v11479 = vunpack.c.l.b16 %v11440
    %v11480 = vunpack.c.l.b16 %v11441
    %v11481 = vunpack.c.l.b16 %v11442
    %v11482 = vunpack.c.l.b16 %v11443
    %v11483 = vpack.c.b16 %v11468, %v11467
    %v11484 = vpack.c.b16 %v11470, %v11469
    %v11485 = vpack.c.b16 %v11472, %v11471
    %v11486 = vpack.c.b16 %v11474, %v11473
    %v11487 = vpack.c.b16 %v11476, %v11475
    %v11488 = vpack.c.b16 %v11478, %v11477
    %v11489 = vpack.c.b16 %v11480, %v11479
    %v11490 = vpack.c.b16 %v11482, %v11481
    %11499 = vmatprep.subr.bf16.mxu0 0
    %11500 = vmatpush1.bf16.msra.mxu0 %v11483
    %11501 = vmatprep.subr.bf16.mxu0 0
    %11502 = vmatpush1.bf16.msra.mxu0 %v11484
    %11503 = vmatprep.subr.bf16.mxu0 0
    %11504 = vmatpush1.bf16.msra.mxu0 %v11485
    %11505 = vmatprep.subr.bf16.mxu0 0
    %11506 = vmatpush1.bf16.msra.mxu0 %v11486
    %11507 = vmatprep.subr.bf16.mxu0 0
    %11508 = vmatpush1.bf16.msra.mxu0 %v11487
    %11509 = vmatprep.subr.bf16.mxu0 0
    %11510 = vmatpush1.bf16.msra.mxu0 %v11488
    %11511 = vmatprep.subr.bf16.mxu0 0
    %11512 = vmatpush1.bf16.msra.mxu0 %v11489
    %11513 = vmatprep.subr.bf16.mxu0 0
    %11514 = vmatpush1.bf16.msra.mxu0 %v11490
    %11515 = vmatprep.subr.bf16.mxu0 0
    %11516 = vmatpush1.bf16.msra.mxu0 0
    %11517 = vmatprep.subr.bf16.mxu0 0
    %11518 = vmatpush1.bf16.msra.mxu0 0
    %11519 = vmatprep.subr.bf16.mxu0 0
    %11520 = vmatpush1.bf16.msra.mxu0 0
    %11521 = vmatprep.subr.bf16.mxu0 0
    %11522 = vmatpush1.bf16.msra.mxu0 0
    %11523 = vmatprep.subr.bf16.mxu0 0
    %11524 = vmatpush1.bf16.msra.mxu0 0
    %11525 = vmatprep.subr.bf16.mxu0 0
    %11526 = vmatpush1.bf16.msra.mxu0 0
    %11527 = vmatprep.subr.bf16.mxu0 0
    %11528 = vmatpush1.bf16.msra.mxu0 0
    %11529 = vmatprep.subr.bf16.mxu0 0
    %11530 = vmatpush1.bf16.msra.mxu0 0
    %11531 = vmatprep.mubr.bf16.mxu0 0
    %11532 = vmatmul.mubr.bf16.gmra.mrb[0].mxu0 %v11427
    %v11533 = vpop.f32.mrb[0].mxu0
    %v11534 = vadd.f32 %v11449, %v11533
    %v11535 = vpop.f32.mrb[0].mxu0
    %v11536 = vpop.f32.mrb[0].mxu0
    %v11537 = vpop.f32.mrb[0].mxu0
    %11538 = vdwg.mxu0
    %vm11539 = vcmask 74752
    %11540 = vst.msk [vmem:[#allocation17] sm:$0x3] %vm11539, %v11534
    // Predicated region
    $region82: #{classifier_forward.1} parent=1 // pred_check
      _
    $region83: #{classifier_forward.1} parent=1 // pred_check_branch
      %11542 = sbr.rel (0) target = $region85
    $region84: #{classifier_forward.1} parent=1 // pred_region
      %s11544 = ssub.s32 32, 32
      %11545 = vsyncadd [#allocation4], %s11544
      %s11547 = sshll.u32 [#allocation17], 4
      %s11548 = int_to_ptr.vmem [resolvable:$true] %s11547
      %11550 = dma.vmem_to_hbm [thread:$0]  %s11548, 32, %s11, [#allocation4]
    $region85: #{classifier_forward.1} parent=1 // pred_fallthru
      _
    // Predicated region
    $region86: #{classifier_forward.1} parent=1 // pred_check
      _
    $region87: #{classifier_forward.1} parent=1 // pred_check_branch
      %11552 = sbr.rel (0) target = $region89
    $region88: #{classifier_forward.1} parent=1 // pred_region
      %11553 = dma.done [#allocation4], 32
    $region89: #{classifier_forward.1} parent=1 // pred_fallthru
      _
    %11554 = vsyncpa [#allocation3], 1
    %11555 = vsyncpa [#allocation6], 1
    %11556 = vsyncpa [#allocation9], 1
    %11557 = vsyncpa [#allocation12], 1
    %11558 = vsyncpa [#allocation15], 1
    %11559 = vsyncpa [#allocation4], 1

</llo_original>
